<compile_context>
chip_gen: v6e
topology: v6e:2x2x1
jax: 0.10.0
libtpu: 0.0.40
codegen_flags: <defaults>
</compile_context>

<pallas_src>
import functools

import jax
import jax.numpy as jnp
from jax import lax
from jax.experimental import pallas as pl
from jax.experimental.pallas import tpu as pltpu


def _round_up(x, m):
    return ((x + m - 1) // m) * m


# ----------------------------- Pallas kernel -------------------------------


def _gru_decoder_kernel(n_layers, seq_len, *refs):
    """Whole-sequence GRU decoder, single invocation.

    refs layout (all VMEM):
      x_ref      (S, Bp, E)   matmul dtype (bf16 or f32), embedded + ReLU
      h0_ref     (L, Bp, H)   f32
      per layer l (10 refs):
        wx_r, wx_z, wx_n   (in_dim, H)   matmul dtype
        wh_r, wh_z, wh_n   (H, H)        matmul dtype
        b_r, b_z           (1, H)        f32   (bih+bhh pre-summed)
        b_ni, b_nh         (1, H)        f32   (n-gate biases kept separate)
      head_w_ref (H, Vp)      matmul dtype (zero-padded columns)
      head_b_ref (1, Vp)      f32          (zero-padded)
      preds_ref  (S, Bp, Vp)  f32 output (lane-dense)
      hout_ref   (L, Bp, H)   f32 output
    """
    x_ref = refs[0]
    h0_ref = refs[1]
    layer_refs = refs[2:2 + 10 * n_layers]
    head_w_ref = refs[2 + 10 * n_layers]
    head_b_ref = refs[3 + 10 * n_layers]
    preds_ref = refs[4 + 10 * n_layers]
    hout_ref = refs[5 + 10 * n_layers]

    mm_dtype = x_ref.dtype

    h0 = tuple(h0_ref[l].astype(jnp.float32) for l in range(n_layers))

    def step(t, hs):
        inp_mm = x_ref[t]                               # (Bp, E) matmul dtype
        new_hs = []
        for l in range(n_layers):
            base = 10 * l
            wx_r = layer_refs[base + 0][...]
            wx_z = layer_refs[base + 1][...]
            wx_n = layer_refs[base + 2][...]
            wh_r = layer_refs[base + 3][...]
            wh_z = layer_refs[base + 4][...]
            wh_n = layer_refs[base + 5][...]
            b_r = layer_refs[base + 6][...]
            b_z = layer_refs[base + 7][...]
            b_ni = layer_refs[base + 8][...]
            b_nh = layer_refs[base + 9][...]

            h_prev = hs[l]                              # (Bp, H) f32
            h_mm = h_prev.astype(mm_dtype)

            # Per-gate dots (no lane-unaligned slicing); f32 accumulate.
            gr = (jnp.dot(inp_mm, wx_r, preferred_element_type=jnp.float32)
                  + jnp.dot(h_mm, wh_r, preferred_element_type=jnp.float32)
                  + b_r)
            gz = (jnp.dot(inp_mm, wx_z, preferred_element_type=jnp.float32)
                  + jnp.dot(h_mm, wh_z, preferred_element_type=jnp.float32)
                  + b_z)
            gn_x = jnp.dot(inp_mm, wx_n, preferred_element_type=jnp.float32) + b_ni
            gn_h = jnp.dot(h_mm, wh_n, preferred_element_type=jnp.float32) + b_nh

            # PyTorch GRU gate order/semantics (r, z, n); elementwise in f32.
            r = jax.nn.sigmoid(gr)
            z = jax.nn.sigmoid(gz)
            n = jnp.tanh(gn_x + r * gn_h)
            h_new = (1.0 - z) * n + z * h_prev

            new_hs.append(h_new)
            inp_mm = h_new.astype(mm_dtype)             # feeds next layer

        # Head on last-layer output; (Bp, Vp) lane-dense store.
        logits = (jnp.dot(inp_mm, head_w_ref[...],
                          preferred_element_type=jnp.float32)
                  + head_b_ref[...])
        preds_ref[t] = logits
        return tuple(new_hs)

    hs = lax.fori_loop(0, seq_len, step, h0, unroll=True)

    # Final hidden written exactly once, after the time loop.
    for l in range(n_layers):
        hout_ref[l] = hs[l]


# ------------------------ One-time parameter prep --------------------------


def prepare_decoder_params(params, *, latent_dim, matmul_dtype=jnp.bfloat16):
    """Hoisted transposes / per-gate splits / bias pre-sums / padding / casts."""
    H = latent_dim
    V, E = params["emb"].shape
    Vp = _round_up(V, 128)                              # lane-dense logits

    flat = []
    for (wih, whh, bih, bhh) in params["layers"]:
        wih_t = wih.T                                   # (in_dim, 3H), r|z|n
        whh_t = whh.T                                   # (H, 3H)
        flat += [
            wih_t[:, 0:H].astype(matmul_dtype),
            wih_t[:, H:2 * H].astype(matmul_dtype),
            wih_t[:, 2 * H:3 * H].astype(matmul_dtype),
            whh_t[:, 0:H].astype(matmul_dtype),
            whh_t[:, H:2 * H].astype(matmul_dtype),
            whh_t[:, 2 * H:3 * H].astype(matmul_dtype),
            (bih[0:H] + bhh[0:H]).reshape(1, H).astype(jnp.float32),
            (bih[H:2 * H] + bhh[H:2 * H]).reshape(1, H).astype(jnp.float32),
            bih[2 * H:3 * H].reshape(1, H).astype(jnp.float32),
            bhh[2 * H:3 * H].reshape(1, H).astype(jnp.float32),
        ]

    head_w_t = params["head_w"].T.astype(matmul_dtype)  # (H, V)
    head_w_p = jnp.zeros((H, Vp), matmul_dtype).at[:, :V].set(head_w_t)
    head_b_p = jnp.zeros((1, Vp), jnp.float32).at[0, :V].set(
        params["head_b"].astype(jnp.float32))

    return dict(
        emb=params["emb"].astype(jnp.float32),
        flat=tuple(flat),
        head_w=head_w_p,
        head_b=head_b_p,
        vocab=V,
        vocab_padded=Vp,
        embed_dim=E,
        matmul_dtype=matmul_dtype,
    )


# ------------------------------- Wrapper ------------------------------------


def decoder_forward(y_seqs, hidden, prep, *, n_layers, latent_dim):
    """Pallas implementation of Decoder.forward (non-packed path)."""
    S, B = y_seqs.shape
    L, H = n_layers, latent_dim
    V, Vp = prep["vocab"], prep["vocab_padded"]
    mm_dtype = prep["matmul_dtype"]

    Bp = _round_up(B, 8)                                # sublane-dense rows

    # Glue: embedding lookup + ReLU (nn.Embedding(padding_idx) + nn.ReLU).
    x = jnp.maximum(prep["emb"][y_seqs], 0.0)           # (S, B, E) f32
    if Bp != B:
        x = jnp.pad(x, ((0, 0), (0, Bp - B), (0, 0)))
        hidden_in = jnp.pad(hidden, ((0, 0), (0, Bp - B), (0, 0)))
    else:
        hidden_in = hidden
    x = x.astype(mm_dtype)
    hidden_in = hidden_in.astype(jnp.float32)

    kernel = functools.partial(_gru_decoder_kernel, L, S)
    vmem = pl.BlockSpec(memory_space=pltpu.MemorySpace.VMEM)
    n_inputs = 2 + 10 * L + 2

    # TODO(synk): on v7x, shard a (padded) batch or the vocab axis across the
    # 2 TensorCores (parallel grid axis / core_map) once B or V is non-toy.
    preds_p, h_final_p = pl.pallas_call(
        kernel,
        out_shape=(
            jax.ShapeDtypeStruct((S, Bp, Vp), jnp.float32),
            jax.ShapeDtypeStruct((L, Bp, H), jnp.float32),
        ),
        in_specs=[vmem] * n_inputs,
        out_specs=(vmem, vmem),
    )(x, hidden_in, *prep["flat"], prep["head_w"], prep["head_b"])

    # Strip batch / vocab padding.
    return preds_p[:, :B, :V], h_final_p[:, :B, :]


# ------------------------- Pure-JAX reference ------------------------------


def decoder_forward_ref(y_seqs, hidden, params, *, n_layers, latent_dim):
    H = latent_dim
    x = jnp.maximum(params["emb"][y_seqs], 0.0).astype(jnp.float32)  # (S,B,E)
    seq = x
    finals = []
    for l in range(n_layers):
        wih, whh, bih, bhh = params["layers"][l]

        def step(h_prev, x_t, wih=wih, whh=whh, bih=bih, bhh=bhh):
            gx = x_t @ wih.T + bih
            gh = h_prev @ whh.T + bhh
            r = jax.nn.sigmoid(gx[:, 0:H] + gh[:, 0:H])
            z = jax.nn.sigmoid(gx[:, H:2 * H] + gh[:, H:2 * H])
            n = jnp.tanh(gx[:, 2 * H:3 * H] + r * gh[:, 2 * H:3 * H])
            h_new = (1.0 - z) * n + z * h_prev
            return h_new, h_new

        h_last, outs = jax.lax.scan(step, hidden[l], seq)
        seq = outs
        finals.append(h_last)
    preds = seq @ params["head_w"].T + params["head_b"]
    return preds, jnp.stack(finals)


# ------------------------------ Param init ---------------------------------


def init_params(key, *, output_dim, embed_dim, latent_dim, n_layers, pad_id):
    ks = jax.random.split(key, 3 + 4 * n_layers)
    emb = jax.random.normal(ks[0], (output_dim, embed_dim), jnp.float32)
    emb = emb.at[pad_id].set(0.0)  # padding_idx row is zero

    bound = 1.0 / jnp.sqrt(latent_dim)
    layers = []
    for l in range(n_layers):
        in_dim = embed_dim if l == 0 else latent_dim
        k0, k1, k2, k3 = jax.random.split(ks[1 + l], 4)
        wih = jax.random.uniform(k0, (3 * latent_dim, in_dim), jnp.float32, -bound, bound)
        whh = jax.random.uniform(k1, (3 * latent_dim, latent_dim), jnp.float32, -bound, bound)
        bih = jax.random.uniform(k2, (3 * latent_dim,), jnp.float32, -bound, bound)
        bhh = jax.random.uniform(k3, (3 * latent_dim,), jnp.float32, -bound, bound)
        layers.append((wih, whh, bih, bhh))

    hb = 1.0 / jnp.sqrt(latent_dim)
    head_w = jax.random.uniform(ks[-2], (output_dim, latent_dim), jnp.float32, -hb, hb)
    head_b = jax.random.uniform(ks[-1], (output_dim,), jnp.float32, -hb, hb)
    return {"emb": emb, "layers": layers, "head_w": head_w, "head_b": head_b}


# --------------------------------- Main -------------------------------------


if __name__ == "__main__":
    OUTPUT_DIM = 16   # vocab size
    EMBED_DIM = 32
    LATENT_DIM = 32
    N_LAYERS = 2
    SEQ = 8
    BATCH = 4
    PAD_ID = 0

    key = jax.random.PRNGKey(0)
    k_params, k_tokens, k_hidden = jax.random.split(key, 3)

    params = init_params(
        k_params,
        output_dim=OUTPUT_DIM,
        embed_dim=EMBED_DIM,
        latent_dim=LATENT_DIM,
        n_layers=N_LAYERS,
        pad_id=PAD_ID,
    )

    y_seqs = jax.random.randint(k_tokens, (SEQ, BATCH), 0, OUTPUT_DIM, jnp.int32)
    hidden = jax.random.normal(k_hidden, (N_LAYERS, BATCH, LATENT_DIM), jnp.float32)

    # Reference (pure f32 JAX).
    preds_ref, h_ref = decoder_forward_ref(
        y_seqs, hidden, params, n_layers=N_LAYERS, latent_dim=LATENT_DIM
    )

    # One-time prepared parameter sets (hoisted transposes/casts/padding).
    prep_f32 = prepare_decoder_params(params, latent_dim=LATENT_DIM,
                                      matmul_dtype=jnp.float32)
    prep_bf16 = prepare_decoder_params(params, latent_dim=LATENT_DIM,
                                       matmul_dtype=jnp.bfloat16)

    fwd_f32 = jax.jit(lambda y, h: decoder_forward(
        y, h, prep_f32, n_layers=N_LAYERS, latent_dim=LATENT_DIM))
    fwd_bf16 = jax.jit(lambda y, h: decoder_forward(
        y, h, prep_bf16, n_layers=N_LAYERS, latent_dim=LATENT_DIM))

    # Exact-math (f32 MXU) path: tight tolerance correctness check.
    preds32, h32 = jax.block_until_ready(fwd_f32(y_seqs, hidden))
    assert preds32.shape == (SEQ, BATCH, OUTPUT_DIM)
    assert h32.shape == (N_LAYERS, BATCH, LATENT_DIM)
    assert jnp.allclose(preds32, preds_ref, atol=2e-5, rtol=2e-5)
    assert jnp.allclose(h32, h_ref, atol=2e-5, rtol=2e-5)

    # Performance path: bf16 matmul operands, f32 accumulate + f32 gate math.
    preds16, h16 = jax.block_until_ready(fwd_bf16(y_seqs, hidden))
    assert preds16.shape == (SEQ, BATCH, OUTPUT_DIM)
    assert h16.shape == (N_LAYERS, BATCH, LATENT_DIM)
    assert jnp.allclose(preds16, preds_ref, atol=1e-1, rtol=1e-1)
    assert jnp.allclose(h16, h_ref, atol=1e-1, rtol=1e-1)

    # TODO(synk): packed_sequences path (pack_padded_sequence) and the
    # autoregressive generate() loop are host-side control flow, not kernels.
    print("KERNEL_OK")
</pallas_src>

<mosaic_0001>
module attributes {stable_mosaic.version = 11 : i64} {
  func.func @_gru_decoder_kernel(%arg0: memref<8x8x32xf32, #tpu.memory_space<vmem>>, %arg1: memref<2x8x32xf32, #tpu.memory_space<vmem>>, %arg2: memref<32x32xf32, #tpu.memory_space<vmem>>, %arg3: memref<32x32xf32, #tpu.memory_space<vmem>>, %arg4: memref<32x32xf32, #tpu.memory_space<vmem>>, %arg5: memref<32x32xf32, #tpu.memory_space<vmem>>, %arg6: memref<32x32xf32, #tpu.memory_space<vmem>>, %arg7: memref<32x32xf32, #tpu.memory_space<vmem>>, %arg8: memref<1x32xf32, #tpu.memory_space<vmem>>, %arg9: memref<1x32xf32, #tpu.memory_space<vmem>>, %arg10: memref<1x32xf32, #tpu.memory_space<vmem>>, %arg11: memref<1x32xf32, #tpu.memory_space<vmem>>, %arg12: memref<32x32xf32, #tpu.memory_space<vmem>>, %arg13: memref<32x32xf32, #tpu.memory_space<vmem>>, %arg14: memref<32x32xf32, #tpu.memory_space<vmem>>, %arg15: memref<32x32xf32, #tpu.memory_space<vmem>>, %arg16: memref<32x32xf32, #tpu.memory_space<vmem>>, %arg17: memref<32x32xf32, #tpu.memory_space<vmem>>, %arg18: memref<1x32xf32, #tpu.memory_space<vmem>>, %arg19: memref<1x32xf32, #tpu.memory_space<vmem>>, %arg20: memref<1x32xf32, #tpu.memory_space<vmem>>, %arg21: memref<1x32xf32, #tpu.memory_space<vmem>>, %arg22: memref<32x128xf32, #tpu.memory_space<vmem>>, %arg23: memref<1x128xf32, #tpu.memory_space<vmem>>, %arg24: memref<8x8x128xf32, #tpu.memory_space<vmem>>, %arg25: memref<2x8x32xf32, #tpu.memory_space<vmem>>) attributes {dimension_semantics = [], scalar_prefetch = 0 : i64, scratch_operands = 0 : i64, tpu.core_type = #tpu.core_type<tc>} {
    %c0 = arith.constant 0 : index
    %c0_0 = arith.constant 0 : index
    %c0_1 = arith.constant 0 : index
    %0 = vector.load %arg1[%c0, %c0_0, %c0_1] : memref<2x8x32xf32, #tpu.memory_space<vmem>>, vector<1x8x32xf32>
    %1 = vector.shape_cast %0 : vector<1x8x32xf32> to vector<8x32xf32>
    %c1 = arith.constant 1 : index
    %c0_2 = arith.constant 0 : index
    %c0_3 = arith.constant 0 : index
    %2 = vector.load %arg1[%c1, %c0_2, %c0_3] : memref<2x8x32xf32, #tpu.memory_space<vmem>>, vector<1x8x32xf32>
    %3 = vector.shape_cast %2 : vector<1x8x32xf32> to vector<8x32xf32>
    %c0_i32 = arith.constant 0 : i32
    %4 = arith.index_cast %c0_i32 : i32 to index
    %c0_4 = arith.constant 0 : index
    %c0_5 = arith.constant 0 : index
    %5 = vector.load %arg0[%4, %c0_4, %c0_5] : memref<8x8x32xf32, #tpu.memory_space<vmem>>, vector<1x8x32xf32>
    %6 = vector.shape_cast %5 : vector<1x8x32xf32> to vector<8x32xf32>
    %c0_6 = arith.constant 0 : index
    %c0_7 = arith.constant 0 : index
    %7 = vector.load %arg2[%c0_6, %c0_7] : memref<32x32xf32, #tpu.memory_space<vmem>>, vector<32x32xf32>
    %c0_8 = arith.constant 0 : index
    %c0_9 = arith.constant 0 : index
    %8 = vector.load %arg3[%c0_8, %c0_9] : memref<32x32xf32, #tpu.memory_space<vmem>>, vector<32x32xf32>
    %c0_10 = arith.constant 0 : index
    %c0_11 = arith.constant 0 : index
    %9 = vector.load %arg4[%c0_10, %c0_11] : memref<32x32xf32, #tpu.memory_space<vmem>>, vector<32x32xf32>
    %c0_12 = arith.constant 0 : index
    %c0_13 = arith.constant 0 : index
    %10 = vector.load %arg5[%c0_12, %c0_13] : memref<32x32xf32, #tpu.memory_space<vmem>>, vector<32x32xf32>
    %c0_14 = arith.constant 0 : index
    %c0_15 = arith.constant 0 : index
    %11 = vector.load %arg6[%c0_14, %c0_15] : memref<32x32xf32, #tpu.memory_space<vmem>>, vector<32x32xf32>
    %c0_16 = arith.constant 0 : index
    %c0_17 = arith.constant 0 : index
    %12 = vector.load %arg7[%c0_16, %c0_17] : memref<32x32xf32, #tpu.memory_space<vmem>>, vector<32x32xf32>
    %c0_18 = arith.constant 0 : index
    %c0_19 = arith.constant 0 : index
    %13 = vector.load %arg8[%c0_18, %c0_19] : memref<1x32xf32, #tpu.memory_space<vmem>>, vector<1x32xf32>
    %c0_20 = arith.constant 0 : index
    %c0_21 = arith.constant 0 : index
    %14 = vector.load %arg9[%c0_20, %c0_21] : memref<1x32xf32, #tpu.memory_space<vmem>>, vector<1x32xf32>
    %c0_22 = arith.constant 0 : index
    %c0_23 = arith.constant 0 : index
    %15 = vector.load %arg10[%c0_22, %c0_23] : memref<1x32xf32, #tpu.memory_space<vmem>>, vector<1x32xf32>
    %c0_24 = arith.constant 0 : index
    %c0_25 = arith.constant 0 : index
    %16 = vector.load %arg11[%c0_24, %c0_25] : memref<1x32xf32, #tpu.memory_space<vmem>>, vector<1x32xf32>
    %cst = arith.constant dense<0.000000e+00> : vector<8x32xf32>
    %17 = tpu.matmul %6, %7, %cst {dimension_numbers = #tpu.dot_dimension_numbers<[1], [0], [0], [1], [0, 0, 1, 1], [], []>} : vector<8x32xf32>, vector<32x32xf32>, vector<8x32xf32> -> vector<8x32xf32>
    %cst_26 = arith.constant dense<0.000000e+00> : vector<8x32xf32>
    %18 = tpu.matmul %1, %10, %cst_26 {dimension_numbers = #tpu.dot_dimension_numbers<[1], [0], [0], [1], [0, 0, 1, 1], [], []>} : vector<8x32xf32>, vector<32x32xf32>, vector<8x32xf32> -> vector<8x32xf32>
    %19 = arith.addf %17, %18 : vector<8x32xf32>
    %20 = vector.broadcast %13 : vector<1x32xf32> to vector<8x32xf32>
    %21 = arith.addf %19, %20 : vector<8x32xf32>
    %cst_27 = arith.constant dense<0.000000e+00> : vector<8x32xf32>
    %22 = tpu.matmul %6, %8, %cst_27 {dimension_numbers = #tpu.dot_dimension_numbers<[1], [0], [0], [1], [0, 0, 1, 1], [], []>} : vector<8x32xf32>, vector<32x32xf32>, vector<8x32xf32> -> vector<8x32xf32>
    %cst_28 = arith.constant dense<0.000000e+00> : vector<8x32xf32>
    %23 = tpu.matmul %1, %11, %cst_28 {dimension_numbers = #tpu.dot_dimension_numbers<[1], [0], [0], [1], [0, 0, 1, 1], [], []>} : vector<8x32xf32>, vector<32x32xf32>, vector<8x32xf32> -> vector<8x32xf32>
    %24 = arith.addf %22, %23 : vector<8x32xf32>
    %25 = vector.broadcast %14 : vector<1x32xf32> to vector<8x32xf32>
    %26 = arith.addf %24, %25 : vector<8x32xf32>
    %cst_29 = arith.constant dense<0.000000e+00> : vector<8x32xf32>
    %27 = tpu.matmul %6, %9, %cst_29 {dimension_numbers = #tpu.dot_dimension_numbers<[1], [0], [0], [1], [0, 0, 1, 1], [], []>} : vector<8x32xf32>, vector<32x32xf32>, vector<8x32xf32> -> vector<8x32xf32>
    %28 = vector.broadcast %15 : vector<1x32xf32> to vector<8x32xf32>
    %29 = arith.addf %27, %28 : vector<8x32xf32>
    %cst_30 = arith.constant dense<0.000000e+00> : vector<8x32xf32>
    %30 = tpu.matmul %1, %12, %cst_30 {dimension_numbers = #tpu.dot_dimension_numbers<[1], [0], [0], [1], [0, 0, 1, 1], [], []>} : vector<8x32xf32>, vector<32x32xf32>, vector<8x32xf32> -> vector<8x32xf32>
    %31 = vector.broadcast %16 : vector<1x32xf32> to vector<8x32xf32>
    %32 = arith.addf %30, %31 : vector<8x32xf32>
    %33 = arith.negf %21 : vector<8x32xf32>
    %34 = math.exp %33 : vector<8x32xf32>
    %cst_31 = arith.constant 1.000000e+00 : f32
    %35 = vector.broadcast %cst_31 : f32 to vector<8x32xf32>
    %36 = arith.addf %35, %34 : vector<8x32xf32>
    %37 = arith.divf %35, %36 : vector<8x32xf32>
    %38 = arith.negf %26 : vector<8x32xf32>
    %39 = math.exp %38 : vector<8x32xf32>
    %cst_32 = arith.constant 1.000000e+00 : f32
    %40 = vector.broadcast %cst_32 : f32 to vector<8x32xf32>
    %41 = arith.addf %40, %39 : vector<8x32xf32>
    %42 = arith.divf %40, %41 : vector<8x32xf32>
    %43 = arith.mulf %37, %32 : vector<8x32xf32>
    %44 = arith.addf %29, %43 : vector<8x32xf32>
    %45 = math.tanh %44 : vector<8x32xf32>
    %cst_33 = arith.constant 1.000000e+00 : f32
    %46 = vector.broadcast %cst_33 : f32 to vector<8x32xf32>
    %47 = arith.subf %46, %42 : vector<8x32xf32>
    %48 = arith.mulf %47, %45 : vector<8x32xf32>
    %49 = arith.mulf %42, %1 : vector<8x32xf32>
    %50 = arith.addf %48, %49 : vector<8x32xf32>
    %c0_34 = arith.constant 0 : index
    %c0_35 = arith.constant 0 : index
    %51 = vector.load %arg12[%c0_34, %c0_35] : memref<32x32xf32, #tpu.memory_space<vmem>>, vector<32x32xf32>
    %c0_36 = arith.constant 0 : index
    %c0_37 = arith.constant 0 : index
    %52 = vector.load %arg13[%c0_36, %c0_37] : memref<32x32xf32, #tpu.memory_space<vmem>>, vector<32x32xf32>
    %c0_38 = arith.constant 0 : index
    %c0_39 = arith.constant 0 : index
    %53 = vector.load %arg14[%c0_38, %c0_39] : memref<32x32xf32, #tpu.memory_space<vmem>>, vector<32x32xf32>
    %c0_40 = arith.constant 0 : index
    %c0_41 = arith.constant 0 : index
    %54 = vector.load %arg15[%c0_40, %c0_41] : memref<32x32xf32, #tpu.memory_space<vmem>>, vector<32x32xf32>
    %c0_42 = arith.constant 0 : index
    %c0_43 = arith.constant 0 : index
    %55 = vector.load %arg16[%c0_42, %c0_43] : memref<32x32xf32, #tpu.memory_space<vmem>>, vector<32x32xf32>
    %c0_44 = arith.constant 0 : index
    %c0_45 = arith.constant 0 : index
    %56 = vector.load %arg17[%c0_44, %c0_45] : memref<32x32xf32, #tpu.memory_space<vmem>>, vector<32x32xf32>
    %c0_46 = arith.constant 0 : index
    %c0_47 = arith.constant 0 : index
    %57 = vector.load %arg18[%c0_46, %c0_47] : memref<1x32xf32, #tpu.memory_space<vmem>>, vector<1x32xf32>
    %c0_48 = arith.constant 0 : index
    %c0_49 = arith.constant 0 : index
    %58 = vector.load %arg19[%c0_48, %c0_49] : memref<1x32xf32, #tpu.memory_space<vmem>>, vector<1x32xf32>
    %c0_50 = arith.constant 0 : index
    %c0_51 = arith.constant 0 : index
    %59 = vector.load %arg20[%c0_50, %c0_51] : memref<1x32xf32, #tpu.memory_space<vmem>>, vector<1x32xf32>
    %c0_52 = arith.constant 0 : index
    %c0_53 = arith.constant 0 : index
    %60 = vector.load %arg21[%c0_52, %c0_53] : memref<1x32xf32, #tpu.memory_space<vmem>>, vector<1x32xf32>
    %cst_54 = arith.constant dense<0.000000e+00> : vector<8x32xf32>
    %61 = tpu.matmul %50, %51, %cst_54 {dimension_numbers = #tpu.dot_dimension_numbers<[1], [0], [0], [1], [0, 0, 1, 1], [], []>} : vector<8x32xf32>, vector<32x32xf32>, vector<8x32xf32> -> vector<8x32xf32>
    %cst_55 = arith.constant dense<0.000000e+00> : vector<8x32xf32>
    %62 = tpu.matmul %3, %54, %cst_55 {dimension_numbers = #tpu.dot_dimension_numbers<[1], [0], [0], [1], [0, 0, 1, 1], [], []>} : vector<8x32xf32>, vector<32x32xf32>, vector<8x32xf32> -> vector<8x32xf32>
    %63 = arith.addf %61, %62 : vector<8x32xf32>
    %64 = vector.broadcast %57 : vector<1x32xf32> to vector<8x32xf32>
    %65 = arith.addf %63, %64 : vector<8x32xf32>
    %cst_56 = arith.constant dense<0.000000e+00> : vector<8x32xf32>
    %66 = tpu.matmul %50, %52, %cst_56 {dimension_numbers = #tpu.dot_dimension_numbers<[1], [0], [0], [1], [0, 0, 1, 1], [], []>} : vector<8x32xf32>, vector<32x32xf32>, vector<8x32xf32> -> vector<8x32xf32>
    %cst_57 = arith.constant dense<0.000000e+00> : vector<8x32xf32>
    %67 = tpu.matmul %3, %55, %cst_57 {dimension_numbers = #tpu.dot_dimension_numbers<[1], [0], [0], [1], [0, 0, 1, 1], [], []>} : vector<8x32xf32>, vector<32x32xf32>, vector<8x32xf32> -> vector<8x32xf32>
    %68 = arith.addf %66, %67 : vector<8x32xf32>
    %69 = vector.broadcast %58 : vector<1x32xf32> to vector<8x32xf32>
    %70 = arith.addf %68, %69 : vector<8x32xf32>
    %cst_58 = arith.constant dense<0.000000e+00> : vector<8x32xf32>
    %71 = tpu.matmul %50, %53, %cst_58 {dimension_numbers = #tpu.dot_dimension_numbers<[1], [0], [0], [1], [0, 0, 1, 1], [], []>} : vector<8x32xf32>, vector<32x32xf32>, vector<8x32xf32> -> vector<8x32xf32>
    %72 = vector.broadcast %59 : vector<1x32xf32> to vector<8x32xf32>
    %73 = arith.addf %71, %72 : vector<8x32xf32>
    %cst_59 = arith.constant dense<0.000000e+00> : vector<8x32xf32>
    %74 = tpu.matmul %3, %56, %cst_59 {dimension_numbers = #tpu.dot_dimension_numbers<[1], [0], [0], [1], [0, 0, 1, 1], [], []>} : vector<8x32xf32>, vector<32x32xf32>, vector<8x32xf32> -> vector<8x32xf32>
    %75 = vector.broadcast %60 : vector<1x32xf32> to vector<8x32xf32>
    %76 = arith.addf %74, %75 : vector<8x32xf32>
    %77 = arith.negf %65 : vector<8x32xf32>
    %78 = math.exp %77 : vector<8x32xf32>
    %cst_60 = arith.constant 1.000000e+00 : f32
    %79 = vector.broadcast %cst_60 : f32 to vector<8x32xf32>
    %80 = arith.addf %79, %78 : vector<8x32xf32>
    %81 = arith.divf %79, %80 : vector<8x32xf32>
    %82 = arith.negf %70 : vector<8x32xf32>
    %83 = math.exp %82 : vector<8x32xf32>
    %cst_61 = arith.constant 1.000000e+00 : f32
    %84 = vector.broadcast %cst_61 : f32 to vector<8x32xf32>
    %85 = arith.addf %84, %83 : vector<8x32xf32>
    %86 = arith.divf %84, %85 : vector<8x32xf32>
    %87 = arith.mulf %81, %76 : vector<8x32xf32>
    %88 = arith.addf %73, %87 : vector<8x32xf32>
    %89 = math.tanh %88 : vector<8x32xf32>
    %cst_62 = arith.constant 1.000000e+00 : f32
    %90 = vector.broadcast %cst_62 : f32 to vector<8x32xf32>
    %91 = arith.subf %90, %86 : vector<8x32xf32>
    %92 = arith.mulf %91, %89 : vector<8x32xf32>
    %93 = arith.mulf %86, %3 : vector<8x32xf32>
    %94 = arith.addf %92, %93 : vector<8x32xf32>
    %c0_63 = arith.constant 0 : index
    %c0_64 = arith.constant 0 : index
    %95 = vector.load %arg22[%c0_63, %c0_64] : memref<32x128xf32, #tpu.memory_space<vmem>>, vector<32x128xf32>
    %cst_65 = arith.constant dense<0.000000e+00> : vector<8x128xf32>
    %96 = tpu.matmul %94, %95, %cst_65 {dimension_numbers = #tpu.dot_dimension_numbers<[1], [0], [0], [1], [0, 0, 1, 1], [], []>} : vector<8x32xf32>, vector<32x128xf32>, vector<8x128xf32> -> vector<8x128xf32>
    %c0_66 = arith.constant 0 : index
    %c0_67 = arith.constant 0 : index
    %97 = vector.load %arg23[%c0_66, %c0_67] : memref<1x128xf32, #tpu.memory_space<vmem>>, vector<1x128xf32>
    %98 = vector.broadcast %97 : vector<1x128xf32> to vector<8x128xf32>
    %99 = arith.addf %96, %98 : vector<8x128xf32>
    %100 = arith.index_cast %c0_i32 : i32 to index
    %c0_68 = arith.constant 0 : index
    %c0_69 = arith.constant 0 : index
    %101 = vector.load %arg24[%100, %c0_68, %c0_69] : memref<8x8x128xf32, #tpu.memory_space<vmem>>, vector<1x8x128xf32>
    %102 = vector.shape_cast %101 : vector<1x8x128xf32> to vector<8x128xf32>
    %103 = vector.shape_cast %99 : vector<8x128xf32> to vector<1x8x128xf32>
    tpu.vector_store %arg24[%100, %c0_68, %c0_69], %103 {strides = array<i32>} : memref<8x8x128xf32, #tpu.memory_space<vmem>>, vector<1x8x128xf32>,
    %c1_i32 = arith.constant 1 : i32
    %104 = arith.index_cast %c1_i32 : i32 to index
    %c0_70 = arith.constant 0 : index
    %c0_71 = arith.constant 0 : index
    %105 = vector.load %arg0[%104, %c0_70, %c0_71] : memref<8x8x32xf32, #tpu.memory_space<vmem>>, vector<1x8x32xf32>
    %106 = vector.shape_cast %105 : vector<1x8x32xf32> to vector<8x32xf32>
    %c0_72 = arith.constant 0 : index
    %c0_73 = arith.constant 0 : index
    %107 = vector.load %arg2[%c0_72, %c0_73] : memref<32x32xf32, #tpu.memory_space<vmem>>, vector<32x32xf32>
    %c0_74 = arith.constant 0 : index
    %c0_75 = arith.constant 0 : index
    %108 = vector.load %arg3[%c0_74, %c0_75] : memref<32x32xf32, #tpu.memory_space<vmem>>, vector<32x32xf32>
    %c0_76 = arith.constant 0 : index
    %c0_77 = arith.constant 0 : index
    %109 = vector.load %arg4[%c0_76, %c0_77] : memref<32x32xf32, #tpu.memory_space<vmem>>, vector<32x32xf32>
    %c0_78 = arith.constant 0 : index
    %c0_79 = arith.constant 0 : index
    %110 = vector.load %arg5[%c0_78, %c0_79] : memref<32x32xf32, #tpu.memory_space<vmem>>, vector<32x32xf32>
    %c0_80 = arith.constant 0 : index
    %c0_81 = arith.constant 0 : index
    %111 = vector.load %arg6[%c0_80, %c0_81] : memref<32x32xf32, #tpu.memory_space<vmem>>, vector<32x32xf32>
    %c0_82 = arith.constant 0 : index
    %c0_83 = arith.constant 0 : index
    %112 = vector.load %arg7[%c0_82, %c0_83] : memref<32x32xf32, #tpu.memory_space<vmem>>, vector<32x32xf32>
    %c0_84 = arith.constant 0 : index
    %c0_85 = arith.constant 0 : index
    %113 = vector.load %arg8[%c0_84, %c0_85] : memref<1x32xf32, #tpu.memory_space<vmem>>, vector<1x32xf32>
    %c0_86 = arith.constant 0 : index
    %c0_87 = arith.constant 0 : index
    %114 = vector.load %arg9[%c0_86, %c0_87] : memref<1x32xf32, #tpu.memory_space<vmem>>, vector<1x32xf32>
    %c0_88 = arith.constant 0 : index
    %c0_89 = arith.constant 0 : index
    %115 = vector.load %arg10[%c0_88, %c0_89] : memref<1x32xf32, #tpu.memory_space<vmem>>, vector<1x32xf32>
    %c0_90 = arith.constant 0 : index
    %c0_91 = arith.constant 0 : index
    %116 = vector.load %arg11[%c0_90, %c0_91] : memref<1x32xf32, #tpu.memory_space<vmem>>, vector<1x32xf32>
    %cst_92 = arith.constant dense<0.000000e+00> : vector<8x32xf32>
    %117 = tpu.matmul %106, %107, %cst_92 {dimension_numbers = #tpu.dot_dimension_numbers<[1], [0], [0], [1], [0, 0, 1, 1], [], []>} : vector<8x32xf32>, vector<32x32xf32>, vector<8x32xf32> -> vector<8x32xf32>
    %cst_93 = arith.constant dense<0.000000e+00> : vector<8x32xf32>
    %118 = tpu.matmul %50, %110, %cst_93 {dimension_numbers = #tpu.dot_dimension_numbers<[1], [0], [0], [1], [0, 0, 1, 1], [], []>} : vector<8x32xf32>, vector<32x32xf32>, vector<8x32xf32> -> vector<8x32xf32>
    %119 = arith.addf %117, %118 : vector<8x32xf32>
    %120 = vector.broadcast %113 : vector<1x32xf32> to vector<8x32xf32>
    %121 = arith.addf %119, %120 : vector<8x32xf32>
    %cst_94 = arith.constant dense<0.000000e+00> : vector<8x32xf32>
    %122 = tpu.matmul %106, %108, %cst_94 {dimension_numbers = #tpu.dot_dimension_numbers<[1], [0], [0], [1], [0, 0, 1, 1], [], []>} : vector<8x32xf32>, vector<32x32xf32>, vector<8x32xf32> -> vector<8x32xf32>
    %cst_95 = arith.constant dense<0.000000e+00> : vector<8x32xf32>
    %123 = tpu.matmul %50, %111, %cst_95 {dimension_numbers = #tpu.dot_dimension_numbers<[1], [0], [0], [1], [0, 0, 1, 1], [], []>} : vector<8x32xf32>, vector<32x32xf32>, vector<8x32xf32> -> vector<8x32xf32>
    %124 = arith.addf %122, %123 : vector<8x32xf32>
    %125 = vector.broadcast %114 : vector<1x32xf32> to vector<8x32xf32>
    %126 = arith.addf %124, %125 : vector<8x32xf32>
    %cst_96 = arith.constant dense<0.000000e+00> : vector<8x32xf32>
    %127 = tpu.matmul %106, %109, %cst_96 {dimension_numbers = #tpu.dot_dimension_numbers<[1], [0], [0], [1], [0, 0, 1, 1], [], []>} : vector<8x32xf32>, vector<32x32xf32>, vector<8x32xf32> -> vector<8x32xf32>
    %128 = vector.broadcast %115 : vector<1x32xf32> to vector<8x32xf32>
    %129 = arith.addf %127, %128 : vector<8x32xf32>
    %cst_97 = arith.constant dense<0.000000e+00> : vector<8x32xf32>
    %130 = tpu.matmul %50, %112, %cst_97 {dimension_numbers = #tpu.dot_dimension_numbers<[1], [0], [0], [1], [0, 0, 1, 1], [], []>} : vector<8x32xf32>, vector<32x32xf32>, vector<8x32xf32> -> vector<8x32xf32>
    %131 = vector.broadcast %116 : vector<1x32xf32> to vector<8x32xf32>
    %132 = arith.addf %130, %131 : vector<8x32xf32>
    %133 = arith.negf %121 : vector<8x32xf32>
    %134 = math.exp %133 : vector<8x32xf32>
    %cst_98 = arith.constant 1.000000e+00 : f32
    %135 = vector.broadcast %cst_98 : f32 to vector<8x32xf32>
    %136 = arith.addf %135, %134 : vector<8x32xf32>
    %137 = arith.divf %135, %136 : vector<8x32xf32>
    %138 = arith.negf %126 : vector<8x32xf32>
    %139 = math.exp %138 : vector<8x32xf32>
    %cst_99 = arith.constant 1.000000e+00 : f32
    %140 = vector.broadcast %cst_99 : f32 to vector<8x32xf32>
    %141 = arith.addf %140, %139 : vector<8x32xf32>
    %142 = arith.divf %140, %141 : vector<8x32xf32>
    %143 = arith.mulf %137, %132 : vector<8x32xf32>
    %144 = arith.addf %129, %143 : vector<8x32xf32>
    %145 = math.tanh %144 : vector<8x32xf32>
    %cst_100 = arith.constant 1.000000e+00 : f32
    %146 = vector.broadcast %cst_100 : f32 to vector<8x32xf32>
    %147 = arith.subf %146, %142 : vector<8x32xf32>
    %148 = arith.mulf %147, %145 : vector<8x32xf32>
    %149 = arith.mulf %142, %50 : vector<8x32xf32>
    %150 = arith.addf %148, %149 : vector<8x32xf32>
    %c0_101 = arith.constant 0 : index
    %c0_102 = arith.constant 0 : index
    %151 = vector.load %arg12[%c0_101, %c0_102] : memref<32x32xf32, #tpu.memory_space<vmem>>, vector<32x32xf32>
    %c0_103 = arith.constant 0 : index
    %c0_104 = arith.constant 0 : index
    %152 = vector.load %arg13[%c0_103, %c0_104] : memref<32x32xf32, #tpu.memory_space<vmem>>, vector<32x32xf32>
    %c0_105 = arith.constant 0 : index
    %c0_106 = arith.constant 0 : index
    %153 = vector.load %arg14[%c0_105, %c0_106] : memref<32x32xf32, #tpu.memory_space<vmem>>, vector<32x32xf32>
    %c0_107 = arith.constant 0 : index
    %c0_108 = arith.constant 0 : index
    %154 = vector.load %arg15[%c0_107, %c0_108] : memref<32x32xf32, #tpu.memory_space<vmem>>, vector<32x32xf32>
    %c0_109 = arith.constant 0 : index
    %c0_110 = arith.constant 0 : index
    %155 = vector.load %arg16[%c0_109, %c0_110] : memref<32x32xf32, #tpu.memory_space<vmem>>, vector<32x32xf32>
    %c0_111 = arith.constant 0 : index
    %c0_112 = arith.constant 0 : index
    %156 = vector.load %arg17[%c0_111, %c0_112] : memref<32x32xf32, #tpu.memory_space<vmem>>, vector<32x32xf32>
    %c0_113 = arith.constant 0 : index
    %c0_114 = arith.constant 0 : index
    %157 = vector.load %arg18[%c0_113, %c0_114] : memref<1x32xf32, #tpu.memory_space<vmem>>, vector<1x32xf32>
    %c0_115 = arith.constant 0 : index
    %c0_116 = arith.constant 0 : index
    %158 = vector.load %arg19[%c0_115, %c0_116] : memref<1x32xf32, #tpu.memory_space<vmem>>, vector<1x32xf32>
    %c0_117 = arith.constant 0 : index
    %c0_118 = arith.constant 0 : index
    %159 = vector.load %arg20[%c0_117, %c0_118] : memref<1x32xf32, #tpu.memory_space<vmem>>, vector<1x32xf32>
    %c0_119 = arith.constant 0 : index
    %c0_120 = arith.constant 0 : index
    %160 = vector.load %arg21[%c0_119, %c0_120] : memref<1x32xf32, #tpu.memory_space<vmem>>, vector<1x32xf32>
    %cst_121 = arith.constant dense<0.000000e+00> : vector<8x32xf32>
    %161 = tpu.matmul %150, %151, %cst_121 {dimension_numbers = #tpu.dot_dimension_numbers<[1], [0], [0], [1], [0, 0, 1, 1], [], []>} : vector<8x32xf32>, vector<32x32xf32>, vector<8x32xf32> -> vector<8x32xf32>
    %cst_122 = arith.constant dense<0.000000e+00> : vector<8x32xf32>
    %162 = tpu.matmul %94, %154, %cst_122 {dimension_numbers = #tpu.dot_dimension_numbers<[1], [0], [0], [1], [0, 0, 1, 1], [], []>} : vector<8x32xf32>, vector<32x32xf32>, vector<8x32xf32> -> vector<8x32xf32>
    %163 = arith.addf %161, %162 : vector<8x32xf32>
    %164 = vector.broadcast %157 : vector<1x32xf32> to vector<8x32xf32>
    %165 = arith.addf %163, %164 : vector<8x32xf32>
    %cst_123 = arith.constant dense<0.000000e+00> : vector<8x32xf32>
    %166 = tpu.matmul %150, %152, %cst_123 {dimension_numbers = #tpu.dot_dimension_numbers<[1], [0], [0], [1], [0, 0, 1, 1], [], []>} : vector<8x32xf32>, vector<32x32xf32>, vector<8x32xf32> -> vector<8x32xf32>
    %cst_124 = arith.constant dense<0.000000e+00> : vector<8x32xf32>
    %167 = tpu.matmul %94, %155, %cst_124 {dimension_numbers = #tpu.dot_dimension_numbers<[1], [0], [0], [1], [0, 0, 1, 1], [], []>} : vector<8x32xf32>, vector<32x32xf32>, vector<8x32xf32> -> vector<8x32xf32>
    %168 = arith.addf %166, %167 : vector<8x32xf32>
    %169 = vector.broadcast %158 : vector<1x32xf32> to vector<8x32xf32>
    %170 = arith.addf %168, %169 : vector<8x32xf32>
    %cst_125 = arith.constant dense<0.000000e+00> : vector<8x32xf32>
    %171 = tpu.matmul %150, %153, %cst_125 {dimension_numbers = #tpu.dot_dimension_numbers<[1], [0], [0], [1], [0, 0, 1, 1], [], []>} : vector<8x32xf32>, vector<32x32xf32>, vector<8x32xf32> -> vector<8x32xf32>
    %172 = vector.broadcast %159 : vector<1x32xf32> to vector<8x32xf32>
    %173 = arith.addf %171, %172 : vector<8x32xf32>
    %cst_126 = arith.constant dense<0.000000e+00> : vector<8x32xf32>
    %174 = tpu.matmul %94, %156, %cst_126 {dimension_numbers = #tpu.dot_dimension_numbers<[1], [0], [0], [1], [0, 0, 1, 1], [], []>} : vector<8x32xf32>, vector<32x32xf32>, vector<8x32xf32> -> vector<8x32xf32>
    %175 = vector.broadcast %160 : vector<1x32xf32> to vector<8x32xf32>
    %176 = arith.addf %174, %175 : vector<8x32xf32>
    %177 = arith.negf %165 : vector<8x32xf32>
    %178 = math.exp %177 : vector<8x32xf32>
    %cst_127 = arith.constant 1.000000e+00 : f32
    %179 = vector.broadcast %cst_127 : f32 to vector<8x32xf32>
    %180 = arith.addf %179, %178 : vector<8x32xf32>
    %181 = arith.divf %179, %180 : vector<8x32xf32>
    %182 = arith.negf %170 : vector<8x32xf32>
    %183 = math.exp %182 : vector<8x32xf32>
    %cst_128 = arith.constant 1.000000e+00 : f32
    %184 = vector.broadcast %cst_128 : f32 to vector<8x32xf32>
    %185 = arith.addf %184, %183 : vector<8x32xf32>
    %186 = arith.divf %184, %185 : vector<8x32xf32>
    %187 = arith.mulf %181, %176 : vector<8x32xf32>
    %188 = arith.addf %173, %187 : vector<8x32xf32>
    %189 = math.tanh %188 : vector<8x32xf32>
    %cst_129 = arith.constant 1.000000e+00 : f32
    %190 = vector.broadcast %cst_129 : f32 to vector<8x32xf32>
    %191 = arith.subf %190, %186 : vector<8x32xf32>
    %192 = arith.mulf %191, %189 : vector<8x32xf32>
    %193 = arith.mulf %186, %94 : vector<8x32xf32>
    %194 = arith.addf %192, %193 : vector<8x32xf32>
    %c0_130 = arith.constant 0 : index
    %c0_131 = arith.constant 0 : index
    %195 = vector.load %arg22[%c0_130, %c0_131] : memref<32x128xf32, #tpu.memory_space<vmem>>, vector<32x128xf32>
    %cst_132 = arith.constant dense<0.000000e+00> : vector<8x128xf32>
    %196 = tpu.matmul %194, %195, %cst_132 {dimension_numbers = #tpu.dot_dimension_numbers<[1], [0], [0], [1], [0, 0, 1, 1], [], []>} : vector<8x32xf32>, vector<32x128xf32>, vector<8x128xf32> -> vector<8x128xf32>
    %c0_133 = arith.constant 0 : index
    %c0_134 = arith.constant 0 : index
    %197 = vector.load %arg23[%c0_133, %c0_134] : memref<1x128xf32, #tpu.memory_space<vmem>>, vector<1x128xf32>
    %198 = vector.broadcast %197 : vector<1x128xf32> to vector<8x128xf32>
    %199 = arith.addf %196, %198 : vector<8x128xf32>
    %200 = arith.index_cast %c1_i32 : i32 to index
    %c0_135 = arith.constant 0 : index
    %c0_136 = arith.constant 0 : index
    %201 = vector.load %arg24[%200, %c0_135, %c0_136] : memref<8x8x128xf32, #tpu.memory_space<vmem>>, vector<1x8x128xf32>
    %202 = vector.shape_cast %201 : vector<1x8x128xf32> to vector<8x128xf32>
    %203 = vector.shape_cast %199 : vector<8x128xf32> to vector<1x8x128xf32>
    tpu.vector_store %arg24[%200, %c0_135, %c0_136], %203 {strides = array<i32>} : memref<8x8x128xf32, #tpu.memory_space<vmem>>, vector<1x8x128xf32>,
    %c2_i32 = arith.constant 2 : i32
    %204 = arith.index_cast %c2_i32 : i32 to index
    %c0_137 = arith.constant 0 : index
    %c0_138 = arith.constant 0 : index
    %205 = vector.load %arg0[%204, %c0_137, %c0_138] : memref<8x8x32xf32, #tpu.memory_space<vmem>>, vector<1x8x32xf32>
    %206 = vector.shape_cast %205 : vector<1x8x32xf32> to vector<8x32xf32>
    %c0_139 = arith.constant 0 : index
    %c0_140 = arith.constant 0 : index
    %207 = vector.load %arg2[%c0_139, %c0_140] : memref<32x32xf32, #tpu.memory_space<vmem>>, vector<32x32xf32>
    %c0_141 = arith.constant 0 : index
    %c0_142 = arith.constant 0 : index
    %208 = vector.load %arg3[%c0_141, %c0_142] : memref<32x32xf32, #tpu.memory_space<vmem>>, vector<32x32xf32>
    %c0_143 = arith.constant 0 : index
    %c0_144 = arith.constant 0 : index
    %209 = vector.load %arg4[%c0_143, %c0_144] : memref<32x32xf32, #tpu.memory_space<vmem>>, vector<32x32xf32>
    %c0_145 = arith.constant 0 : index
    %c0_146 = arith.constant 0 : index
    %210 = vector.load %arg5[%c0_145, %c0_146] : memref<32x32xf32, #tpu.memory_space<vmem>>, vector<32x32xf32>
    %c0_147 = arith.constant 0 : index
    %c0_148 = arith.constant 0 : index
    %211 = vector.load %arg6[%c0_147, %c0_148] : memref<32x32xf32, #tpu.memory_space<vmem>>, vector<32x32xf32>
    %c0_149 = arith.constant 0 : index
    %c0_150 = arith.constant 0 : index
    %212 = vector.load %arg7[%c0_149, %c0_150] : memref<32x32xf32, #tpu.memory_space<vmem>>, vector<32x32xf32>
    %c0_151 = arith.constant 0 : index
    %c0_152 = arith.constant 0 : index
    %213 = vector.load %arg8[%c0_151, %c0_152] : memref<1x32xf32, #tpu.memory_space<vmem>>, vector<1x32xf32>
    %c0_153 = arith.constant 0 : index
    %c0_154 = arith.constant 0 : index
    %214 = vector.load %arg9[%c0_153, %c0_154] : memref<1x32xf32, #tpu.memory_space<vmem>>, vector<1x32xf32>
    %c0_155 = arith.constant 0 : index
    %c0_156 = arith.constant 0 : index
    %215 = vector.load %arg10[%c0_155, %c0_156] : memref<1x32xf32, #tpu.memory_space<vmem>>, vector<1x32xf32>
    %c0_157 = arith.constant 0 : index
    %c0_158 = arith.constant 0 : index
    %216 = vector.load %arg11[%c0_157, %c0_158] : memref<1x32xf32, #tpu.memory_space<vmem>>, vector<1x32xf32>
    %cst_159 = arith.constant dense<0.000000e+00> : vector<8x32xf32>
    %217 = tpu.matmul %206, %207, %cst_159 {dimension_numbers = #tpu.dot_dimension_numbers<[1], [0], [0], [1], [0, 0, 1, 1], [], []>} : vector<8x32xf32>, vector<32x32xf32>, vector<8x32xf32> -> vector<8x32xf32>
    %cst_160 = arith.constant dense<0.000000e+00> : vector<8x32xf32>
    %218 = tpu.matmul %150, %210, %cst_160 {dimension_numbers = #tpu.dot_dimension_numbers<[1], [0], [0], [1], [0, 0, 1, 1], [], []>} : vector<8x32xf32>, vector<32x32xf32>, vector<8x32xf32> -> vector<8x32xf32>
    %219 = arith.addf %217, %218 : vector<8x32xf32>
    %220 = vector.broadcast %213 : vector<1x32xf32> to vector<8x32xf32>
    %221 = arith.addf %219, %220 : vector<8x32xf32>
    %cst_161 = arith.constant dense<0.000000e+00> : vector<8x32xf32>
    %222 = tpu.matmul %206, %208, %cst_161 {dimension_numbers = #tpu.dot_dimension_numbers<[1], [0], [0], [1], [0, 0, 1, 1], [], []>} : vector<8x32xf32>, vector<32x32xf32>, vector<8x32xf32> -> vector<8x32xf32>
    %cst_162 = arith.constant dense<0.000000e+00> : vector<8x32xf32>
    %223 = tpu.matmul %150, %211, %cst_162 {dimension_numbers = #tpu.dot_dimension_numbers<[1], [0], [0], [1], [0, 0, 1, 1], [], []>} : vector<8x32xf32>, vector<32x32xf32>, vector<8x32xf32> -> vector<8x32xf32>
    %224 = arith.addf %222, %223 : vector<8x32xf32>
    %225 = vector.broadcast %214 : vector<1x32xf32> to vector<8x32xf32>
    %226 = arith.addf %224, %225 : vector<8x32xf32>
    %cst_163 = arith.constant dense<0.000000e+00> : vector<8x32xf32>
    %227 = tpu.matmul %206, %209, %cst_163 {dimension_numbers = #tpu.dot_dimension_numbers<[1], [0], [0], [1], [0, 0, 1, 1], [], []>} : vector<8x32xf32>, vector<32x32xf32>, vector<8x32xf32> -> vector<8x32xf32>
    %228 = vector.broadcast %215 : vector<1x32xf32> to vector<8x32xf32>
    %229 = arith.addf %227, %228 : vector<8x32xf32>
    %cst_164 = arith.constant dense<0.000000e+00> : vector<8x32xf32>
    %230 = tpu.matmul %150, %212, %cst_164 {dimension_numbers = #tpu.dot_dimension_numbers<[1], [0], [0], [1], [0, 0, 1, 1], [], []>} : vector<8x32xf32>, vector<32x32xf32>, vector<8x32xf32> -> vector<8x32xf32>
    %231 = vector.broadcast %216 : vector<1x32xf32> to vector<8x32xf32>
    %232 = arith.addf %230, %231 : vector<8x32xf32>
    %233 = arith.negf %221 : vector<8x32xf32>
    %234 = math.exp %233 : vector<8x32xf32>
    %cst_165 = arith.constant 1.000000e+00 : f32
    %235 = vector.broadcast %cst_165 : f32 to vector<8x32xf32>
    %236 = arith.addf %235, %234 : vector<8x32xf32>
    %237 = arith.divf %235, %236 : vector<8x32xf32>
    %238 = arith.negf %226 : vector<8x32xf32>
    %239 = math.exp %238 : vector<8x32xf32>
    %cst_166 = arith.constant 1.000000e+00 : f32
    %240 = vector.broadcast %cst_166 : f32 to vector<8x32xf32>
    %241 = arith.addf %240, %239 : vector<8x32xf32>
    %242 = arith.divf %240, %241 : vector<8x32xf32>
    %243 = arith.mulf %237, %232 : vector<8x32xf32>
    %244 = arith.addf %229, %243 : vector<8x32xf32>
    %245 = math.tanh %244 : vector<8x32xf32>
    %cst_167 = arith.constant 1.000000e+00 : f32
    %246 = vector.broadcast %cst_167 : f32 to vector<8x32xf32>
    %247 = arith.subf %246, %242 : vector<8x32xf32>
    %248 = arith.mulf %247, %245 : vector<8x32xf32>
    %249 = arith.mulf %242, %150 : vector<8x32xf32>
    %250 = arith.addf %248, %249 : vector<8x32xf32>
    %c0_168 = arith.constant 0 : index
    %c0_169 = arith.constant 0 : index
    %251 = vector.load %arg12[%c0_168, %c0_169] : memref<32x32xf32, #tpu.memory_space<vmem>>, vector<32x32xf32>
    %c0_170 = arith.constant 0 : index
    %c0_171 = arith.constant 0 : index
    %252 = vector.load %arg13[%c0_170, %c0_171] : memref<32x32xf32, #tpu.memory_space<vmem>>, vector<32x32xf32>
    %c0_172 = arith.constant 0 : index
    %c0_173 = arith.constant 0 : index
    %253 = vector.load %arg14[%c0_172, %c0_173] : memref<32x32xf32, #tpu.memory_space<vmem>>, vector<32x32xf32>
    %c0_174 = arith.constant 0 : index
    %c0_175 = arith.constant 0 : index
    %254 = vector.load %arg15[%c0_174, %c0_175] : memref<32x32xf32, #tpu.memory_space<vmem>>, vector<32x32xf32>
    %c0_176 = arith.constant 0 : index
    %c0_177 = arith.constant 0 : index
    %255 = vector.load %arg16[%c0_176, %c0_177] : memref<32x32xf32, #tpu.memory_space<vmem>>, vector<32x32xf32>
    %c0_178 = arith.constant 0 : index
    %c0_179 = arith.constant 0 : index
    %256 = vector.load %arg17[%c0_178, %c0_179] : memref<32x32xf32, #tpu.memory_space<vmem>>, vector<32x32xf32>
    %c0_180 = arith.constant 0 : index
    %c0_181 = arith.constant 0 : index
    %257 = vector.load %arg18[%c0_180, %c0_181] : memref<1x32xf32, #tpu.memory_space<vmem>>, vector<1x32xf32>
    %c0_182 = arith.constant 0 : index
    %c0_183 = arith.constant 0 : index
    %258 = vector.load %arg19[%c0_182, %c0_183] : memref<1x32xf32, #tpu.memory_space<vmem>>, vector<1x32xf32>
    %c0_184 = arith.constant 0 : index
    %c0_185 = arith.constant 0 : index
    %259 = vector.load %arg20[%c0_184, %c0_185] : memref<1x32xf32, #tpu.memory_space<vmem>>, vector<1x32xf32>
    %c0_186 = arith.constant 0 : index
    %c0_187 = arith.constant 0 : index
    %260 = vector.load %arg21[%c0_186, %c0_187] : memref<1x32xf32, #tpu.memory_space<vmem>>, vector<1x32xf32>
    %cst_188 = arith.constant dense<0.000000e+00> : vector<8x32xf32>
    %261 = tpu.matmul %250, %251, %cst_188 {dimension_numbers = #tpu.dot_dimension_numbers<[1], [0], [0], [1], [0, 0, 1, 1], [], []>} : vector<8x32xf32>, vector<32x32xf32>, vector<8x32xf32> -> vector<8x32xf32>
    %cst_189 = arith.constant dense<0.000000e+00> : vector<8x32xf32>
    %262 = tpu.matmul %194, %254, %cst_189 {dimension_numbers = #tpu.dot_dimension_numbers<[1], [0], [0], [1], [0, 0, 1, 1], [], []>} : vector<8x32xf32>, vector<32x32xf32>, vector<8x32xf32> -> vector<8x32xf32>
    %263 = arith.addf %261, %262 : vector<8x32xf32>
    %264 = vector.broadcast %257 : vector<1x32xf32> to vector<8x32xf32>
    %265 = arith.addf %263, %264 : vector<8x32xf32>
    %cst_190 = arith.constant dense<0.000000e+00> : vector<8x32xf32>
    %266 = tpu.matmul %250, %252, %cst_190 {dimension_numbers = #tpu.dot_dimension_numbers<[1], [0], [0], [1], [0, 0, 1, 1], [], []>} : vector<8x32xf32>, vector<32x32xf32>, vector<8x32xf32> -> vector<8x32xf32>
    %cst_191 = arith.constant dense<0.000000e+00> : vector<8x32xf32>
    %267 = tpu.matmul %194, %255, %cst_191 {dimension_numbers = #tpu.dot_dimension_numbers<[1], [0], [0], [1], [0, 0, 1, 1], [], []>} : vector<8x32xf32>, vector<32x32xf32>, vector<8x32xf32> -> vector<8x32xf32>
    %268 = arith.addf %266, %267 : vector<8x32xf32>
    %269 = vector.broadcast %258 : vector<1x32xf32> to vector<8x32xf32>
    %270 = arith.addf %268, %269 : vector<8x32xf32>
    %cst_192 = arith.constant dense<0.000000e+00> : vector<8x32xf32>
    %271 = tpu.matmul %250, %253, %cst_192 {dimension_numbers = #tpu.dot_dimension_numbers<[1], [0], [0], [1], [0, 0, 1, 1], [], []>} : vector<8x32xf32>, vector<32x32xf32>, vector<8x32xf32> -> vector<8x32xf32>
    %272 = vector.broadcast %259 : vector<1x32xf32> to vector<8x32xf32>
    %273 = arith.addf %271, %272 : vector<8x32xf32>
    %cst_193 = arith.constant dense<0.000000e+00> : vector<8x32xf32>
    %274 = tpu.matmul %194, %256, %cst_193 {dimension_numbers = #tpu.dot_dimension_numbers<[1], [0], [0], [1], [0, 0, 1, 1], [], []>} : vector<8x32xf32>, vector<32x32xf32>, vector<8x32xf32> -> vector<8x32xf32>
    %275 = vector.broadcast %260 : vector<1x32xf32> to vector<8x32xf32>
    %276 = arith.addf %274, %275 : vector<8x32xf32>
    %277 = arith.negf %265 : vector<8x32xf32>
    %278 = math.exp %277 : vector<8x32xf32>
    %cst_194 = arith.constant 1.000000e+00 : f32
    %279 = vector.broadcast %cst_194 : f32 to vector<8x32xf32>
    %280 = arith.addf %279, %278 : vector<8x32xf32>
    %281 = arith.divf %279, %280 : vector<8x32xf32>
    %282 = arith.negf %270 : vector<8x32xf32>
    %283 = math.exp %282 : vector<8x32xf32>
    %cst_195 = arith.constant 1.000000e+00 : f32
    %284 = vector.broadcast %cst_195 : f32 to vector<8x32xf32>
    %285 = arith.addf %284, %283 : vector<8x32xf32>
    %286 = arith.divf %284, %285 : vector<8x32xf32>
    %287 = arith.mulf %281, %276 : vector<8x32xf32>
    %288 = arith.addf %273, %287 : vector<8x32xf32>
    %289 = math.tanh %288 : vector<8x32xf32>
    %cst_196 = arith.constant 1.000000e+00 : f32
    %290 = vector.broadcast %cst_196 : f32 to vector<8x32xf32>
    %291 = arith.subf %290, %286 : vector<8x32xf32>
    %292 = arith.mulf %291, %289 : vector<8x32xf32>
    %293 = arith.mulf %286, %194 : vector<8x32xf32>
    %294 = arith.addf %292, %293 : vector<8x32xf32>
    %c0_197 = arith.constant 0 : index
    %c0_198 = arith.constant 0 : index
    %295 = vector.load %arg22[%c0_197, %c0_198] : memref<32x128xf32, #tpu.memory_space<vmem>>, vector<32x128xf32>
    %cst_199 = arith.constant dense<0.000000e+00> : vector<8x128xf32>
    %296 = tpu.matmul %294, %295, %cst_199 {dimension_numbers = #tpu.dot_dimension_numbers<[1], [0], [0], [1], [0, 0, 1, 1], [], []>} : vector<8x32xf32>, vector<32x128xf32>, vector<8x128xf32> -> vector<8x128xf32>
    %c0_200 = arith.constant 0 : index
    %c0_201 = arith.constant 0 : index
    %297 = vector.load %arg23[%c0_200, %c0_201] : memref<1x128xf32, #tpu.memory_space<vmem>>, vector<1x128xf32>
    %298 = vector.broadcast %297 : vector<1x128xf32> to vector<8x128xf32>
    %299 = arith.addf %296, %298 : vector<8x128xf32>
    %300 = arith.index_cast %c2_i32 : i32 to index
    %c0_202 = arith.constant 0 : index
    %c0_203 = arith.constant 0 : index
    %301 = vector.load %arg24[%300, %c0_202, %c0_203] : memref<8x8x128xf32, #tpu.memory_space<vmem>>, vector<1x8x128xf32>
    %302 = vector.shape_cast %301 : vector<1x8x128xf32> to vector<8x128xf32>
    %303 = vector.shape_cast %299 : vector<8x128xf32> to vector<1x8x128xf32>
    tpu.vector_store %arg24[%300, %c0_202, %c0_203], %303 {strides = array<i32>} : memref<8x8x128xf32, #tpu.memory_space<vmem>>, vector<1x8x128xf32>,
    %c3_i32 = arith.constant 3 : i32
    %304 = arith.index_cast %c3_i32 : i32 to index
    %c0_204 = arith.constant 0 : index
    %c0_205 = arith.constant 0 : index
    %305 = vector.load %arg0[%304, %c0_204, %c0_205] : memref<8x8x32xf32, #tpu.memory_space<vmem>>, vector<1x8x32xf32>
    %306 = vector.shape_cast %305 : vector<1x8x32xf32> to vector<8x32xf32>
    %c0_206 = arith.constant 0 : index
    %c0_207 = arith.constant 0 : index
    %307 = vector.load %arg2[%c0_206, %c0_207] : memref<32x32xf32, #tpu.memory_space<vmem>>, vector<32x32xf32>
    %c0_208 = arith.constant 0 : index
    %c0_209 = arith.constant 0 : index
    %308 = vector.load %arg3[%c0_208, %c0_209] : memref<32x32xf32, #tpu.memory_space<vmem>>, vector<32x32xf32>
    %c0_210 = arith.constant 0 : index
    %c0_211 = arith.constant 0 : index
    %309 = vector.load %arg4[%c0_210, %c0_211] : memref<32x32xf32, #tpu.memory_space<vmem>>, vector<32x32xf32>
    %c0_212 = arith.constant 0 : index
    %c0_213 = arith.constant 0 : index
    %310 = vector.load %arg5[%c0_212, %c0_213] : memref<32x32xf32, #tpu.memory_space<vmem>>, vector<32x32xf32>
    %c0_214 = arith.constant 0 : index
    %c0_215 = arith.constant 0 : index
    %311 = vector.load %arg6[%c0_214, %c0_215] : memref<32x32xf32, #tpu.memory_space<vmem>>, vector<32x32xf32>
    %c0_216 = arith.constant 0 : index
    %c0_217 = arith.constant 0 : index
    %312 = vector.load %arg7[%c0_216, %c0_217] : memref<32x32xf32, #tpu.memory_space<vmem>>, vector<32x32xf32>
    %c0_218 = arith.constant 0 : index
    %c0_219 = arith.constant 0 : index
    %313 = vector.load %arg8[%c0_218, %c0_219] : memref<1x32xf32, #tpu.memory_space<vmem>>, vector<1x32xf32>
    %c0_220 = arith.constant 0 : index
    %c0_221 = arith.constant 0 : index
    %314 = vector.load %arg9[%c0_220, %c0_221] : memref<1x32xf32, #tpu.memory_space<vmem>>, vector<1x32xf32>
    %c0_222 = arith.constant 0 : index
    %c0_223 = arith.constant 0 : index
    %315 = vector.load %arg10[%c0_222, %c0_223] : memref<1x32xf32, #tpu.memory_space<vmem>>, vector<1x32xf32>
    %c0_224 = arith.constant 0 : index
    %c0_225 = arith.constant 0 : index
    %316 = vector.load %arg11[%c0_224, %c0_225] : memref<1x32xf32, #tpu.memory_space<vmem>>, vector<1x32xf32>
    %cst_226 = arith.constant dense<0.000000e+00> : vector<8x32xf32>
    %317 = tpu.matmul %306, %307, %cst_226 {dimension_numbers = #tpu.dot_dimension_numbers<[1], [0], [0], [1], [0, 0, 1, 1], [], []>} : vector<8x32xf32>, vector<32x32xf32>, vector<8x32xf32> -> vector<8x32xf32>
    %cst_227 = arith.constant dense<0.000000e+00> : vector<8x32xf32>
    %318 = tpu.matmul %250, %310, %cst_227 {dimension_numbers = #tpu.dot_dimension_numbers<[1], [0], [0], [1], [0, 0, 1, 1], [], []>} : vector<8x32xf32>, vector<32x32xf32>, vector<8x32xf32> -> vector<8x32xf32>
    %319 = arith.addf %317, %318 : vector<8x32xf32>
    %320 = vector.broadcast %313 : vector<1x32xf32> to vector<8x32xf32>
    %321 = arith.addf %319, %320 : vector<8x32xf32>
    %cst_228 = arith.constant dense<0.000000e+00> : vector<8x32xf32>
    %322 = tpu.matmul %306, %308, %cst_228 {dimension_numbers = #tpu.dot_dimension_numbers<[1], [0], [0], [1], [0, 0, 1, 1], [], []>} : vector<8x32xf32>, vector<32x32xf32>, vector<8x32xf32> -> vector<8x32xf32>
    %cst_229 = arith.constant dense<0.000000e+00> : vector<8x32xf32>
    %323 = tpu.matmul %250, %311, %cst_229 {dimension_numbers = #tpu.dot_dimension_numbers<[1], [0], [0], [1], [0, 0, 1, 1], [], []>} : vector<8x32xf32>, vector<32x32xf32>, vector<8x32xf32> -> vector<8x32xf32>
    %324 = arith.addf %322, %323 : vector<8x32xf32>
    %325 = vector.broadcast %314 : vector<1x32xf32> to vector<8x32xf32>
    %326 = arith.addf %324, %325 : vector<8x32xf32>
    %cst_230 = arith.constant dense<0.000000e+00> : vector<8x32xf32>
    %327 = tpu.matmul %306, %309, %cst_230 {dimension_numbers = #tpu.dot_dimension_numbers<[1], [0], [0], [1], [0, 0, 1, 1], [], []>} : vector<8x32xf32>, vector<32x32xf32>, vector<8x32xf32> -> vector<8x32xf32>
    %328 = vector.broadcast %315 : vector<1x32xf32> to vector<8x32xf32>
    %329 = arith.addf %327, %328 : vector<8x32xf32>
    %cst_231 = arith.constant dense<0.000000e+00> : vector<8x32xf32>
    %330 = tpu.matmul %250, %312, %cst_231 {dimension_numbers = #tpu.dot_dimension_numbers<[1], [0], [0], [1], [0, 0, 1, 1], [], []>} : vector<8x32xf32>, vector<32x32xf32>, vector<8x32xf32> -> vector<8x32xf32>
    %331 = vector.broadcast %316 : vector<1x32xf32> to vector<8x32xf32>
    %332 = arith.addf %330, %331 : vector<8x32xf32>
    %333 = arith.negf %321 : vector<8x32xf32>
    %334 = math.exp %333 : vector<8x32xf32>
    %cst_232 = arith.constant 1.000000e+00 : f32
    %335 = vector.broadcast %cst_232 : f32 to vector<8x32xf32>
    %336 = arith.addf %335, %334 : vector<8x32xf32>
    %337 = arith.divf %335, %336 : vector<8x32xf32>
    %338 = arith.negf %326 : vector<8x32xf32>
    %339 = math.exp %338 : vector<8x32xf32>
    %cst_233 = arith.constant 1.000000e+00 : f32
    %340 = vector.broadcast %cst_233 : f32 to vector<8x32xf32>
    %341 = arith.addf %340, %339 : vector<8x32xf32>
    %342 = arith.divf %340, %341 : vector<8x32xf32>
    %343 = arith.mulf %337, %332 : vector<8x32xf32>
    %344 = arith.addf %329, %343 : vector<8x32xf32>
    %345 = math.tanh %344 : vector<8x32xf32>
    %cst_234 = arith.constant 1.000000e+00 : f32
    %346 = vector.broadcast %cst_234 : f32 to vector<8x32xf32>
    %347 = arith.subf %346, %342 : vector<8x32xf32>
    %348 = arith.mulf %347, %345 : vector<8x32xf32>
    %349 = arith.mulf %342, %250 : vector<8x32xf32>
    %350 = arith.addf %348, %349 : vector<8x32xf32>
    %c0_235 = arith.constant 0 : index
    %c0_236 = arith.constant 0 : index
    %351 = vector.load %arg12[%c0_235, %c0_236] : memref<32x32xf32, #tpu.memory_space<vmem>>, vector<32x32xf32>
    %c0_237 = arith.constant 0 : index
    %c0_238 = arith.constant 0 : index
    %352 = vector.load %arg13[%c0_237, %c0_238] : memref<32x32xf32, #tpu.memory_space<vmem>>, vector<32x32xf32>
    %c0_239 = arith.constant 0 : index
    %c0_240 = arith.constant 0 : index
    %353 = vector.load %arg14[%c0_239, %c0_240] : memref<32x32xf32, #tpu.memory_space<vmem>>, vector<32x32xf32>
    %c0_241 = arith.constant 0 : index
    %c0_242 = arith.constant 0 : index
    %354 = vector.load %arg15[%c0_241, %c0_242] : memref<32x32xf32, #tpu.memory_space<vmem>>, vector<32x32xf32>
    %c0_243 = arith.constant 0 : index
    %c0_244 = arith.constant 0 : index
    %355 = vector.load %arg16[%c0_243, %c0_244] : memref<32x32xf32, #tpu.memory_space<vmem>>, vector<32x32xf32>
    %c0_245 = arith.constant 0 : index
    %c0_246 = arith.constant 0 : index
    %356 = vector.load %arg17[%c0_245, %c0_246] : memref<32x32xf32, #tpu.memory_space<vmem>>, vector<32x32xf32>
    %c0_247 = arith.constant 0 : index
    %c0_248 = arith.constant 0 : index
    %357 = vector.load %arg18[%c0_247, %c0_248] : memref<1x32xf32, #tpu.memory_space<vmem>>, vector<1x32xf32>
    %c0_249 = arith.constant 0 : index
    %c0_250 = arith.constant 0 : index
    %358 = vector.load %arg19[%c0_249, %c0_250] : memref<1x32xf32, #tpu.memory_space<vmem>>, vector<1x32xf32>
    %c0_251 = arith.constant 0 : index
    %c0_252 = arith.constant 0 : index
    %359 = vector.load %arg20[%c0_251, %c0_252] : memref<1x32xf32, #tpu.memory_space<vmem>>, vector<1x32xf32>
    %c0_253 = arith.constant 0 : index
    %c0_254 = arith.constant 0 : index
    %360 = vector.load %arg21[%c0_253, %c0_254] : memref<1x32xf32, #tpu.memory_space<vmem>>, vector<1x32xf32>
    %cst_255 = arith.constant dense<0.000000e+00> : vector<8x32xf32>
    %361 = tpu.matmul %350, %351, %cst_255 {dimension_numbers = #tpu.dot_dimension_numbers<[1], [0], [0], [1], [0, 0, 1, 1], [], []>} : vector<8x32xf32>, vector<32x32xf32>, vector<8x32xf32> -> vector<8x32xf32>
    %cst_256 = arith.constant dense<0.000000e+00> : vector<8x32xf32>
    %362 = tpu.matmul %294, %354, %cst_256 {dimension_numbers = #tpu.dot_dimension_numbers<[1], [0], [0], [1], [0, 0, 1, 1], [], []>} : vector<8x32xf32>, vector<32x32xf32>, vector<8x32xf32> -> vector<8x32xf32>
    %363 = arith.addf %361, %362 : vector<8x32xf32>
    %364 = vector.broadcast %357 : vector<1x32xf32> to vector<8x32xf32>
    %365 = arith.addf %363, %364 : vector<8x32xf32>
    %cst_257 = arith.constant dense<0.000000e+00> : vector<8x32xf32>
    %366 = tpu.matmul %350, %352, %cst_257 {dimension_numbers = #tpu.dot_dimension_numbers<[1], [0], [0], [1], [0, 0, 1, 1], [], []>} : vector<8x32xf32>, vector<32x32xf32>, vector<8x32xf32> -> vector<8x32xf32>
    %cst_258 = arith.constant dense<0.000000e+00> : vector<8x32xf32>
    %367 = tpu.matmul %294, %355, %cst_258 {dimension_numbers = #tpu.dot_dimension_numbers<[1], [0], [0], [1], [0, 0, 1, 1], [], []>} : vector<8x32xf32>, vector<32x32xf32>, vector<8x32xf32> -> vector<8x32xf32>
    %368 = arith.addf %366, %367 : vector<8x32xf32>
    %369 = vector.broadcast %358 : vector<1x32xf32> to vector<8x32xf32>
    %370 = arith.addf %368, %369 : vector<8x32xf32>
    %cst_259 = arith.constant dense<0.000000e+00> : vector<8x32xf32>
    %371 = tpu.matmul %350, %353, %cst_259 {dimension_numbers = #tpu.dot_dimension_numbers<[1], [0], [0], [1], [0, 0, 1, 1], [], []>} : vector<8x32xf32>, vector<32x32xf32>, vector<8x32xf32> -> vector<8x32xf32>
    %372 = vector.broadcast %359 : vector<1x32xf32> to vector<8x32xf32>
    %373 = arith.addf %371, %372 : vector<8x32xf32>
    %cst_260 = arith.constant dense<0.000000e+00> : vector<8x32xf32>
    %374 = tpu.matmul %294, %356, %cst_260 {dimension_numbers = #tpu.dot_dimension_numbers<[1], [0], [0], [1], [0, 0, 1, 1], [], []>} : vector<8x32xf32>, vector<32x32xf32>, vector<8x32xf32> -> vector<8x32xf32>
    %375 = vector.broadcast %360 : vector<1x32xf32> to vector<8x32xf32>
    %376 = arith.addf %374, %375 : vector<8x32xf32>
    %377 = arith.negf %365 : vector<8x32xf32>
    %378 = math.exp %377 : vector<8x32xf32>
    %cst_261 = arith.constant 1.000000e+00 : f32
    %379 = vector.broadcast %cst_261 : f32 to vector<8x32xf32>
    %380 = arith.addf %379, %378 : vector<8x32xf32>
    %381 = arith.divf %379, %380 : vector<8x32xf32>
    %382 = arith.negf %370 : vector<8x32xf32>
    %383 = math.exp %382 : vector<8x32xf32>
    %cst_262 = arith.constant 1.000000e+00 : f32
    %384 = vector.broadcast %cst_262 : f32 to vector<8x32xf32>
    %385 = arith.addf %384, %383 : vector<8x32xf32>
    %386 = arith.divf %384, %385 : vector<8x32xf32>
    %387 = arith.mulf %381, %376 : vector<8x32xf32>
    %388 = arith.addf %373, %387 : vector<8x32xf32>
    %389 = math.tanh %388 : vector<8x32xf32>
    %cst_263 = arith.constant 1.000000e+00 : f32
    %390 = vector.broadcast %cst_263 : f32 to vector<8x32xf32>
    %391 = arith.subf %390, %386 : vector<8x32xf32>
    %392 = arith.mulf %391, %389 : vector<8x32xf32>
    %393 = arith.mulf %386, %294 : vector<8x32xf32>
    %394 = arith.addf %392, %393 : vector<8x32xf32>
    %c0_264 = arith.constant 0 : index
    %c0_265 = arith.constant 0 : index
    %395 = vector.load %arg22[%c0_264, %c0_265] : memref<32x128xf32, #tpu.memory_space<vmem>>, vector<32x128xf32>
    %cst_266 = arith.constant dense<0.000000e+00> : vector<8x128xf32>
    %396 = tpu.matmul %394, %395, %cst_266 {dimension_numbers = #tpu.dot_dimension_numbers<[1], [0], [0], [1], [0, 0, 1, 1], [], []>} : vector<8x32xf32>, vector<32x128xf32>, vector<8x128xf32> -> vector<8x128xf32>
    %c0_267 = arith.constant 0 : index
    %c0_268 = arith.constant 0 : index
    %397 = vector.load %arg23[%c0_267, %c0_268] : memref<1x128xf32, #tpu.memory_space<vmem>>, vector<1x128xf32>
    %398 = vector.broadcast %397 : vector<1x128xf32> to vector<8x128xf32>
    %399 = arith.addf %396, %398 : vector<8x128xf32>
    %400 = arith.index_cast %c3_i32 : i32 to index
    %c0_269 = arith.constant 0 : index
    %c0_270 = arith.constant 0 : index
    %401 = vector.load %arg24[%400, %c0_269, %c0_270] : memref<8x8x128xf32, #tpu.memory_space<vmem>>, vector<1x8x128xf32>
    %402 = vector.shape_cast %401 : vector<1x8x128xf32> to vector<8x128xf32>
    %403 = vector.shape_cast %399 : vector<8x128xf32> to vector<1x8x128xf32>
    tpu.vector_store %arg24[%400, %c0_269, %c0_270], %403 {strides = array<i32>} : memref<8x8x128xf32, #tpu.memory_space<vmem>>, vector<1x8x128xf32>,
    %c4_i32 = arith.constant 4 : i32
    %404 = arith.index_cast %c4_i32 : i32 to index
    %c0_271 = arith.constant 0 : index
    %c0_272 = arith.constant 0 : index
    %405 = vector.load %arg0[%404, %c0_271, %c0_272] : memref<8x8x32xf32, #tpu.memory_space<vmem>>, vector<1x8x32xf32>
    %406 = vector.shape_cast %405 : vector<1x8x32xf32> to vector<8x32xf32>
    %c0_273 = arith.constant 0 : index
    %c0_274 = arith.constant 0 : index
    %407 = vector.load %arg2[%c0_273, %c0_274] : memref<32x32xf32, #tpu.memory_space<vmem>>, vector<32x32xf32>
    %c0_275 = arith.constant 0 : index
    %c0_276 = arith.constant 0 : index
    %408 = vector.load %arg3[%c0_275, %c0_276] : memref<32x32xf32, #tpu.memory_space<vmem>>, vector<32x32xf32>
    %c0_277 = arith.constant 0 : index
    %c0_278 = arith.constant 0 : index
    %409 = vector.load %arg4[%c0_277, %c0_278] : memref<32x32xf32, #tpu.memory_space<vmem>>, vector<32x32xf32>
    %c0_279 = arith.constant 0 : index
    %c0_280 = arith.constant 0 : index
    %410 = vector.load %arg5[%c0_279, %c0_280] : memref<32x32xf32, #tpu.memory_space<vmem>>, vector<32x32xf32>
    %c0_281 = arith.constant 0 : index
    %c0_282 = arith.constant 0 : index
    %411 = vector.load %arg6[%c0_281, %c0_282] : memref<32x32xf32, #tpu.memory_space<vmem>>, vector<32x32xf32>
    %c0_283 = arith.constant 0 : index
    %c0_284 = arith.constant 0 : index
    %412 = vector.load %arg7[%c0_283, %c0_284] : memref<32x32xf32, #tpu.memory_space<vmem>>, vector<32x32xf32>
    %c0_285 = arith.constant 0 : index
    %c0_286 = arith.constant 0 : index
    %413 = vector.load %arg8[%c0_285, %c0_286] : memref<1x32xf32, #tpu.memory_space<vmem>>, vector<1x32xf32>
    %c0_287 = arith.constant 0 : index
    %c0_288 = arith.constant 0 : index
    %414 = vector.load %arg9[%c0_287, %c0_288] : memref<1x32xf32, #tpu.memory_space<vmem>>, vector<1x32xf32>
    %c0_289 = arith.constant 0 : index
    %c0_290 = arith.constant 0 : index
    %415 = vector.load %arg10[%c0_289, %c0_290] : memref<1x32xf32, #tpu.memory_space<vmem>>, vector<1x32xf32>
    %c0_291 = arith.constant 0 : index
    %c0_292 = arith.constant 0 : index
    %416 = vector.load %arg11[%c0_291, %c0_292] : memref<1x32xf32, #tpu.memory_space<vmem>>, vector<1x32xf32>
    %cst_293 = arith.constant dense<0.000000e+00> : vector<8x32xf32>
    %417 = tpu.matmul %406, %407, %cst_293 {dimension_numbers = #tpu.dot_dimension_numbers<[1], [0], [0], [1], [0, 0, 1, 1], [], []>} : vector<8x32xf32>, vector<32x32xf32>, vector<8x32xf32> -> vector<8x32xf32>
    %cst_294 = arith.constant dense<0.000000e+00> : vector<8x32xf32>
    %418 = tpu.matmul %350, %410, %cst_294 {dimension_numbers = #tpu.dot_dimension_numbers<[1], [0], [0], [1], [0, 0, 1, 1], [], []>} : vector<8x32xf32>, vector<32x32xf32>, vector<8x32xf32> -> vector<8x32xf32>
    %419 = arith.addf %417, %418 : vector<8x32xf32>
    %420 = vector.broadcast %413 : vector<1x32xf32> to vector<8x32xf32>
    %421 = arith.addf %419, %420 : vector<8x32xf32>
    %cst_295 = arith.constant dense<0.000000e+00> : vector<8x32xf32>
    %422 = tpu.matmul %406, %408, %cst_295 {dimension_numbers = #tpu.dot_dimension_numbers<[1], [0], [0], [1], [0, 0, 1, 1], [], []>} : vector<8x32xf32>, vector<32x32xf32>, vector<8x32xf32> -> vector<8x32xf32>
    %cst_296 = arith.constant dense<0.000000e+00> : vector<8x32xf32>
    %423 = tpu.matmul %350, %411, %cst_296 {dimension_numbers = #tpu.dot_dimension_numbers<[1], [0], [0], [1], [0, 0, 1, 1], [], []>} : vector<8x32xf32>, vector<32x32xf32>, vector<8x32xf32> -> vector<8x32xf32>
    %424 = arith.addf %422, %423 : vector<8x32xf32>
    %425 = vector.broadcast %414 : vector<1x32xf32> to vector<8x32xf32>
    %426 = arith.addf %424, %425 : vector<8x32xf32>
    %cst_297 = arith.constant dense<0.000000e+00> : vector<8x32xf32>
    %427 = tpu.matmul %406, %409, %cst_297 {dimension_numbers = #tpu.dot_dimension_numbers<[1], [0], [0], [1], [0, 0, 1, 1], [], []>} : vector<8x32xf32>, vector<32x32xf32>, vector<8x32xf32> -> vector<8x32xf32>
    %428 = vector.broadcast %415 : vector<1x32xf32> to vector<8x32xf32>
    %429 = arith.addf %427, %428 : vector<8x32xf32>
    %cst_298 = arith.constant dense<0.000000e+00> : vector<8x32xf32>
    %430 = tpu.matmul %350, %412, %cst_298 {dimension_numbers = #tpu.dot_dimension_numbers<[1], [0], [0], [1], [0, 0, 1, 1], [], []>} : vector<8x32xf32>, vector<32x32xf32>, vector<8x32xf32> -> vector<8x32xf32>
    %431 = vector.broadcast %416 : vector<1x32xf32> to vector<8x32xf32>
    %432 = arith.addf %430, %431 : vector<8x32xf32>
    %433 = arith.negf %421 : vector<8x32xf32>
    %434 = math.exp %433 : vector<8x32xf32>
    %cst_299 = arith.constant 1.000000e+00 : f32
    %435 = vector.broadcast %cst_299 : f32 to vector<8x32xf32>
    %436 = arith.addf %435, %434 : vector<8x32xf32>
    %437 = arith.divf %435, %436 : vector<8x32xf32>
    %438 = arith.negf %426 : vector<8x32xf32>
    %439 = math.exp %438 : vector<8x32xf32>
    %cst_300 = arith.constant 1.000000e+00 : f32
    %440 = vector.broadcast %cst_300 : f32 to vector<8x32xf32>
    %441 = arith.addf %440, %439 : vector<8x32xf32>
    %442 = arith.divf %440, %441 : vector<8x32xf32>
    %443 = arith.mulf %437, %432 : vector<8x32xf32>
    %444 = arith.addf %429, %443 : vector<8x32xf32>
    %445 = math.tanh %444 : vector<8x32xf32>
    %cst_301 = arith.constant 1.000000e+00 : f32
    %446 = vector.broadcast %cst_301 : f32 to vector<8x32xf32>
    %447 = arith.subf %446, %442 : vector<8x32xf32>
    %448 = arith.mulf %447, %445 : vector<8x32xf32>
    %449 = arith.mulf %442, %350 : vector<8x32xf32>
    %450 = arith.addf %448, %449 : vector<8x32xf32>
    %c0_302 = arith.constant 0 : index
    %c0_303 = arith.constant 0 : index
    %451 = vector.load %arg12[%c0_302, %c0_303] : memref<32x32xf32, #tpu.memory_space<vmem>>, vector<32x32xf32>
    %c0_304 = arith.constant 0 : index
    %c0_305 = arith.constant 0 : index
    %452 = vector.load %arg13[%c0_304, %c0_305] : memref<32x32xf32, #tpu.memory_space<vmem>>, vector<32x32xf32>
    %c0_306 = arith.constant 0 : index
    %c0_307 = arith.constant 0 : index
    %453 = vector.load %arg14[%c0_306, %c0_307] : memref<32x32xf32, #tpu.memory_space<vmem>>, vector<32x32xf32>
    %c0_308 = arith.constant 0 : index
    %c0_309 = arith.constant 0 : index
    %454 = vector.load %arg15[%c0_308, %c0_309] : memref<32x32xf32, #tpu.memory_space<vmem>>, vector<32x32xf32>
    %c0_310 = arith.constant 0 : index
    %c0_311 = arith.constant 0 : index
    %455 = vector.load %arg16[%c0_310, %c0_311] : memref<32x32xf32, #tpu.memory_space<vmem>>, vector<32x32xf32>
    %c0_312 = arith.constant 0 : index
    %c0_313 = arith.constant 0 : index
    %456 = vector.load %arg17[%c0_312, %c0_313] : memref<32x32xf32, #tpu.memory_space<vmem>>, vector<32x32xf32>
    %c0_314 = arith.constant 0 : index
    %c0_315 = arith.constant 0 : index
    %457 = vector.load %arg18[%c0_314, %c0_315] : memref<1x32xf32, #tpu.memory_space<vmem>>, vector<1x32xf32>
    %c0_316 = arith.constant 0 : index
    %c0_317 = arith.constant 0 : index
    %458 = vector.load %arg19[%c0_316, %c0_317] : memref<1x32xf32, #tpu.memory_space<vmem>>, vector<1x32xf32>
    %c0_318 = arith.constant 0 : index
    %c0_319 = arith.constant 0 : index
    %459 = vector.load %arg20[%c0_318, %c0_319] : memref<1x32xf32, #tpu.memory_space<vmem>>, vector<1x32xf32>
    %c0_320 = arith.constant 0 : index
    %c0_321 = arith.constant 0 : index
    %460 = vector.load %arg21[%c0_320, %c0_321] : memref<1x32xf32, #tpu.memory_space<vmem>>, vector<1x32xf32>
    %cst_322 = arith.constant dense<0.000000e+00> : vector<8x32xf32>
    %461 = tpu.matmul %450, %451, %cst_322 {dimension_numbers = #tpu.dot_dimension_numbers<[1], [0], [0], [1], [0, 0, 1, 1], [], []>} : vector<8x32xf32>, vector<32x32xf32>, vector<8x32xf32> -> vector<8x32xf32>
    %cst_323 = arith.constant dense<0.000000e+00> : vector<8x32xf32>
    %462 = tpu.matmul %394, %454, %cst_323 {dimension_numbers = #tpu.dot_dimension_numbers<[1], [0], [0], [1], [0, 0, 1, 1], [], []>} : vector<8x32xf32>, vector<32x32xf32>, vector<8x32xf32> -> vector<8x32xf32>
    %463 = arith.addf %461, %462 : vector<8x32xf32>
    %464 = vector.broadcast %457 : vector<1x32xf32> to vector<8x32xf32>
    %465 = arith.addf %463, %464 : vector<8x32xf32>
    %cst_324 = arith.constant dense<0.000000e+00> : vector<8x32xf32>
    %466 = tpu.matmul %450, %452, %cst_324 {dimension_numbers = #tpu.dot_dimension_numbers<[1], [0], [0], [1], [0, 0, 1, 1], [], []>} : vector<8x32xf32>, vector<32x32xf32>, vector<8x32xf32> -> vector<8x32xf32>
    %cst_325 = arith.constant dense<0.000000e+00> : vector<8x32xf32>
    %467 = tpu.matmul %394, %455, %cst_325 {dimension_numbers = #tpu.dot_dimension_numbers<[1], [0], [0], [1], [0, 0, 1, 1], [], []>} : vector<8x32xf32>, vector<32x32xf32>, vector<8x32xf32> -> vector<8x32xf32>
    %468 = arith.addf %466, %467 : vector<8x32xf32>
    %469 = vector.broadcast %458 : vector<1x32xf32> to vector<8x32xf32>
    %470 = arith.addf %468, %469 : vector<8x32xf32>
    %cst_326 = arith.constant dense<0.000000e+00> : vector<8x32xf32>
    %471 = tpu.matmul %450, %453, %cst_326 {dimension_numbers = #tpu.dot_dimension_numbers<[1], [0], [0], [1], [0, 0, 1, 1], [], []>} : vector<8x32xf32>, vector<32x32xf32>, vector<8x32xf32> -> vector<8x32xf32>
    %472 = vector.broadcast %459 : vector<1x32xf32> to vector<8x32xf32>
    %473 = arith.addf %471, %472 : vector<8x32xf32>
    %cst_327 = arith.constant dense<0.000000e+00> : vector<8x32xf32>
    %474 = tpu.matmul %394, %456, %cst_327 {dimension_numbers = #tpu.dot_dimension_numbers<[1], [0], [0], [1], [0, 0, 1, 1], [], []>} : vector<8x32xf32>, vector<32x32xf32>, vector<8x32xf32> -> vector<8x32xf32>
    %475 = vector.broadcast %460 : vector<1x32xf32> to vector<8x32xf32>
    %476 = arith.addf %474, %475 : vector<8x32xf32>
    %477 = arith.negf %465 : vector<8x32xf32>
    %478 = math.exp %477 : vector<8x32xf32>
    %cst_328 = arith.constant 1.000000e+00 : f32
    %479 = vector.broadcast %cst_328 : f32 to vector<8x32xf32>
    %480 = arith.addf %479, %478 : vector<8x32xf32>
    %481 = arith.divf %479, %480 : vector<8x32xf32>
    %482 = arith.negf %470 : vector<8x32xf32>
    %483 = math.exp %482 : vector<8x32xf32>
    %cst_329 = arith.constant 1.000000e+00 : f32
    %484 = vector.broadcast %cst_329 : f32 to vector<8x32xf32>
    %485 = arith.addf %484, %483 : vector<8x32xf32>
    %486 = arith.divf %484, %485 : vector<8x32xf32>
    %487 = arith.mulf %481, %476 : vector<8x32xf32>
    %488 = arith.addf %473, %487 : vector<8x32xf32>
    %489 = math.tanh %488 : vector<8x32xf32>
    %cst_330 = arith.constant 1.000000e+00 : f32
    %490 = vector.broadcast %cst_330 : f32 to vector<8x32xf32>
    %491 = arith.subf %490, %486 : vector<8x32xf32>
    %492 = arith.mulf %491, %489 : vector<8x32xf32>
    %493 = arith.mulf %486, %394 : vector<8x32xf32>
    %494 = arith.addf %492, %493 : vector<8x32xf32>
    %c0_331 = arith.constant 0 : index
    %c0_332 = arith.constant 0 : index
    %495 = vector.load %arg22[%c0_331, %c0_332] : memref<32x128xf32, #tpu.memory_space<vmem>>, vector<32x128xf32>
    %cst_333 = arith.constant dense<0.000000e+00> : vector<8x128xf32>
    %496 = tpu.matmul %494, %495, %cst_333 {dimension_numbers = #tpu.dot_dimension_numbers<[1], [0], [0], [1], [0, 0, 1, 1], [], []>} : vector<8x32xf32>, vector<32x128xf32>, vector<8x128xf32> -> vector<8x128xf32>
    %c0_334 = arith.constant 0 : index
    %c0_335 = arith.constant 0 : index
    %497 = vector.load %arg23[%c0_334, %c0_335] : memref<1x128xf32, #tpu.memory_space<vmem>>, vector<1x128xf32>
    %498 = vector.broadcast %497 : vector<1x128xf32> to vector<8x128xf32>
    %499 = arith.addf %496, %498 : vector<8x128xf32>
    %500 = arith.index_cast %c4_i32 : i32 to index
    %c0_336 = arith.constant 0 : index
    %c0_337 = arith.constant 0 : index
    %501 = vector.load %arg24[%500, %c0_336, %c0_337] : memref<8x8x128xf32, #tpu.memory_space<vmem>>, vector<1x8x128xf32>
    %502 = vector.shape_cast %501 : vector<1x8x128xf32> to vector<8x128xf32>
    %503 = vector.shape_cast %499 : vector<8x128xf32> to vector<1x8x128xf32>
    tpu.vector_store %arg24[%500, %c0_336, %c0_337], %503 {strides = array<i32>} : memref<8x8x128xf32, #tpu.memory_space<vmem>>, vector<1x8x128xf32>,
    %c5_i32 = arith.constant 5 : i32
    %504 = arith.index_cast %c5_i32 : i32 to index
    %c0_338 = arith.constant 0 : index
    %c0_339 = arith.constant 0 : index
    %505 = vector.load %arg0[%504, %c0_338, %c0_339] : memref<8x8x32xf32, #tpu.memory_space<vmem>>, vector<1x8x32xf32>
    %506 = vector.shape_cast %505 : vector<1x8x32xf32> to vector<8x32xf32>
    %c0_340 = arith.constant 0 : index
    %c0_341 = arith.constant 0 : index
    %507 = vector.load %arg2[%c0_340, %c0_341] : memref<32x32xf32, #tpu.memory_space<vmem>>, vector<32x32xf32>
    %c0_342 = arith.constant 0 : index
    %c0_343 = arith.constant 0 : index
    %508 = vector.load %arg3[%c0_342, %c0_343] : memref<32x32xf32, #tpu.memory_space<vmem>>, vector<32x32xf32>
    %c0_344 = arith.constant 0 : index
    %c0_345 = arith.constant 0 : index
    %509 = vector.load %arg4[%c0_344, %c0_345] : memref<32x32xf32, #tpu.memory_space<vmem>>, vector<32x32xf32>
    %c0_346 = arith.constant 0 : index
    %c0_347 = arith.constant 0 : index
    %510 = vector.load %arg5[%c0_346, %c0_347] : memref<32x32xf32, #tpu.memory_space<vmem>>, vector<32x32xf32>
    %c0_348 = arith.constant 0 : index
    %c0_349 = arith.constant 0 : index
    %511 = vector.load %arg6[%c0_348, %c0_349] : memref<32x32xf32, #tpu.memory_space<vmem>>, vector<32x32xf32>
    %c0_350 = arith.constant 0 : index
    %c0_351 = arith.constant 0 : index
    %512 = vector.load %arg7[%c0_350, %c0_351] : memref<32x32xf32, #tpu.memory_space<vmem>>, vector<32x32xf32>
    %c0_352 = arith.constant 0 : index
    %c0_353 = arith.constant 0 : index
    %513 = vector.load %arg8[%c0_352, %c0_353] : memref<1x32xf32, #tpu.memory_space<vmem>>, vector<1x32xf32>
    %c0_354 = arith.constant 0 : index
    %c0_355 = arith.constant 0 : index
    %514 = vector.load %arg9[%c0_354, %c0_355] : memref<1x32xf32, #tpu.memory_space<vmem>>, vector<1x32xf32>
    %c0_356 = arith.constant 0 : index
    %c0_357 = arith.constant 0 : index
    %515 = vector.load %arg10[%c0_356, %c0_357] : memref<1x32xf32, #tpu.memory_space<vmem>>, vector<1x32xf32>
    %c0_358 = arith.constant 0 : index
    %c0_359 = arith.constant 0 : index
    %516 = vector.load %arg11[%c0_358, %c0_359] : memref<1x32xf32, #tpu.memory_space<vmem>>, vector<1x32xf32>
    %cst_360 = arith.constant dense<0.000000e+00> : vector<8x32xf32>
    %517 = tpu.matmul %506, %507, %cst_360 {dimension_numbers = #tpu.dot_dimension_numbers<[1], [0], [0], [1], [0, 0, 1, 1], [], []>} : vector<8x32xf32>, vector<32x32xf32>, vector<8x32xf32> -> vector<8x32xf32>
    %cst_361 = arith.constant dense<0.000000e+00> : vector<8x32xf32>
    %518 = tpu.matmul %450, %510, %cst_361 {dimension_numbers = #tpu.dot_dimension_numbers<[1], [0], [0], [1], [0, 0, 1, 1], [], []>} : vector<8x32xf32>, vector<32x32xf32>, vector<8x32xf32> -> vector<8x32xf32>
    %519 = arith.addf %517, %518 : vector<8x32xf32>
    %520 = vector.broadcast %513 : vector<1x32xf32> to vector<8x32xf32>
    %521 = arith.addf %519, %520 : vector<8x32xf32>
    %cst_362 = arith.constant dense<0.000000e+00> : vector<8x32xf32>
    %522 = tpu.matmul %506, %508, %cst_362 {dimension_numbers = #tpu.dot_dimension_numbers<[1], [0], [0], [1], [0, 0, 1, 1], [], []>} : vector<8x32xf32>, vector<32x32xf32>, vector<8x32xf32> -> vector<8x32xf32>
    %cst_363 = arith.constant dense<0.000000e+00> : vector<8x32xf32>
    %523 = tpu.matmul %450, %511, %cst_363 {dimension_numbers = #tpu.dot_dimension_numbers<[1], [0], [0], [1], [0, 0, 1, 1], [], []>} : vector<8x32xf32>, vector<32x32xf32>, vector<8x32xf32> -> vector<8x32xf32>
    %524 = arith.addf %522, %523 : vector<8x32xf32>
    %525 = vector.broadcast %514 : vector<1x32xf32> to vector<8x32xf32>
    %526 = arith.addf %524, %525 : vector<8x32xf32>
    %cst_364 = arith.constant dense<0.000000e+00> : vector<8x32xf32>
    %527 = tpu.matmul %506, %509, %cst_364 {dimension_numbers = #tpu.dot_dimension_numbers<[1], [0], [0], [1], [0, 0, 1, 1], [], []>} : vector<8x32xf32>, vector<32x32xf32>, vector<8x32xf32> -> vector<8x32xf32>
    %528 = vector.broadcast %515 : vector<1x32xf32> to vector<8x32xf32>
    %529 = arith.addf %527, %528 : vector<8x32xf32>
    %cst_365 = arith.constant dense<0.000000e+00> : vector<8x32xf32>
    %530 = tpu.matmul %450, %512, %cst_365 {dimension_numbers = #tpu.dot_dimension_numbers<[1], [0], [0], [1], [0, 0, 1, 1], [], []>} : vector<8x32xf32>, vector<32x32xf32>, vector<8x32xf32> -> vector<8x32xf32>
    %531 = vector.broadcast %516 : vector<1x32xf32> to vector<8x32xf32>
    %532 = arith.addf %530, %531 : vector<8x32xf32>
    %533 = arith.negf %521 : vector<8x32xf32>
    %534 = math.exp %533 : vector<8x32xf32>
    %cst_366 = arith.constant 1.000000e+00 : f32
    %535 = vector.broadcast %cst_366 : f32 to vector<8x32xf32>
    %536 = arith.addf %535, %534 : vector<8x32xf32>
    %537 = arith.divf %535, %536 : vector<8x32xf32>
    %538 = arith.negf %526 : vector<8x32xf32>
    %539 = math.exp %538 : vector<8x32xf32>
    %cst_367 = arith.constant 1.000000e+00 : f32
    %540 = vector.broadcast %cst_367 : f32 to vector<8x32xf32>
    %541 = arith.addf %540, %539 : vector<8x32xf32>
    %542 = arith.divf %540, %541 : vector<8x32xf32>
    %543 = arith.mulf %537, %532 : vector<8x32xf32>
    %544 = arith.addf %529, %543 : vector<8x32xf32>
    %545 = math.tanh %544 : vector<8x32xf32>
    %cst_368 = arith.constant 1.000000e+00 : f32
    %546 = vector.broadcast %cst_368 : f32 to vector<8x32xf32>
    %547 = arith.subf %546, %542 : vector<8x32xf32>
    %548 = arith.mulf %547, %545 : vector<8x32xf32>
    %549 = arith.mulf %542, %450 : vector<8x32xf32>
    %550 = arith.addf %548, %549 : vector<8x32xf32>
    %c0_369 = arith.constant 0 : index
    %c0_370 = arith.constant 0 : index
    %551 = vector.load %arg12[%c0_369, %c0_370] : memref<32x32xf32, #tpu.memory_space<vmem>>, vector<32x32xf32>
    %c0_371 = arith.constant 0 : index
    %c0_372 = arith.constant 0 : index
    %552 = vector.load %arg13[%c0_371, %c0_372] : memref<32x32xf32, #tpu.memory_space<vmem>>, vector<32x32xf32>
    %c0_373 = arith.constant 0 : index
    %c0_374 = arith.constant 0 : index
    %553 = vector.load %arg14[%c0_373, %c0_374] : memref<32x32xf32, #tpu.memory_space<vmem>>, vector<32x32xf32>
    %c0_375 = arith.constant 0 : index
    %c0_376 = arith.constant 0 : index
    %554 = vector.load %arg15[%c0_375, %c0_376] : memref<32x32xf32, #tpu.memory_space<vmem>>, vector<32x32xf32>
    %c0_377 = arith.constant 0 : index
    %c0_378 = arith.constant 0 : index
    %555 = vector.load %arg16[%c0_377, %c0_378] : memref<32x32xf32, #tpu.memory_space<vmem>>, vector<32x32xf32>
    %c0_379 = arith.constant 0 : index
    %c0_380 = arith.constant 0 : index
    %556 = vector.load %arg17[%c0_379, %c0_380] : memref<32x32xf32, #tpu.memory_space<vmem>>, vector<32x32xf32>
    %c0_381 = arith.constant 0 : index
    %c0_382 = arith.constant 0 : index
    %557 = vector.load %arg18[%c0_381, %c0_382] : memref<1x32xf32, #tpu.memory_space<vmem>>, vector<1x32xf32>
    %c0_383 = arith.constant 0 : index
    %c0_384 = arith.constant 0 : index
    %558 = vector.load %arg19[%c0_383, %c0_384] : memref<1x32xf32, #tpu.memory_space<vmem>>, vector<1x32xf32>
    %c0_385 = arith.constant 0 : index
    %c0_386 = arith.constant 0 : index
    %559 = vector.load %arg20[%c0_385, %c0_386] : memref<1x32xf32, #tpu.memory_space<vmem>>, vector<1x32xf32>
    %c0_387 = arith.constant 0 : index
    %c0_388 = arith.constant 0 : index
    %560 = vector.load %arg21[%c0_387, %c0_388] : memref<1x32xf32, #tpu.memory_space<vmem>>, vector<1x32xf32>
    %cst_389 = arith.constant dense<0.000000e+00> : vector<8x32xf32>
    %561 = tpu.matmul %550, %551, %cst_389 {dimension_numbers = #tpu.dot_dimension_numbers<[1], [0], [0], [1], [0, 0, 1, 1], [], []>} : vector<8x32xf32>, vector<32x32xf32>, vector<8x32xf32> -> vector<8x32xf32>
    %cst_390 = arith.constant dense<0.000000e+00> : vector<8x32xf32>
    %562 = tpu.matmul %494, %554, %cst_390 {dimension_numbers = #tpu.dot_dimension_numbers<[1], [0], [0], [1], [0, 0, 1, 1], [], []>} : vector<8x32xf32>, vector<32x32xf32>, vector<8x32xf32> -> vector<8x32xf32>
    %563 = arith.addf %561, %562 : vector<8x32xf32>
    %564 = vector.broadcast %557 : vector<1x32xf32> to vector<8x32xf32>
    %565 = arith.addf %563, %564 : vector<8x32xf32>
    %cst_391 = arith.constant dense<0.000000e+00> : vector<8x32xf32>
    %566 = tpu.matmul %550, %552, %cst_391 {dimension_numbers = #tpu.dot_dimension_numbers<[1], [0], [0], [1], [0, 0, 1, 1], [], []>} : vector<8x32xf32>, vector<32x32xf32>, vector<8x32xf32> -> vector<8x32xf32>
    %cst_392 = arith.constant dense<0.000000e+00> : vector<8x32xf32>
    %567 = tpu.matmul %494, %555, %cst_392 {dimension_numbers = #tpu.dot_dimension_numbers<[1], [0], [0], [1], [0, 0, 1, 1], [], []>} : vector<8x32xf32>, vector<32x32xf32>, vector<8x32xf32> -> vector<8x32xf32>
    %568 = arith.addf %566, %567 : vector<8x32xf32>
    %569 = vector.broadcast %558 : vector<1x32xf32> to vector<8x32xf32>
    %570 = arith.addf %568, %569 : vector<8x32xf32>
    %cst_393 = arith.constant dense<0.000000e+00> : vector<8x32xf32>
    %571 = tpu.matmul %550, %553, %cst_393 {dimension_numbers = #tpu.dot_dimension_numbers<[1], [0], [0], [1], [0, 0, 1, 1], [], []>} : vector<8x32xf32>, vector<32x32xf32>, vector<8x32xf32> -> vector<8x32xf32>
    %572 = vector.broadcast %559 : vector<1x32xf32> to vector<8x32xf32>
    %573 = arith.addf %571, %572 : vector<8x32xf32>
    %cst_394 = arith.constant dense<0.000000e+00> : vector<8x32xf32>
    %574 = tpu.matmul %494, %556, %cst_394 {dimension_numbers = #tpu.dot_dimension_numbers<[1], [0], [0], [1], [0, 0, 1, 1], [], []>} : vector<8x32xf32>, vector<32x32xf32>, vector<8x32xf32> -> vector<8x32xf32>
    %575 = vector.broadcast %560 : vector<1x32xf32> to vector<8x32xf32>
    %576 = arith.addf %574, %575 : vector<8x32xf32>
    %577 = arith.negf %565 : vector<8x32xf32>
    %578 = math.exp %577 : vector<8x32xf32>
    %cst_395 = arith.constant 1.000000e+00 : f32
    %579 = vector.broadcast %cst_395 : f32 to vector<8x32xf32>
    %580 = arith.addf %579, %578 : vector<8x32xf32>
    %581 = arith.divf %579, %580 : vector<8x32xf32>
    %582 = arith.negf %570 : vector<8x32xf32>
    %583 = math.exp %582 : vector<8x32xf32>
    %cst_396 = arith.constant 1.000000e+00 : f32
    %584 = vector.broadcast %cst_396 : f32 to vector<8x32xf32>
    %585 = arith.addf %584, %583 : vector<8x32xf32>
    %586 = arith.divf %584, %585 : vector<8x32xf32>
    %587 = arith.mulf %581, %576 : vector<8x32xf32>
    %588 = arith.addf %573, %587 : vector<8x32xf32>
    %589 = math.tanh %588 : vector<8x32xf32>
    %cst_397 = arith.constant 1.000000e+00 : f32
    %590 = vector.broadcast %cst_397 : f32 to vector<8x32xf32>
    %591 = arith.subf %590, %586 : vector<8x32xf32>
    %592 = arith.mulf %591, %589 : vector<8x32xf32>
    %593 = arith.mulf %586, %494 : vector<8x32xf32>
    %594 = arith.addf %592, %593 : vector<8x32xf32>
    %c0_398 = arith.constant 0 : index
    %c0_399 = arith.constant 0 : index
    %595 = vector.load %arg22[%c0_398, %c0_399] : memref<32x128xf32, #tpu.memory_space<vmem>>, vector<32x128xf32>
    %cst_400 = arith.constant dense<0.000000e+00> : vector<8x128xf32>
    %596 = tpu.matmul %594, %595, %cst_400 {dimension_numbers = #tpu.dot_dimension_numbers<[1], [0], [0], [1], [0, 0, 1, 1], [], []>} : vector<8x32xf32>, vector<32x128xf32>, vector<8x128xf32> -> vector<8x128xf32>
    %c0_401 = arith.constant 0 : index
    %c0_402 = arith.constant 0 : index
    %597 = vector.load %arg23[%c0_401, %c0_402] : memref<1x128xf32, #tpu.memory_space<vmem>>, vector<1x128xf32>
    %598 = vector.broadcast %597 : vector<1x128xf32> to vector<8x128xf32>
    %599 = arith.addf %596, %598 : vector<8x128xf32>
    %600 = arith.index_cast %c5_i32 : i32 to index
    %c0_403 = arith.constant 0 : index
    %c0_404 = arith.constant 0 : index
    %601 = vector.load %arg24[%600, %c0_403, %c0_404] : memref<8x8x128xf32, #tpu.memory_space<vmem>>, vector<1x8x128xf32>
    %602 = vector.shape_cast %601 : vector<1x8x128xf32> to vector<8x128xf32>
    %603 = vector.shape_cast %599 : vector<8x128xf32> to vector<1x8x128xf32>
    tpu.vector_store %arg24[%600, %c0_403, %c0_404], %603 {strides = array<i32>} : memref<8x8x128xf32, #tpu.memory_space<vmem>>, vector<1x8x128xf32>,
    %c6_i32 = arith.constant 6 : i32
    %604 = arith.index_cast %c6_i32 : i32 to index
    %c0_405 = arith.constant 0 : index
    %c0_406 = arith.constant 0 : index
    %605 = vector.load %arg0[%604, %c0_405, %c0_406] : memref<8x8x32xf32, #tpu.memory_space<vmem>>, vector<1x8x32xf32>
    %606 = vector.shape_cast %605 : vector<1x8x32xf32> to vector<8x32xf32>
    %c0_407 = arith.constant 0 : index
    %c0_408 = arith.constant 0 : index
    %607 = vector.load %arg2[%c0_407, %c0_408] : memref<32x32xf32, #tpu.memory_space<vmem>>, vector<32x32xf32>
    %c0_409 = arith.constant 0 : index
    %c0_410 = arith.constant 0 : index
    %608 = vector.load %arg3[%c0_409, %c0_410] : memref<32x32xf32, #tpu.memory_space<vmem>>, vector<32x32xf32>
    %c0_411 = arith.constant 0 : index
    %c0_412 = arith.constant 0 : index
    %609 = vector.load %arg4[%c0_411, %c0_412] : memref<32x32xf32, #tpu.memory_space<vmem>>, vector<32x32xf32>
    %c0_413 = arith.constant 0 : index
    %c0_414 = arith.constant 0 : index
    %610 = vector.load %arg5[%c0_413, %c0_414] : memref<32x32xf32, #tpu.memory_space<vmem>>, vector<32x32xf32>
    %c0_415 = arith.constant 0 : index
    %c0_416 = arith.constant 0 : index
    %611 = vector.load %arg6[%c0_415, %c0_416] : memref<32x32xf32, #tpu.memory_space<vmem>>, vector<32x32xf32>
    %c0_417 = arith.constant 0 : index
    %c0_418 = arith.constant 0 : index
    %612 = vector.load %arg7[%c0_417, %c0_418] : memref<32x32xf32, #tpu.memory_space<vmem>>, vector<32x32xf32>
    %c0_419 = arith.constant 0 : index
    %c0_420 = arith.constant 0 : index
    %613 = vector.load %arg8[%c0_419, %c0_420] : memref<1x32xf32, #tpu.memory_space<vmem>>, vector<1x32xf32>
    %c0_421 = arith.constant 0 : index
    %c0_422 = arith.constant 0 : index
    %614 = vector.load %arg9[%c0_421, %c0_422] : memref<1x32xf32, #tpu.memory_space<vmem>>, vector<1x32xf32>
    %c0_423 = arith.constant 0 : index
    %c0_424 = arith.constant 0 : index
    %615 = vector.load %arg10[%c0_423, %c0_424] : memref<1x32xf32, #tpu.memory_space<vmem>>, vector<1x32xf32>
    %c0_425 = arith.constant 0 : index
    %c0_426 = arith.constant 0 : index
    %616 = vector.load %arg11[%c0_425, %c0_426] : memref<1x32xf32, #tpu.memory_space<vmem>>, vector<1x32xf32>
    %cst_427 = arith.constant dense<0.000000e+00> : vector<8x32xf32>
    %617 = tpu.matmul %606, %607, %cst_427 {dimension_numbers = #tpu.dot_dimension_numbers<[1], [0], [0], [1], [0, 0, 1, 1], [], []>} : vector<8x32xf32>, vector<32x32xf32>, vector<8x32xf32> -> vector<8x32xf32>
    %cst_428 = arith.constant dense<0.000000e+00> : vector<8x32xf32>
    %618 = tpu.matmul %550, %610, %cst_428 {dimension_numbers = #tpu.dot_dimension_numbers<[1], [0], [0], [1], [0, 0, 1, 1], [], []>} : vector<8x32xf32>, vector<32x32xf32>, vector<8x32xf32> -> vector<8x32xf32>
    %619 = arith.addf %617, %618 : vector<8x32xf32>
    %620 = vector.broadcast %613 : vector<1x32xf32> to vector<8x32xf32>
    %621 = arith.addf %619, %620 : vector<8x32xf32>
    %cst_429 = arith.constant dense<0.000000e+00> : vector<8x32xf32>
    %622 = tpu.matmul %606, %608, %cst_429 {dimension_numbers = #tpu.dot_dimension_numbers<[1], [0], [0], [1], [0, 0, 1, 1], [], []>} : vector<8x32xf32>, vector<32x32xf32>, vector<8x32xf32> -> vector<8x32xf32>
    %cst_430 = arith.constant dense<0.000000e+00> : vector<8x32xf32>
    %623 = tpu.matmul %550, %611, %cst_430 {dimension_numbers = #tpu.dot_dimension_numbers<[1], [0], [0], [1], [0, 0, 1, 1], [], []>} : vector<8x32xf32>, vector<32x32xf32>, vector<8x32xf32> -> vector<8x32xf32>
    %624 = arith.addf %622, %623 : vector<8x32xf32>
    %625 = vector.broadcast %614 : vector<1x32xf32> to vector<8x32xf32>
    %626 = arith.addf %624, %625 : vector<8x32xf32>
    %cst_431 = arith.constant dense<0.000000e+00> : vector<8x32xf32>
    %627 = tpu.matmul %606, %609, %cst_431 {dimension_numbers = #tpu.dot_dimension_numbers<[1], [0], [0], [1], [0, 0, 1, 1], [], []>} : vector<8x32xf32>, vector<32x32xf32>, vector<8x32xf32> -> vector<8x32xf32>
    %628 = vector.broadcast %615 : vector<1x32xf32> to vector<8x32xf32>
    %629 = arith.addf %627, %628 : vector<8x32xf32>
    %cst_432 = arith.constant dense<0.000000e+00> : vector<8x32xf32>
    %630 = tpu.matmul %550, %612, %cst_432 {dimension_numbers = #tpu.dot_dimension_numbers<[1], [0], [0], [1], [0, 0, 1, 1], [], []>} : vector<8x32xf32>, vector<32x32xf32>, vector<8x32xf32> -> vector<8x32xf32>
    %631 = vector.broadcast %616 : vector<1x32xf32> to vector<8x32xf32>
    %632 = arith.addf %630, %631 : vector<8x32xf32>
    %633 = arith.negf %621 : vector<8x32xf32>
    %634 = math.exp %633 : vector<8x32xf32>
    %cst_433 = arith.constant 1.000000e+00 : f32
    %635 = vector.broadcast %cst_433 : f32 to vector<8x32xf32>
    %636 = arith.addf %635, %634 : vector<8x32xf32>
    %637 = arith.divf %635, %636 : vector<8x32xf32>
    %638 = arith.negf %626 : vector<8x32xf32>
    %639 = math.exp %638 : vector<8x32xf32>
    %cst_434 = arith.constant 1.000000e+00 : f32
    %640 = vector.broadcast %cst_434 : f32 to vector<8x32xf32>
    %641 = arith.addf %640, %639 : vector<8x32xf32>
    %642 = arith.divf %640, %641 : vector<8x32xf32>
    %643 = arith.mulf %637, %632 : vector<8x32xf32>
    %644 = arith.addf %629, %643 : vector<8x32xf32>
    %645 = math.tanh %644 : vector<8x32xf32>
    %cst_435 = arith.constant 1.000000e+00 : f32
    %646 = vector.broadcast %cst_435 : f32 to vector<8x32xf32>
    %647 = arith.subf %646, %642 : vector<8x32xf32>
    %648 = arith.mulf %647, %645 : vector<8x32xf32>
    %649 = arith.mulf %642, %550 : vector<8x32xf32>
    %650 = arith.addf %648, %649 : vector<8x32xf32>
    %c0_436 = arith.constant 0 : index
    %c0_437 = arith.constant 0 : index
    %651 = vector.load %arg12[%c0_436, %c0_437] : memref<32x32xf32, #tpu.memory_space<vmem>>, vector<32x32xf32>
    %c0_438 = arith.constant 0 : index
    %c0_439 = arith.constant 0 : index
    %652 = vector.load %arg13[%c0_438, %c0_439] : memref<32x32xf32, #tpu.memory_space<vmem>>, vector<32x32xf32>
    %c0_440 = arith.constant 0 : index
    %c0_441 = arith.constant 0 : index
    %653 = vector.load %arg14[%c0_440, %c0_441] : memref<32x32xf32, #tpu.memory_space<vmem>>, vector<32x32xf32>
    %c0_442 = arith.constant 0 : index
    %c0_443 = arith.constant 0 : index
    %654 = vector.load %arg15[%c0_442, %c0_443] : memref<32x32xf32, #tpu.memory_space<vmem>>, vector<32x32xf32>
    %c0_444 = arith.constant 0 : index
    %c0_445 = arith.constant 0 : index
    %655 = vector.load %arg16[%c0_444, %c0_445] : memref<32x32xf32, #tpu.memory_space<vmem>>, vector<32x32xf32>
    %c0_446 = arith.constant 0 : index
    %c0_447 = arith.constant 0 : index
    %656 = vector.load %arg17[%c0_446, %c0_447] : memref<32x32xf32, #tpu.memory_space<vmem>>, vector<32x32xf32>
    %c0_448 = arith.constant 0 : index
    %c0_449 = arith.constant 0 : index
    %657 = vector.load %arg18[%c0_448, %c0_449] : memref<1x32xf32, #tpu.memory_space<vmem>>, vector<1x32xf32>
    %c0_450 = arith.constant 0 : index
    %c0_451 = arith.constant 0 : index
    %658 = vector.load %arg19[%c0_450, %c0_451] : memref<1x32xf32, #tpu.memory_space<vmem>>, vector<1x32xf32>
    %c0_452 = arith.constant 0 : index
    %c0_453 = arith.constant 0 : index
    %659 = vector.load %arg20[%c0_452, %c0_453] : memref<1x32xf32, #tpu.memory_space<vmem>>, vector<1x32xf32>
    %c0_454 = arith.constant 0 : index
    %c0_455 = arith.constant 0 : index
    %660 = vector.load %arg21[%c0_454, %c0_455] : memref<1x32xf32, #tpu.memory_space<vmem>>, vector<1x32xf32>
    %cst_456 = arith.constant dense<0.000000e+00> : vector<8x32xf32>
    %661 = tpu.matmul %650, %651, %cst_456 {dimension_numbers = #tpu.dot_dimension_numbers<[1], [0], [0], [1], [0, 0, 1, 1], [], []>} : vector<8x32xf32>, vector<32x32xf32>, vector<8x32xf32> -> vector<8x32xf32>
    %cst_457 = arith.constant dense<0.000000e+00> : vector<8x32xf32>
    %662 = tpu.matmul %594, %654, %cst_457 {dimension_numbers = #tpu.dot_dimension_numbers<[1], [0], [0], [1], [0, 0, 1, 1], [], []>} : vector<8x32xf32>, vector<32x32xf32>, vector<8x32xf32> -> vector<8x32xf32>
    %663 = arith.addf %661, %662 : vector<8x32xf32>
    %664 = vector.broadcast %657 : vector<1x32xf32> to vector<8x32xf32>
    %665 = arith.addf %663, %664 : vector<8x32xf32>
    %cst_458 = arith.constant dense<0.000000e+00> : vector<8x32xf32>
    %666 = tpu.matmul %650, %652, %cst_458 {dimension_numbers = #tpu.dot_dimension_numbers<[1], [0], [0], [1], [0, 0, 1, 1], [], []>} : vector<8x32xf32>, vector<32x32xf32>, vector<8x32xf32> -> vector<8x32xf32>
    %cst_459 = arith.constant dense<0.000000e+00> : vector<8x32xf32>
    %667 = tpu.matmul %594, %655, %cst_459 {dimension_numbers = #tpu.dot_dimension_numbers<[1], [0], [0], [1], [0, 0, 1, 1], [], []>} : vector<8x32xf32>, vector<32x32xf32>, vector<8x32xf32> -> vector<8x32xf32>
    %668 = arith.addf %666, %667 : vector<8x32xf32>
    %669 = vector.broadcast %658 : vector<1x32xf32> to vector<8x32xf32>
    %670 = arith.addf %668, %669 : vector<8x32xf32>
    %cst_460 = arith.constant dense<0.000000e+00> : vector<8x32xf32>
    %671 = tpu.matmul %650, %653, %cst_460 {dimension_numbers = #tpu.dot_dimension_numbers<[1], [0], [0], [1], [0, 0, 1, 1], [], []>} : vector<8x32xf32>, vector<32x32xf32>, vector<8x32xf32> -> vector<8x32xf32>
    %672 = vector.broadcast %659 : vector<1x32xf32> to vector<8x32xf32>
    %673 = arith.addf %671, %672 : vector<8x32xf32>
    %cst_461 = arith.constant dense<0.000000e+00> : vector<8x32xf32>
    %674 = tpu.matmul %594, %656, %cst_461 {dimension_numbers = #tpu.dot_dimension_numbers<[1], [0], [0], [1], [0, 0, 1, 1], [], []>} : vector<8x32xf32>, vector<32x32xf32>, vector<8x32xf32> -> vector<8x32xf32>
    %675 = vector.broadcast %660 : vector<1x32xf32> to vector<8x32xf32>
    %676 = arith.addf %674, %675 : vector<8x32xf32>
    %677 = arith.negf %665 : vector<8x32xf32>
    %678 = math.exp %677 : vector<8x32xf32>
    %cst_462 = arith.constant 1.000000e+00 : f32
    %679 = vector.broadcast %cst_462 : f32 to vector<8x32xf32>
    %680 = arith.addf %679, %678 : vector<8x32xf32>
    %681 = arith.divf %679, %680 : vector<8x32xf32>
    %682 = arith.negf %670 : vector<8x32xf32>
    %683 = math.exp %682 : vector<8x32xf32>
    %cst_463 = arith.constant 1.000000e+00 : f32
    %684 = vector.broadcast %cst_463 : f32 to vector<8x32xf32>
    %685 = arith.addf %684, %683 : vector<8x32xf32>
    %686 = arith.divf %684, %685 : vector<8x32xf32>
    %687 = arith.mulf %681, %676 : vector<8x32xf32>
    %688 = arith.addf %673, %687 : vector<8x32xf32>
    %689 = math.tanh %688 : vector<8x32xf32>
    %cst_464 = arith.constant 1.000000e+00 : f32
    %690 = vector.broadcast %cst_464 : f32 to vector<8x32xf32>
    %691 = arith.subf %690, %686 : vector<8x32xf32>
    %692 = arith.mulf %691, %689 : vector<8x32xf32>
    %693 = arith.mulf %686, %594 : vector<8x32xf32>
    %694 = arith.addf %692, %693 : vector<8x32xf32>
    %c0_465 = arith.constant 0 : index
    %c0_466 = arith.constant 0 : index
    %695 = vector.load %arg22[%c0_465, %c0_466] : memref<32x128xf32, #tpu.memory_space<vmem>>, vector<32x128xf32>
    %cst_467 = arith.constant dense<0.000000e+00> : vector<8x128xf32>
    %696 = tpu.matmul %694, %695, %cst_467 {dimension_numbers = #tpu.dot_dimension_numbers<[1], [0], [0], [1], [0, 0, 1, 1], [], []>} : vector<8x32xf32>, vector<32x128xf32>, vector<8x128xf32> -> vector<8x128xf32>
    %c0_468 = arith.constant 0 : index
    %c0_469 = arith.constant 0 : index
    %697 = vector.load %arg23[%c0_468, %c0_469] : memref<1x128xf32, #tpu.memory_space<vmem>>, vector<1x128xf32>
    %698 = vector.broadcast %697 : vector<1x128xf32> to vector<8x128xf32>
    %699 = arith.addf %696, %698 : vector<8x128xf32>
    %700 = arith.index_cast %c6_i32 : i32 to index
    %c0_470 = arith.constant 0 : index
    %c0_471 = arith.constant 0 : index
    %701 = vector.load %arg24[%700, %c0_470, %c0_471] : memref<8x8x128xf32, #tpu.memory_space<vmem>>, vector<1x8x128xf32>
    %702 = vector.shape_cast %701 : vector<1x8x128xf32> to vector<8x128xf32>
    %703 = vector.shape_cast %699 : vector<8x128xf32> to vector<1x8x128xf32>
    tpu.vector_store %arg24[%700, %c0_470, %c0_471], %703 {strides = array<i32>} : memref<8x8x128xf32, #tpu.memory_space<vmem>>, vector<1x8x128xf32>,
    %c7_i32 = arith.constant 7 : i32
    %704 = arith.index_cast %c7_i32 : i32 to index
    %c0_472 = arith.constant 0 : index
    %c0_473 = arith.constant 0 : index
    %705 = vector.load %arg0[%704, %c0_472, %c0_473] : memref<8x8x32xf32, #tpu.memory_space<vmem>>, vector<1x8x32xf32>
    %706 = vector.shape_cast %705 : vector<1x8x32xf32> to vector<8x32xf32>
    %c0_474 = arith.constant 0 : index
    %c0_475 = arith.constant 0 : index
    %707 = vector.load %arg2[%c0_474, %c0_475] : memref<32x32xf32, #tpu.memory_space<vmem>>, vector<32x32xf32>
    %c0_476 = arith.constant 0 : index
    %c0_477 = arith.constant 0 : index
    %708 = vector.load %arg3[%c0_476, %c0_477] : memref<32x32xf32, #tpu.memory_space<vmem>>, vector<32x32xf32>
    %c0_478 = arith.constant 0 : index
    %c0_479 = arith.constant 0 : index
    %709 = vector.load %arg4[%c0_478, %c0_479] : memref<32x32xf32, #tpu.memory_space<vmem>>, vector<32x32xf32>
    %c0_480 = arith.constant 0 : index
    %c0_481 = arith.constant 0 : index
    %710 = vector.load %arg5[%c0_480, %c0_481] : memref<32x32xf32, #tpu.memory_space<vmem>>, vector<32x32xf32>
    %c0_482 = arith.constant 0 : index
    %c0_483 = arith.constant 0 : index
    %711 = vector.load %arg6[%c0_482, %c0_483] : memref<32x32xf32, #tpu.memory_space<vmem>>, vector<32x32xf32>
    %c0_484 = arith.constant 0 : index
    %c0_485 = arith.constant 0 : index
    %712 = vector.load %arg7[%c0_484, %c0_485] : memref<32x32xf32, #tpu.memory_space<vmem>>, vector<32x32xf32>
    %c0_486 = arith.constant 0 : index
    %c0_487 = arith.constant 0 : index
    %713 = vector.load %arg8[%c0_486, %c0_487] : memref<1x32xf32, #tpu.memory_space<vmem>>, vector<1x32xf32>
    %c0_488 = arith.constant 0 : index
    %c0_489 = arith.constant 0 : index
    %714 = vector.load %arg9[%c0_488, %c0_489] : memref<1x32xf32, #tpu.memory_space<vmem>>, vector<1x32xf32>
    %c0_490 = arith.constant 0 : index
    %c0_491 = arith.constant 0 : index
    %715 = vector.load %arg10[%c0_490, %c0_491] : memref<1x32xf32, #tpu.memory_space<vmem>>, vector<1x32xf32>
    %c0_492 = arith.constant 0 : index
    %c0_493 = arith.constant 0 : index
    %716 = vector.load %arg11[%c0_492, %c0_493] : memref<1x32xf32, #tpu.memory_space<vmem>>, vector<1x32xf32>
    %cst_494 = arith.constant dense<0.000000e+00> : vector<8x32xf32>
    %717 = tpu.matmul %706, %707, %cst_494 {dimension_numbers = #tpu.dot_dimension_numbers<[1], [0], [0], [1], [0, 0, 1, 1], [], []>} : vector<8x32xf32>, vector<32x32xf32>, vector<8x32xf32> -> vector<8x32xf32>
    %cst_495 = arith.constant dense<0.000000e+00> : vector<8x32xf32>
    %718 = tpu.matmul %650, %710, %cst_495 {dimension_numbers = #tpu.dot_dimension_numbers<[1], [0], [0], [1], [0, 0, 1, 1], [], []>} : vector<8x32xf32>, vector<32x32xf32>, vector<8x32xf32> -> vector<8x32xf32>
    %719 = arith.addf %717, %718 : vector<8x32xf32>
    %720 = vector.broadcast %713 : vector<1x32xf32> to vector<8x32xf32>
    %721 = arith.addf %719, %720 : vector<8x32xf32>
    %cst_496 = arith.constant dense<0.000000e+00> : vector<8x32xf32>
    %722 = tpu.matmul %706, %708, %cst_496 {dimension_numbers = #tpu.dot_dimension_numbers<[1], [0], [0], [1], [0, 0, 1, 1], [], []>} : vector<8x32xf32>, vector<32x32xf32>, vector<8x32xf32> -> vector<8x32xf32>
    %cst_497 = arith.constant dense<0.000000e+00> : vector<8x32xf32>
    %723 = tpu.matmul %650, %711, %cst_497 {dimension_numbers = #tpu.dot_dimension_numbers<[1], [0], [0], [1], [0, 0, 1, 1], [], []>} : vector<8x32xf32>, vector<32x32xf32>, vector<8x32xf32> -> vector<8x32xf32>
    %724 = arith.addf %722, %723 : vector<8x32xf32>
    %725 = vector.broadcast %714 : vector<1x32xf32> to vector<8x32xf32>
    %726 = arith.addf %724, %725 : vector<8x32xf32>
    %cst_498 = arith.constant dense<0.000000e+00> : vector<8x32xf32>
    %727 = tpu.matmul %706, %709, %cst_498 {dimension_numbers = #tpu.dot_dimension_numbers<[1], [0], [0], [1], [0, 0, 1, 1], [], []>} : vector<8x32xf32>, vector<32x32xf32>, vector<8x32xf32> -> vector<8x32xf32>
    %728 = vector.broadcast %715 : vector<1x32xf32> to vector<8x32xf32>
    %729 = arith.addf %727, %728 : vector<8x32xf32>
    %cst_499 = arith.constant dense<0.000000e+00> : vector<8x32xf32>
    %730 = tpu.matmul %650, %712, %cst_499 {dimension_numbers = #tpu.dot_dimension_numbers<[1], [0], [0], [1], [0, 0, 1, 1], [], []>} : vector<8x32xf32>, vector<32x32xf32>, vector<8x32xf32> -> vector<8x32xf32>
    %731 = vector.broadcast %716 : vector<1x32xf32> to vector<8x32xf32>
    %732 = arith.addf %730, %731 : vector<8x32xf32>
    %733 = arith.negf %721 : vector<8x32xf32>
    %734 = math.exp %733 : vector<8x32xf32>
    %cst_500 = arith.constant 1.000000e+00 : f32
    %735 = vector.broadcast %cst_500 : f32 to vector<8x32xf32>
    %736 = arith.addf %735, %734 : vector<8x32xf32>
    %737 = arith.divf %735, %736 : vector<8x32xf32>
    %738 = arith.negf %726 : vector<8x32xf32>
    %739 = math.exp %738 : vector<8x32xf32>
    %cst_501 = arith.constant 1.000000e+00 : f32
    %740 = vector.broadcast %cst_501 : f32 to vector<8x32xf32>
    %741 = arith.addf %740, %739 : vector<8x32xf32>
    %742 = arith.divf %740, %741 : vector<8x32xf32>
    %743 = arith.mulf %737, %732 : vector<8x32xf32>
    %744 = arith.addf %729, %743 : vector<8x32xf32>
    %745 = math.tanh %744 : vector<8x32xf32>
    %cst_502 = arith.constant 1.000000e+00 : f32
    %746 = vector.broadcast %cst_502 : f32 to vector<8x32xf32>
    %747 = arith.subf %746, %742 : vector<8x32xf32>
    %748 = arith.mulf %747, %745 : vector<8x32xf32>
    %749 = arith.mulf %742, %650 : vector<8x32xf32>
    %750 = arith.addf %748, %749 : vector<8x32xf32>
    %c0_503 = arith.constant 0 : index
    %c0_504 = arith.constant 0 : index
    %751 = vector.load %arg12[%c0_503, %c0_504] : memref<32x32xf32, #tpu.memory_space<vmem>>, vector<32x32xf32>
    %c0_505 = arith.constant 0 : index
    %c0_506 = arith.constant 0 : index
    %752 = vector.load %arg13[%c0_505, %c0_506] : memref<32x32xf32, #tpu.memory_space<vmem>>, vector<32x32xf32>
    %c0_507 = arith.constant 0 : index
    %c0_508 = arith.constant 0 : index
    %753 = vector.load %arg14[%c0_507, %c0_508] : memref<32x32xf32, #tpu.memory_space<vmem>>, vector<32x32xf32>
    %c0_509 = arith.constant 0 : index
    %c0_510 = arith.constant 0 : index
    %754 = vector.load %arg15[%c0_509, %c0_510] : memref<32x32xf32, #tpu.memory_space<vmem>>, vector<32x32xf32>
    %c0_511 = arith.constant 0 : index
    %c0_512 = arith.constant 0 : index
    %755 = vector.load %arg16[%c0_511, %c0_512] : memref<32x32xf32, #tpu.memory_space<vmem>>, vector<32x32xf32>
    %c0_513 = arith.constant 0 : index
    %c0_514 = arith.constant 0 : index
    %756 = vector.load %arg17[%c0_513, %c0_514] : memref<32x32xf32, #tpu.memory_space<vmem>>, vector<32x32xf32>
    %c0_515 = arith.constant 0 : index
    %c0_516 = arith.constant 0 : index
    %757 = vector.load %arg18[%c0_515, %c0_516] : memref<1x32xf32, #tpu.memory_space<vmem>>, vector<1x32xf32>
    %c0_517 = arith.constant 0 : index
    %c0_518 = arith.constant 0 : index
    %758 = vector.load %arg19[%c0_517, %c0_518] : memref<1x32xf32, #tpu.memory_space<vmem>>, vector<1x32xf32>
    %c0_519 = arith.constant 0 : index
    %c0_520 = arith.constant 0 : index
    %759 = vector.load %arg20[%c0_519, %c0_520] : memref<1x32xf32, #tpu.memory_space<vmem>>, vector<1x32xf32>
    %c0_521 = arith.constant 0 : index
    %c0_522 = arith.constant 0 : index
    %760 = vector.load %arg21[%c0_521, %c0_522] : memref<1x32xf32, #tpu.memory_space<vmem>>, vector<1x32xf32>
    %cst_523 = arith.constant dense<0.000000e+00> : vector<8x32xf32>
    %761 = tpu.matmul %750, %751, %cst_523 {dimension_numbers = #tpu.dot_dimension_numbers<[1], [0], [0], [1], [0, 0, 1, 1], [], []>} : vector<8x32xf32>, vector<32x32xf32>, vector<8x32xf32> -> vector<8x32xf32>
    %cst_524 = arith.constant dense<0.000000e+00> : vector<8x32xf32>
    %762 = tpu.matmul %694, %754, %cst_524 {dimension_numbers = #tpu.dot_dimension_numbers<[1], [0], [0], [1], [0, 0, 1, 1], [], []>} : vector<8x32xf32>, vector<32x32xf32>, vector<8x32xf32> -> vector<8x32xf32>
    %763 = arith.addf %761, %762 : vector<8x32xf32>
    %764 = vector.broadcast %757 : vector<1x32xf32> to vector<8x32xf32>
    %765 = arith.addf %763, %764 : vector<8x32xf32>
    %cst_525 = arith.constant dense<0.000000e+00> : vector<8x32xf32>
    %766 = tpu.matmul %750, %752, %cst_525 {dimension_numbers = #tpu.dot_dimension_numbers<[1], [0], [0], [1], [0, 0, 1, 1], [], []>} : vector<8x32xf32>, vector<32x32xf32>, vector<8x32xf32> -> vector<8x32xf32>
    %cst_526 = arith.constant dense<0.000000e+00> : vector<8x32xf32>
    %767 = tpu.matmul %694, %755, %cst_526 {dimension_numbers = #tpu.dot_dimension_numbers<[1], [0], [0], [1], [0, 0, 1, 1], [], []>} : vector<8x32xf32>, vector<32x32xf32>, vector<8x32xf32> -> vector<8x32xf32>
    %768 = arith.addf %766, %767 : vector<8x32xf32>
    %769 = vector.broadcast %758 : vector<1x32xf32> to vector<8x32xf32>
    %770 = arith.addf %768, %769 : vector<8x32xf32>
    %cst_527 = arith.constant dense<0.000000e+00> : vector<8x32xf32>
    %771 = tpu.matmul %750, %753, %cst_527 {dimension_numbers = #tpu.dot_dimension_numbers<[1], [0], [0], [1], [0, 0, 1, 1], [], []>} : vector<8x32xf32>, vector<32x32xf32>, vector<8x32xf32> -> vector<8x32xf32>
    %772 = vector.broadcast %759 : vector<1x32xf32> to vector<8x32xf32>
    %773 = arith.addf %771, %772 : vector<8x32xf32>
    %cst_528 = arith.constant dense<0.000000e+00> : vector<8x32xf32>
    %774 = tpu.matmul %694, %756, %cst_528 {dimension_numbers = #tpu.dot_dimension_numbers<[1], [0], [0], [1], [0, 0, 1, 1], [], []>} : vector<8x32xf32>, vector<32x32xf32>, vector<8x32xf32> -> vector<8x32xf32>
    %775 = vector.broadcast %760 : vector<1x32xf32> to vector<8x32xf32>
    %776 = arith.addf %774, %775 : vector<8x32xf32>
    %777 = arith.negf %765 : vector<8x32xf32>
    %778 = math.exp %777 : vector<8x32xf32>
    %cst_529 = arith.constant 1.000000e+00 : f32
    %779 = vector.broadcast %cst_529 : f32 to vector<8x32xf32>
    %780 = arith.addf %779, %778 : vector<8x32xf32>
    %781 = arith.divf %779, %780 : vector<8x32xf32>
    %782 = arith.negf %770 : vector<8x32xf32>
    %783 = math.exp %782 : vector<8x32xf32>
    %cst_530 = arith.constant 1.000000e+00 : f32
    %784 = vector.broadcast %cst_530 : f32 to vector<8x32xf32>
    %785 = arith.addf %784, %783 : vector<8x32xf32>
    %786 = arith.divf %784, %785 : vector<8x32xf32>
    %787 = arith.mulf %781, %776 : vector<8x32xf32>
    %788 = arith.addf %773, %787 : vector<8x32xf32>
    %789 = math.tanh %788 : vector<8x32xf32>
    %cst_531 = arith.constant 1.000000e+00 : f32
    %790 = vector.broadcast %cst_531 : f32 to vector<8x32xf32>
    %791 = arith.subf %790, %786 : vector<8x32xf32>
    %792 = arith.mulf %791, %789 : vector<8x32xf32>
    %793 = arith.mulf %786, %694 : vector<8x32xf32>
    %794 = arith.addf %792, %793 : vector<8x32xf32>
    %c0_532 = arith.constant 0 : index
    %c0_533 = arith.constant 0 : index
    %795 = vector.load %arg22[%c0_532, %c0_533] : memref<32x128xf32, #tpu.memory_space<vmem>>, vector<32x128xf32>
    %cst_534 = arith.constant dense<0.000000e+00> : vector<8x128xf32>
    %796 = tpu.matmul %794, %795, %cst_534 {dimension_numbers = #tpu.dot_dimension_numbers<[1], [0], [0], [1], [0, 0, 1, 1], [], []>} : vector<8x32xf32>, vector<32x128xf32>, vector<8x128xf32> -> vector<8x128xf32>
    %c0_535 = arith.constant 0 : index
    %c0_536 = arith.constant 0 : index
    %797 = vector.load %arg23[%c0_535, %c0_536] : memref<1x128xf32, #tpu.memory_space<vmem>>, vector<1x128xf32>
    %798 = vector.broadcast %797 : vector<1x128xf32> to vector<8x128xf32>
    %799 = arith.addf %796, %798 : vector<8x128xf32>
    %800 = arith.index_cast %c7_i32 : i32 to index
    %c0_537 = arith.constant 0 : index
    %c0_538 = arith.constant 0 : index
    %801 = vector.load %arg24[%800, %c0_537, %c0_538] : memref<8x8x128xf32, #tpu.memory_space<vmem>>, vector<1x8x128xf32>
    %802 = vector.shape_cast %801 : vector<1x8x128xf32> to vector<8x128xf32>
    %803 = vector.shape_cast %799 : vector<8x128xf32> to vector<1x8x128xf32>
    tpu.vector_store %arg24[%800, %c0_537, %c0_538], %803 {strides = array<i32>} : memref<8x8x128xf32, #tpu.memory_space<vmem>>, vector<1x8x128xf32>,
    %c8_i32 = arith.constant 8 : i32
    %c0_539 = arith.constant 0 : index
    %c0_540 = arith.constant 0 : index
    %c0_541 = arith.constant 0 : index
    %804 = vector.load %arg25[%c0_539, %c0_540, %c0_541] : memref<2x8x32xf32, #tpu.memory_space<vmem>>, vector<1x8x32xf32>
    %805 = vector.shape_cast %804 : vector<1x8x32xf32> to vector<8x32xf32>
    %806 = vector.shape_cast %750 : vector<8x32xf32> to vector<1x8x32xf32>
    tpu.vector_store %arg25[%c0_539, %c0_540, %c0_541], %806 {strides = array<i32>} : memref<2x8x32xf32, #tpu.memory_space<vmem>>, vector<1x8x32xf32>,
    %c1_542 = arith.constant 1 : index
    %c0_543 = arith.constant 0 : index
    %c0_544 = arith.constant 0 : index
    %807 = vector.load %arg25[%c1_542, %c0_543, %c0_544] : memref<2x8x32xf32, #tpu.memory_space<vmem>>, vector<1x8x32xf32>
    %808 = vector.shape_cast %807 : vector<1x8x32xf32> to vector<8x32xf32>
    %809 = vector.shape_cast %794 : vector<8x32xf32> to vector<1x8x32xf32>
    tpu.vector_store %arg25[%c1_542, %c0_543, %c0_544], %809 {strides = array<i32>} : memref<2x8x32xf32, #tpu.memory_space<vmem>>, vector<1x8x32xf32>,
    return
  }
}

</mosaic_0001>

<llo_original>
// kernel: _lambda_.1
$region0: #{_lambda_.1}
  #allocation0 [shape = 'u32[]', space=smem, size = 0x4, offset = 0x4, fixed_abs, tag = 'smem constant byte address 0x4 - core index']
  #allocation1 [shape = 'u32[144,128]{1,0:T(1,128)}', space=vmem, size = 0x12000, scoped, tag = 'internal scratch']
  %s0 = inlined_call_operand.vmem [shape: f32[8,8,32], index: 0, kind: input, shape index: {}]
  %s1 = inlined_call_operand.vmem [shape: f32[2,8,32], index: 1, kind: input, shape index: {}]
  %s2 = inlined_call_operand.vmem [shape: f32[32,32], index: 2, kind: input, shape index: {}]
  %s3 = inlined_call_operand.vmem [shape: f32[32,32], index: 3, kind: input, shape index: {}]
  %s4 = inlined_call_operand.vmem [shape: f32[32,32], index: 4, kind: input, shape index: {}]
  %s5 = inlined_call_operand.vmem [shape: f32[32,32], index: 5, kind: input, shape index: {}]
  %s6 = inlined_call_operand.vmem [shape: f32[32,32], index: 6, kind: input, shape index: {}]
  %s7 = inlined_call_operand.vmem [shape: f32[32,32], index: 7, kind: input, shape index: {}]
  %s8 = inlined_call_operand.vmem [shape: f32[1,32], index: 8, kind: input, shape index: {}]
  %s9 = inlined_call_operand.vmem [shape: f32[1,32], index: 9, kind: input, shape index: {}]
  %s10 = inlined_call_operand.vmem [shape: f32[1,32], index: 10, kind: input, shape index: {}]
  %s11 = inlined_call_operand.vmem [shape: f32[1,32], index: 11, kind: input, shape index: {}]
  %s12 = inlined_call_operand.vmem [shape: f32[32,32], index: 12, kind: input, shape index: {}]
  %s13 = inlined_call_operand.vmem [shape: f32[32,32], index: 13, kind: input, shape index: {}]
  %s14 = inlined_call_operand.vmem [shape: f32[32,32], index: 14, kind: input, shape index: {}]
  %s15 = inlined_call_operand.vmem [shape: f32[32,32], index: 15, kind: input, shape index: {}]
  %s16 = inlined_call_operand.vmem [shape: f32[32,32], index: 16, kind: input, shape index: {}]
  %s17 = inlined_call_operand.vmem [shape: f32[32,32], index: 17, kind: input, shape index: {}]
  %s18 = inlined_call_operand.vmem [shape: f32[1,32], index: 18, kind: input, shape index: {}]
  %s19 = inlined_call_operand.vmem [shape: f32[1,32], index: 19, kind: input, shape index: {}]
  %s20 = inlined_call_operand.vmem [shape: f32[1,32], index: 20, kind: input, shape index: {}]
  %s21 = inlined_call_operand.vmem [shape: f32[1,32], index: 21, kind: input, shape index: {}]
  %s22 = inlined_call_operand.vmem [shape: f32[32,128], index: 22, kind: input, shape index: {}]
  %s23 = inlined_call_operand.vmem [shape: f32[1,128], index: 23, kind: input, shape index: {}]
  %s24 = inlined_call_operand.vmem [shape: f32[8,8,128], index: 24, kind: output, shape index: {0}]
  %s25 = inlined_call_operand.vmem [shape: f32[2,8,32], index: 25, kind: output, shape index: {1}]
  %26 = xla_tuple %s24, %s25
  %s27 = sld [smem:[#allocation0]]
  $region114: #{_lambda_.1} parent=0
    _
  %s29 = ssub.s32 1, %s27
  %s30 = scalar_select 0, %s29, %s27
  // Predicated region
  $region2: #{_lambda_.1} parent=0 // pred_check
    _
  $region3: #{_lambda_.1} parent=0 // pred_check_branch
    %32 = sbr.rel (0) target = $region5
  $region4: #{_lambda_.1} parent=0 // pred_region
    _
  $region5: #{_lambda_.1} parent=0 // pred_fallthru
    _
  // Predicated region
  $region6: #{_lambda_.1} parent=0 // pred_check
    _
  $region7: #{_lambda_.1} parent=0 // pred_check_branch
    %34 = sbr.rel (0) target = $region9
  $region8: #{_lambda_.1} parent=0 // pred_region
    _
  $region9: #{_lambda_.1} parent=0 // pred_fallthru
    _
  // Predicated region
  $region10: #{_lambda_.1} parent=0 // pred_check
    _
  $region11: #{_lambda_.1} parent=0 // pred_check_branch
    %36 = sbr.rel (0) target = $region13
  $region12: #{_lambda_.1} parent=0 // pred_region
    _
  $region13: #{_lambda_.1} parent=0 // pred_fallthru
    _
  // Predicated region
  $region14: #{_lambda_.1} parent=0 // pred_check
    _
  $region15: #{_lambda_.1} parent=0 // pred_check_branch
    %38 = sbr.rel (0) target = $region17
  $region16: #{_lambda_.1} parent=0 // pred_region
    _
  $region17: #{_lambda_.1} parent=0 // pred_fallthru
    _
  // Predicated region
  $region18: #{_lambda_.1} parent=0 // pred_check
    _
  $region19: #{_lambda_.1} parent=0 // pred_check_branch
    %40 = sbr.rel (0) target = $region21
  $region20: #{_lambda_.1} parent=0 // pred_region
    _
  $region21: #{_lambda_.1} parent=0 // pred_fallthru
    _
  // Predicated region
  $region22: #{_lambda_.1} parent=0 // pred_check
    _
  $region23: #{_lambda_.1} parent=0 // pred_check_branch
    %42 = sbr.rel (0) target = $region25
  $region24: #{_lambda_.1} parent=0 // pred_region
    _
  $region25: #{_lambda_.1} parent=0 // pred_fallthru
    _
  // Predicated region
  $region26: #{_lambda_.1} parent=0 // pred_check
    _
  $region27: #{_lambda_.1} parent=0 // pred_check_branch
    %44 = sbr.rel (0) target = $region29
  $region28: #{_lambda_.1} parent=0 // pred_region
    _
  $region29: #{_lambda_.1} parent=0 // pred_fallthru
    _
  // Predicated region
  $region30: #{_lambda_.1} parent=0 // pred_check
    _
  $region31: #{_lambda_.1} parent=0 // pred_check_branch
    %46 = sbr.rel (0) target = $region33
  $region32: #{_lambda_.1} parent=0 // pred_region
    _
  $region33: #{_lambda_.1} parent=0 // pred_fallthru
    _
  // Predicated region
  $region34: #{_lambda_.1} parent=0 // pred_check
    _
  $region35: #{_lambda_.1} parent=0 // pred_check_branch
    %48 = sbr.rel (0) target = $region37
  $region36: #{_lambda_.1} parent=0 // pred_region
    _
  $region37: #{_lambda_.1} parent=0 // pred_fallthru
    _
  // Predicated region
  $region38: #{_lambda_.1} parent=0 // pred_check
    _
  $region39: #{_lambda_.1} parent=0 // pred_check_branch
    %50 = sbr.rel (0) target = $region41
  $region40: #{_lambda_.1} parent=0 // pred_region
    _
  $region41: #{_lambda_.1} parent=0 // pred_fallthru
    _
  // Predicated region
  $region42: #{_lambda_.1} parent=0 // pred_check
    _
  $region43: #{_lambda_.1} parent=0 // pred_check_branch
    %52 = sbr.rel (0) target = $region45
  $region44: #{_lambda_.1} parent=0 // pred_region
    _
  $region45: #{_lambda_.1} parent=0 // pred_fallthru
    _
  // Predicated region
  $region46: #{_lambda_.1} parent=0 // pred_check
    _
  $region47: #{_lambda_.1} parent=0 // pred_check_branch
    %54 = sbr.rel (0) target = $region49
  $region48: #{_lambda_.1} parent=0 // pred_region
    _
  $region49: #{_lambda_.1} parent=0 // pred_fallthru
    _
  // Predicated region
  $region50: #{_lambda_.1} parent=0 // pred_check
    _
  $region51: #{_lambda_.1} parent=0 // pred_check_branch
    %56 = sbr.rel (0) target = $region53
  $region52: #{_lambda_.1} parent=0 // pred_region
    _
  $region53: #{_lambda_.1} parent=0 // pred_fallthru
    _
  // Predicated region
  $region54: #{_lambda_.1} parent=0 // pred_check
    _
  $region55: #{_lambda_.1} parent=0 // pred_check_branch
    %58 = sbr.rel (0) target = $region57
  $region56: #{_lambda_.1} parent=0 // pred_region
    _
  $region57: #{_lambda_.1} parent=0 // pred_fallthru
    _
  // Predicated region
  $region58: #{_lambda_.1} parent=0 // pred_check
    _
  $region59: #{_lambda_.1} parent=0 // pred_check_branch
    %60 = sbr.rel (0) target = $region61
  $region60: #{_lambda_.1} parent=0 // pred_region
    _
  $region61: #{_lambda_.1} parent=0 // pred_fallthru
    _
  // Predicated region
  $region62: #{_lambda_.1} parent=0 // pred_check
    _
  $region63: #{_lambda_.1} parent=0 // pred_check_branch
    %62 = sbr.rel (0) target = $region65
  $region64: #{_lambda_.1} parent=0 // pred_region
    _
  $region65: #{_lambda_.1} parent=0 // pred_fallthru
    _
  // Predicated region
  $region66: #{_lambda_.1} parent=0 // pred_check
    _
  $region67: #{_lambda_.1} parent=0 // pred_check_branch
    %64 = sbr.rel (0) target = $region69
  $region68: #{_lambda_.1} parent=0 // pred_region
    _
  $region69: #{_lambda_.1} parent=0 // pred_fallthru
    _
  // Predicated region
  $region70: #{_lambda_.1} parent=0 // pred_check
    _
  $region71: #{_lambda_.1} parent=0 // pred_check_branch
    %66 = sbr.rel (0) target = $region73
  $region72: #{_lambda_.1} parent=0 // pred_region
    _
  $region73: #{_lambda_.1} parent=0 // pred_fallthru
    _
  // Predicated region
  $region74: #{_lambda_.1} parent=0 // pred_check
    _
  $region75: #{_lambda_.1} parent=0 // pred_check_branch
    %68 = sbr.rel (0) target = $region77
  $region76: #{_lambda_.1} parent=0 // pred_region
    _
  $region77: #{_lambda_.1} parent=0 // pred_fallthru
    _
  // Predicated region
  $region78: #{_lambda_.1} parent=0 // pred_check
    _
  $region79: #{_lambda_.1} parent=0 // pred_check_branch
    %70 = sbr.rel (0) target = $region81
  $region80: #{_lambda_.1} parent=0 // pred_region
    _
  $region81: #{_lambda_.1} parent=0 // pred_fallthru
    _
  // Predicated region
  $region82: #{_lambda_.1} parent=0 // pred_check
    _
  $region83: #{_lambda_.1} parent=0 // pred_check_branch
    %72 = sbr.rel (0) target = $region85
  $region84: #{_lambda_.1} parent=0 // pred_region
    _
  $region85: #{_lambda_.1} parent=0 // pred_fallthru
    _
  // Predicated region
  $region86: #{_lambda_.1} parent=0 // pred_check
    _
  $region87: #{_lambda_.1} parent=0 // pred_check_branch
    %74 = sbr.rel (0) target = $region89
  $region88: #{_lambda_.1} parent=0 // pred_region
    _
  $region89: #{_lambda_.1} parent=0 // pred_fallthru
    _
  // Predicated region
  $region90: #{_lambda_.1} parent=0 // pred_check
    _
  $region91: #{_lambda_.1} parent=0 // pred_check_branch
    %76 = sbr.rel (0) target = $region93
  $region92: #{_lambda_.1} parent=0 // pred_region
    _
  $region93: #{_lambda_.1} parent=0 // pred_fallthru
    _
  // Predicated region
  $region94: #{_lambda_.1} parent=0 // pred_check
    _
  $region95: #{_lambda_.1} parent=0 // pred_check_branch
    %78 = sbr.rel (0) target = $region97
  $region96: #{_lambda_.1} parent=0 // pred_region
    _
  $region97: #{_lambda_.1} parent=0 // pred_fallthru
    _
  %v79 = vld [vmem:[%s1] sm:$0xff]
  %s80 = scalar_lea.vmem %s1, 8
  %v81 = vld [vmem:[%s80] sm:$0xff]
  %v82 = vld [vmem:[%s0] sm:$0xff]
  %v83 = vld [vmem:[%s2] sm:$0xff]
  %v84 = vld [vmem:[%s2 + $0x8] sm:$0xff]
  %v85 = vld [vmem:[%s2 + $0x10] sm:$0xff]
  %v86 = vld [vmem:[%s2 + $0x18] sm:$0xff]
  %v87 = vld [vmem:[%s3] sm:$0xff]
  %v88 = vld [vmem:[%s3 + $0x8] sm:$0xff]
  %v89 = vld [vmem:[%s3 + $0x10] sm:$0xff]
  %v90 = vld [vmem:[%s3 + $0x18] sm:$0xff]
  %v91 = vld [vmem:[%s4] sm:$0xff]
  %v92 = vld [vmem:[%s4 + $0x8] sm:$0xff]
  %v93 = vld [vmem:[%s4 + $0x10] sm:$0xff]
  %v94 = vld [vmem:[%s4 + $0x18] sm:$0xff]
  %v95 = vld [vmem:[%s5] sm:$0xff]
  %v96 = vld [vmem:[%s5 + $0x8] sm:$0xff]
  %v97 = vld [vmem:[%s5 + $0x10] sm:$0xff]
  %v98 = vld [vmem:[%s5 + $0x18] sm:$0xff]
  %v99 = vld [vmem:[%s6] sm:$0xff]
  %v100 = vld [vmem:[%s6 + $0x8] sm:$0xff]
  %v101 = vld [vmem:[%s6 + $0x10] sm:$0xff]
  %v102 = vld [vmem:[%s6 + $0x18] sm:$0xff]
  %v103 = vld [vmem:[%s7] sm:$0xff]
  %v104 = vld [vmem:[%s7 + $0x8] sm:$0xff]
  %v105 = vld [vmem:[%s7 + $0x10] sm:$0xff]
  %v106 = vld [vmem:[%s7 + $0x18] sm:$0xff]
  %v107 = vld [vmem:[%s8] sm:$0x1]
  %v108 = vld [vmem:[%s9] sm:$0x1]
  %v109 = vld [vmem:[%s10] sm:$0x1]
  %v110 = vld [vmem:[%s11] sm:$0x1]
  %vm111 = vcmask 261120
  %v113 = vsel %vm111, %v79, 0
  %115 = vmatprep.subr.mxu0 0.0
  %116 = vmatpush1.msra.mxu0 0.0
  %117 = vmatprep.subr.mxu0 0.0
  %118 = vmatpush1.msra.mxu0 0.0
  %119 = vmatprep.subr.mxu0 0.0
  %120 = vmatpush1.msra.mxu0 0.0
  %121 = vmatprep.subr.mxu0 0.0
  %122 = vmatpush1.msra.mxu0 0.0
  %123 = vmatprep.subr.mxu0 0.0
  %124 = vmatpush1.msra.mxu0 0.0
  %125 = vmatprep.subr.mxu0 0.0
  %126 = vmatpush1.msra.mxu0 0.0
  %127 = vmatprep.subr.mxu0 0.0
  %128 = vmatpush1.msra.mxu0 0.0
  %129 = vmatprep.subr.mxu0 0.0
  %130 = vmatpush1.msra.mxu0 0.0
  %131 = vmatprep.subr.mxu0 0.0
  %132 = vmatpush1.msra.mxu0 0.0
  %133 = vmatprep.subr.mxu0 0.0
  %134 = vmatpush1.msra.mxu0 0.0
  %135 = vmatprep.subr.mxu0 0.0
  %136 = vmatpush1.msra.mxu0 0.0
  %137 = vmatprep.subr.mxu0 0.0
  %138 = vmatpush1.msra.mxu0 0.0
  %139 = vmatprep.subr.mxu0 0.0
  %140 = vmatpush1.msra.mxu0 %v98
  %141 = vmatprep.subr.mxu0 0.0
  %142 = vmatpush1.msra.mxu0 %v97
  %143 = vmatprep.subr.mxu0 0.0
  %144 = vmatpush1.msra.mxu0 %v96
  %145 = vmatprep.subr.mxu0 0.0
  %146 = vmatpush1.msra.mxu0 %v95
  %147 = vmatprep.subr.mxu0 0.0
  %148 = vmatpush2.msra.mxu0 0.0
  %149 = vmatprep.subr.mxu0 0.0
  %150 = vmatpush2.msra.mxu0 0.0
  %151 = vmatprep.subr.mxu0 0.0
  %152 = vmatpush2.msra.mxu0 0.0
  %153 = vmatprep.subr.mxu0 0.0
  %154 = vmatpush2.msra.mxu0 0.0
  %155 = vmatprep.subr.mxu0 0.0
  %156 = vmatpush2.msra.mxu0 0.0
  %157 = vmatprep.subr.mxu0 0.0
  %158 = vmatpush2.msra.mxu0 0.0
  %159 = vmatprep.subr.mxu0 0.0
  %160 = vmatpush2.msra.mxu0 0.0
  %161 = vmatprep.subr.mxu0 0.0
  %162 = vmatpush2.msra.mxu0 0.0
  %163 = vmatprep.subr.mxu0 0.0
  %164 = vmatpush2.msra.mxu0 0.0
  %165 = vmatprep.subr.mxu0 0.0
  %166 = vmatpush2.msra.mxu0 0.0
  %167 = vmatprep.subr.mxu0 0.0
  %168 = vmatpush2.msra.mxu0 0.0
  %169 = vmatprep.subr.mxu0 0.0
  %170 = vmatpush2.msra.mxu0 0.0
  %171 = vmatprep.subr.mxu0 0.0
  %172 = vmatpush2.msra.mxu0 0.0
  %173 = vmatprep.subr.mxu0 0.0
  %174 = vmatpush2.msra.mxu0 0.0
  %175 = vmatprep.subr.mxu0 0.0
  %176 = vmatpush2.msra.mxu0 0.0
  %177 = vmatprep.subr.mxu0 0.0
  %178 = vmatpush2.msra.mxu0 0.0
  %179 = vmatprep.mubr.f32.mxu0 0.0
  %180 = vmatmul.mubr.f32.gmra.mxu0 %v113
  %v181 = vpop.f32.mrf.mxu0
  %v182 = vadd.f32 0.0, %v181
  %v183 = vpop.f32.mrf.mxu0
  %184 = vdwg.mxu0
  %v186 = vsel %vm111, %v82, 0
  %188 = vmatprep.subr.mxu0 0.0
  %189 = vmatpush1.msra.mxu0 0.0
  %190 = vmatprep.subr.mxu0 0.0
  %191 = vmatpush1.msra.mxu0 0.0
  %192 = vmatprep.subr.mxu0 0.0
  %193 = vmatpush1.msra.mxu0 0.0
  %194 = vmatprep.subr.mxu0 0.0
  %195 = vmatpush1.msra.mxu0 0.0
  %196 = vmatprep.subr.mxu0 0.0
  %197 = vmatpush1.msra.mxu0 0.0
  %198 = vmatprep.subr.mxu0 0.0
  %199 = vmatpush1.msra.mxu0 0.0
  %200 = vmatprep.subr.mxu0 0.0
  %201 = vmatpush1.msra.mxu0 0.0
  %202 = vmatprep.subr.mxu0 0.0
  %203 = vmatpush1.msra.mxu0 0.0
  %204 = vmatprep.subr.mxu0 0.0
  %205 = vmatpush1.msra.mxu0 0.0
  %206 = vmatprep.subr.mxu0 0.0
  %207 = vmatpush1.msra.mxu0 0.0
  %208 = vmatprep.subr.mxu0 0.0
  %209 = vmatpush1.msra.mxu0 0.0
  %210 = vmatprep.subr.mxu0 0.0
  %211 = vmatpush1.msra.mxu0 0.0
  %212 = vmatprep.subr.mxu0 0.0
  %213 = vmatpush1.msra.mxu0 %v86
  %214 = vmatprep.subr.mxu0 0.0
  %215 = vmatpush1.msra.mxu0 %v85
  %216 = vmatprep.subr.mxu0 0.0
  %217 = vmatpush1.msra.mxu0 %v84
  %218 = vmatprep.subr.mxu0 0.0
  %219 = vmatpush1.msra.mxu0 %v83
  %220 = vmatprep.subr.mxu0 0.0
  %221 = vmatpush2.msra.mxu0 0.0
  %222 = vmatprep.subr.mxu0 0.0
  %223 = vmatpush2.msra.mxu0 0.0
  %224 = vmatprep.subr.mxu0 0.0
  %225 = vmatpush2.msra.mxu0 0.0
  %226 = vmatprep.subr.mxu0 0.0
  %227 = vmatpush2.msra.mxu0 0.0
  %228 = vmatprep.subr.mxu0 0.0
  %229 = vmatpush2.msra.mxu0 0.0
  %230 = vmatprep.subr.mxu0 0.0
  %231 = vmatpush2.msra.mxu0 0.0
  %232 = vmatprep.subr.mxu0 0.0
  %233 = vmatpush2.msra.mxu0 0.0
  %234 = vmatprep.subr.mxu0 0.0
  %235 = vmatpush2.msra.mxu0 0.0
  %236 = vmatprep.subr.mxu0 0.0
  %237 = vmatpush2.msra.mxu0 0.0
  %238 = vmatprep.subr.mxu0 0.0
  %239 = vmatpush2.msra.mxu0 0.0
  %240 = vmatprep.subr.mxu0 0.0
  %241 = vmatpush2.msra.mxu0 0.0
  %242 = vmatprep.subr.mxu0 0.0
  %243 = vmatpush2.msra.mxu0 0.0
  %244 = vmatprep.subr.mxu0 0.0
  %245 = vmatpush2.msra.mxu0 0.0
  %246 = vmatprep.subr.mxu0 0.0
  %247 = vmatpush2.msra.mxu0 0.0
  %248 = vmatprep.subr.mxu0 0.0
  %249 = vmatpush2.msra.mxu0 0.0
  %250 = vmatprep.subr.mxu0 0.0
  %251 = vmatpush2.msra.mxu0 0.0
  %252 = vmatprep.mubr.f32.mxu0 0.0
  %253 = vmatmul.mubr.f32.gmra.mxu0 %v186
  %v254 = vpop.f32.mrf.mxu0
  %v255 = vadd.f32 %v182, %v254
  %v256 = vpop.f32.mrf.mxu0
  %257 = vdwg.mxu0
  %v259 = vlaneseq
  %v260 = vshrl.u32 %v259, 7
  %v261 = vsub.s32 0, %v260
  %v262 = vrot.slane %v107, %v261
  %v264 = vadd.f32 %v255, %v262
  %265 = vmatprep.subr.mxu0 0.0
  %266 = vmatpush1.msra.mxu0 0.0
  %267 = vmatprep.subr.mxu0 0.0
  %268 = vmatpush1.msra.mxu0 0.0
  %269 = vmatprep.subr.mxu0 0.0
  %270 = vmatpush1.msra.mxu0 0.0
  %271 = vmatprep.subr.mxu0 0.0
  %272 = vmatpush1.msra.mxu0 0.0
  %273 = vmatprep.subr.mxu0 0.0
  %274 = vmatpush1.msra.mxu0 0.0
  %275 = vmatprep.subr.mxu0 0.0
  %276 = vmatpush1.msra.mxu0 0.0
  %277 = vmatprep.subr.mxu0 0.0
  %278 = vmatpush1.msra.mxu0 0.0
  %279 = vmatprep.subr.mxu0 0.0
  %280 = vmatpush1.msra.mxu0 0.0
  %281 = vmatprep.subr.mxu0 0.0
  %282 = vmatpush1.msra.mxu0 0.0
  %283 = vmatprep.subr.mxu0 0.0
  %284 = vmatpush1.msra.mxu0 0.0
  %285 = vmatprep.subr.mxu0 0.0
  %286 = vmatpush1.msra.mxu0 0.0
  %287 = vmatprep.subr.mxu0 0.0
  %288 = vmatpush1.msra.mxu0 0.0
  %289 = vmatprep.subr.mxu0 0.0
  %290 = vmatpush1.msra.mxu0 %v102
  %291 = vmatprep.subr.mxu0 0.0
  %292 = vmatpush1.msra.mxu0 %v101
  %293 = vmatprep.subr.mxu0 0.0
  %294 = vmatpush1.msra.mxu0 %v100
  %295 = vmatprep.subr.mxu0 0.0
  %296 = vmatpush1.msra.mxu0 %v99
  %297 = vmatprep.subr.mxu0 0.0
  %298 = vmatpush2.msra.mxu0 0.0
  %299 = vmatprep.subr.mxu0 0.0
  %300 = vmatpush2.msra.mxu0 0.0
  %301 = vmatprep.subr.mxu0 0.0
  %302 = vmatpush2.msra.mxu0 0.0
  %303 = vmatprep.subr.mxu0 0.0
  %304 = vmatpush2.msra.mxu0 0.0
  %305 = vmatprep.subr.mxu0 0.0
  %306 = vmatpush2.msra.mxu0 0.0
  %307 = vmatprep.subr.mxu0 0.0
  %308 = vmatpush2.msra.mxu0 0.0
  %309 = vmatprep.subr.mxu0 0.0
  %310 = vmatpush2.msra.mxu0 0.0
  %311 = vmatprep.subr.mxu0 0.0
  %312 = vmatpush2.msra.mxu0 0.0
  %313 = vmatprep.subr.mxu0 0.0
  %314 = vmatpush2.msra.mxu0 0.0
  %315 = vmatprep.subr.mxu0 0.0
  %316 = vmatpush2.msra.mxu0 0.0
  %317 = vmatprep.subr.mxu0 0.0
  %318 = vmatpush2.msra.mxu0 0.0
  %319 = vmatprep.subr.mxu0 0.0
  %320 = vmatpush2.msra.mxu0 0.0
  %321 = vmatprep.subr.mxu0 0.0
  %322 = vmatpush2.msra.mxu0 0.0
  %323 = vmatprep.subr.mxu0 0.0
  %324 = vmatpush2.msra.mxu0 0.0
  %325 = vmatprep.subr.mxu0 0.0
  %326 = vmatpush2.msra.mxu0 0.0
  %327 = vmatprep.subr.mxu0 0.0
  %328 = vmatpush2.msra.mxu0 0.0
  %329 = vmatprep.mubr.f32.mxu0 0.0
  %330 = vmatmul.mubr.f32.gmra.mxu0 %v113
  %v331 = vpop.f32.mrf.mxu0
  %v332 = vadd.f32 0.0, %v331
  %v333 = vpop.f32.mrf.mxu0
  %334 = vdwg.mxu0
  %335 = vmatprep.subr.mxu0 0.0
  %336 = vmatpush1.msra.mxu0 0.0
  %337 = vmatprep.subr.mxu0 0.0
  %338 = vmatpush1.msra.mxu0 0.0
  %339 = vmatprep.subr.mxu0 0.0
  %340 = vmatpush1.msra.mxu0 0.0
  %341 = vmatprep.subr.mxu0 0.0
  %342 = vmatpush1.msra.mxu0 0.0
  %343 = vmatprep.subr.mxu0 0.0
  %344 = vmatpush1.msra.mxu0 0.0
  %345 = vmatprep.subr.mxu0 0.0
  %346 = vmatpush1.msra.mxu0 0.0
  %347 = vmatprep.subr.mxu0 0.0
  %348 = vmatpush1.msra.mxu0 0.0
  %349 = vmatprep.subr.mxu0 0.0
  %350 = vmatpush1.msra.mxu0 0.0
  %351 = vmatprep.subr.mxu0 0.0
  %352 = vmatpush1.msra.mxu0 0.0
  %353 = vmatprep.subr.mxu0 0.0
  %354 = vmatpush1.msra.mxu0 0.0
  %355 = vmatprep.subr.mxu0 0.0
  %356 = vmatpush1.msra.mxu0 0.0
  %357 = vmatprep.subr.mxu0 0.0
  %358 = vmatpush1.msra.mxu0 0.0
  %359 = vmatprep.subr.mxu0 0.0
  %360 = vmatpush1.msra.mxu0 %v90
  %361 = vmatprep.subr.mxu0 0.0
  %362 = vmatpush1.msra.mxu0 %v89
  %363 = vmatprep.subr.mxu0 0.0
  %364 = vmatpush1.msra.mxu0 %v88
  %365 = vmatprep.subr.mxu0 0.0
  %366 = vmatpush1.msra.mxu0 %v87
  %367 = vmatprep.subr.mxu0 0.0
  %368 = vmatpush2.msra.mxu0 0.0
  %369 = vmatprep.subr.mxu0 0.0
  %370 = vmatpush2.msra.mxu0 0.0
  %371 = vmatprep.subr.mxu0 0.0
  %372 = vmatpush2.msra.mxu0 0.0
  %373 = vmatprep.subr.mxu0 0.0
  %374 = vmatpush2.msra.mxu0 0.0
  %375 = vmatprep.subr.mxu0 0.0
  %376 = vmatpush2.msra.mxu0 0.0
  %377 = vmatprep.subr.mxu0 0.0
  %378 = vmatpush2.msra.mxu0 0.0
  %379 = vmatprep.subr.mxu0 0.0
  %380 = vmatpush2.msra.mxu0 0.0
  %381 = vmatprep.subr.mxu0 0.0
  %382 = vmatpush2.msra.mxu0 0.0
  %383 = vmatprep.subr.mxu0 0.0
  %384 = vmatpush2.msra.mxu0 0.0
  %385 = vmatprep.subr.mxu0 0.0
  %386 = vmatpush2.msra.mxu0 0.0
  %387 = vmatprep.subr.mxu0 0.0
  %388 = vmatpush2.msra.mxu0 0.0
  %389 = vmatprep.subr.mxu0 0.0
  %390 = vmatpush2.msra.mxu0 0.0
  %391 = vmatprep.subr.mxu0 0.0
  %392 = vmatpush2.msra.mxu0 0.0
  %393 = vmatprep.subr.mxu0 0.0
  %394 = vmatpush2.msra.mxu0 0.0
  %395 = vmatprep.subr.mxu0 0.0
  %396 = vmatpush2.msra.mxu0 0.0
  %397 = vmatprep.subr.mxu0 0.0
  %398 = vmatpush2.msra.mxu0 0.0
  %399 = vmatprep.mubr.f32.mxu0 0.0
  %400 = vmatmul.mubr.f32.gmra.mxu0 %v186
  %v401 = vpop.f32.mrf.mxu0
  %v402 = vadd.f32 %v332, %v401
  %v403 = vpop.f32.mrf.mxu0
  %404 = vdwg.mxu0
  %v406 = vlaneseq
  %v407 = vshrl.u32 %v406, 7
  %v408 = vsub.s32 0, %v407
  %v409 = vrot.slane %v108, %v408
  %v411 = vadd.f32 %v402, %v409
  %v413 = vlaneseq
  %v414 = vshrl.u32 %v413, 7
  %v415 = vsub.s32 0, %v414
  %v416 = vrot.slane %v109, %v415
  %418 = vmatprep.subr.mxu0 0.0
  %419 = vmatpush1.msra.mxu0 0.0
  %420 = vmatprep.subr.mxu0 0.0
  %421 = vmatpush1.msra.mxu0 0.0
  %422 = vmatprep.subr.mxu0 0.0
  %423 = vmatpush1.msra.mxu0 0.0
  %424 = vmatprep.subr.mxu0 0.0
  %425 = vmatpush1.msra.mxu0 0.0
  %426 = vmatprep.subr.mxu0 0.0
  %427 = vmatpush1.msra.mxu0 0.0
  %428 = vmatprep.subr.mxu0 0.0
  %429 = vmatpush1.msra.mxu0 0.0
  %430 = vmatprep.subr.mxu0 0.0
  %431 = vmatpush1.msra.mxu0 0.0
  %432 = vmatprep.subr.mxu0 0.0
  %433 = vmatpush1.msra.mxu0 0.0
  %434 = vmatprep.subr.mxu0 0.0
  %435 = vmatpush1.msra.mxu0 0.0
  %436 = vmatprep.subr.mxu0 0.0
  %437 = vmatpush1.msra.mxu0 0.0
  %438 = vmatprep.subr.mxu0 0.0
  %439 = vmatpush1.msra.mxu0 0.0
  %440 = vmatprep.subr.mxu0 0.0
  %441 = vmatpush1.msra.mxu0 0.0
  %442 = vmatprep.subr.mxu0 0.0
  %443 = vmatpush1.msra.mxu0 %v94
  %444 = vmatprep.subr.mxu0 0.0
  %445 = vmatpush1.msra.mxu0 %v93
  %446 = vmatprep.subr.mxu0 0.0
  %447 = vmatpush1.msra.mxu0 %v92
  %448 = vmatprep.subr.mxu0 0.0
  %449 = vmatpush1.msra.mxu0 %v91
  %450 = vmatprep.subr.mxu0 0.0
  %451 = vmatpush2.msra.mxu0 0.0
  %452 = vmatprep.subr.mxu0 0.0
  %453 = vmatpush2.msra.mxu0 0.0
  %454 = vmatprep.subr.mxu0 0.0
  %455 = vmatpush2.msra.mxu0 0.0
  %456 = vmatprep.subr.mxu0 0.0
  %457 = vmatpush2.msra.mxu0 0.0
  %458 = vmatprep.subr.mxu0 0.0
  %459 = vmatpush2.msra.mxu0 0.0
  %460 = vmatprep.subr.mxu0 0.0
  %461 = vmatpush2.msra.mxu0 0.0
  %462 = vmatprep.subr.mxu0 0.0
  %463 = vmatpush2.msra.mxu0 0.0
  %464 = vmatprep.subr.mxu0 0.0
  %465 = vmatpush2.msra.mxu0 0.0
  %466 = vmatprep.subr.mxu0 0.0
  %467 = vmatpush2.msra.mxu0 0.0
  %468 = vmatprep.subr.mxu0 0.0
  %469 = vmatpush2.msra.mxu0 0.0
  %470 = vmatprep.subr.mxu0 0.0
  %471 = vmatpush2.msra.mxu0 0.0
  %472 = vmatprep.subr.mxu0 0.0
  %473 = vmatpush2.msra.mxu0 0.0
  %474 = vmatprep.subr.mxu0 0.0
  %475 = vmatpush2.msra.mxu0 0.0
  %476 = vmatprep.subr.mxu0 0.0
  %477 = vmatpush2.msra.mxu0 0.0
  %478 = vmatprep.subr.mxu0 0.0
  %479 = vmatpush2.msra.mxu0 0.0
  %480 = vmatprep.subr.mxu0 0.0
  %481 = vmatpush2.msra.mxu0 0.0
  %482 = vmatprep.mubr.f32.mxu0 0.0
  %483 = vmatmul.mubr.f32.gmra.mxu0 %v186
  %v484 = vpop.f32.mrf.mxu0
  %v485 = vadd.f32 %v416, %v484
  %v486 = vpop.f32.mrf.mxu0
  %487 = vdwg.mxu0
  %v489 = vlaneseq
  %v490 = vshrl.u32 %v489, 7
  %v491 = vsub.s32 0, %v490
  %v492 = vrot.slane %v110, %v491
  %494 = vmatprep.subr.mxu0 0.0
  %495 = vmatpush1.msra.mxu0 0.0
  %496 = vmatprep.subr.mxu0 0.0
  %497 = vmatpush1.msra.mxu0 0.0
  %498 = vmatprep.subr.mxu0 0.0
  %499 = vmatpush1.msra.mxu0 0.0
  %500 = vmatprep.subr.mxu0 0.0
  %501 = vmatpush1.msra.mxu0 0.0
  %502 = vmatprep.subr.mxu0 0.0
  %503 = vmatpush1.msra.mxu0 0.0
  %504 = vmatprep.subr.mxu0 0.0
  %505 = vmatpush1.msra.mxu0 0.0
  %506 = vmatprep.subr.mxu0 0.0
  %507 = vmatpush1.msra.mxu0 0.0
  %508 = vmatprep.subr.mxu0 0.0
  %509 = vmatpush1.msra.mxu0 0.0
  %510 = vmatprep.subr.mxu0 0.0
  %511 = vmatpush1.msra.mxu0 0.0
  %512 = vmatprep.subr.mxu0 0.0
  %513 = vmatpush1.msra.mxu0 0.0
  %514 = vmatprep.subr.mxu0 0.0
  %515 = vmatpush1.msra.mxu0 0.0
  %516 = vmatprep.subr.mxu0 0.0
  %517 = vmatpush1.msra.mxu0 0.0
  %518 = vmatprep.subr.mxu0 0.0
  %519 = vmatpush1.msra.mxu0 %v106
  %520 = vmatprep.subr.mxu0 0.0
  %521 = vmatpush1.msra.mxu0 %v105
  %522 = vmatprep.subr.mxu0 0.0
  %523 = vmatpush1.msra.mxu0 %v104
  %524 = vmatprep.subr.mxu0 0.0
  %525 = vmatpush1.msra.mxu0 %v103
  %526 = vmatprep.subr.mxu0 0.0
  %527 = vmatpush2.msra.mxu0 0.0
  %528 = vmatprep.subr.mxu0 0.0
  %529 = vmatpush2.msra.mxu0 0.0
  %530 = vmatprep.subr.mxu0 0.0
  %531 = vmatpush2.msra.mxu0 0.0
  %532 = vmatprep.subr.mxu0 0.0
  %533 = vmatpush2.msra.mxu0 0.0
  %534 = vmatprep.subr.mxu0 0.0
  %535 = vmatpush2.msra.mxu0 0.0
  %536 = vmatprep.subr.mxu0 0.0
  %537 = vmatpush2.msra.mxu0 0.0
  %538 = vmatprep.subr.mxu0 0.0
  %539 = vmatpush2.msra.mxu0 0.0
  %540 = vmatprep.subr.mxu0 0.0
  %541 = vmatpush2.msra.mxu0 0.0
  %542 = vmatprep.subr.mxu0 0.0
  %543 = vmatpush2.msra.mxu0 0.0
  %544 = vmatprep.subr.mxu0 0.0
  %545 = vmatpush2.msra.mxu0 0.0
  %546 = vmatprep.subr.mxu0 0.0
  %547 = vmatpush2.msra.mxu0 0.0
  %548 = vmatprep.subr.mxu0 0.0
  %549 = vmatpush2.msra.mxu0 0.0
  %550 = vmatprep.subr.mxu0 0.0
  %551 = vmatpush2.msra.mxu0 0.0
  %552 = vmatprep.subr.mxu0 0.0
  %553 = vmatpush2.msra.mxu0 0.0
  %554 = vmatprep.subr.mxu0 0.0
  %555 = vmatpush2.msra.mxu0 0.0
  %556 = vmatprep.subr.mxu0 0.0
  %557 = vmatpush2.msra.mxu0 0.0
  %558 = vmatprep.mubr.f32.mxu0 0.0
  %559 = vmatmul.mubr.f32.gmra.mxu0 %v113
  %v560 = vpop.f32.mrf.mxu0
  %v561 = vadd.f32 %v492, %v560
  %v562 = vpop.f32.mrf.mxu0
  %563 = vdwg.mxu0
  %v564 = vxor.u32 %v264, 2147483648
  %v565 = vmul.f32 %v564, 1.442695
  %v566 = vpow.pop %v565
  %v567 = vadd.f32 %v566, 1.0
  %v568 = vrcp.pop %v567
  %v569 = vmul.f32 1.0, %v568
  %v570 = vxor.u32 %v411, 2147483648
  %v571 = vmul.f32 %v570, 1.442695
  %v572 = vpow.pop %v571
  %v573 = vadd.f32 %v572, 1.0
  %v574 = vrcp.pop %v573
  %v575 = vmul.f32 1.0, %v574
  %v576 = vmul.f32 %v569, %v561
  %v577 = vadd.f32 %v485, %v576
  %v578 = vtanh.pop %v577
  %v579 = vsub.f32 1.0, %v575
  %v580 = vmul.f32 %v579, %v578
  %v581 = vmul.f32 %v575, %v79
  %v582 = vadd.f32 %v580, %v581
  %v583 = vld [vmem:[%s12] sm:$0xff]
  %v584 = vld [vmem:[%s12 + $0x8] sm:$0xff]
  %v585 = vld [vmem:[%s12 + $0x10] sm:$0xff]
  %v586 = vld [vmem:[%s12 + $0x18] sm:$0xff]
  %v587 = vld [vmem:[%s13] sm:$0xff]
  %v588 = vld [vmem:[%s13 + $0x8] sm:$0xff]
  %v589 = vld [vmem:[%s13 + $0x10] sm:$0xff]
  %v590 = vld [vmem:[%s13 + $0x18] sm:$0xff]
  %v591 = vld [vmem:[%s14] sm:$0xff]
  %v592 = vld [vmem:[%s14 + $0x8] sm:$0xff]
  %v593 = vld [vmem:[%s14 + $0x10] sm:$0xff]
  %v594 = vld [vmem:[%s14 + $0x18] sm:$0xff]
  %v595 = vld [vmem:[%s15] sm:$0xff]
  %v596 = vld [vmem:[%s15 + $0x8] sm:$0xff]
  %v597 = vld [vmem:[%s15 + $0x10] sm:$0xff]
  %v598 = vld [vmem:[%s15 + $0x18] sm:$0xff]
  %v599 = vld [vmem:[%s16] sm:$0xff]
  %v600 = vld [vmem:[%s16 + $0x8] sm:$0xff]
  %v601 = vld [vmem:[%s16 + $0x10] sm:$0xff]
  %v602 = vld [vmem:[%s16 + $0x18] sm:$0xff]
  %v603 = vld [vmem:[%s17] sm:$0xff]
  %v604 = vld [vmem:[%s17 + $0x8] sm:$0xff]
  %v605 = vld [vmem:[%s17 + $0x10] sm:$0xff]
  %v606 = vld [vmem:[%s17 + $0x18] sm:$0xff]
  %v607 = vld [vmem:[%s18] sm:$0x1]
  %v608 = vld [vmem:[%s19] sm:$0x1]
  %v609 = vld [vmem:[%s20] sm:$0x1]
  %v610 = vld [vmem:[%s21] sm:$0x1]
  %v612 = vsel %vm111, %v81, 0
  %614 = vmatprep.subr.mxu0 0.0
  %615 = vmatpush1.msra.mxu0 0.0
  %616 = vmatprep.subr.mxu0 0.0
  %617 = vmatpush1.msra.mxu0 0.0
  %618 = vmatprep.subr.mxu0 0.0
  %619 = vmatpush1.msra.mxu0 0.0
  %620 = vmatprep.subr.mxu0 0.0
  %621 = vmatpush1.msra.mxu0 0.0
  %622 = vmatprep.subr.mxu0 0.0
  %623 = vmatpush1.msra.mxu0 0.0
  %624 = vmatprep.subr.mxu0 0.0
  %625 = vmatpush1.msra.mxu0 0.0
  %626 = vmatprep.subr.mxu0 0.0
  %627 = vmatpush1.msra.mxu0 0.0
  %628 = vmatprep.subr.mxu0 0.0
  %629 = vmatpush1.msra.mxu0 0.0
  %630 = vmatprep.subr.mxu0 0.0
  %631 = vmatpush1.msra.mxu0 0.0
  %632 = vmatprep.subr.mxu0 0.0
  %633 = vmatpush1.msra.mxu0 0.0
  %634 = vmatprep.subr.mxu0 0.0
  %635 = vmatpush1.msra.mxu0 0.0
  %636 = vmatprep.subr.mxu0 0.0
  %637 = vmatpush1.msra.mxu0 0.0
  %638 = vmatprep.subr.mxu0 0.0
  %639 = vmatpush1.msra.mxu0 %v598
  %640 = vmatprep.subr.mxu0 0.0
  %641 = vmatpush1.msra.mxu0 %v597
  %642 = vmatprep.subr.mxu0 0.0
  %643 = vmatpush1.msra.mxu0 %v596
  %644 = vmatprep.subr.mxu0 0.0
  %645 = vmatpush1.msra.mxu0 %v595
  %646 = vmatprep.subr.mxu0 0.0
  %647 = vmatpush2.msra.mxu0 0.0
  %648 = vmatprep.subr.mxu0 0.0
  %649 = vmatpush2.msra.mxu0 0.0
  %650 = vmatprep.subr.mxu0 0.0
  %651 = vmatpush2.msra.mxu0 0.0
  %652 = vmatprep.subr.mxu0 0.0
  %653 = vmatpush2.msra.mxu0 0.0
  %654 = vmatprep.subr.mxu0 0.0
  %655 = vmatpush2.msra.mxu0 0.0
  %656 = vmatprep.subr.mxu0 0.0
  %657 = vmatpush2.msra.mxu0 0.0
  %658 = vmatprep.subr.mxu0 0.0
  %659 = vmatpush2.msra.mxu0 0.0
  %660 = vmatprep.subr.mxu0 0.0
  %661 = vmatpush2.msra.mxu0 0.0
  %662 = vmatprep.subr.mxu0 0.0
  %663 = vmatpush2.msra.mxu0 0.0
  %664 = vmatprep.subr.mxu0 0.0
  %665 = vmatpush2.msra.mxu0 0.0
  %666 = vmatprep.subr.mxu0 0.0
  %667 = vmatpush2.msra.mxu0 0.0
  %668 = vmatprep.subr.mxu0 0.0
  %669 = vmatpush2.msra.mxu0 0.0
  %670 = vmatprep.subr.mxu0 0.0
  %671 = vmatpush2.msra.mxu0 0.0
  %672 = vmatprep.subr.mxu0 0.0
  %673 = vmatpush2.msra.mxu0 0.0
  %674 = vmatprep.subr.mxu0 0.0
  %675 = vmatpush2.msra.mxu0 0.0
  %676 = vmatprep.subr.mxu0 0.0
  %677 = vmatpush2.msra.mxu0 0.0
  %678 = vmatprep.mubr.f32.mxu0 0.0
  %679 = vmatmul.mubr.f32.gmra.mxu0 %v612
  %v680 = vpop.f32.mrf.mxu0
  %v681 = vadd.f32 0.0, %v680
  %v682 = vpop.f32.mrf.mxu0
  %683 = vdwg.mxu0
  %v685 = vsel %vm111, %v582, 0
  %687 = vmatprep.subr.mxu0 0.0
  %688 = vmatpush1.msra.mxu0 0.0
  %689 = vmatprep.subr.mxu0 0.0
  %690 = vmatpush1.msra.mxu0 0.0
  %691 = vmatprep.subr.mxu0 0.0
  %692 = vmatpush1.msra.mxu0 0.0
  %693 = vmatprep.subr.mxu0 0.0
  %694 = vmatpush1.msra.mxu0 0.0
  %695 = vmatprep.subr.mxu0 0.0
  %696 = vmatpush1.msra.mxu0 0.0
  %697 = vmatprep.subr.mxu0 0.0
  %698 = vmatpush1.msra.mxu0 0.0
  %699 = vmatprep.subr.mxu0 0.0
  %700 = vmatpush1.msra.mxu0 0.0
  %701 = vmatprep.subr.mxu0 0.0
  %702 = vmatpush1.msra.mxu0 0.0
  %703 = vmatprep.subr.mxu0 0.0
  %704 = vmatpush1.msra.mxu0 0.0
  %705 = vmatprep.subr.mxu0 0.0
  %706 = vmatpush1.msra.mxu0 0.0
  %707 = vmatprep.subr.mxu0 0.0
  %708 = vmatpush1.msra.mxu0 0.0
  %709 = vmatprep.subr.mxu0 0.0
  %710 = vmatpush1.msra.mxu0 0.0
  %711 = vmatprep.subr.mxu0 0.0
  %712 = vmatpush1.msra.mxu0 %v586
  %713 = vmatprep.subr.mxu0 0.0
  %714 = vmatpush1.msra.mxu0 %v585
  %715 = vmatprep.subr.mxu0 0.0
  %716 = vmatpush1.msra.mxu0 %v584
  %717 = vmatprep.subr.mxu0 0.0
  %718 = vmatpush1.msra.mxu0 %v583
  %719 = vmatprep.subr.mxu0 0.0
  %720 = vmatpush2.msra.mxu0 0.0
  %721 = vmatprep.subr.mxu0 0.0
  %722 = vmatpush2.msra.mxu0 0.0
  %723 = vmatprep.subr.mxu0 0.0
  %724 = vmatpush2.msra.mxu0 0.0
  %725 = vmatprep.subr.mxu0 0.0
  %726 = vmatpush2.msra.mxu0 0.0
  %727 = vmatprep.subr.mxu0 0.0
  %728 = vmatpush2.msra.mxu0 0.0
  %729 = vmatprep.subr.mxu0 0.0
  %730 = vmatpush2.msra.mxu0 0.0
  %731 = vmatprep.subr.mxu0 0.0
  %732 = vmatpush2.msra.mxu0 0.0
  %733 = vmatprep.subr.mxu0 0.0
  %734 = vmatpush2.msra.mxu0 0.0
  %735 = vmatprep.subr.mxu0 0.0
  %736 = vmatpush2.msra.mxu0 0.0
  %737 = vmatprep.subr.mxu0 0.0
  %738 = vmatpush2.msra.mxu0 0.0
  %739 = vmatprep.subr.mxu0 0.0
  %740 = vmatpush2.msra.mxu0 0.0
  %741 = vmatprep.subr.mxu0 0.0
  %742 = vmatpush2.msra.mxu0 0.0
  %743 = vmatprep.subr.mxu0 0.0
  %744 = vmatpush2.msra.mxu0 0.0
  %745 = vmatprep.subr.mxu0 0.0
  %746 = vmatpush2.msra.mxu0 0.0
  %747 = vmatprep.subr.mxu0 0.0
  %748 = vmatpush2.msra.mxu0 0.0
  %749 = vmatprep.subr.mxu0 0.0
  %750 = vmatpush2.msra.mxu0 0.0
  %751 = vmatprep.mubr.f32.mxu0 0.0
  %752 = vmatmul.mubr.f32.gmra.mxu0 %v685
  %v753 = vpop.f32.mrf.mxu0
  %v754 = vadd.f32 %v681, %v753
  %v755 = vpop.f32.mrf.mxu0
  %756 = vdwg.mxu0
  %v758 = vlaneseq
  %v759 = vshrl.u32 %v758, 7
  %v760 = vsub.s32 0, %v759
  %v761 = vrot.slane %v607, %v760
  %v763 = vadd.f32 %v754, %v761
  %764 = vmatprep.subr.mxu0 0.0
  %765 = vmatpush1.msra.mxu0 0.0
  %766 = vmatprep.subr.mxu0 0.0
  %767 = vmatpush1.msra.mxu0 0.0
  %768 = vmatprep.subr.mxu0 0.0
  %769 = vmatpush1.msra.mxu0 0.0
  %770 = vmatprep.subr.mxu0 0.0
  %771 = vmatpush1.msra.mxu0 0.0
  %772 = vmatprep.subr.mxu0 0.0
  %773 = vmatpush1.msra.mxu0 0.0
  %774 = vmatprep.subr.mxu0 0.0
  %775 = vmatpush1.msra.mxu0 0.0
  %776 = vmatprep.subr.mxu0 0.0
  %777 = vmatpush1.msra.mxu0 0.0
  %778 = vmatprep.subr.mxu0 0.0
  %779 = vmatpush1.msra.mxu0 0.0
  %780 = vmatprep.subr.mxu0 0.0
  %781 = vmatpush1.msra.mxu0 0.0
  %782 = vmatprep.subr.mxu0 0.0
  %783 = vmatpush1.msra.mxu0 0.0
  %784 = vmatprep.subr.mxu0 0.0
  %785 = vmatpush1.msra.mxu0 0.0
  %786 = vmatprep.subr.mxu0 0.0
  %787 = vmatpush1.msra.mxu0 0.0
  %788 = vmatprep.subr.mxu0 0.0
  %789 = vmatpush1.msra.mxu0 %v602
  %790 = vmatprep.subr.mxu0 0.0
  %791 = vmatpush1.msra.mxu0 %v601
  %792 = vmatprep.subr.mxu0 0.0
  %793 = vmatpush1.msra.mxu0 %v600
  %794 = vmatprep.subr.mxu0 0.0
  %795 = vmatpush1.msra.mxu0 %v599
  %796 = vmatprep.subr.mxu0 0.0
  %797 = vmatpush2.msra.mxu0 0.0
  %798 = vmatprep.subr.mxu0 0.0
  %799 = vmatpush2.msra.mxu0 0.0
  %800 = vmatprep.subr.mxu0 0.0
  %801 = vmatpush2.msra.mxu0 0.0
  %802 = vmatprep.subr.mxu0 0.0
  %803 = vmatpush2.msra.mxu0 0.0
  %804 = vmatprep.subr.mxu0 0.0
  %805 = vmatpush2.msra.mxu0 0.0
  %806 = vmatprep.subr.mxu0 0.0
  %807 = vmatpush2.msra.mxu0 0.0
  %808 = vmatprep.subr.mxu0 0.0
  %809 = vmatpush2.msra.mxu0 0.0
  %810 = vmatprep.subr.mxu0 0.0
  %811 = vmatpush2.msra.mxu0 0.0
  %812 = vmatprep.subr.mxu0 0.0
  %813 = vmatpush2.msra.mxu0 0.0
  %814 = vmatprep.subr.mxu0 0.0
  %815 = vmatpush2.msra.mxu0 0.0
  %816 = vmatprep.subr.mxu0 0.0
  %817 = vmatpush2.msra.mxu0 0.0
  %818 = vmatprep.subr.mxu0 0.0
  %819 = vmatpush2.msra.mxu0 0.0
  %820 = vmatprep.subr.mxu0 0.0
  %821 = vmatpush2.msra.mxu0 0.0
  %822 = vmatprep.subr.mxu0 0.0
  %823 = vmatpush2.msra.mxu0 0.0
  %824 = vmatprep.subr.mxu0 0.0
  %825 = vmatpush2.msra.mxu0 0.0
  %826 = vmatprep.subr.mxu0 0.0
  %827 = vmatpush2.msra.mxu0 0.0
  %828 = vmatprep.mubr.f32.mxu0 0.0
  %829 = vmatmul.mubr.f32.gmra.mxu0 %v612
  %v830 = vpop.f32.mrf.mxu0
  %v831 = vadd.f32 0.0, %v830
  %v832 = vpop.f32.mrf.mxu0
  %833 = vdwg.mxu0
  %834 = vmatprep.subr.mxu0 0.0
  %835 = vmatpush1.msra.mxu0 0.0
  %836 = vmatprep.subr.mxu0 0.0
  %837 = vmatpush1.msra.mxu0 0.0
  %838 = vmatprep.subr.mxu0 0.0
  %839 = vmatpush1.msra.mxu0 0.0
  %840 = vmatprep.subr.mxu0 0.0
  %841 = vmatpush1.msra.mxu0 0.0
  %842 = vmatprep.subr.mxu0 0.0
  %843 = vmatpush1.msra.mxu0 0.0
  %844 = vmatprep.subr.mxu0 0.0
  %845 = vmatpush1.msra.mxu0 0.0
  %846 = vmatprep.subr.mxu0 0.0
  %847 = vmatpush1.msra.mxu0 0.0
  %848 = vmatprep.subr.mxu0 0.0
  %849 = vmatpush1.msra.mxu0 0.0
  %850 = vmatprep.subr.mxu0 0.0
  %851 = vmatpush1.msra.mxu0 0.0
  %852 = vmatprep.subr.mxu0 0.0
  %853 = vmatpush1.msra.mxu0 0.0
  %854 = vmatprep.subr.mxu0 0.0
  %855 = vmatpush1.msra.mxu0 0.0
  %856 = vmatprep.subr.mxu0 0.0
  %857 = vmatpush1.msra.mxu0 0.0
  %858 = vmatprep.subr.mxu0 0.0
  %859 = vmatpush1.msra.mxu0 %v590
  %860 = vmatprep.subr.mxu0 0.0
  %861 = vmatpush1.msra.mxu0 %v589
  %862 = vmatprep.subr.mxu0 0.0
  %863 = vmatpush1.msra.mxu0 %v588
  %864 = vmatprep.subr.mxu0 0.0
  %865 = vmatpush1.msra.mxu0 %v587
  %866 = vmatprep.subr.mxu0 0.0
  %867 = vmatpush2.msra.mxu0 0.0
  %868 = vmatprep.subr.mxu0 0.0
  %869 = vmatpush2.msra.mxu0 0.0
  %870 = vmatprep.subr.mxu0 0.0
  %871 = vmatpush2.msra.mxu0 0.0
  %872 = vmatprep.subr.mxu0 0.0
  %873 = vmatpush2.msra.mxu0 0.0
  %874 = vmatprep.subr.mxu0 0.0
  %875 = vmatpush2.msra.mxu0 0.0
  %876 = vmatprep.subr.mxu0 0.0
  %877 = vmatpush2.msra.mxu0 0.0
  %878 = vmatprep.subr.mxu0 0.0
  %879 = vmatpush2.msra.mxu0 0.0
  %880 = vmatprep.subr.mxu0 0.0
  %881 = vmatpush2.msra.mxu0 0.0
  %882 = vmatprep.subr.mxu0 0.0
  %883 = vmatpush2.msra.mxu0 0.0
  %884 = vmatprep.subr.mxu0 0.0
  %885 = vmatpush2.msra.mxu0 0.0
  %886 = vmatprep.subr.mxu0 0.0
  %887 = vmatpush2.msra.mxu0 0.0
  %888 = vmatprep.subr.mxu0 0.0
  %889 = vmatpush2.msra.mxu0 0.0
  %890 = vmatprep.subr.mxu0 0.0
  %891 = vmatpush2.msra.mxu0 0.0
  %892 = vmatprep.subr.mxu0 0.0
  %893 = vmatpush2.msra.mxu0 0.0
  %894 = vmatprep.subr.mxu0 0.0
  %895 = vmatpush2.msra.mxu0 0.0
  %896 = vmatprep.subr.mxu0 0.0
  %897 = vmatpush2.msra.mxu0 0.0
  %898 = vmatprep.mubr.f32.mxu0 0.0
  %899 = vmatmul.mubr.f32.gmra.mxu0 %v685
  %v900 = vpop.f32.mrf.mxu0
  %v901 = vadd.f32 %v831, %v900
  %v902 = vpop.f32.mrf.mxu0
  %903 = vdwg.mxu0
  %v905 = vlaneseq
  %v906 = vshrl.u32 %v905, 7
  %v907 = vsub.s32 0, %v906
  %v908 = vrot.slane %v608, %v907
  %v910 = vadd.f32 %v901, %v908
  %v912 = vlaneseq
  %v913 = vshrl.u32 %v912, 7
  %v914 = vsub.s32 0, %v913
  %v915 = vrot.slane %v609, %v914
  %917 = vmatprep.subr.mxu0 0.0
  %918 = vmatpush1.msra.mxu0 0.0
  %919 = vmatprep.subr.mxu0 0.0
  %920 = vmatpush1.msra.mxu0 0.0
  %921 = vmatprep.subr.mxu0 0.0
  %922 = vmatpush1.msra.mxu0 0.0
  %923 = vmatprep.subr.mxu0 0.0
  %924 = vmatpush1.msra.mxu0 0.0
  %925 = vmatprep.subr.mxu0 0.0
  %926 = vmatpush1.msra.mxu0 0.0
  %927 = vmatprep.subr.mxu0 0.0
  %928 = vmatpush1.msra.mxu0 0.0
  %929 = vmatprep.subr.mxu0 0.0
  %930 = vmatpush1.msra.mxu0 0.0
  %931 = vmatprep.subr.mxu0 0.0
  %932 = vmatpush1.msra.mxu0 0.0
  %933 = vmatprep.subr.mxu0 0.0
  %934 = vmatpush1.msra.mxu0 0.0
  %935 = vmatprep.subr.mxu0 0.0
  %936 = vmatpush1.msra.mxu0 0.0
  %937 = vmatprep.subr.mxu0 0.0
  %938 = vmatpush1.msra.mxu0 0.0
  %939 = vmatprep.subr.mxu0 0.0
  %940 = vmatpush1.msra.mxu0 0.0
  %941 = vmatprep.subr.mxu0 0.0
  %942 = vmatpush1.msra.mxu0 %v594
  %943 = vmatprep.subr.mxu0 0.0
  %944 = vmatpush1.msra.mxu0 %v593
  %945 = vmatprep.subr.mxu0 0.0
  %946 = vmatpush1.msra.mxu0 %v592
  %947 = vmatprep.subr.mxu0 0.0
  %948 = vmatpush1.msra.mxu0 %v591
  %949 = vmatprep.subr.mxu0 0.0
  %950 = vmatpush2.msra.mxu0 0.0
  %951 = vmatprep.subr.mxu0 0.0
  %952 = vmatpush2.msra.mxu0 0.0
  %953 = vmatprep.subr.mxu0 0.0
  %954 = vmatpush2.msra.mxu0 0.0
  %955 = vmatprep.subr.mxu0 0.0
  %956 = vmatpush2.msra.mxu0 0.0
  %957 = vmatprep.subr.mxu0 0.0
  %958 = vmatpush2.msra.mxu0 0.0
  %959 = vmatprep.subr.mxu0 0.0
  %960 = vmatpush2.msra.mxu0 0.0
  %961 = vmatprep.subr.mxu0 0.0
  %962 = vmatpush2.msra.mxu0 0.0
  %963 = vmatprep.subr.mxu0 0.0
  %964 = vmatpush2.msra.mxu0 0.0
  %965 = vmatprep.subr.mxu0 0.0
  %966 = vmatpush2.msra.mxu0 0.0
  %967 = vmatprep.subr.mxu0 0.0
  %968 = vmatpush2.msra.mxu0 0.0
  %969 = vmatprep.subr.mxu0 0.0
  %970 = vmatpush2.msra.mxu0 0.0
  %971 = vmatprep.subr.mxu0 0.0
  %972 = vmatpush2.msra.mxu0 0.0
  %973 = vmatprep.subr.mxu0 0.0
  %974 = vmatpush2.msra.mxu0 0.0
  %975 = vmatprep.subr.mxu0 0.0
  %976 = vmatpush2.msra.mxu0 0.0
  %977 = vmatprep.subr.mxu0 0.0
  %978 = vmatpush2.msra.mxu0 0.0
  %979 = vmatprep.subr.mxu0 0.0
  %980 = vmatpush2.msra.mxu0 0.0
  %981 = vmatprep.mubr.f32.mxu0 0.0
  %982 = vmatmul.mubr.f32.gmra.mxu0 %v685
  %v983 = vpop.f32.mrf.mxu0
  %v984 = vadd.f32 %v915, %v983
  %v985 = vpop.f32.mrf.mxu0
  %986 = vdwg.mxu0
  %v988 = vlaneseq
  %v989 = vshrl.u32 %v988, 7
  %v990 = vsub.s32 0, %v989
  %v991 = vrot.slane %v610, %v990
  %993 = vmatprep.subr.mxu0 0.0
  %994 = vmatpush1.msra.mxu0 0.0
  %995 = vmatprep.subr.mxu0 0.0
  %996 = vmatpush1.msra.mxu0 0.0
  %997 = vmatprep.subr.mxu0 0.0
  %998 = vmatpush1.msra.mxu0 0.0
  %999 = vmatprep.subr.mxu0 0.0
  %1000 = vmatpush1.msra.mxu0 0.0
  %1001 = vmatprep.subr.mxu0 0.0
  %1002 = vmatpush1.msra.mxu0 0.0
  %1003 = vmatprep.subr.mxu0 0.0
  %1004 = vmatpush1.msra.mxu0 0.0
  %1005 = vmatprep.subr.mxu0 0.0
  %1006 = vmatpush1.msra.mxu0 0.0
  %1007 = vmatprep.subr.mxu0 0.0
  %1008 = vmatpush1.msra.mxu0 0.0
  %1009 = vmatprep.subr.mxu0 0.0
  %1010 = vmatpush1.msra.mxu0 0.0
  %1011 = vmatprep.subr.mxu0 0.0
  %1012 = vmatpush1.msra.mxu0 0.0
  %1013 = vmatprep.subr.mxu0 0.0
  %1014 = vmatpush1.msra.mxu0 0.0
  %1015 = vmatprep.subr.mxu0 0.0
  %1016 = vmatpush1.msra.mxu0 0.0
  %1017 = vmatprep.subr.mxu0 0.0
  %1018 = vmatpush1.msra.mxu0 %v606
  %1019 = vmatprep.subr.mxu0 0.0
  %1020 = vmatpush1.msra.mxu0 %v605
  %1021 = vmatprep.subr.mxu0 0.0
  %1022 = vmatpush1.msra.mxu0 %v604
  %1023 = vmatprep.subr.mxu0 0.0
  %1024 = vmatpush1.msra.mxu0 %v603
  %1025 = vmatprep.subr.mxu0 0.0
  %1026 = vmatpush2.msra.mxu0 0.0
  %1027 = vmatprep.subr.mxu0 0.0
  %1028 = vmatpush2.msra.mxu0 0.0
  %1029 = vmatprep.subr.mxu0 0.0
  %1030 = vmatpush2.msra.mxu0 0.0
  %1031 = vmatprep.subr.mxu0 0.0
  %1032 = vmatpush2.msra.mxu0 0.0
  %1033 = vmatprep.subr.mxu0 0.0
  %1034 = vmatpush2.msra.mxu0 0.0
  %1035 = vmatprep.subr.mxu0 0.0
  %1036 = vmatpush2.msra.mxu0 0.0
  %1037 = vmatprep.subr.mxu0 0.0
  %1038 = vmatpush2.msra.mxu0 0.0
  %1039 = vmatprep.subr.mxu0 0.0
  %1040 = vmatpush2.msra.mxu0 0.0
  %1041 = vmatprep.subr.mxu0 0.0
  %1042 = vmatpush2.msra.mxu0 0.0
  %1043 = vmatprep.subr.mxu0 0.0
  %1044 = vmatpush2.msra.mxu0 0.0
  %1045 = vmatprep.subr.mxu0 0.0
  %1046 = vmatpush2.msra.mxu0 0.0
  %1047 = vmatprep.subr.mxu0 0.0
  %1048 = vmatpush2.msra.mxu0 0.0
  %1049 = vmatprep.subr.mxu0 0.0
  %1050 = vmatpush2.msra.mxu0 0.0
  %1051 = vmatprep.subr.mxu0 0.0
  %1052 = vmatpush2.msra.mxu0 0.0
  %1053 = vmatprep.subr.mxu0 0.0
  %1054 = vmatpush2.msra.mxu0 0.0
  %1055 = vmatprep.subr.mxu0 0.0
  %1056 = vmatpush2.msra.mxu0 0.0
  %1057 = vmatprep.mubr.f32.mxu0 0.0
  %1058 = vmatmul.mubr.f32.gmra.mxu0 %v612
  %v1059 = vpop.f32.mrf.mxu0
  %v1060 = vadd.f32 %v991, %v1059
  %v1061 = vpop.f32.mrf.mxu0
  %1062 = vdwg.mxu0
  %v1063 = vxor.u32 %v763, 2147483648
  %v1064 = vmul.f32 %v1063, 1.442695
  %v1065 = vpow.pop %v1064
  %v1066 = vadd.f32 %v1065, 1.0
  %v1067 = vrcp.pop %v1066
  %v1068 = vmul.f32 1.0, %v1067
  %v1069 = vxor.u32 %v910, 2147483648
  %v1070 = vmul.f32 %v1069, 1.442695
  %v1071 = vpow.pop %v1070
  %v1072 = vadd.f32 %v1071, 1.0
  %v1073 = vrcp.pop %v1072
  %v1074 = vmul.f32 1.0, %v1073
  %v1075 = vmul.f32 %v1068, %v1060
  %v1076 = vadd.f32 %v984, %v1075
  %v1077 = vtanh.pop %v1076
  %v1078 = vsub.f32 1.0, %v1074
  %v1079 = vmul.f32 %v1078, %v1077
  %v1080 = vmul.f32 %v1074, %v81
  %v1081 = vadd.f32 %v1079, %v1080
  %v1082 = vld [vmem:[%s22] sm:$0xff]
  %v1083 = vld [vmem:[%s22 + $0x8] sm:$0xff]
  %v1084 = vld [vmem:[%s22 + $0x10] sm:$0xff]
  %v1085 = vld [vmem:[%s22 + $0x18] sm:$0xff]
  %v1086 = vld [vmem:[%s23] sm:$0x1]
  %v1088 = vlaneseq
  %v1089 = vshrl.u32 %v1088, 7
  %v1090 = vsub.s32 0, %v1089
  %v1091 = vrot.slane %v1086, %v1090
  %v1094 = vsel %vm111, %v1081, 0
  %1096 = vmatprep.subr.mxu0 0.0
  %1097 = vmatpush1.msra.mxu0 0.0
  %1098 = vmatprep.subr.mxu0 0.0
  %1099 = vmatpush1.msra.mxu0 0.0
  %1100 = vmatprep.subr.mxu0 0.0
  %1101 = vmatpush1.msra.mxu0 0.0
  %1102 = vmatprep.subr.mxu0 0.0
  %1103 = vmatpush1.msra.mxu0 0.0
  %1104 = vmatprep.subr.mxu0 0.0
  %1105 = vmatpush1.msra.mxu0 0.0
  %1106 = vmatprep.subr.mxu0 0.0
  %1107 = vmatpush1.msra.mxu0 0.0
  %1108 = vmatprep.subr.mxu0 0.0
  %1109 = vmatpush1.msra.mxu0 0.0
  %1110 = vmatprep.subr.mxu0 0.0
  %1111 = vmatpush1.msra.mxu0 0.0
  %1112 = vmatprep.subr.mxu0 0.0
  %1113 = vmatpush1.msra.mxu0 0.0
  %1114 = vmatprep.subr.mxu0 0.0
  %1115 = vmatpush1.msra.mxu0 0.0
  %1116 = vmatprep.subr.mxu0 0.0
  %1117 = vmatpush1.msra.mxu0 0.0
  %1118 = vmatprep.subr.mxu0 0.0
  %1119 = vmatpush1.msra.mxu0 0.0
  %1120 = vmatprep.subr.mxu0 0.0
  %1121 = vmatpush1.msra.mxu0 %v1085
  %1122 = vmatprep.subr.mxu0 0.0
  %1123 = vmatpush1.msra.mxu0 %v1084
  %1124 = vmatprep.subr.mxu0 0.0
  %1125 = vmatpush1.msra.mxu0 %v1083
  %1126 = vmatprep.subr.mxu0 0.0
  %1127 = vmatpush1.msra.mxu0 %v1082
  %1128 = vmatprep.subr.mxu0 0.0
  %1129 = vmatpush2.msra.mxu0 0.0
  %1130 = vmatprep.subr.mxu0 0.0
  %1131 = vmatpush2.msra.mxu0 0.0
  %1132 = vmatprep.subr.mxu0 0.0
  %1133 = vmatpush2.msra.mxu0 0.0
  %1134 = vmatprep.subr.mxu0 0.0
  %1135 = vmatpush2.msra.mxu0 0.0
  %1136 = vmatprep.subr.mxu0 0.0
  %1137 = vmatpush2.msra.mxu0 0.0
  %1138 = vmatprep.subr.mxu0 0.0
  %1139 = vmatpush2.msra.mxu0 0.0
  %1140 = vmatprep.subr.mxu0 0.0
  %1141 = vmatpush2.msra.mxu0 0.0
  %1142 = vmatprep.subr.mxu0 0.0
  %1143 = vmatpush2.msra.mxu0 0.0
  %1144 = vmatprep.subr.mxu0 0.0
  %1145 = vmatpush2.msra.mxu0 0.0
  %1146 = vmatprep.subr.mxu0 0.0
  %1147 = vmatpush2.msra.mxu0 0.0
  %1148 = vmatprep.subr.mxu0 0.0
  %1149 = vmatpush2.msra.mxu0 0.0
  %1150 = vmatprep.subr.mxu0 0.0
  %1151 = vmatpush2.msra.mxu0 0.0
  %1152 = vmatprep.subr.mxu0 0.0
  %1153 = vmatpush2.msra.mxu0 0.0
  %1154 = vmatprep.subr.mxu0 0.0
  %1155 = vmatpush2.msra.mxu0 0.0
  %1156 = vmatprep.subr.mxu0 0.0
  %1157 = vmatpush2.msra.mxu0 0.0
  %1158 = vmatprep.subr.mxu0 0.0
  %1159 = vmatpush2.msra.mxu0 0.0
  %1160 = vmatprep.mubr.f32.mxu0 0.0
  %1161 = vmatmul.mubr.f32.gmra.mxu0 %v1094
  %v1162 = vpop.f32.mrf.mxu0
  %v1163 = vadd.f32 %v1091, %v1162
  %v1164 = vpop.f32.mrf.mxu0
  %1165 = vdwg.mxu0
  %1166 = vst [vmem:[%s24] sm:$0xff] %v1163
  %s1167 = scalar_lea.vmem %s0, 8
  %v1168 = vld [vmem:[%s1167] sm:$0xff]
  %v1169 = vld [vmem:[%s2] sm:$0xff]
  %v1170 = vld [vmem:[%s2 + $0x8] sm:$0xff]
  %v1171 = vld [vmem:[%s2 + $0x10] sm:$0xff]
  %v1172 = vld [vmem:[%s2 + $0x18] sm:$0xff]
  %v1173 = vld [vmem:[%s3] sm:$0xff]
  %v1174 = vld [vmem:[%s3 + $0x8] sm:$0xff]
  %v1175 = vld [vmem:[%s3 + $0x10] sm:$0xff]
  %v1176 = vld [vmem:[%s3 + $0x18] sm:$0xff]
  %v1177 = vld [vmem:[%s4] sm:$0xff]
  %v1178 = vld [vmem:[%s4 + $0x8] sm:$0xff]
  %v1179 = vld [vmem:[%s4 + $0x10] sm:$0xff]
  %v1180 = vld [vmem:[%s4 + $0x18] sm:$0xff]
  %v1181 = vld [vmem:[%s5] sm:$0xff]
  %v1182 = vld [vmem:[%s5 + $0x8] sm:$0xff]
  %v1183 = vld [vmem:[%s5 + $0x10] sm:$0xff]
  %v1184 = vld [vmem:[%s5 + $0x18] sm:$0xff]
  %v1185 = vld [vmem:[%s6] sm:$0xff]
  %v1186 = vld [vmem:[%s6 + $0x8] sm:$0xff]
  %v1187 = vld [vmem:[%s6 + $0x10] sm:$0xff]
  %v1188 = vld [vmem:[%s6 + $0x18] sm:$0xff]
  %v1189 = vld [vmem:[%s7] sm:$0xff]
  %v1190 = vld [vmem:[%s7 + $0x8] sm:$0xff]
  %v1191 = vld [vmem:[%s7 + $0x10] sm:$0xff]
  %v1192 = vld [vmem:[%s7 + $0x18] sm:$0xff]
  %v1193 = vld [vmem:[%s8] sm:$0x1]
  %v1194 = vld [vmem:[%s9] sm:$0x1]
  %v1195 = vld [vmem:[%s10] sm:$0x1]
  %v1196 = vld [vmem:[%s11] sm:$0x1]
  %1197 = vmatprep.subr.mxu0 0.0
  %1198 = vmatpush1.msra.mxu0 0.0
  %1199 = vmatprep.subr.mxu0 0.0
  %1200 = vmatpush1.msra.mxu0 0.0
  %1201 = vmatprep.subr.mxu0 0.0
  %1202 = vmatpush1.msra.mxu0 0.0
  %1203 = vmatprep.subr.mxu0 0.0
  %1204 = vmatpush1.msra.mxu0 0.0
  %1205 = vmatprep.subr.mxu0 0.0
  %1206 = vmatpush1.msra.mxu0 0.0
  %1207 = vmatprep.subr.mxu0 0.0
  %1208 = vmatpush1.msra.mxu0 0.0
  %1209 = vmatprep.subr.mxu0 0.0
  %1210 = vmatpush1.msra.mxu0 0.0
  %1211 = vmatprep.subr.mxu0 0.0
  %1212 = vmatpush1.msra.mxu0 0.0
  %1213 = vmatprep.subr.mxu0 0.0
  %1214 = vmatpush1.msra.mxu0 0.0
  %1215 = vmatprep.subr.mxu0 0.0
  %1216 = vmatpush1.msra.mxu0 0.0
  %1217 = vmatprep.subr.mxu0 0.0
  %1218 = vmatpush1.msra.mxu0 0.0
  %1219 = vmatprep.subr.mxu0 0.0
  %1220 = vmatpush1.msra.mxu0 0.0
  %1221 = vmatprep.subr.mxu0 0.0
  %1222 = vmatpush1.msra.mxu0 %v1184
  %1223 = vmatprep.subr.mxu0 0.0
  %1224 = vmatpush1.msra.mxu0 %v1183
  %1225 = vmatprep.subr.mxu0 0.0
  %1226 = vmatpush1.msra.mxu0 %v1182
  %1227 = vmatprep.subr.mxu0 0.0
  %1228 = vmatpush1.msra.mxu0 %v1181
  %1229 = vmatprep.subr.mxu0 0.0
  %1230 = vmatpush2.msra.mxu0 0.0
  %1231 = vmatprep.subr.mxu0 0.0
  %1232 = vmatpush2.msra.mxu0 0.0
  %1233 = vmatprep.subr.mxu0 0.0
  %1234 = vmatpush2.msra.mxu0 0.0
  %1235 = vmatprep.subr.mxu0 0.0
  %1236 = vmatpush2.msra.mxu0 0.0
  %1237 = vmatprep.subr.mxu0 0.0
  %1238 = vmatpush2.msra.mxu0 0.0
  %1239 = vmatprep.subr.mxu0 0.0
  %1240 = vmatpush2.msra.mxu0 0.0
  %1241 = vmatprep.subr.mxu0 0.0
  %1242 = vmatpush2.msra.mxu0 0.0
  %1243 = vmatprep.subr.mxu0 0.0
  %1244 = vmatpush2.msra.mxu0 0.0
  %1245 = vmatprep.subr.mxu0 0.0
  %1246 = vmatpush2.msra.mxu0 0.0
  %1247 = vmatprep.subr.mxu0 0.0
  %1248 = vmatpush2.msra.mxu0 0.0
  %1249 = vmatprep.subr.mxu0 0.0
  %1250 = vmatpush2.msra.mxu0 0.0
  %1251 = vmatprep.subr.mxu0 0.0
  %1252 = vmatpush2.msra.mxu0 0.0
  %1253 = vmatprep.subr.mxu0 0.0
  %1254 = vmatpush2.msra.mxu0 0.0
  %1255 = vmatprep.subr.mxu0 0.0
  %1256 = vmatpush2.msra.mxu0 0.0
  %1257 = vmatprep.subr.mxu0 0.0
  %1258 = vmatpush2.msra.mxu0 0.0
  %1259 = vmatprep.subr.mxu0 0.0
  %1260 = vmatpush2.msra.mxu0 0.0
  %1261 = vmatprep.mubr.f32.mxu0 0.0
  %1262 = vmatmul.mubr.f32.gmra.mxu0 %v685
  %v1263 = vpop.f32.mrf.mxu0
  %v1264 = vadd.f32 0.0, %v1263
  %v1265 = vpop.f32.mrf.mxu0
  %1266 = vdwg.mxu0
  %v1268 = vsel %vm111, %v1168, 0
  %1270 = vmatprep.subr.mxu0 0.0
  %1271 = vmatpush1.msra.mxu0 0.0
  %1272 = vmatprep.subr.mxu0 0.0
  %1273 = vmatpush1.msra.mxu0 0.0
  %1274 = vmatprep.subr.mxu0 0.0
  %1275 = vmatpush1.msra.mxu0 0.0
  %1276 = vmatprep.subr.mxu0 0.0
  %1277 = vmatpush1.msra.mxu0 0.0
  %1278 = vmatprep.subr.mxu0 0.0
  %1279 = vmatpush1.msra.mxu0 0.0
  %1280 = vmatprep.subr.mxu0 0.0
  %1281 = vmatpush1.msra.mxu0 0.0
  %1282 = vmatprep.subr.mxu0 0.0
  %1283 = vmatpush1.msra.mxu0 0.0
  %1284 = vmatprep.subr.mxu0 0.0
  %1285 = vmatpush1.msra.mxu0 0.0
  %1286 = vmatprep.subr.mxu0 0.0
  %1287 = vmatpush1.msra.mxu0 0.0
  %1288 = vmatprep.subr.mxu0 0.0
  %1289 = vmatpush1.msra.mxu0 0.0
  %1290 = vmatprep.subr.mxu0 0.0
  %1291 = vmatpush1.msra.mxu0 0.0
  %1292 = vmatprep.subr.mxu0 0.0
  %1293 = vmatpush1.msra.mxu0 0.0
  %1294 = vmatprep.subr.mxu0 0.0
  %1295 = vmatpush1.msra.mxu0 %v1172
  %1296 = vmatprep.subr.mxu0 0.0
  %1297 = vmatpush1.msra.mxu0 %v1171
  %1298 = vmatprep.subr.mxu0 0.0
  %1299 = vmatpush1.msra.mxu0 %v1170
  %1300 = vmatprep.subr.mxu0 0.0
  %1301 = vmatpush1.msra.mxu0 %v1169
  %1302 = vmatprep.subr.mxu0 0.0
  %1303 = vmatpush2.msra.mxu0 0.0
  %1304 = vmatprep.subr.mxu0 0.0
  %1305 = vmatpush2.msra.mxu0 0.0
  %1306 = vmatprep.subr.mxu0 0.0
  %1307 = vmatpush2.msra.mxu0 0.0
  %1308 = vmatprep.subr.mxu0 0.0
  %1309 = vmatpush2.msra.mxu0 0.0
  %1310 = vmatprep.subr.mxu0 0.0
  %1311 = vmatpush2.msra.mxu0 0.0
  %1312 = vmatprep.subr.mxu0 0.0
  %1313 = vmatpush2.msra.mxu0 0.0
  %1314 = vmatprep.subr.mxu0 0.0
  %1315 = vmatpush2.msra.mxu0 0.0
  %1316 = vmatprep.subr.mxu0 0.0
  %1317 = vmatpush2.msra.mxu0 0.0
  %1318 = vmatprep.subr.mxu0 0.0
  %1319 = vmatpush2.msra.mxu0 0.0
  %1320 = vmatprep.subr.mxu0 0.0
  %1321 = vmatpush2.msra.mxu0 0.0
  %1322 = vmatprep.subr.mxu0 0.0
  %1323 = vmatpush2.msra.mxu0 0.0
  %1324 = vmatprep.subr.mxu0 0.0
  %1325 = vmatpush2.msra.mxu0 0.0
  %1326 = vmatprep.subr.mxu0 0.0
  %1327 = vmatpush2.msra.mxu0 0.0
  %1328 = vmatprep.subr.mxu0 0.0
  %1329 = vmatpush2.msra.mxu0 0.0
  %1330 = vmatprep.subr.mxu0 0.0
  %1331 = vmatpush2.msra.mxu0 0.0
  %1332 = vmatprep.subr.mxu0 0.0
  %1333 = vmatpush2.msra.mxu0 0.0
  %1334 = vmatprep.mubr.f32.mxu0 0.0
  %1335 = vmatmul.mubr.f32.gmra.mxu0 %v1268
  %v1336 = vpop.f32.mrf.mxu0
  %v1337 = vadd.f32 %v1264, %v1336
  %v1338 = vpop.f32.mrf.mxu0
  %1339 = vdwg.mxu0
  %v1341 = vlaneseq
  %v1342 = vshrl.u32 %v1341, 7
  %v1343 = vsub.s32 0, %v1342
  %v1344 = vrot.slane %v1193, %v1343
  %v1346 = vadd.f32 %v1337, %v1344
  %1347 = vmatprep.subr.mxu0 0.0
  %1348 = vmatpush1.msra.mxu0 0.0
  %1349 = vmatprep.subr.mxu0 0.0
  %1350 = vmatpush1.msra.mxu0 0.0
  %1351 = vmatprep.subr.mxu0 0.0
  %1352 = vmatpush1.msra.mxu0 0.0
  %1353 = vmatprep.subr.mxu0 0.0
  %1354 = vmatpush1.msra.mxu0 0.0
  %1355 = vmatprep.subr.mxu0 0.0
  %1356 = vmatpush1.msra.mxu0 0.0
  %1357 = vmatprep.subr.mxu0 0.0
  %1358 = vmatpush1.msra.mxu0 0.0
  %1359 = vmatprep.subr.mxu0 0.0
  %1360 = vmatpush1.msra.mxu0 0.0
  %1361 = vmatprep.subr.mxu0 0.0
  %1362 = vmatpush1.msra.mxu0 0.0
  %1363 = vmatprep.subr.mxu0 0.0
  %1364 = vmatpush1.msra.mxu0 0.0
  %1365 = vmatprep.subr.mxu0 0.0
  %1366 = vmatpush1.msra.mxu0 0.0
  %1367 = vmatprep.subr.mxu0 0.0
  %1368 = vmatpush1.msra.mxu0 0.0
  %1369 = vmatprep.subr.mxu0 0.0
  %1370 = vmatpush1.msra.mxu0 0.0
  %1371 = vmatprep.subr.mxu0 0.0
  %1372 = vmatpush1.msra.mxu0 %v1188
  %1373 = vmatprep.subr.mxu0 0.0
  %1374 = vmatpush1.msra.mxu0 %v1187
  %1375 = vmatprep.subr.mxu0 0.0
  %1376 = vmatpush1.msra.mxu0 %v1186
  %1377 = vmatprep.subr.mxu0 0.0
  %1378 = vmatpush1.msra.mxu0 %v1185
  %1379 = vmatprep.subr.mxu0 0.0
  %1380 = vmatpush2.msra.mxu0 0.0
  %1381 = vmatprep.subr.mxu0 0.0
  %1382 = vmatpush2.msra.mxu0 0.0
  %1383 = vmatprep.subr.mxu0 0.0
  %1384 = vmatpush2.msra.mxu0 0.0
  %1385 = vmatprep.subr.mxu0 0.0
  %1386 = vmatpush2.msra.mxu0 0.0
  %1387 = vmatprep.subr.mxu0 0.0
  %1388 = vmatpush2.msra.mxu0 0.0
  %1389 = vmatprep.subr.mxu0 0.0
  %1390 = vmatpush2.msra.mxu0 0.0
  %1391 = vmatprep.subr.mxu0 0.0
  %1392 = vmatpush2.msra.mxu0 0.0
  %1393 = vmatprep.subr.mxu0 0.0
  %1394 = vmatpush2.msra.mxu0 0.0
  %1395 = vmatprep.subr.mxu0 0.0
  %1396 = vmatpush2.msra.mxu0 0.0
  %1397 = vmatprep.subr.mxu0 0.0
  %1398 = vmatpush2.msra.mxu0 0.0
  %1399 = vmatprep.subr.mxu0 0.0
  %1400 = vmatpush2.msra.mxu0 0.0
  %1401 = vmatprep.subr.mxu0 0.0
  %1402 = vmatpush2.msra.mxu0 0.0
  %1403 = vmatprep.subr.mxu0 0.0
  %1404 = vmatpush2.msra.mxu0 0.0
  %1405 = vmatprep.subr.mxu0 0.0
  %1406 = vmatpush2.msra.mxu0 0.0
  %1407 = vmatprep.subr.mxu0 0.0
  %1408 = vmatpush2.msra.mxu0 0.0
  %1409 = vmatprep.subr.mxu0 0.0
  %1410 = vmatpush2.msra.mxu0 0.0
  %1411 = vmatprep.mubr.f32.mxu0 0.0
  %1412 = vmatmul.mubr.f32.gmra.mxu0 %v685
  %v1413 = vpop.f32.mrf.mxu0
  %v1414 = vadd.f32 0.0, %v1413
  %v1415 = vpop.f32.mrf.mxu0
  %1416 = vdwg.mxu0
  %1417 = vmatprep.subr.mxu0 0.0
  %1418 = vmatpush1.msra.mxu0 0.0
  %1419 = vmatprep.subr.mxu0 0.0
  %1420 = vmatpush1.msra.mxu0 0.0
  %1421 = vmatprep.subr.mxu0 0.0
  %1422 = vmatpush1.msra.mxu0 0.0
  %1423 = vmatprep.subr.mxu0 0.0
  %1424 = vmatpush1.msra.mxu0 0.0
  %1425 = vmatprep.subr.mxu0 0.0
  %1426 = vmatpush1.msra.mxu0 0.0
  %1427 = vmatprep.subr.mxu0 0.0
  %1428 = vmatpush1.msra.mxu0 0.0
  %1429 = vmatprep.subr.mxu0 0.0
  %1430 = vmatpush1.msra.mxu0 0.0
  %1431 = vmatprep.subr.mxu0 0.0
  %1432 = vmatpush1.msra.mxu0 0.0
  %1433 = vmatprep.subr.mxu0 0.0
  %1434 = vmatpush1.msra.mxu0 0.0
  %1435 = vmatprep.subr.mxu0 0.0
  %1436 = vmatpush1.msra.mxu0 0.0
  %1437 = vmatprep.subr.mxu0 0.0
  %1438 = vmatpush1.msra.mxu0 0.0
  %1439 = vmatprep.subr.mxu0 0.0
  %1440 = vmatpush1.msra.mxu0 0.0
  %1441 = vmatprep.subr.mxu0 0.0
  %1442 = vmatpush1.msra.mxu0 %v1176
  %1443 = vmatprep.subr.mxu0 0.0
  %1444 = vmatpush1.msra.mxu0 %v1175
  %1445 = vmatprep.subr.mxu0 0.0
  %1446 = vmatpush1.msra.mxu0 %v1174
  %1447 = vmatprep.subr.mxu0 0.0
  %1448 = vmatpush1.msra.mxu0 %v1173
  %1449 = vmatprep.subr.mxu0 0.0
  %1450 = vmatpush2.msra.mxu0 0.0
  %1451 = vmatprep.subr.mxu0 0.0
  %1452 = vmatpush2.msra.mxu0 0.0
  %1453 = vmatprep.subr.mxu0 0.0
  %1454 = vmatpush2.msra.mxu0 0.0
  %1455 = vmatprep.subr.mxu0 0.0
  %1456 = vmatpush2.msra.mxu0 0.0
  %1457 = vmatprep.subr.mxu0 0.0
  %1458 = vmatpush2.msra.mxu0 0.0
  %1459 = vmatprep.subr.mxu0 0.0
  %1460 = vmatpush2.msra.mxu0 0.0
  %1461 = vmatprep.subr.mxu0 0.0
  %1462 = vmatpush2.msra.mxu0 0.0
  %1463 = vmatprep.subr.mxu0 0.0
  %1464 = vmatpush2.msra.mxu0 0.0
  %1465 = vmatprep.subr.mxu0 0.0
  %1466 = vmatpush2.msra.mxu0 0.0
  %1467 = vmatprep.subr.mxu0 0.0
  %1468 = vmatpush2.msra.mxu0 0.0
  %1469 = vmatprep.subr.mxu0 0.0
  %1470 = vmatpush2.msra.mxu0 0.0
  %1471 = vmatprep.subr.mxu0 0.0
  %1472 = vmatpush2.msra.mxu0 0.0
  %1473 = vmatprep.subr.mxu0 0.0
  %1474 = vmatpush2.msra.mxu0 0.0
  %1475 = vmatprep.subr.mxu0 0.0
  %1476 = vmatpush2.msra.mxu0 0.0
  %1477 = vmatprep.subr.mxu0 0.0
  %1478 = vmatpush2.msra.mxu0 0.0
  %1479 = vmatprep.subr.mxu0 0.0
  %1480 = vmatpush2.msra.mxu0 0.0
  %1481 = vmatprep.mubr.f32.mxu0 0.0
  %1482 = vmatmul.mubr.f32.gmra.mxu0 %v1268
  %v1483 = vpop.f32.mrf.mxu0
  %v1484 = vadd.f32 %v1414, %v1483
  %v1485 = vpop.f32.mrf.mxu0
  %1486 = vdwg.mxu0
  %v1488 = vlaneseq
  %v1489 = vshrl.u32 %v1488, 7
  %v1490 = vsub.s32 0, %v1489
  %v1491 = vrot.slane %v1194, %v1490
  %v1493 = vadd.f32 %v1484, %v1491
  %v1495 = vlaneseq
  %v1496 = vshrl.u32 %v1495, 7
  %v1497 = vsub.s32 0, %v1496
  %v1498 = vrot.slane %v1195, %v1497
  %1500 = vmatprep.subr.mxu0 0.0
  %1501 = vmatpush1.msra.mxu0 0.0
  %1502 = vmatprep.subr.mxu0 0.0
  %1503 = vmatpush1.msra.mxu0 0.0
  %1504 = vmatprep.subr.mxu0 0.0
  %1505 = vmatpush1.msra.mxu0 0.0
  %1506 = vmatprep.subr.mxu0 0.0
  %1507 = vmatpush1.msra.mxu0 0.0
  %1508 = vmatprep.subr.mxu0 0.0
  %1509 = vmatpush1.msra.mxu0 0.0
  %1510 = vmatprep.subr.mxu0 0.0
  %1511 = vmatpush1.msra.mxu0 0.0
  %1512 = vmatprep.subr.mxu0 0.0
  %1513 = vmatpush1.msra.mxu0 0.0
  %1514 = vmatprep.subr.mxu0 0.0
  %1515 = vmatpush1.msra.mxu0 0.0
  %1516 = vmatprep.subr.mxu0 0.0
  %1517 = vmatpush1.msra.mxu0 0.0
  %1518 = vmatprep.subr.mxu0 0.0
  %1519 = vmatpush1.msra.mxu0 0.0
  %1520 = vmatprep.subr.mxu0 0.0
  %1521 = vmatpush1.msra.mxu0 0.0
  %1522 = vmatprep.subr.mxu0 0.0
  %1523 = vmatpush1.msra.mxu0 0.0
  %1524 = vmatprep.subr.mxu0 0.0
  %1525 = vmatpush1.msra.mxu0 %v1180
  %1526 = vmatprep.subr.mxu0 0.0
  %1527 = vmatpush1.msra.mxu0 %v1179
  %1528 = vmatprep.subr.mxu0 0.0
  %1529 = vmatpush1.msra.mxu0 %v1178
  %1530 = vmatprep.subr.mxu0 0.0
  %1531 = vmatpush1.msra.mxu0 %v1177
  %1532 = vmatprep.subr.mxu0 0.0
  %1533 = vmatpush2.msra.mxu0 0.0
  %1534 = vmatprep.subr.mxu0 0.0
  %1535 = vmatpush2.msra.mxu0 0.0
  %1536 = vmatprep.subr.mxu0 0.0
  %1537 = vmatpush2.msra.mxu0 0.0
  %1538 = vmatprep.subr.mxu0 0.0
  %1539 = vmatpush2.msra.mxu0 0.0
  %1540 = vmatprep.subr.mxu0 0.0
  %1541 = vmatpush2.msra.mxu0 0.0
  %1542 = vmatprep.subr.mxu0 0.0
  %1543 = vmatpush2.msra.mxu0 0.0
  %1544 = vmatprep.subr.mxu0 0.0
  %1545 = vmatpush2.msra.mxu0 0.0
  %1546 = vmatprep.subr.mxu0 0.0
  %1547 = vmatpush2.msra.mxu0 0.0
  %1548 = vmatprep.subr.mxu0 0.0
  %1549 = vmatpush2.msra.mxu0 0.0
  %1550 = vmatprep.subr.mxu0 0.0
  %1551 = vmatpush2.msra.mxu0 0.0
  %1552 = vmatprep.subr.mxu0 0.0
  %1553 = vmatpush2.msra.mxu0 0.0
  %1554 = vmatprep.subr.mxu0 0.0
  %1555 = vmatpush2.msra.mxu0 0.0
  %1556 = vmatprep.subr.mxu0 0.0
  %1557 = vmatpush2.msra.mxu0 0.0
  %1558 = vmatprep.subr.mxu0 0.0
  %1559 = vmatpush2.msra.mxu0 0.0
  %1560 = vmatprep.subr.mxu0 0.0
  %1561 = vmatpush2.msra.mxu0 0.0
  %1562 = vmatprep.subr.mxu0 0.0
  %1563 = vmatpush2.msra.mxu0 0.0
  %1564 = vmatprep.mubr.f32.mxu0 0.0
  %1565 = vmatmul.mubr.f32.gmra.mxu0 %v1268
  %v1566 = vpop.f32.mrf.mxu0
  %v1567 = vadd.f32 %v1498, %v1566
  %v1568 = vpop.f32.mrf.mxu0
  %1569 = vdwg.mxu0
  %v1571 = vlaneseq
  %v1572 = vshrl.u32 %v1571, 7
  %v1573 = vsub.s32 0, %v1572
  %v1574 = vrot.slane %v1196, %v1573
  %1576 = vmatprep.subr.mxu0 0.0
  %1577 = vmatpush1.msra.mxu0 0.0
  %1578 = vmatprep.subr.mxu0 0.0
  %1579 = vmatpush1.msra.mxu0 0.0
  %1580 = vmatprep.subr.mxu0 0.0
  %1581 = vmatpush1.msra.mxu0 0.0
  %1582 = vmatprep.subr.mxu0 0.0
  %1583 = vmatpush1.msra.mxu0 0.0
  %1584 = vmatprep.subr.mxu0 0.0
  %1585 = vmatpush1.msra.mxu0 0.0
  %1586 = vmatprep.subr.mxu0 0.0
  %1587 = vmatpush1.msra.mxu0 0.0
  %1588 = vmatprep.subr.mxu0 0.0
  %1589 = vmatpush1.msra.mxu0 0.0
  %1590 = vmatprep.subr.mxu0 0.0
  %1591 = vmatpush1.msra.mxu0 0.0
  %1592 = vmatprep.subr.mxu0 0.0
  %1593 = vmatpush1.msra.mxu0 0.0
  %1594 = vmatprep.subr.mxu0 0.0
  %1595 = vmatpush1.msra.mxu0 0.0
  %1596 = vmatprep.subr.mxu0 0.0
  %1597 = vmatpush1.msra.mxu0 0.0
  %1598 = vmatprep.subr.mxu0 0.0
  %1599 = vmatpush1.msra.mxu0 0.0
  %1600 = vmatprep.subr.mxu0 0.0
  %1601 = vmatpush1.msra.mxu0 %v1192
  %1602 = vmatprep.subr.mxu0 0.0
  %1603 = vmatpush1.msra.mxu0 %v1191
  %1604 = vmatprep.subr.mxu0 0.0
  %1605 = vmatpush1.msra.mxu0 %v1190
  %1606 = vmatprep.subr.mxu0 0.0
  %1607 = vmatpush1.msra.mxu0 %v1189
  %1608 = vmatprep.subr.mxu0 0.0
  %1609 = vmatpush2.msra.mxu0 0.0
  %1610 = vmatprep.subr.mxu0 0.0
  %1611 = vmatpush2.msra.mxu0 0.0
  %1612 = vmatprep.subr.mxu0 0.0
  %1613 = vmatpush2.msra.mxu0 0.0
  %1614 = vmatprep.subr.mxu0 0.0
  %1615 = vmatpush2.msra.mxu0 0.0
  %1616 = vmatprep.subr.mxu0 0.0
  %1617 = vmatpush2.msra.mxu0 0.0
  %1618 = vmatprep.subr.mxu0 0.0
  %1619 = vmatpush2.msra.mxu0 0.0
  %1620 = vmatprep.subr.mxu0 0.0
  %1621 = vmatpush2.msra.mxu0 0.0
  %1622 = vmatprep.subr.mxu0 0.0
  %1623 = vmatpush2.msra.mxu0 0.0
  %1624 = vmatprep.subr.mxu0 0.0
  %1625 = vmatpush2.msra.mxu0 0.0
  %1626 = vmatprep.subr.mxu0 0.0
  %1627 = vmatpush2.msra.mxu0 0.0
  %1628 = vmatprep.subr.mxu0 0.0
  %1629 = vmatpush2.msra.mxu0 0.0
  %1630 = vmatprep.subr.mxu0 0.0
  %1631 = vmatpush2.msra.mxu0 0.0
  %1632 = vmatprep.subr.mxu0 0.0
  %1633 = vmatpush2.msra.mxu0 0.0
  %1634 = vmatprep.subr.mxu0 0.0
  %1635 = vmatpush2.msra.mxu0 0.0
  %1636 = vmatprep.subr.mxu0 0.0
  %1637 = vmatpush2.msra.mxu0 0.0
  %1638 = vmatprep.subr.mxu0 0.0
  %1639 = vmatpush2.msra.mxu0 0.0
  %1640 = vmatprep.mubr.f32.mxu0 0.0
  %1641 = vmatmul.mubr.f32.gmra.mxu0 %v685
  %v1642 = vpop.f32.mrf.mxu0
  %v1643 = vadd.f32 %v1574, %v1642
  %v1644 = vpop.f32.mrf.mxu0
  %1645 = vdwg.mxu0
  %v1646 = vxor.u32 %v1346, 2147483648
  %v1647 = vmul.f32 %v1646, 1.442695
  %v1648 = vpow.pop %v1647
  %v1649 = vadd.f32 %v1648, 1.0
  %v1650 = vrcp.pop %v1649
  %v1651 = vmul.f32 1.0, %v1650
  %v1652 = vxor.u32 %v1493, 2147483648
  %v1653 = vmul.f32 %v1652, 1.442695
  %v1654 = vpow.pop %v1653
  %v1655 = vadd.f32 %v1654, 1.0
  %v1656 = vrcp.pop %v1655
  %v1657 = vmul.f32 1.0, %v1656
  %v1658 = vmul.f32 %v1651, %v1643
  %v1659 = vadd.f32 %v1567, %v1658
  %v1660 = vtanh.pop %v1659
  %v1661 = vsub.f32 1.0, %v1657
  %v1662 = vmul.f32 %v1661, %v1660
  %v1663 = vmul.f32 %v1657, %v582
  %v1664 = vadd.f32 %v1662, %v1663
  %v1665 = vld [vmem:[%s12] sm:$0xff]
  %v1666 = vld [vmem:[%s12 + $0x8] sm:$0xff]
  %v1667 = vld [vmem:[%s12 + $0x10] sm:$0xff]
  %v1668 = vld [vmem:[%s12 + $0x18] sm:$0xff]
  %v1669 = vld [vmem:[%s13] sm:$0xff]
  %v1670 = vld [vmem:[%s13 + $0x8] sm:$0xff]
  %v1671 = vld [vmem:[%s13 + $0x10] sm:$0xff]
  %v1672 = vld [vmem:[%s13 + $0x18] sm:$0xff]
  %v1673 = vld [vmem:[%s14] sm:$0xff]
  %v1674 = vld [vmem:[%s14 + $0x8] sm:$0xff]
  %v1675 = vld [vmem:[%s14 + $0x10] sm:$0xff]
  %v1676 = vld [vmem:[%s14 + $0x18] sm:$0xff]
  %v1677 = vld [vmem:[%s15] sm:$0xff]
  %v1678 = vld [vmem:[%s15 + $0x8] sm:$0xff]
  %v1679 = vld [vmem:[%s15 + $0x10] sm:$0xff]
  %v1680 = vld [vmem:[%s15 + $0x18] sm:$0xff]
  %v1681 = vld [vmem:[%s16] sm:$0xff]
  %v1682 = vld [vmem:[%s16 + $0x8] sm:$0xff]
  %v1683 = vld [vmem:[%s16 + $0x10] sm:$0xff]
  %v1684 = vld [vmem:[%s16 + $0x18] sm:$0xff]
  %v1685 = vld [vmem:[%s17] sm:$0xff]
  %v1686 = vld [vmem:[%s17 + $0x8] sm:$0xff]
  %v1687 = vld [vmem:[%s17 + $0x10] sm:$0xff]
  %v1688 = vld [vmem:[%s17 + $0x18] sm:$0xff]
  %v1689 = vld [vmem:[%s18] sm:$0x1]
  %v1690 = vld [vmem:[%s19] sm:$0x1]
  %v1691 = vld [vmem:[%s20] sm:$0x1]
  %v1692 = vld [vmem:[%s21] sm:$0x1]
  %1693 = vmatprep.subr.mxu0 0.0
  %1694 = vmatpush1.msra.mxu0 0.0
  %1695 = vmatprep.subr.mxu0 0.0
  %1696 = vmatpush1.msra.mxu0 0.0
  %1697 = vmatprep.subr.mxu0 0.0
  %1698 = vmatpush1.msra.mxu0 0.0
  %1699 = vmatprep.subr.mxu0 0.0
  %1700 = vmatpush1.msra.mxu0 0.0
  %1701 = vmatprep.subr.mxu0 0.0
  %1702 = vmatpush1.msra.mxu0 0.0
  %1703 = vmatprep.subr.mxu0 0.0
  %1704 = vmatpush1.msra.mxu0 0.0
  %1705 = vmatprep.subr.mxu0 0.0
  %1706 = vmatpush1.msra.mxu0 0.0
  %1707 = vmatprep.subr.mxu0 0.0
  %1708 = vmatpush1.msra.mxu0 0.0
  %1709 = vmatprep.subr.mxu0 0.0
  %1710 = vmatpush1.msra.mxu0 0.0
  %1711 = vmatprep.subr.mxu0 0.0
  %1712 = vmatpush1.msra.mxu0 0.0
  %1713 = vmatprep.subr.mxu0 0.0
  %1714 = vmatpush1.msra.mxu0 0.0
  %1715 = vmatprep.subr.mxu0 0.0
  %1716 = vmatpush1.msra.mxu0 0.0
  %1717 = vmatprep.subr.mxu0 0.0
  %1718 = vmatpush1.msra.mxu0 %v1680
  %1719 = vmatprep.subr.mxu0 0.0
  %1720 = vmatpush1.msra.mxu0 %v1679
  %1721 = vmatprep.subr.mxu0 0.0
  %1722 = vmatpush1.msra.mxu0 %v1678
  %1723 = vmatprep.subr.mxu0 0.0
  %1724 = vmatpush1.msra.mxu0 %v1677
  %1725 = vmatprep.subr.mxu0 0.0
  %1726 = vmatpush2.msra.mxu0 0.0
  %1727 = vmatprep.subr.mxu0 0.0
  %1728 = vmatpush2.msra.mxu0 0.0
  %1729 = vmatprep.subr.mxu0 0.0
  %1730 = vmatpush2.msra.mxu0 0.0
  %1731 = vmatprep.subr.mxu0 0.0
  %1732 = vmatpush2.msra.mxu0 0.0
  %1733 = vmatprep.subr.mxu0 0.0
  %1734 = vmatpush2.msra.mxu0 0.0
  %1735 = vmatprep.subr.mxu0 0.0
  %1736 = vmatpush2.msra.mxu0 0.0
  %1737 = vmatprep.subr.mxu0 0.0
  %1738 = vmatpush2.msra.mxu0 0.0
  %1739 = vmatprep.subr.mxu0 0.0
  %1740 = vmatpush2.msra.mxu0 0.0
  %1741 = vmatprep.subr.mxu0 0.0
  %1742 = vmatpush2.msra.mxu0 0.0
  %1743 = vmatprep.subr.mxu0 0.0
  %1744 = vmatpush2.msra.mxu0 0.0
  %1745 = vmatprep.subr.mxu0 0.0
  %1746 = vmatpush2.msra.mxu0 0.0
  %1747 = vmatprep.subr.mxu0 0.0
  %1748 = vmatpush2.msra.mxu0 0.0
  %1749 = vmatprep.subr.mxu0 0.0
  %1750 = vmatpush2.msra.mxu0 0.0
  %1751 = vmatprep.subr.mxu0 0.0
  %1752 = vmatpush2.msra.mxu0 0.0
  %1753 = vmatprep.subr.mxu0 0.0
  %1754 = vmatpush2.msra.mxu0 0.0
  %1755 = vmatprep.subr.mxu0 0.0
  %1756 = vmatpush2.msra.mxu0 0.0
  %1757 = vmatprep.mubr.f32.mxu0 0.0
  %1758 = vmatmul.mubr.f32.gmra.mxu0 %v1094
  %v1759 = vpop.f32.mrf.mxu0
  %v1760 = vadd.f32 0.0, %v1759
  %v1761 = vpop.f32.mrf.mxu0
  %1762 = vdwg.mxu0
  %v1764 = vsel %vm111, %v1664, 0
  %1766 = vmatprep.subr.mxu0 0.0
  %1767 = vmatpush1.msra.mxu0 0.0
  %1768 = vmatprep.subr.mxu0 0.0
  %1769 = vmatpush1.msra.mxu0 0.0
  %1770 = vmatprep.subr.mxu0 0.0
  %1771 = vmatpush1.msra.mxu0 0.0
  %1772 = vmatprep.subr.mxu0 0.0
  %1773 = vmatpush1.msra.mxu0 0.0
  %1774 = vmatprep.subr.mxu0 0.0
  %1775 = vmatpush1.msra.mxu0 0.0
  %1776 = vmatprep.subr.mxu0 0.0
  %1777 = vmatpush1.msra.mxu0 0.0
  %1778 = vmatprep.subr.mxu0 0.0
  %1779 = vmatpush1.msra.mxu0 0.0
  %1780 = vmatprep.subr.mxu0 0.0
  %1781 = vmatpush1.msra.mxu0 0.0
  %1782 = vmatprep.subr.mxu0 0.0
  %1783 = vmatpush1.msra.mxu0 0.0
  %1784 = vmatprep.subr.mxu0 0.0
  %1785 = vmatpush1.msra.mxu0 0.0
  %1786 = vmatprep.subr.mxu0 0.0
  %1787 = vmatpush1.msra.mxu0 0.0
  %1788 = vmatprep.subr.mxu0 0.0
  %1789 = vmatpush1.msra.mxu0 0.0
  %1790 = vmatprep.subr.mxu0 0.0
  %1791 = vmatpush1.msra.mxu0 %v1668
  %1792 = vmatprep.subr.mxu0 0.0
  %1793 = vmatpush1.msra.mxu0 %v1667
  %1794 = vmatprep.subr.mxu0 0.0
  %1795 = vmatpush1.msra.mxu0 %v1666
  %1796 = vmatprep.subr.mxu0 0.0
  %1797 = vmatpush1.msra.mxu0 %v1665
  %1798 = vmatprep.subr.mxu0 0.0
  %1799 = vmatpush2.msra.mxu0 0.0
  %1800 = vmatprep.subr.mxu0 0.0
  %1801 = vmatpush2.msra.mxu0 0.0
  %1802 = vmatprep.subr.mxu0 0.0
  %1803 = vmatpush2.msra.mxu0 0.0
  %1804 = vmatprep.subr.mxu0 0.0
  %1805 = vmatpush2.msra.mxu0 0.0
  %1806 = vmatprep.subr.mxu0 0.0
  %1807 = vmatpush2.msra.mxu0 0.0
  %1808 = vmatprep.subr.mxu0 0.0
  %1809 = vmatpush2.msra.mxu0 0.0
  %1810 = vmatprep.subr.mxu0 0.0
  %1811 = vmatpush2.msra.mxu0 0.0
  %1812 = vmatprep.subr.mxu0 0.0
  %1813 = vmatpush2.msra.mxu0 0.0
  %1814 = vmatprep.subr.mxu0 0.0
  %1815 = vmatpush2.msra.mxu0 0.0
  %1816 = vmatprep.subr.mxu0 0.0
  %1817 = vmatpush2.msra.mxu0 0.0
  %1818 = vmatprep.subr.mxu0 0.0
  %1819 = vmatpush2.msra.mxu0 0.0
  %1820 = vmatprep.subr.mxu0 0.0
  %1821 = vmatpush2.msra.mxu0 0.0
  %1822 = vmatprep.subr.mxu0 0.0
  %1823 = vmatpush2.msra.mxu0 0.0
  %1824 = vmatprep.subr.mxu0 0.0
  %1825 = vmatpush2.msra.mxu0 0.0
  %1826 = vmatprep.subr.mxu0 0.0
  %1827 = vmatpush2.msra.mxu0 0.0
  %1828 = vmatprep.subr.mxu0 0.0
  %1829 = vmatpush2.msra.mxu0 0.0
  %1830 = vmatprep.mubr.f32.mxu0 0.0
  %1831 = vmatmul.mubr.f32.gmra.mxu0 %v1764
  %v1832 = vpop.f32.mrf.mxu0
  %v1833 = vadd.f32 %v1760, %v1832
  %v1834 = vpop.f32.mrf.mxu0
  %1835 = vdwg.mxu0
  %v1837 = vlaneseq
  %v1838 = vshrl.u32 %v1837, 7
  %v1839 = vsub.s32 0, %v1838
  %v1840 = vrot.slane %v1689, %v1839
  %v1842 = vadd.f32 %v1833, %v1840
  %1843 = vmatprep.subr.mxu0 0.0
  %1844 = vmatpush1.msra.mxu0 0.0
  %1845 = vmatprep.subr.mxu0 0.0
  %1846 = vmatpush1.msra.mxu0 0.0
  %1847 = vmatprep.subr.mxu0 0.0
  %1848 = vmatpush1.msra.mxu0 0.0
  %1849 = vmatprep.subr.mxu0 0.0
  %1850 = vmatpush1.msra.mxu0 0.0
  %1851 = vmatprep.subr.mxu0 0.0
  %1852 = vmatpush1.msra.mxu0 0.0
  %1853 = vmatprep.subr.mxu0 0.0
  %1854 = vmatpush1.msra.mxu0 0.0
  %1855 = vmatprep.subr.mxu0 0.0
  %1856 = vmatpush1.msra.mxu0 0.0
  %1857 = vmatprep.subr.mxu0 0.0
  %1858 = vmatpush1.msra.mxu0 0.0
  %1859 = vmatprep.subr.mxu0 0.0
  %1860 = vmatpush1.msra.mxu0 0.0
  %1861 = vmatprep.subr.mxu0 0.0
  %1862 = vmatpush1.msra.mxu0 0.0
  %1863 = vmatprep.subr.mxu0 0.0
  %1864 = vmatpush1.msra.mxu0 0.0
  %1865 = vmatprep.subr.mxu0 0.0
  %1866 = vmatpush1.msra.mxu0 0.0
  %1867 = vmatprep.subr.mxu0 0.0
  %1868 = vmatpush1.msra.mxu0 %v1684
  %1869 = vmatprep.subr.mxu0 0.0
  %1870 = vmatpush1.msra.mxu0 %v1683
  %1871 = vmatprep.subr.mxu0 0.0
  %1872 = vmatpush1.msra.mxu0 %v1682
  %1873 = vmatprep.subr.mxu0 0.0
  %1874 = vmatpush1.msra.mxu0 %v1681
  %1875 = vmatprep.subr.mxu0 0.0
  %1876 = vmatpush2.msra.mxu0 0.0
  %1877 = vmatprep.subr.mxu0 0.0
  %1878 = vmatpush2.msra.mxu0 0.0
  %1879 = vmatprep.subr.mxu0 0.0
  %1880 = vmatpush2.msra.mxu0 0.0
  %1881 = vmatprep.subr.mxu0 0.0
  %1882 = vmatpush2.msra.mxu0 0.0
  %1883 = vmatprep.subr.mxu0 0.0
  %1884 = vmatpush2.msra.mxu0 0.0
  %1885 = vmatprep.subr.mxu0 0.0
  %1886 = vmatpush2.msra.mxu0 0.0
  %1887 = vmatprep.subr.mxu0 0.0
  %1888 = vmatpush2.msra.mxu0 0.0
  %1889 = vmatprep.subr.mxu0 0.0
  %1890 = vmatpush2.msra.mxu0 0.0
  %1891 = vmatprep.subr.mxu0 0.0
  %1892 = vmatpush2.msra.mxu0 0.0
  %1893 = vmatprep.subr.mxu0 0.0
  %1894 = vmatpush2.msra.mxu0 0.0
  %1895 = vmatprep.subr.mxu0 0.0
  %1896 = vmatpush2.msra.mxu0 0.0
  %1897 = vmatprep.subr.mxu0 0.0
  %1898 = vmatpush2.msra.mxu0 0.0
  %1899 = vmatprep.subr.mxu0 0.0
  %1900 = vmatpush2.msra.mxu0 0.0
  %1901 = vmatprep.subr.mxu0 0.0
  %1902 = vmatpush2.msra.mxu0 0.0
  %1903 = vmatprep.subr.mxu0 0.0
  %1904 = vmatpush2.msra.mxu0 0.0
  %1905 = vmatprep.subr.mxu0 0.0
  %1906 = vmatpush2.msra.mxu0 0.0
  %1907 = vmatprep.mubr.f32.mxu0 0.0
  %1908 = vmatmul.mubr.f32.gmra.mxu0 %v1094
  %v1909 = vpop.f32.mrf.mxu0
  %v1910 = vadd.f32 0.0, %v1909
  %v1911 = vpop.f32.mrf.mxu0
  %1912 = vdwg.mxu0
  %1913 = vmatprep.subr.mxu0 0.0
  %1914 = vmatpush1.msra.mxu0 0.0
  %1915 = vmatprep.subr.mxu0 0.0
  %1916 = vmatpush1.msra.mxu0 0.0
  %1917 = vmatprep.subr.mxu0 0.0
  %1918 = vmatpush1.msra.mxu0 0.0
  %1919 = vmatprep.subr.mxu0 0.0
  %1920 = vmatpush1.msra.mxu0 0.0
  %1921 = vmatprep.subr.mxu0 0.0
  %1922 = vmatpush1.msra.mxu0 0.0
  %1923 = vmatprep.subr.mxu0 0.0
  %1924 = vmatpush1.msra.mxu0 0.0
  %1925 = vmatprep.subr.mxu0 0.0
  %1926 = vmatpush1.msra.mxu0 0.0
  %1927 = vmatprep.subr.mxu0 0.0
  %1928 = vmatpush1.msra.mxu0 0.0
  %1929 = vmatprep.subr.mxu0 0.0
  %1930 = vmatpush1.msra.mxu0 0.0
  %1931 = vmatprep.subr.mxu0 0.0
  %1932 = vmatpush1.msra.mxu0 0.0
  %1933 = vmatprep.subr.mxu0 0.0
  %1934 = vmatpush1.msra.mxu0 0.0
  %1935 = vmatprep.subr.mxu0 0.0
  %1936 = vmatpush1.msra.mxu0 0.0
  %1937 = vmatprep.subr.mxu0 0.0
  %1938 = vmatpush1.msra.mxu0 %v1672
  %1939 = vmatprep.subr.mxu0 0.0
  %1940 = vmatpush1.msra.mxu0 %v1671
  %1941 = vmatprep.subr.mxu0 0.0
  %1942 = vmatpush1.msra.mxu0 %v1670
  %1943 = vmatprep.subr.mxu0 0.0
  %1944 = vmatpush1.msra.mxu0 %v1669
  %1945 = vmatprep.subr.mxu0 0.0
  %1946 = vmatpush2.msra.mxu0 0.0
  %1947 = vmatprep.subr.mxu0 0.0
  %1948 = vmatpush2.msra.mxu0 0.0
  %1949 = vmatprep.subr.mxu0 0.0
  %1950 = vmatpush2.msra.mxu0 0.0
  %1951 = vmatprep.subr.mxu0 0.0
  %1952 = vmatpush2.msra.mxu0 0.0
  %1953 = vmatprep.subr.mxu0 0.0
  %1954 = vmatpush2.msra.mxu0 0.0
  %1955 = vmatprep.subr.mxu0 0.0
  %1956 = vmatpush2.msra.mxu0 0.0
  %1957 = vmatprep.subr.mxu0 0.0
  %1958 = vmatpush2.msra.mxu0 0.0
  %1959 = vmatprep.subr.mxu0 0.0
  %1960 = vmatpush2.msra.mxu0 0.0
  %1961 = vmatprep.subr.mxu0 0.0
  %1962 = vmatpush2.msra.mxu0 0.0
  %1963 = vmatprep.subr.mxu0 0.0
  %1964 = vmatpush2.msra.mxu0 0.0
  %1965 = vmatprep.subr.mxu0 0.0
  %1966 = vmatpush2.msra.mxu0 0.0
  %1967 = vmatprep.subr.mxu0 0.0
  %1968 = vmatpush2.msra.mxu0 0.0
  %1969 = vmatprep.subr.mxu0 0.0
  %1970 = vmatpush2.msra.mxu0 0.0
  %1971 = vmatprep.subr.mxu0 0.0
  %1972 = vmatpush2.msra.mxu0 0.0
  %1973 = vmatprep.subr.mxu0 0.0
  %1974 = vmatpush2.msra.mxu0 0.0
  %1975 = vmatprep.subr.mxu0 0.0
  %1976 = vmatpush2.msra.mxu0 0.0
  %1977 = vmatprep.mubr.f32.mxu0 0.0
  %1978 = vmatmul.mubr.f32.gmra.mxu0 %v1764
  %v1979 = vpop.f32.mrf.mxu0
  %v1980 = vadd.f32 %v1910, %v1979
  %v1981 = vpop.f32.mrf.mxu0
  %1982 = vdwg.mxu0
  %v1984 = vlaneseq
  %v1985 = vshrl.u32 %v1984, 7
  %v1986 = vsub.s32 0, %v1985
  %v1987 = vrot.slane %v1690, %v1986
  %v1989 = vadd.f32 %v1980, %v1987
  %v1991 = vlaneseq
  %v1992 = vshrl.u32 %v1991, 7
  %v1993 = vsub.s32 0, %v1992
  %v1994 = vrot.slane %v1691, %v1993
  %1996 = vmatprep.subr.mxu0 0.0
  %1997 = vmatpush1.msra.mxu0 0.0
  %1998 = vmatprep.subr.mxu0 0.0
  %1999 = vmatpush1.msra.mxu0 0.0
  %2000 = vmatprep.subr.mxu0 0.0
  %2001 = vmatpush1.msra.mxu0 0.0
  %2002 = vmatprep.subr.mxu0 0.0
  %2003 = vmatpush1.msra.mxu0 0.0
  %2004 = vmatprep.subr.mxu0 0.0
  %2005 = vmatpush1.msra.mxu0 0.0
  %2006 = vmatprep.subr.mxu0 0.0
  %2007 = vmatpush1.msra.mxu0 0.0
  %2008 = vmatprep.subr.mxu0 0.0
  %2009 = vmatpush1.msra.mxu0 0.0
  %2010 = vmatprep.subr.mxu0 0.0
  %2011 = vmatpush1.msra.mxu0 0.0
  %2012 = vmatprep.subr.mxu0 0.0
  %2013 = vmatpush1.msra.mxu0 0.0
  %2014 = vmatprep.subr.mxu0 0.0
  %2015 = vmatpush1.msra.mxu0 0.0
  %2016 = vmatprep.subr.mxu0 0.0
  %2017 = vmatpush1.msra.mxu0 0.0
  %2018 = vmatprep.subr.mxu0 0.0
  %2019 = vmatpush1.msra.mxu0 0.0
  %2020 = vmatprep.subr.mxu0 0.0
  %2021 = vmatpush1.msra.mxu0 %v1676
  %2022 = vmatprep.subr.mxu0 0.0
  %2023 = vmatpush1.msra.mxu0 %v1675
  %2024 = vmatprep.subr.mxu0 0.0
  %2025 = vmatpush1.msra.mxu0 %v1674
  %2026 = vmatprep.subr.mxu0 0.0
  %2027 = vmatpush1.msra.mxu0 %v1673
  %2028 = vmatprep.subr.mxu0 0.0
  %2029 = vmatpush2.msra.mxu0 0.0
  %2030 = vmatprep.subr.mxu0 0.0
  %2031 = vmatpush2.msra.mxu0 0.0
  %2032 = vmatprep.subr.mxu0 0.0
  %2033 = vmatpush2.msra.mxu0 0.0
  %2034 = vmatprep.subr.mxu0 0.0
  %2035 = vmatpush2.msra.mxu0 0.0
  %2036 = vmatprep.subr.mxu0 0.0
  %2037 = vmatpush2.msra.mxu0 0.0
  %2038 = vmatprep.subr.mxu0 0.0
  %2039 = vmatpush2.msra.mxu0 0.0
  %2040 = vmatprep.subr.mxu0 0.0
  %2041 = vmatpush2.msra.mxu0 0.0
  %2042 = vmatprep.subr.mxu0 0.0
  %2043 = vmatpush2.msra.mxu0 0.0
  %2044 = vmatprep.subr.mxu0 0.0
  %2045 = vmatpush2.msra.mxu0 0.0
  %2046 = vmatprep.subr.mxu0 0.0
  %2047 = vmatpush2.msra.mxu0 0.0
  %2048 = vmatprep.subr.mxu0 0.0
  %2049 = vmatpush2.msra.mxu0 0.0
  %2050 = vmatprep.subr.mxu0 0.0
  %2051 = vmatpush2.msra.mxu0 0.0
  %2052 = vmatprep.subr.mxu0 0.0
  %2053 = vmatpush2.msra.mxu0 0.0
  %2054 = vmatprep.subr.mxu0 0.0
  %2055 = vmatpush2.msra.mxu0 0.0
  %2056 = vmatprep.subr.mxu0 0.0
  %2057 = vmatpush2.msra.mxu0 0.0
  %2058 = vmatprep.subr.mxu0 0.0
  %2059 = vmatpush2.msra.mxu0 0.0
  %2060 = vmatprep.mubr.f32.mxu0 0.0
  %2061 = vmatmul.mubr.f32.gmra.mxu0 %v1764
  %v2062 = vpop.f32.mrf.mxu0
  %v2063 = vadd.f32 %v1994, %v2062
  %v2064 = vpop.f32.mrf.mxu0
  %2065 = vdwg.mxu0
  %v2067 = vlaneseq
  %v2068 = vshrl.u32 %v2067, 7
  %v2069 = vsub.s32 0, %v2068
  %v2070 = vrot.slane %v1692, %v2069
  %2072 = vmatprep.subr.mxu0 0.0
  %2073 = vmatpush1.msra.mxu0 0.0
  %2074 = vmatprep.subr.mxu0 0.0
  %2075 = vmatpush1.msra.mxu0 0.0
  %2076 = vmatprep.subr.mxu0 0.0
  %2077 = vmatpush1.msra.mxu0 0.0
  %2078 = vmatprep.subr.mxu0 0.0
  %2079 = vmatpush1.msra.mxu0 0.0
  %2080 = vmatprep.subr.mxu0 0.0
  %2081 = vmatpush1.msra.mxu0 0.0
  %2082 = vmatprep.subr.mxu0 0.0
  %2083 = vmatpush1.msra.mxu0 0.0
  %2084 = vmatprep.subr.mxu0 0.0
  %2085 = vmatpush1.msra.mxu0 0.0
  %2086 = vmatprep.subr.mxu0 0.0
  %2087 = vmatpush1.msra.mxu0 0.0
  %2088 = vmatprep.subr.mxu0 0.0
  %2089 = vmatpush1.msra.mxu0 0.0
  %2090 = vmatprep.subr.mxu0 0.0
  %2091 = vmatpush1.msra.mxu0 0.0
  %2092 = vmatprep.subr.mxu0 0.0
  %2093 = vmatpush1.msra.mxu0 0.0
  %2094 = vmatprep.subr.mxu0 0.0
  %2095 = vmatpush1.msra.mxu0 0.0
  %2096 = vmatprep.subr.mxu0 0.0
  %2097 = vmatpush1.msra.mxu0 %v1688
  %2098 = vmatprep.subr.mxu0 0.0
  %2099 = vmatpush1.msra.mxu0 %v1687
  %2100 = vmatprep.subr.mxu0 0.0
  %2101 = vmatpush1.msra.mxu0 %v1686
  %2102 = vmatprep.subr.mxu0 0.0
  %2103 = vmatpush1.msra.mxu0 %v1685
  %2104 = vmatprep.subr.mxu0 0.0
  %2105 = vmatpush2.msra.mxu0 0.0
  %2106 = vmatprep.subr.mxu0 0.0
  %2107 = vmatpush2.msra.mxu0 0.0
  %2108 = vmatprep.subr.mxu0 0.0
  %2109 = vmatpush2.msra.mxu0 0.0
  %2110 = vmatprep.subr.mxu0 0.0
  %2111 = vmatpush2.msra.mxu0 0.0
  %2112 = vmatprep.subr.mxu0 0.0
  %2113 = vmatpush2.msra.mxu0 0.0
  %2114 = vmatprep.subr.mxu0 0.0
  %2115 = vmatpush2.msra.mxu0 0.0
  %2116 = vmatprep.subr.mxu0 0.0
  %2117 = vmatpush2.msra.mxu0 0.0
  %2118 = vmatprep.subr.mxu0 0.0
  %2119 = vmatpush2.msra.mxu0 0.0
  %2120 = vmatprep.subr.mxu0 0.0
  %2121 = vmatpush2.msra.mxu0 0.0
  %2122 = vmatprep.subr.mxu0 0.0
  %2123 = vmatpush2.msra.mxu0 0.0
  %2124 = vmatprep.subr.mxu0 0.0
  %2125 = vmatpush2.msra.mxu0 0.0
  %2126 = vmatprep.subr.mxu0 0.0
  %2127 = vmatpush2.msra.mxu0 0.0
  %2128 = vmatprep.subr.mxu0 0.0
  %2129 = vmatpush2.msra.mxu0 0.0
  %2130 = vmatprep.subr.mxu0 0.0
  %2131 = vmatpush2.msra.mxu0 0.0
  %2132 = vmatprep.subr.mxu0 0.0
  %2133 = vmatpush2.msra.mxu0 0.0
  %2134 = vmatprep.subr.mxu0 0.0
  %2135 = vmatpush2.msra.mxu0 0.0
  %2136 = vmatprep.mubr.f32.mxu0 0.0
  %2137 = vmatmul.mubr.f32.gmra.mxu0 %v1094
  %v2138 = vpop.f32.mrf.mxu0
  %v2139 = vadd.f32 %v2070, %v2138
  %v2140 = vpop.f32.mrf.mxu0
  %2141 = vdwg.mxu0
  %v2142 = vxor.u32 %v1842, 2147483648
  %v2143 = vmul.f32 %v2142, 1.442695
  %v2144 = vpow.pop %v2143
  %v2145 = vadd.f32 %v2144, 1.0
  %v2146 = vrcp.pop %v2145
  %v2147 = vmul.f32 1.0, %v2146
  %v2148 = vxor.u32 %v1989, 2147483648
  %v2149 = vmul.f32 %v2148, 1.442695
  %v2150 = vpow.pop %v2149
  %v2151 = vadd.f32 %v2150, 1.0
  %v2152 = vrcp.pop %v2151
  %v2153 = vmul.f32 1.0, %v2152
  %v2154 = vmul.f32 %v2147, %v2139
  %v2155 = vadd.f32 %v2063, %v2154
  %v2156 = vtanh.pop %v2155
  %v2157 = vsub.f32 1.0, %v2153
  %v2158 = vmul.f32 %v2157, %v2156
  %v2159 = vmul.f32 %v2153, %v1081
  %v2160 = vadd.f32 %v2158, %v2159
  %v2161 = vld [vmem:[%s22] sm:$0xff]
  %v2162 = vld [vmem:[%s22 + $0x8] sm:$0xff]
  %v2163 = vld [vmem:[%s22 + $0x10] sm:$0xff]
  %v2164 = vld [vmem:[%s22 + $0x18] sm:$0xff]
  %v2165 = vld [vmem:[%s23] sm:$0x1]
  %v2167 = vlaneseq
  %v2168 = vshrl.u32 %v2167, 7
  %v2169 = vsub.s32 0, %v2168
  %v2170 = vrot.slane %v2165, %v2169
  %v2173 = vsel %vm111, %v2160, 0
  %2175 = vmatprep.subr.mxu0 0.0
  %2176 = vmatpush1.msra.mxu0 0.0
  %2177 = vmatprep.subr.mxu0 0.0
  %2178 = vmatpush1.msra.mxu0 0.0
  %2179 = vmatprep.subr.mxu0 0.0
  %2180 = vmatpush1.msra.mxu0 0.0
  %2181 = vmatprep.subr.mxu0 0.0
  %2182 = vmatpush1.msra.mxu0 0.0
  %2183 = vmatprep.subr.mxu0 0.0
  %2184 = vmatpush1.msra.mxu0 0.0
  %2185 = vmatprep.subr.mxu0 0.0
  %2186 = vmatpush1.msra.mxu0 0.0
  %2187 = vmatprep.subr.mxu0 0.0
  %2188 = vmatpush1.msra.mxu0 0.0
  %2189 = vmatprep.subr.mxu0 0.0
  %2190 = vmatpush1.msra.mxu0 0.0
  %2191 = vmatprep.subr.mxu0 0.0
  %2192 = vmatpush1.msra.mxu0 0.0
  %2193 = vmatprep.subr.mxu0 0.0
  %2194 = vmatpush1.msra.mxu0 0.0
  %2195 = vmatprep.subr.mxu0 0.0
  %2196 = vmatpush1.msra.mxu0 0.0
  %2197 = vmatprep.subr.mxu0 0.0
  %2198 = vmatpush1.msra.mxu0 0.0
  %2199 = vmatprep.subr.mxu0 0.0
  %2200 = vmatpush1.msra.mxu0 %v2164
  %2201 = vmatprep.subr.mxu0 0.0
  %2202 = vmatpush1.msra.mxu0 %v2163
  %2203 = vmatprep.subr.mxu0 0.0
  %2204 = vmatpush1.msra.mxu0 %v2162
  %2205 = vmatprep.subr.mxu0 0.0
  %2206 = vmatpush1.msra.mxu0 %v2161
  %2207 = vmatprep.subr.mxu0 0.0
  %2208 = vmatpush2.msra.mxu0 0.0
  %2209 = vmatprep.subr.mxu0 0.0
  %2210 = vmatpush2.msra.mxu0 0.0
  %2211 = vmatprep.subr.mxu0 0.0
  %2212 = vmatpush2.msra.mxu0 0.0
  %2213 = vmatprep.subr.mxu0 0.0
  %2214 = vmatpush2.msra.mxu0 0.0
  %2215 = vmatprep.subr.mxu0 0.0
  %2216 = vmatpush2.msra.mxu0 0.0
  %2217 = vmatprep.subr.mxu0 0.0
  %2218 = vmatpush2.msra.mxu0 0.0
  %2219 = vmatprep.subr.mxu0 0.0
  %2220 = vmatpush2.msra.mxu0 0.0
  %2221 = vmatprep.subr.mxu0 0.0
  %2222 = vmatpush2.msra.mxu0 0.0
  %2223 = vmatprep.subr.mxu0 0.0
  %2224 = vmatpush2.msra.mxu0 0.0
  %2225 = vmatprep.subr.mxu0 0.0
  %2226 = vmatpush2.msra.mxu0 0.0
  %2227 = vmatprep.subr.mxu0 0.0
  %2228 = vmatpush2.msra.mxu0 0.0
  %2229 = vmatprep.subr.mxu0 0.0
  %2230 = vmatpush2.msra.mxu0 0.0
  %2231 = vmatprep.subr.mxu0 0.0
  %2232 = vmatpush2.msra.mxu0 0.0
  %2233 = vmatprep.subr.mxu0 0.0
  %2234 = vmatpush2.msra.mxu0 0.0
  %2235 = vmatprep.subr.mxu0 0.0
  %2236 = vmatpush2.msra.mxu0 0.0
  %2237 = vmatprep.subr.mxu0 0.0
  %2238 = vmatpush2.msra.mxu0 0.0
  %2239 = vmatprep.mubr.f32.mxu0 0.0
  %2240 = vmatmul.mubr.f32.gmra.mxu0 %v2173
  %v2241 = vpop.f32.mrf.mxu0
  %v2242 = vadd.f32 %v2170, %v2241
  %v2243 = vpop.f32.mrf.mxu0
  %2244 = vdwg.mxu0
  %s2245 = scalar_lea.vmem %s24, 8
  %2246 = vst [vmem:[%s2245] sm:$0xff] %v2242
  %s2247 = scalar_lea.vmem %s0, 16
  %v2248 = vld [vmem:[%s2247] sm:$0xff]
  %v2249 = vld [vmem:[%s2] sm:$0xff]
  %v2250 = vld [vmem:[%s2 + $0x8] sm:$0xff]
  %v2251 = vld [vmem:[%s2 + $0x10] sm:$0xff]
  %v2252 = vld [vmem:[%s2 + $0x18] sm:$0xff]
  %v2253 = vld [vmem:[%s3] sm:$0xff]
  %v2254 = vld [vmem:[%s3 + $0x8] sm:$0xff]
  %v2255 = vld [vmem:[%s3 + $0x10] sm:$0xff]
  %v2256 = vld [vmem:[%s3 + $0x18] sm:$0xff]
  %v2257 = vld [vmem:[%s4] sm:$0xff]
  %v2258 = vld [vmem:[%s4 + $0x8] sm:$0xff]
  %v2259 = vld [vmem:[%s4 + $0x10] sm:$0xff]
  %v2260 = vld [vmem:[%s4 + $0x18] sm:$0xff]
  %v2261 = vld [vmem:[%s5] sm:$0xff]
  %v2262 = vld [vmem:[%s5 + $0x8] sm:$0xff]
  %v2263 = vld [vmem:[%s5 + $0x10] sm:$0xff]
  %v2264 = vld [vmem:[%s5 + $0x18] sm:$0xff]
  %v2265 = vld [vmem:[%s6] sm:$0xff]
  %v2266 = vld [vmem:[%s6 + $0x8] sm:$0xff]
  %v2267 = vld [vmem:[%s6 + $0x10] sm:$0xff]
  %v2268 = vld [vmem:[%s6 + $0x18] sm:$0xff]
  %v2269 = vld [vmem:[%s7] sm:$0xff]
  %v2270 = vld [vmem:[%s7 + $0x8] sm:$0xff]
  %v2271 = vld [vmem:[%s7 + $0x10] sm:$0xff]
  %v2272 = vld [vmem:[%s7 + $0x18] sm:$0xff]
  %v2273 = vld [vmem:[%s8] sm:$0x1]
  %v2274 = vld [vmem:[%s9] sm:$0x1]
  %v2275 = vld [vmem:[%s10] sm:$0x1]
  %v2276 = vld [vmem:[%s11] sm:$0x1]
  %2277 = vmatprep.subr.mxu0 0.0
  %2278 = vmatpush1.msra.mxu0 0.0
  %2279 = vmatprep.subr.mxu0 0.0
  %2280 = vmatpush1.msra.mxu0 0.0
  %2281 = vmatprep.subr.mxu0 0.0
  %2282 = vmatpush1.msra.mxu0 0.0
  %2283 = vmatprep.subr.mxu0 0.0
  %2284 = vmatpush1.msra.mxu0 0.0
  %2285 = vmatprep.subr.mxu0 0.0
  %2286 = vmatpush1.msra.mxu0 0.0
  %2287 = vmatprep.subr.mxu0 0.0
  %2288 = vmatpush1.msra.mxu0 0.0
  %2289 = vmatprep.subr.mxu0 0.0
  %2290 = vmatpush1.msra.mxu0 0.0
  %2291 = vmatprep.subr.mxu0 0.0
  %2292 = vmatpush1.msra.mxu0 0.0
  %2293 = vmatprep.subr.mxu0 0.0
  %2294 = vmatpush1.msra.mxu0 0.0
  %2295 = vmatprep.subr.mxu0 0.0
  %2296 = vmatpush1.msra.mxu0 0.0
  %2297 = vmatprep.subr.mxu0 0.0
  %2298 = vmatpush1.msra.mxu0 0.0
  %2299 = vmatprep.subr.mxu0 0.0
  %2300 = vmatpush1.msra.mxu0 0.0
  %2301 = vmatprep.subr.mxu0 0.0
  %2302 = vmatpush1.msra.mxu0 %v2264
  %2303 = vmatprep.subr.mxu0 0.0
  %2304 = vmatpush1.msra.mxu0 %v2263
  %2305 = vmatprep.subr.mxu0 0.0
  %2306 = vmatpush1.msra.mxu0 %v2262
  %2307 = vmatprep.subr.mxu0 0.0
  %2308 = vmatpush1.msra.mxu0 %v2261
  %2309 = vmatprep.subr.mxu0 0.0
  %2310 = vmatpush2.msra.mxu0 0.0
  %2311 = vmatprep.subr.mxu0 0.0
  %2312 = vmatpush2.msra.mxu0 0.0
  %2313 = vmatprep.subr.mxu0 0.0
  %2314 = vmatpush2.msra.mxu0 0.0
  %2315 = vmatprep.subr.mxu0 0.0
  %2316 = vmatpush2.msra.mxu0 0.0
  %2317 = vmatprep.subr.mxu0 0.0
  %2318 = vmatpush2.msra.mxu0 0.0
  %2319 = vmatprep.subr.mxu0 0.0
  %2320 = vmatpush2.msra.mxu0 0.0
  %2321 = vmatprep.subr.mxu0 0.0
  %2322 = vmatpush2.msra.mxu0 0.0
  %2323 = vmatprep.subr.mxu0 0.0
  %2324 = vmatpush2.msra.mxu0 0.0
  %2325 = vmatprep.subr.mxu0 0.0
  %2326 = vmatpush2.msra.mxu0 0.0
  %2327 = vmatprep.subr.mxu0 0.0
  %2328 = vmatpush2.msra.mxu0 0.0
  %2329 = vmatprep.subr.mxu0 0.0
  %2330 = vmatpush2.msra.mxu0 0.0
  %2331 = vmatprep.subr.mxu0 0.0
  %2332 = vmatpush2.msra.mxu0 0.0
  %2333 = vmatprep.subr.mxu0 0.0
  %2334 = vmatpush2.msra.mxu0 0.0
  %2335 = vmatprep.subr.mxu0 0.0
  %2336 = vmatpush2.msra.mxu0 0.0
  %2337 = vmatprep.subr.mxu0 0.0
  %2338 = vmatpush2.msra.mxu0 0.0
  %2339 = vmatprep.subr.mxu0 0.0
  %2340 = vmatpush2.msra.mxu0 0.0
  %2341 = vmatprep.mubr.f32.mxu0 0.0
  %2342 = vmatmul.mubr.f32.gmra.mxu0 %v1764
  %v2343 = vpop.f32.mrf.mxu0
  %v2344 = vadd.f32 0.0, %v2343
  %v2345 = vpop.f32.mrf.mxu0
  %2346 = vdwg.mxu0
  %v2348 = vsel %vm111, %v2248, 0
  %2350 = vmatprep.subr.mxu0 0.0
  %2351 = vmatpush1.msra.mxu0 0.0
  %2352 = vmatprep.subr.mxu0 0.0
  %2353 = vmatpush1.msra.mxu0 0.0
  %2354 = vmatprep.subr.mxu0 0.0
  %2355 = vmatpush1.msra.mxu0 0.0
  %2356 = vmatprep.subr.mxu0 0.0
  %2357 = vmatpush1.msra.mxu0 0.0
  %2358 = vmatprep.subr.mxu0 0.0
  %2359 = vmatpush1.msra.mxu0 0.0
  %2360 = vmatprep.subr.mxu0 0.0
  %2361 = vmatpush1.msra.mxu0 0.0
  %2362 = vmatprep.subr.mxu0 0.0
  %2363 = vmatpush1.msra.mxu0 0.0
  %2364 = vmatprep.subr.mxu0 0.0
  %2365 = vmatpush1.msra.mxu0 0.0
  %2366 = vmatprep.subr.mxu0 0.0
  %2367 = vmatpush1.msra.mxu0 0.0
  %2368 = vmatprep.subr.mxu0 0.0
  %2369 = vmatpush1.msra.mxu0 0.0
  %2370 = vmatprep.subr.mxu0 0.0
  %2371 = vmatpush1.msra.mxu0 0.0
  %2372 = vmatprep.subr.mxu0 0.0
  %2373 = vmatpush1.msra.mxu0 0.0
  %2374 = vmatprep.subr.mxu0 0.0
  %2375 = vmatpush1.msra.mxu0 %v2252
  %2376 = vmatprep.subr.mxu0 0.0
  %2377 = vmatpush1.msra.mxu0 %v2251
  %2378 = vmatprep.subr.mxu0 0.0
  %2379 = vmatpush1.msra.mxu0 %v2250
  %2380 = vmatprep.subr.mxu0 0.0
  %2381 = vmatpush1.msra.mxu0 %v2249
  %2382 = vmatprep.subr.mxu0 0.0
  %2383 = vmatpush2.msra.mxu0 0.0
  %2384 = vmatprep.subr.mxu0 0.0
  %2385 = vmatpush2.msra.mxu0 0.0
  %2386 = vmatprep.subr.mxu0 0.0
  %2387 = vmatpush2.msra.mxu0 0.0
  %2388 = vmatprep.subr.mxu0 0.0
  %2389 = vmatpush2.msra.mxu0 0.0
  %2390 = vmatprep.subr.mxu0 0.0
  %2391 = vmatpush2.msra.mxu0 0.0
  %2392 = vmatprep.subr.mxu0 0.0
  %2393 = vmatpush2.msra.mxu0 0.0
  %2394 = vmatprep.subr.mxu0 0.0
  %2395 = vmatpush2.msra.mxu0 0.0
  %2396 = vmatprep.subr.mxu0 0.0
  %2397 = vmatpush2.msra.mxu0 0.0
  %2398 = vmatprep.subr.mxu0 0.0
  %2399 = vmatpush2.msra.mxu0 0.0
  %2400 = vmatprep.subr.mxu0 0.0
  %2401 = vmatpush2.msra.mxu0 0.0
  %2402 = vmatprep.subr.mxu0 0.0
  %2403 = vmatpush2.msra.mxu0 0.0
  %2404 = vmatprep.subr.mxu0 0.0
  %2405 = vmatpush2.msra.mxu0 0.0
  %2406 = vmatprep.subr.mxu0 0.0
  %2407 = vmatpush2.msra.mxu0 0.0
  %2408 = vmatprep.subr.mxu0 0.0
  %2409 = vmatpush2.msra.mxu0 0.0
  %2410 = vmatprep.subr.mxu0 0.0
  %2411 = vmatpush2.msra.mxu0 0.0
  %2412 = vmatprep.subr.mxu0 0.0
  %2413 = vmatpush2.msra.mxu0 0.0
  %2414 = vmatprep.mubr.f32.mxu0 0.0
  %2415 = vmatmul.mubr.f32.gmra.mxu0 %v2348
  %v2416 = vpop.f32.mrf.mxu0
  %v2417 = vadd.f32 %v2344, %v2416
  %v2418 = vpop.f32.mrf.mxu0
  %2419 = vdwg.mxu0
  %v2421 = vlaneseq
  %v2422 = vshrl.u32 %v2421, 7
  %v2423 = vsub.s32 0, %v2422
  %v2424 = vrot.slane %v2273, %v2423
  %v2426 = vadd.f32 %v2417, %v2424
  %2427 = vmatprep.subr.mxu0 0.0
  %2428 = vmatpush1.msra.mxu0 0.0
  %2429 = vmatprep.subr.mxu0 0.0
  %2430 = vmatpush1.msra.mxu0 0.0
  %2431 = vmatprep.subr.mxu0 0.0
  %2432 = vmatpush1.msra.mxu0 0.0
  %2433 = vmatprep.subr.mxu0 0.0
  %2434 = vmatpush1.msra.mxu0 0.0
  %2435 = vmatprep.subr.mxu0 0.0
  %2436 = vmatpush1.msra.mxu0 0.0
  %2437 = vmatprep.subr.mxu0 0.0
  %2438 = vmatpush1.msra.mxu0 0.0
  %2439 = vmatprep.subr.mxu0 0.0
  %2440 = vmatpush1.msra.mxu0 0.0
  %2441 = vmatprep.subr.mxu0 0.0
  %2442 = vmatpush1.msra.mxu0 0.0
  %2443 = vmatprep.subr.mxu0 0.0
  %2444 = vmatpush1.msra.mxu0 0.0
  %2445 = vmatprep.subr.mxu0 0.0
  %2446 = vmatpush1.msra.mxu0 0.0
  %2447 = vmatprep.subr.mxu0 0.0
  %2448 = vmatpush1.msra.mxu0 0.0
  %2449 = vmatprep.subr.mxu0 0.0
  %2450 = vmatpush1.msra.mxu0 0.0
  %2451 = vmatprep.subr.mxu0 0.0
  %2452 = vmatpush1.msra.mxu0 %v2268
  %2453 = vmatprep.subr.mxu0 0.0
  %2454 = vmatpush1.msra.mxu0 %v2267
  %2455 = vmatprep.subr.mxu0 0.0
  %2456 = vmatpush1.msra.mxu0 %v2266
  %2457 = vmatprep.subr.mxu0 0.0
  %2458 = vmatpush1.msra.mxu0 %v2265
  %2459 = vmatprep.subr.mxu0 0.0
  %2460 = vmatpush2.msra.mxu0 0.0
  %2461 = vmatprep.subr.mxu0 0.0
  %2462 = vmatpush2.msra.mxu0 0.0
  %2463 = vmatprep.subr.mxu0 0.0
  %2464 = vmatpush2.msra.mxu0 0.0
  %2465 = vmatprep.subr.mxu0 0.0
  %2466 = vmatpush2.msra.mxu0 0.0
  %2467 = vmatprep.subr.mxu0 0.0
  %2468 = vmatpush2.msra.mxu0 0.0
  %2469 = vmatprep.subr.mxu0 0.0
  %2470 = vmatpush2.msra.mxu0 0.0
  %2471 = vmatprep.subr.mxu0 0.0
  %2472 = vmatpush2.msra.mxu0 0.0
  %2473 = vmatprep.subr.mxu0 0.0
  %2474 = vmatpush2.msra.mxu0 0.0
  %2475 = vmatprep.subr.mxu0 0.0
  %2476 = vmatpush2.msra.mxu0 0.0
  %2477 = vmatprep.subr.mxu0 0.0
  %2478 = vmatpush2.msra.mxu0 0.0
  %2479 = vmatprep.subr.mxu0 0.0
  %2480 = vmatpush2.msra.mxu0 0.0
  %2481 = vmatprep.subr.mxu0 0.0
  %2482 = vmatpush2.msra.mxu0 0.0
  %2483 = vmatprep.subr.mxu0 0.0
  %2484 = vmatpush2.msra.mxu0 0.0
  %2485 = vmatprep.subr.mxu0 0.0
  %2486 = vmatpush2.msra.mxu0 0.0
  %2487 = vmatprep.subr.mxu0 0.0
  %2488 = vmatpush2.msra.mxu0 0.0
  %2489 = vmatprep.subr.mxu0 0.0
  %2490 = vmatpush2.msra.mxu0 0.0
  %2491 = vmatprep.mubr.f32.mxu0 0.0
  %2492 = vmatmul.mubr.f32.gmra.mxu0 %v1764
  %v2493 = vpop.f32.mrf.mxu0
  %v2494 = vadd.f32 0.0, %v2493
  %v2495 = vpop.f32.mrf.mxu0
  %2496 = vdwg.mxu0
  %2497 = vmatprep.subr.mxu0 0.0
  %2498 = vmatpush1.msra.mxu0 0.0
  %2499 = vmatprep.subr.mxu0 0.0
  %2500 = vmatpush1.msra.mxu0 0.0
  %2501 = vmatprep.subr.mxu0 0.0
  %2502 = vmatpush1.msra.mxu0 0.0
  %2503 = vmatprep.subr.mxu0 0.0
  %2504 = vmatpush1.msra.mxu0 0.0
  %2505 = vmatprep.subr.mxu0 0.0
  %2506 = vmatpush1.msra.mxu0 0.0
  %2507 = vmatprep.subr.mxu0 0.0
  %2508 = vmatpush1.msra.mxu0 0.0
  %2509 = vmatprep.subr.mxu0 0.0
  %2510 = vmatpush1.msra.mxu0 0.0
  %2511 = vmatprep.subr.mxu0 0.0
  %2512 = vmatpush1.msra.mxu0 0.0
  %2513 = vmatprep.subr.mxu0 0.0
  %2514 = vmatpush1.msra.mxu0 0.0
  %2515 = vmatprep.subr.mxu0 0.0
  %2516 = vmatpush1.msra.mxu0 0.0
  %2517 = vmatprep.subr.mxu0 0.0
  %2518 = vmatpush1.msra.mxu0 0.0
  %2519 = vmatprep.subr.mxu0 0.0
  %2520 = vmatpush1.msra.mxu0 0.0
  %2521 = vmatprep.subr.mxu0 0.0
  %2522 = vmatpush1.msra.mxu0 %v2256
  %2523 = vmatprep.subr.mxu0 0.0
  %2524 = vmatpush1.msra.mxu0 %v2255
  %2525 = vmatprep.subr.mxu0 0.0
  %2526 = vmatpush1.msra.mxu0 %v2254
  %2527 = vmatprep.subr.mxu0 0.0
  %2528 = vmatpush1.msra.mxu0 %v2253
  %2529 = vmatprep.subr.mxu0 0.0
  %2530 = vmatpush2.msra.mxu0 0.0
  %2531 = vmatprep.subr.mxu0 0.0
  %2532 = vmatpush2.msra.mxu0 0.0
  %2533 = vmatprep.subr.mxu0 0.0
  %2534 = vmatpush2.msra.mxu0 0.0
  %2535 = vmatprep.subr.mxu0 0.0
  %2536 = vmatpush2.msra.mxu0 0.0
  %2537 = vmatprep.subr.mxu0 0.0
  %2538 = vmatpush2.msra.mxu0 0.0
  %2539 = vmatprep.subr.mxu0 0.0
  %2540 = vmatpush2.msra.mxu0 0.0
  %2541 = vmatprep.subr.mxu0 0.0
  %2542 = vmatpush2.msra.mxu0 0.0
  %2543 = vmatprep.subr.mxu0 0.0
  %2544 = vmatpush2.msra.mxu0 0.0
  %2545 = vmatprep.subr.mxu0 0.0
  %2546 = vmatpush2.msra.mxu0 0.0
  %2547 = vmatprep.subr.mxu0 0.0
  %2548 = vmatpush2.msra.mxu0 0.0
  %2549 = vmatprep.subr.mxu0 0.0
  %2550 = vmatpush2.msra.mxu0 0.0
  %2551 = vmatprep.subr.mxu0 0.0
  %2552 = vmatpush2.msra.mxu0 0.0
  %2553 = vmatprep.subr.mxu0 0.0
  %2554 = vmatpush2.msra.mxu0 0.0
  %2555 = vmatprep.subr.mxu0 0.0
  %2556 = vmatpush2.msra.mxu0 0.0
  %2557 = vmatprep.subr.mxu0 0.0
  %2558 = vmatpush2.msra.mxu0 0.0
  %2559 = vmatprep.subr.mxu0 0.0
  %2560 = vmatpush2.msra.mxu0 0.0
  %2561 = vmatprep.mubr.f32.mxu0 0.0
  %2562 = vmatmul.mubr.f32.gmra.mxu0 %v2348
  %v2563 = vpop.f32.mrf.mxu0
  %v2564 = vadd.f32 %v2494, %v2563
  %v2565 = vpop.f32.mrf.mxu0
  %2566 = vdwg.mxu0
  %v2568 = vlaneseq
  %v2569 = vshrl.u32 %v2568, 7
  %v2570 = vsub.s32 0, %v2569
  %v2571 = vrot.slane %v2274, %v2570
  %v2573 = vadd.f32 %v2564, %v2571
  %v2575 = vlaneseq
  %v2576 = vshrl.u32 %v2575, 7
  %v2577 = vsub.s32 0, %v2576
  %v2578 = vrot.slane %v2275, %v2577
  %2580 = vmatprep.subr.mxu0 0.0
  %2581 = vmatpush1.msra.mxu0 0.0
  %2582 = vmatprep.subr.mxu0 0.0
  %2583 = vmatpush1.msra.mxu0 0.0
  %2584 = vmatprep.subr.mxu0 0.0
  %2585 = vmatpush1.msra.mxu0 0.0
  %2586 = vmatprep.subr.mxu0 0.0
  %2587 = vmatpush1.msra.mxu0 0.0
  %2588 = vmatprep.subr.mxu0 0.0
  %2589 = vmatpush1.msra.mxu0 0.0
  %2590 = vmatprep.subr.mxu0 0.0
  %2591 = vmatpush1.msra.mxu0 0.0
  %2592 = vmatprep.subr.mxu0 0.0
  %2593 = vmatpush1.msra.mxu0 0.0
  %2594 = vmatprep.subr.mxu0 0.0
  %2595 = vmatpush1.msra.mxu0 0.0
  %2596 = vmatprep.subr.mxu0 0.0
  %2597 = vmatpush1.msra.mxu0 0.0
  %2598 = vmatprep.subr.mxu0 0.0
  %2599 = vmatpush1.msra.mxu0 0.0
  %2600 = vmatprep.subr.mxu0 0.0
  %2601 = vmatpush1.msra.mxu0 0.0
  %2602 = vmatprep.subr.mxu0 0.0
  %2603 = vmatpush1.msra.mxu0 0.0
  %2604 = vmatprep.subr.mxu0 0.0
  %2605 = vmatpush1.msra.mxu0 %v2260
  %2606 = vmatprep.subr.mxu0 0.0
  %2607 = vmatpush1.msra.mxu0 %v2259
  %2608 = vmatprep.subr.mxu0 0.0
  %2609 = vmatpush1.msra.mxu0 %v2258
  %2610 = vmatprep.subr.mxu0 0.0
  %2611 = vmatpush1.msra.mxu0 %v2257
  %2612 = vmatprep.subr.mxu0 0.0
  %2613 = vmatpush2.msra.mxu0 0.0
  %2614 = vmatprep.subr.mxu0 0.0
  %2615 = vmatpush2.msra.mxu0 0.0
  %2616 = vmatprep.subr.mxu0 0.0
  %2617 = vmatpush2.msra.mxu0 0.0
  %2618 = vmatprep.subr.mxu0 0.0
  %2619 = vmatpush2.msra.mxu0 0.0
  %2620 = vmatprep.subr.mxu0 0.0
  %2621 = vmatpush2.msra.mxu0 0.0
  %2622 = vmatprep.subr.mxu0 0.0
  %2623 = vmatpush2.msra.mxu0 0.0
  %2624 = vmatprep.subr.mxu0 0.0
  %2625 = vmatpush2.msra.mxu0 0.0
  %2626 = vmatprep.subr.mxu0 0.0
  %2627 = vmatpush2.msra.mxu0 0.0
  %2628 = vmatprep.subr.mxu0 0.0
  %2629 = vmatpush2.msra.mxu0 0.0
  %2630 = vmatprep.subr.mxu0 0.0
  %2631 = vmatpush2.msra.mxu0 0.0
  %2632 = vmatprep.subr.mxu0 0.0
  %2633 = vmatpush2.msra.mxu0 0.0
  %2634 = vmatprep.subr.mxu0 0.0
  %2635 = vmatpush2.msra.mxu0 0.0
  %2636 = vmatprep.subr.mxu0 0.0
  %2637 = vmatpush2.msra.mxu0 0.0
  %2638 = vmatprep.subr.mxu0 0.0
  %2639 = vmatpush2.msra.mxu0 0.0
  %2640 = vmatprep.subr.mxu0 0.0
  %2641 = vmatpush2.msra.mxu0 0.0
  %2642 = vmatprep.subr.mxu0 0.0
  %2643 = vmatpush2.msra.mxu0 0.0
  %2644 = vmatprep.mubr.f32.mxu0 0.0
  %2645 = vmatmul.mubr.f32.gmra.mxu0 %v2348
  %v2646 = vpop.f32.mrf.mxu0
  %v2647 = vadd.f32 %v2578, %v2646
  %v2648 = vpop.f32.mrf.mxu0
  %2649 = vdwg.mxu0
  %v2651 = vlaneseq
  %v2652 = vshrl.u32 %v2651, 7
  %v2653 = vsub.s32 0, %v2652
  %v2654 = vrot.slane %v2276, %v2653
  %2656 = vmatprep.subr.mxu0 0.0
  %2657 = vmatpush1.msra.mxu0 0.0
  %2658 = vmatprep.subr.mxu0 0.0
  %2659 = vmatpush1.msra.mxu0 0.0
  %2660 = vmatprep.subr.mxu0 0.0
  %2661 = vmatpush1.msra.mxu0 0.0
  %2662 = vmatprep.subr.mxu0 0.0
  %2663 = vmatpush1.msra.mxu0 0.0
  %2664 = vmatprep.subr.mxu0 0.0
  %2665 = vmatpush1.msra.mxu0 0.0
  %2666 = vmatprep.subr.mxu0 0.0
  %2667 = vmatpush1.msra.mxu0 0.0
  %2668 = vmatprep.subr.mxu0 0.0
  %2669 = vmatpush1.msra.mxu0 0.0
  %2670 = vmatprep.subr.mxu0 0.0
  %2671 = vmatpush1.msra.mxu0 0.0
  %2672 = vmatprep.subr.mxu0 0.0
  %2673 = vmatpush1.msra.mxu0 0.0
  %2674 = vmatprep.subr.mxu0 0.0
  %2675 = vmatpush1.msra.mxu0 0.0
  %2676 = vmatprep.subr.mxu0 0.0
  %2677 = vmatpush1.msra.mxu0 0.0
  %2678 = vmatprep.subr.mxu0 0.0
  %2679 = vmatpush1.msra.mxu0 0.0
  %2680 = vmatprep.subr.mxu0 0.0
  %2681 = vmatpush1.msra.mxu0 %v2272
  %2682 = vmatprep.subr.mxu0 0.0
  %2683 = vmatpush1.msra.mxu0 %v2271
  %2684 = vmatprep.subr.mxu0 0.0
  %2685 = vmatpush1.msra.mxu0 %v2270
  %2686 = vmatprep.subr.mxu0 0.0
  %2687 = vmatpush1.msra.mxu0 %v2269
  %2688 = vmatprep.subr.mxu0 0.0
  %2689 = vmatpush2.msra.mxu0 0.0
  %2690 = vmatprep.subr.mxu0 0.0
  %2691 = vmatpush2.msra.mxu0 0.0
  %2692 = vmatprep.subr.mxu0 0.0
  %2693 = vmatpush2.msra.mxu0 0.0
  %2694 = vmatprep.subr.mxu0 0.0
  %2695 = vmatpush2.msra.mxu0 0.0
  %2696 = vmatprep.subr.mxu0 0.0
  %2697 = vmatpush2.msra.mxu0 0.0
  %2698 = vmatprep.subr.mxu0 0.0
  %2699 = vmatpush2.msra.mxu0 0.0
  %2700 = vmatprep.subr.mxu0 0.0
  %2701 = vmatpush2.msra.mxu0 0.0
  %2702 = vmatprep.subr.mxu0 0.0
  %2703 = vmatpush2.msra.mxu0 0.0
  %2704 = vmatprep.subr.mxu0 0.0
  %2705 = vmatpush2.msra.mxu0 0.0
  %2706 = vmatprep.subr.mxu0 0.0
  %2707 = vmatpush2.msra.mxu0 0.0
  %2708 = vmatprep.subr.mxu0 0.0
  %2709 = vmatpush2.msra.mxu0 0.0
  %2710 = vmatprep.subr.mxu0 0.0
  %2711 = vmatpush2.msra.mxu0 0.0
  %2712 = vmatprep.subr.mxu0 0.0
  %2713 = vmatpush2.msra.mxu0 0.0
  %2714 = vmatprep.subr.mxu0 0.0
  %2715 = vmatpush2.msra.mxu0 0.0
  %2716 = vmatprep.subr.mxu0 0.0
  %2717 = vmatpush2.msra.mxu0 0.0
  %2718 = vmatprep.subr.mxu0 0.0
  %2719 = vmatpush2.msra.mxu0 0.0
  %2720 = vmatprep.mubr.f32.mxu0 0.0
  %2721 = vmatmul.mubr.f32.gmra.mxu0 %v1764
  %v2722 = vpop.f32.mrf.mxu0
  %v2723 = vadd.f32 %v2654, %v2722
  %v2724 = vpop.f32.mrf.mxu0
  %2725 = vdwg.mxu0
  %v2726 = vxor.u32 %v2426, 2147483648
  %v2727 = vmul.f32 %v2726, 1.442695
  %v2728 = vpow.pop %v2727
  %v2729 = vadd.f32 %v2728, 1.0
  %v2730 = vrcp.pop %v2729
  %v2731 = vmul.f32 1.0, %v2730
  %v2732 = vxor.u32 %v2573, 2147483648
  %v2733 = vmul.f32 %v2732, 1.442695
  %v2734 = vpow.pop %v2733
  %v2735 = vadd.f32 %v2734, 1.0
  %v2736 = vrcp.pop %v2735
  %v2737 = vmul.f32 1.0, %v2736
  %v2738 = vmul.f32 %v2731, %v2723
  %v2739 = vadd.f32 %v2647, %v2738
  %v2740 = vtanh.pop %v2739
  %v2741 = vsub.f32 1.0, %v2737
  %v2742 = vmul.f32 %v2741, %v2740
  %v2743 = vmul.f32 %v2737, %v1664
  %v2744 = vadd.f32 %v2742, %v2743
  %v2745 = vld [vmem:[%s12] sm:$0xff]
  %v2746 = vld [vmem:[%s12 + $0x8] sm:$0xff]
  %v2747 = vld [vmem:[%s12 + $0x10] sm:$0xff]
  %v2748 = vld [vmem:[%s12 + $0x18] sm:$0xff]
  %v2749 = vld [vmem:[%s13] sm:$0xff]
  %v2750 = vld [vmem:[%s13 + $0x8] sm:$0xff]
  %v2751 = vld [vmem:[%s13 + $0x10] sm:$0xff]
  %v2752 = vld [vmem:[%s13 + $0x18] sm:$0xff]
  %v2753 = vld [vmem:[%s14] sm:$0xff]
  %v2754 = vld [vmem:[%s14 + $0x8] sm:$0xff]
  %v2755 = vld [vmem:[%s14 + $0x10] sm:$0xff]
  %v2756 = vld [vmem:[%s14 + $0x18] sm:$0xff]
  %v2757 = vld [vmem:[%s15] sm:$0xff]
  %v2758 = vld [vmem:[%s15 + $0x8] sm:$0xff]
  %v2759 = vld [vmem:[%s15 + $0x10] sm:$0xff]
  %v2760 = vld [vmem:[%s15 + $0x18] sm:$0xff]
  %v2761 = vld [vmem:[%s16] sm:$0xff]
  %v2762 = vld [vmem:[%s16 + $0x8] sm:$0xff]
  %v2763 = vld [vmem:[%s16 + $0x10] sm:$0xff]
  %v2764 = vld [vmem:[%s16 + $0x18] sm:$0xff]
  %v2765 = vld [vmem:[%s17] sm:$0xff]
  %v2766 = vld [vmem:[%s17 + $0x8] sm:$0xff]
  %v2767 = vld [vmem:[%s17 + $0x10] sm:$0xff]
  %v2768 = vld [vmem:[%s17 + $0x18] sm:$0xff]
  %v2769 = vld [vmem:[%s18] sm:$0x1]
  %v2770 = vld [vmem:[%s19] sm:$0x1]
  %v2771 = vld [vmem:[%s20] sm:$0x1]
  %v2772 = vld [vmem:[%s21] sm:$0x1]
  %2773 = vmatprep.subr.mxu0 0.0
  %2774 = vmatpush1.msra.mxu0 0.0
  %2775 = vmatprep.subr.mxu0 0.0
  %2776 = vmatpush1.msra.mxu0 0.0
  %2777 = vmatprep.subr.mxu0 0.0
  %2778 = vmatpush1.msra.mxu0 0.0
  %2779 = vmatprep.subr.mxu0 0.0
  %2780 = vmatpush1.msra.mxu0 0.0
  %2781 = vmatprep.subr.mxu0 0.0
  %2782 = vmatpush1.msra.mxu0 0.0
  %2783 = vmatprep.subr.mxu0 0.0
  %2784 = vmatpush1.msra.mxu0 0.0
  %2785 = vmatprep.subr.mxu0 0.0
  %2786 = vmatpush1.msra.mxu0 0.0
  %2787 = vmatprep.subr.mxu0 0.0
  %2788 = vmatpush1.msra.mxu0 0.0
  %2789 = vmatprep.subr.mxu0 0.0
  %2790 = vmatpush1.msra.mxu0 0.0
  %2791 = vmatprep.subr.mxu0 0.0
  %2792 = vmatpush1.msra.mxu0 0.0
  %2793 = vmatprep.subr.mxu0 0.0
  %2794 = vmatpush1.msra.mxu0 0.0
  %2795 = vmatprep.subr.mxu0 0.0
  %2796 = vmatpush1.msra.mxu0 0.0
  %2797 = vmatprep.subr.mxu0 0.0
  %2798 = vmatpush1.msra.mxu0 %v2760
  %2799 = vmatprep.subr.mxu0 0.0
  %2800 = vmatpush1.msra.mxu0 %v2759
  %2801 = vmatprep.subr.mxu0 0.0
  %2802 = vmatpush1.msra.mxu0 %v2758
  %2803 = vmatprep.subr.mxu0 0.0
  %2804 = vmatpush1.msra.mxu0 %v2757
  %2805 = vmatprep.subr.mxu0 0.0
  %2806 = vmatpush2.msra.mxu0 0.0
  %2807 = vmatprep.subr.mxu0 0.0
  %2808 = vmatpush2.msra.mxu0 0.0
  %2809 = vmatprep.subr.mxu0 0.0
  %2810 = vmatpush2.msra.mxu0 0.0
  %2811 = vmatprep.subr.mxu0 0.0
  %2812 = vmatpush2.msra.mxu0 0.0
  %2813 = vmatprep.subr.mxu0 0.0
  %2814 = vmatpush2.msra.mxu0 0.0
  %2815 = vmatprep.subr.mxu0 0.0
  %2816 = vmatpush2.msra.mxu0 0.0
  %2817 = vmatprep.subr.mxu0 0.0
  %2818 = vmatpush2.msra.mxu0 0.0
  %2819 = vmatprep.subr.mxu0 0.0
  %2820 = vmatpush2.msra.mxu0 0.0
  %2821 = vmatprep.subr.mxu0 0.0
  %2822 = vmatpush2.msra.mxu0 0.0
  %2823 = vmatprep.subr.mxu0 0.0
  %2824 = vmatpush2.msra.mxu0 0.0
  %2825 = vmatprep.subr.mxu0 0.0
  %2826 = vmatpush2.msra.mxu0 0.0
  %2827 = vmatprep.subr.mxu0 0.0
  %2828 = vmatpush2.msra.mxu0 0.0
  %2829 = vmatprep.subr.mxu0 0.0
  %2830 = vmatpush2.msra.mxu0 0.0
  %2831 = vmatprep.subr.mxu0 0.0
  %2832 = vmatpush2.msra.mxu0 0.0
  %2833 = vmatprep.subr.mxu0 0.0
  %2834 = vmatpush2.msra.mxu0 0.0
  %2835 = vmatprep.subr.mxu0 0.0
  %2836 = vmatpush2.msra.mxu0 0.0
  %2837 = vmatprep.mubr.f32.mxu0 0.0
  %2838 = vmatmul.mubr.f32.gmra.mxu0 %v2173
  %v2839 = vpop.f32.mrf.mxu0
  %v2840 = vadd.f32 0.0, %v2839
  %v2841 = vpop.f32.mrf.mxu0
  %2842 = vdwg.mxu0
  %v2844 = vsel %vm111, %v2744, 0
  %2846 = vmatprep.subr.mxu0 0.0
  %2847 = vmatpush1.msra.mxu0 0.0
  %2848 = vmatprep.subr.mxu0 0.0
  %2849 = vmatpush1.msra.mxu0 0.0
  %2850 = vmatprep.subr.mxu0 0.0
  %2851 = vmatpush1.msra.mxu0 0.0
  %2852 = vmatprep.subr.mxu0 0.0
  %2853 = vmatpush1.msra.mxu0 0.0
  %2854 = vmatprep.subr.mxu0 0.0
  %2855 = vmatpush1.msra.mxu0 0.0
  %2856 = vmatprep.subr.mxu0 0.0
  %2857 = vmatpush1.msra.mxu0 0.0
  %2858 = vmatprep.subr.mxu0 0.0
  %2859 = vmatpush1.msra.mxu0 0.0
  %2860 = vmatprep.subr.mxu0 0.0
  %2861 = vmatpush1.msra.mxu0 0.0
  %2862 = vmatprep.subr.mxu0 0.0
  %2863 = vmatpush1.msra.mxu0 0.0
  %2864 = vmatprep.subr.mxu0 0.0
  %2865 = vmatpush1.msra.mxu0 0.0
  %2866 = vmatprep.subr.mxu0 0.0
  %2867 = vmatpush1.msra.mxu0 0.0
  %2868 = vmatprep.subr.mxu0 0.0
  %2869 = vmatpush1.msra.mxu0 0.0
  %2870 = vmatprep.subr.mxu0 0.0
  %2871 = vmatpush1.msra.mxu0 %v2748
  %2872 = vmatprep.subr.mxu0 0.0
  %2873 = vmatpush1.msra.mxu0 %v2747
  %2874 = vmatprep.subr.mxu0 0.0
  %2875 = vmatpush1.msra.mxu0 %v2746
  %2876 = vmatprep.subr.mxu0 0.0
  %2877 = vmatpush1.msra.mxu0 %v2745
  %2878 = vmatprep.subr.mxu0 0.0
  %2879 = vmatpush2.msra.mxu0 0.0
  %2880 = vmatprep.subr.mxu0 0.0
  %2881 = vmatpush2.msra.mxu0 0.0
  %2882 = vmatprep.subr.mxu0 0.0
  %2883 = vmatpush2.msra.mxu0 0.0
  %2884 = vmatprep.subr.mxu0 0.0
  %2885 = vmatpush2.msra.mxu0 0.0
  %2886 = vmatprep.subr.mxu0 0.0
  %2887 = vmatpush2.msra.mxu0 0.0
  %2888 = vmatprep.subr.mxu0 0.0
  %2889 = vmatpush2.msra.mxu0 0.0
  %2890 = vmatprep.subr.mxu0 0.0
  %2891 = vmatpush2.msra.mxu0 0.0
  %2892 = vmatprep.subr.mxu0 0.0
  %2893 = vmatpush2.msra.mxu0 0.0
  %2894 = vmatprep.subr.mxu0 0.0
  %2895 = vmatpush2.msra.mxu0 0.0
  %2896 = vmatprep.subr.mxu0 0.0
  %2897 = vmatpush2.msra.mxu0 0.0
  %2898 = vmatprep.subr.mxu0 0.0
  %2899 = vmatpush2.msra.mxu0 0.0
  %2900 = vmatprep.subr.mxu0 0.0
  %2901 = vmatpush2.msra.mxu0 0.0
  %2902 = vmatprep.subr.mxu0 0.0
  %2903 = vmatpush2.msra.mxu0 0.0
  %2904 = vmatprep.subr.mxu0 0.0
  %2905 = vmatpush2.msra.mxu0 0.0
  %2906 = vmatprep.subr.mxu0 0.0
  %2907 = vmatpush2.msra.mxu0 0.0
  %2908 = vmatprep.subr.mxu0 0.0
  %2909 = vmatpush2.msra.mxu0 0.0
  %2910 = vmatprep.mubr.f32.mxu0 0.0
  %2911 = vmatmul.mubr.f32.gmra.mxu0 %v2844
  %v2912 = vpop.f32.mrf.mxu0
  %v2913 = vadd.f32 %v2840, %v2912
  %v2914 = vpop.f32.mrf.mxu0
  %2915 = vdwg.mxu0
  %v2917 = vlaneseq
  %v2918 = vshrl.u32 %v2917, 7
  %v2919 = vsub.s32 0, %v2918
  %v2920 = vrot.slane %v2769, %v2919
  %v2922 = vadd.f32 %v2913, %v2920
  %2923 = vmatprep.subr.mxu0 0.0
  %2924 = vmatpush1.msra.mxu0 0.0
  %2925 = vmatprep.subr.mxu0 0.0
  %2926 = vmatpush1.msra.mxu0 0.0
  %2927 = vmatprep.subr.mxu0 0.0
  %2928 = vmatpush1.msra.mxu0 0.0
  %2929 = vmatprep.subr.mxu0 0.0
  %2930 = vmatpush1.msra.mxu0 0.0
  %2931 = vmatprep.subr.mxu0 0.0
  %2932 = vmatpush1.msra.mxu0 0.0
  %2933 = vmatprep.subr.mxu0 0.0
  %2934 = vmatpush1.msra.mxu0 0.0
  %2935 = vmatprep.subr.mxu0 0.0
  %2936 = vmatpush1.msra.mxu0 0.0
  %2937 = vmatprep.subr.mxu0 0.0
  %2938 = vmatpush1.msra.mxu0 0.0
  %2939 = vmatprep.subr.mxu0 0.0
  %2940 = vmatpush1.msra.mxu0 0.0
  %2941 = vmatprep.subr.mxu0 0.0
  %2942 = vmatpush1.msra.mxu0 0.0
  %2943 = vmatprep.subr.mxu0 0.0
  %2944 = vmatpush1.msra.mxu0 0.0
  %2945 = vmatprep.subr.mxu0 0.0
  %2946 = vmatpush1.msra.mxu0 0.0
  %2947 = vmatprep.subr.mxu0 0.0
  %2948 = vmatpush1.msra.mxu0 %v2764
  %2949 = vmatprep.subr.mxu0 0.0
  %2950 = vmatpush1.msra.mxu0 %v2763
  %2951 = vmatprep.subr.mxu0 0.0
  %2952 = vmatpush1.msra.mxu0 %v2762
  %2953 = vmatprep.subr.mxu0 0.0
  %2954 = vmatpush1.msra.mxu0 %v2761
  %2955 = vmatprep.subr.mxu0 0.0
  %2956 = vmatpush2.msra.mxu0 0.0
  %2957 = vmatprep.subr.mxu0 0.0
  %2958 = vmatpush2.msra.mxu0 0.0
  %2959 = vmatprep.subr.mxu0 0.0
  %2960 = vmatpush2.msra.mxu0 0.0
  %2961 = vmatprep.subr.mxu0 0.0
  %2962 = vmatpush2.msra.mxu0 0.0
  %2963 = vmatprep.subr.mxu0 0.0
  %2964 = vmatpush2.msra.mxu0 0.0
  %2965 = vmatprep.subr.mxu0 0.0
  %2966 = vmatpush2.msra.mxu0 0.0
  %2967 = vmatprep.subr.mxu0 0.0
  %2968 = vmatpush2.msra.mxu0 0.0
  %2969 = vmatprep.subr.mxu0 0.0
  %2970 = vmatpush2.msra.mxu0 0.0
  %2971 = vmatprep.subr.mxu0 0.0
  %2972 = vmatpush2.msra.mxu0 0.0
  %2973 = vmatprep.subr.mxu0 0.0
  %2974 = vmatpush2.msra.mxu0 0.0
  %2975 = vmatprep.subr.mxu0 0.0
  %2976 = vmatpush2.msra.mxu0 0.0
  %2977 = vmatprep.subr.mxu0 0.0
  %2978 = vmatpush2.msra.mxu0 0.0
  %2979 = vmatprep.subr.mxu0 0.0
  %2980 = vmatpush2.msra.mxu0 0.0
  %2981 = vmatprep.subr.mxu0 0.0
  %2982 = vmatpush2.msra.mxu0 0.0
  %2983 = vmatprep.subr.mxu0 0.0
  %2984 = vmatpush2.msra.mxu0 0.0
  %2985 = vmatprep.subr.mxu0 0.0
  %2986 = vmatpush2.msra.mxu0 0.0
  %2987 = vmatprep.mubr.f32.mxu0 0.0
  %2988 = vmatmul.mubr.f32.gmra.mxu0 %v2173
  %v2989 = vpop.f32.mrf.mxu0
  %v2990 = vadd.f32 0.0, %v2989
  %v2991 = vpop.f32.mrf.mxu0
  %2992 = vdwg.mxu0
  %2993 = vmatprep.subr.mxu0 0.0
  %2994 = vmatpush1.msra.mxu0 0.0
  %2995 = vmatprep.subr.mxu0 0.0
  %2996 = vmatpush1.msra.mxu0 0.0
  %2997 = vmatprep.subr.mxu0 0.0
  %2998 = vmatpush1.msra.mxu0 0.0
  %2999 = vmatprep.subr.mxu0 0.0
  %3000 = vmatpush1.msra.mxu0 0.0
  %3001 = vmatprep.subr.mxu0 0.0
  %3002 = vmatpush1.msra.mxu0 0.0
  %3003 = vmatprep.subr.mxu0 0.0
  %3004 = vmatpush1.msra.mxu0 0.0
  %3005 = vmatprep.subr.mxu0 0.0
  %3006 = vmatpush1.msra.mxu0 0.0
  %3007 = vmatprep.subr.mxu0 0.0
  %3008 = vmatpush1.msra.mxu0 0.0
  %3009 = vmatprep.subr.mxu0 0.0
  %3010 = vmatpush1.msra.mxu0 0.0
  %3011 = vmatprep.subr.mxu0 0.0
  %3012 = vmatpush1.msra.mxu0 0.0
  %3013 = vmatprep.subr.mxu0 0.0
  %3014 = vmatpush1.msra.mxu0 0.0
  %3015 = vmatprep.subr.mxu0 0.0
  %3016 = vmatpush1.msra.mxu0 0.0
  %3017 = vmatprep.subr.mxu0 0.0
  %3018 = vmatpush1.msra.mxu0 %v2752
  %3019 = vmatprep.subr.mxu0 0.0
  %3020 = vmatpush1.msra.mxu0 %v2751
  %3021 = vmatprep.subr.mxu0 0.0
  %3022 = vmatpush1.msra.mxu0 %v2750
  %3023 = vmatprep.subr.mxu0 0.0
  %3024 = vmatpush1.msra.mxu0 %v2749
  %3025 = vmatprep.subr.mxu0 0.0
  %3026 = vmatpush2.msra.mxu0 0.0
  %3027 = vmatprep.subr.mxu0 0.0
  %3028 = vmatpush2.msra.mxu0 0.0
  %3029 = vmatprep.subr.mxu0 0.0
  %3030 = vmatpush2.msra.mxu0 0.0
  %3031 = vmatprep.subr.mxu0 0.0
  %3032 = vmatpush2.msra.mxu0 0.0
  %3033 = vmatprep.subr.mxu0 0.0
  %3034 = vmatpush2.msra.mxu0 0.0
  %3035 = vmatprep.subr.mxu0 0.0
  %3036 = vmatpush2.msra.mxu0 0.0
  %3037 = vmatprep.subr.mxu0 0.0
  %3038 = vmatpush2.msra.mxu0 0.0
  %3039 = vmatprep.subr.mxu0 0.0
  %3040 = vmatpush2.msra.mxu0 0.0
  %3041 = vmatprep.subr.mxu0 0.0
  %3042 = vmatpush2.msra.mxu0 0.0
  %3043 = vmatprep.subr.mxu0 0.0
  %3044 = vmatpush2.msra.mxu0 0.0
  %3045 = vmatprep.subr.mxu0 0.0
  %3046 = vmatpush2.msra.mxu0 0.0
  %3047 = vmatprep.subr.mxu0 0.0
  %3048 = vmatpush2.msra.mxu0 0.0
  %3049 = vmatprep.subr.mxu0 0.0
  %3050 = vmatpush2.msra.mxu0 0.0
  %3051 = vmatprep.subr.mxu0 0.0
  %3052 = vmatpush2.msra.mxu0 0.0
  %3053 = vmatprep.subr.mxu0 0.0
  %3054 = vmatpush2.msra.mxu0 0.0
  %3055 = vmatprep.subr.mxu0 0.0
  %3056 = vmatpush2.msra.mxu0 0.0
  %3057 = vmatprep.mubr.f32.mxu0 0.0
  %3058 = vmatmul.mubr.f32.gmra.mxu0 %v2844
  %v3059 = vpop.f32.mrf.mxu0
  %v3060 = vadd.f32 %v2990, %v3059
  %v3061 = vpop.f32.mrf.mxu0
  %3062 = vdwg.mxu0
  %v3064 = vlaneseq
  %v3065 = vshrl.u32 %v3064, 7
  %v3066 = vsub.s32 0, %v3065
  %v3067 = vrot.slane %v2770, %v3066
  %v3069 = vadd.f32 %v3060, %v3067
  %v3071 = vlaneseq
  %v3072 = vshrl.u32 %v3071, 7
  %v3073 = vsub.s32 0, %v3072
  %v3074 = vrot.slane %v2771, %v3073
  %3076 = vmatprep.subr.mxu0 0.0
  %3077 = vmatpush1.msra.mxu0 0.0
  %3078 = vmatprep.subr.mxu0 0.0
  %3079 = vmatpush1.msra.mxu0 0.0
  %3080 = vmatprep.subr.mxu0 0.0
  %3081 = vmatpush1.msra.mxu0 0.0
  %3082 = vmatprep.subr.mxu0 0.0
  %3083 = vmatpush1.msra.mxu0 0.0
  %3084 = vmatprep.subr.mxu0 0.0
  %3085 = vmatpush1.msra.mxu0 0.0
  %3086 = vmatprep.subr.mxu0 0.0
  %3087 = vmatpush1.msra.mxu0 0.0
  %3088 = vmatprep.subr.mxu0 0.0
  %3089 = vmatpush1.msra.mxu0 0.0
  %3090 = vmatprep.subr.mxu0 0.0
  %3091 = vmatpush1.msra.mxu0 0.0
  %3092 = vmatprep.subr.mxu0 0.0
  %3093 = vmatpush1.msra.mxu0 0.0
  %3094 = vmatprep.subr.mxu0 0.0
  %3095 = vmatpush1.msra.mxu0 0.0
  %3096 = vmatprep.subr.mxu0 0.0
  %3097 = vmatpush1.msra.mxu0 0.0
  %3098 = vmatprep.subr.mxu0 0.0
  %3099 = vmatpush1.msra.mxu0 0.0
  %3100 = vmatprep.subr.mxu0 0.0
  %3101 = vmatpush1.msra.mxu0 %v2756
  %3102 = vmatprep.subr.mxu0 0.0
  %3103 = vmatpush1.msra.mxu0 %v2755
  %3104 = vmatprep.subr.mxu0 0.0
  %3105 = vmatpush1.msra.mxu0 %v2754
  %3106 = vmatprep.subr.mxu0 0.0
  %3107 = vmatpush1.msra.mxu0 %v2753
  %3108 = vmatprep.subr.mxu0 0.0
  %3109 = vmatpush2.msra.mxu0 0.0
  %3110 = vmatprep.subr.mxu0 0.0
  %3111 = vmatpush2.msra.mxu0 0.0
  %3112 = vmatprep.subr.mxu0 0.0
  %3113 = vmatpush2.msra.mxu0 0.0
  %3114 = vmatprep.subr.mxu0 0.0
  %3115 = vmatpush2.msra.mxu0 0.0
  %3116 = vmatprep.subr.mxu0 0.0
  %3117 = vmatpush2.msra.mxu0 0.0
  %3118 = vmatprep.subr.mxu0 0.0
  %3119 = vmatpush2.msra.mxu0 0.0
  %3120 = vmatprep.subr.mxu0 0.0
  %3121 = vmatpush2.msra.mxu0 0.0
  %3122 = vmatprep.subr.mxu0 0.0
  %3123 = vmatpush2.msra.mxu0 0.0
  %3124 = vmatprep.subr.mxu0 0.0
  %3125 = vmatpush2.msra.mxu0 0.0
  %3126 = vmatprep.subr.mxu0 0.0
  %3127 = vmatpush2.msra.mxu0 0.0
  %3128 = vmatprep.subr.mxu0 0.0
  %3129 = vmatpush2.msra.mxu0 0.0
  %3130 = vmatprep.subr.mxu0 0.0
  %3131 = vmatpush2.msra.mxu0 0.0
  %3132 = vmatprep.subr.mxu0 0.0
  %3133 = vmatpush2.msra.mxu0 0.0
  %3134 = vmatprep.subr.mxu0 0.0
  %3135 = vmatpush2.msra.mxu0 0.0
  %3136 = vmatprep.subr.mxu0 0.0
  %3137 = vmatpush2.msra.mxu0 0.0
  %3138 = vmatprep.subr.mxu0 0.0
  %3139 = vmatpush2.msra.mxu0 0.0
  %3140 = vmatprep.mubr.f32.mxu0 0.0
  %3141 = vmatmul.mubr.f32.gmra.mxu0 %v2844
  %v3142 = vpop.f32.mrf.mxu0
  %v3143 = vadd.f32 %v3074, %v3142
  %v3144 = vpop.f32.mrf.mxu0
  %3145 = vdwg.mxu0
  %v3147 = vlaneseq
  %v3148 = vshrl.u32 %v3147, 7
  %v3149 = vsub.s32 0, %v3148
  %v3150 = vrot.slane %v2772, %v3149
  %3152 = vmatprep.subr.mxu0 0.0
  %3153 = vmatpush1.msra.mxu0 0.0
  %3154 = vmatprep.subr.mxu0 0.0
  %3155 = vmatpush1.msra.mxu0 0.0
  %3156 = vmatprep.subr.mxu0 0.0
  %3157 = vmatpush1.msra.mxu0 0.0
  %3158 = vmatprep.subr.mxu0 0.0
  %3159 = vmatpush1.msra.mxu0 0.0
  %3160 = vmatprep.subr.mxu0 0.0
  %3161 = vmatpush1.msra.mxu0 0.0
  %3162 = vmatprep.subr.mxu0 0.0
  %3163 = vmatpush1.msra.mxu0 0.0
  %3164 = vmatprep.subr.mxu0 0.0
  %3165 = vmatpush1.msra.mxu0 0.0
  %3166 = vmatprep.subr.mxu0 0.0
  %3167 = vmatpush1.msra.mxu0 0.0
  %3168 = vmatprep.subr.mxu0 0.0
  %3169 = vmatpush1.msra.mxu0 0.0
  %3170 = vmatprep.subr.mxu0 0.0
  %3171 = vmatpush1.msra.mxu0 0.0
  %3172 = vmatprep.subr.mxu0 0.0
  %3173 = vmatpush1.msra.mxu0 0.0
  %3174 = vmatprep.subr.mxu0 0.0
  %3175 = vmatpush1.msra.mxu0 0.0
  %3176 = vmatprep.subr.mxu0 0.0
  %3177 = vmatpush1.msra.mxu0 %v2768
  %3178 = vmatprep.subr.mxu0 0.0
  %3179 = vmatpush1.msra.mxu0 %v2767
  %3180 = vmatprep.subr.mxu0 0.0
  %3181 = vmatpush1.msra.mxu0 %v2766
  %3182 = vmatprep.subr.mxu0 0.0
  %3183 = vmatpush1.msra.mxu0 %v2765
  %3184 = vmatprep.subr.mxu0 0.0
  %3185 = vmatpush2.msra.mxu0 0.0
  %3186 = vmatprep.subr.mxu0 0.0
  %3187 = vmatpush2.msra.mxu0 0.0
  %3188 = vmatprep.subr.mxu0 0.0
  %3189 = vmatpush2.msra.mxu0 0.0
  %3190 = vmatprep.subr.mxu0 0.0
  %3191 = vmatpush2.msra.mxu0 0.0
  %3192 = vmatprep.subr.mxu0 0.0
  %3193 = vmatpush2.msra.mxu0 0.0
  %3194 = vmatprep.subr.mxu0 0.0
  %3195 = vmatpush2.msra.mxu0 0.0
  %3196 = vmatprep.subr.mxu0 0.0
  %3197 = vmatpush2.msra.mxu0 0.0
  %3198 = vmatprep.subr.mxu0 0.0
  %3199 = vmatpush2.msra.mxu0 0.0
  %3200 = vmatprep.subr.mxu0 0.0
  %3201 = vmatpush2.msra.mxu0 0.0
  %3202 = vmatprep.subr.mxu0 0.0
  %3203 = vmatpush2.msra.mxu0 0.0
  %3204 = vmatprep.subr.mxu0 0.0
  %3205 = vmatpush2.msra.mxu0 0.0
  %3206 = vmatprep.subr.mxu0 0.0
  %3207 = vmatpush2.msra.mxu0 0.0
  %3208 = vmatprep.subr.mxu0 0.0
  %3209 = vmatpush2.msra.mxu0 0.0
  %3210 = vmatprep.subr.mxu0 0.0
  %3211 = vmatpush2.msra.mxu0 0.0
  %3212 = vmatprep.subr.mxu0 0.0
  %3213 = vmatpush2.msra.mxu0 0.0
  %3214 = vmatprep.subr.mxu0 0.0
  %3215 = vmatpush2.msra.mxu0 0.0
  %3216 = vmatprep.mubr.f32.mxu0 0.0
  %3217 = vmatmul.mubr.f32.gmra.mxu0 %v2173
  %v3218 = vpop.f32.mrf.mxu0
  %v3219 = vadd.f32 %v3150, %v3218
  %v3220 = vpop.f32.mrf.mxu0
  %3221 = vdwg.mxu0
  %v3222 = vxor.u32 %v2922, 2147483648
  %v3223 = vmul.f32 %v3222, 1.442695
  %v3224 = vpow.pop %v3223
  %v3225 = vadd.f32 %v3224, 1.0
  %v3226 = vrcp.pop %v3225
  %v3227 = vmul.f32 1.0, %v3226
  %v3228 = vxor.u32 %v3069, 2147483648
  %v3229 = vmul.f32 %v3228, 1.442695
  %v3230 = vpow.pop %v3229
  %v3231 = vadd.f32 %v3230, 1.0
  %v3232 = vrcp.pop %v3231
  %v3233 = vmul.f32 1.0, %v3232
  %v3234 = vmul.f32 %v3227, %v3219
  %v3235 = vadd.f32 %v3143, %v3234
  %v3236 = vtanh.pop %v3235
  %v3237 = vsub.f32 1.0, %v3233
  %v3238 = vmul.f32 %v3237, %v3236
  %v3239 = vmul.f32 %v3233, %v2160
  %v3240 = vadd.f32 %v3238, %v3239
  %v3241 = vld [vmem:[%s22] sm:$0xff]
  %v3242 = vld [vmem:[%s22 + $0x8] sm:$0xff]
  %v3243 = vld [vmem:[%s22 + $0x10] sm:$0xff]
  %v3244 = vld [vmem:[%s22 + $0x18] sm:$0xff]
  %v3245 = vld [vmem:[%s23] sm:$0x1]
  %v3247 = vlaneseq
  %v3248 = vshrl.u32 %v3247, 7
  %v3249 = vsub.s32 0, %v3248
  %v3250 = vrot.slane %v3245, %v3249
  %v3253 = vsel %vm111, %v3240, 0
  %3255 = vmatprep.subr.mxu0 0.0
  %3256 = vmatpush1.msra.mxu0 0.0
  %3257 = vmatprep.subr.mxu0 0.0
  %3258 = vmatpush1.msra.mxu0 0.0
  %3259 = vmatprep.subr.mxu0 0.0
  %3260 = vmatpush1.msra.mxu0 0.0
  %3261 = vmatprep.subr.mxu0 0.0
  %3262 = vmatpush1.msra.mxu0 0.0
  %3263 = vmatprep.subr.mxu0 0.0
  %3264 = vmatpush1.msra.mxu0 0.0
  %3265 = vmatprep.subr.mxu0 0.0
  %3266 = vmatpush1.msra.mxu0 0.0
  %3267 = vmatprep.subr.mxu0 0.0
  %3268 = vmatpush1.msra.mxu0 0.0
  %3269 = vmatprep.subr.mxu0 0.0
  %3270 = vmatpush1.msra.mxu0 0.0
  %3271 = vmatprep.subr.mxu0 0.0
  %3272 = vmatpush1.msra.mxu0 0.0
  %3273 = vmatprep.subr.mxu0 0.0
  %3274 = vmatpush1.msra.mxu0 0.0
  %3275 = vmatprep.subr.mxu0 0.0
  %3276 = vmatpush1.msra.mxu0 0.0
  %3277 = vmatprep.subr.mxu0 0.0
  %3278 = vmatpush1.msra.mxu0 0.0
  %3279 = vmatprep.subr.mxu0 0.0
  %3280 = vmatpush1.msra.mxu0 %v3244
  %3281 = vmatprep.subr.mxu0 0.0
  %3282 = vmatpush1.msra.mxu0 %v3243
  %3283 = vmatprep.subr.mxu0 0.0
  %3284 = vmatpush1.msra.mxu0 %v3242
  %3285 = vmatprep.subr.mxu0 0.0
  %3286 = vmatpush1.msra.mxu0 %v3241
  %3287 = vmatprep.subr.mxu0 0.0
  %3288 = vmatpush2.msra.mxu0 0.0
  %3289 = vmatprep.subr.mxu0 0.0
  %3290 = vmatpush2.msra.mxu0 0.0
  %3291 = vmatprep.subr.mxu0 0.0
  %3292 = vmatpush2.msra.mxu0 0.0
  %3293 = vmatprep.subr.mxu0 0.0
  %3294 = vmatpush2.msra.mxu0 0.0
  %3295 = vmatprep.subr.mxu0 0.0
  %3296 = vmatpush2.msra.mxu0 0.0
  %3297 = vmatprep.subr.mxu0 0.0
  %3298 = vmatpush2.msra.mxu0 0.0
  %3299 = vmatprep.subr.mxu0 0.0
  %3300 = vmatpush2.msra.mxu0 0.0
  %3301 = vmatprep.subr.mxu0 0.0
  %3302 = vmatpush2.msra.mxu0 0.0
  %3303 = vmatprep.subr.mxu0 0.0
  %3304 = vmatpush2.msra.mxu0 0.0
  %3305 = vmatprep.subr.mxu0 0.0
  %3306 = vmatpush2.msra.mxu0 0.0
  %3307 = vmatprep.subr.mxu0 0.0
  %3308 = vmatpush2.msra.mxu0 0.0
  %3309 = vmatprep.subr.mxu0 0.0
  %3310 = vmatpush2.msra.mxu0 0.0
  %3311 = vmatprep.subr.mxu0 0.0
  %3312 = vmatpush2.msra.mxu0 0.0
  %3313 = vmatprep.subr.mxu0 0.0
  %3314 = vmatpush2.msra.mxu0 0.0
  %3315 = vmatprep.subr.mxu0 0.0
  %3316 = vmatpush2.msra.mxu0 0.0
  %3317 = vmatprep.subr.mxu0 0.0
  %3318 = vmatpush2.msra.mxu0 0.0
  %3319 = vmatprep.mubr.f32.mxu0 0.0
  %3320 = vmatmul.mubr.f32.gmra.mxu0 %v3253
  %v3321 = vpop.f32.mrf.mxu0
  %v3322 = vadd.f32 %v3250, %v3321
  %v3323 = vpop.f32.mrf.mxu0
  %3324 = vdwg.mxu0
  %s3325 = scalar_lea.vmem %s24, 16
  %3326 = vst [vmem:[%s3325] sm:$0xff] %v3322
  %s3327 = scalar_lea.vmem %s0, 24
  %v3328 = vld [vmem:[%s3327] sm:$0xff]
  %v3329 = vld [vmem:[%s2] sm:$0xff]
  %v3330 = vld [vmem:[%s2 + $0x8] sm:$0xff]
  %v3331 = vld [vmem:[%s2 + $0x10] sm:$0xff]
  %v3332 = vld [vmem:[%s2 + $0x18] sm:$0xff]
  %v3333 = vld [vmem:[%s3] sm:$0xff]
  %v3334 = vld [vmem:[%s3 + $0x8] sm:$0xff]
  %v3335 = vld [vmem:[%s3 + $0x10] sm:$0xff]
  %v3336 = vld [vmem:[%s3 + $0x18] sm:$0xff]
  %v3337 = vld [vmem:[%s4] sm:$0xff]
  %v3338 = vld [vmem:[%s4 + $0x8] sm:$0xff]
  %v3339 = vld [vmem:[%s4 + $0x10] sm:$0xff]
  %v3340 = vld [vmem:[%s4 + $0x18] sm:$0xff]
  %v3341 = vld [vmem:[%s5] sm:$0xff]
  %v3342 = vld [vmem:[%s5 + $0x8] sm:$0xff]
  %v3343 = vld [vmem:[%s5 + $0x10] sm:$0xff]
  %v3344 = vld [vmem:[%s5 + $0x18] sm:$0xff]
  %v3345 = vld [vmem:[%s6] sm:$0xff]
  %v3346 = vld [vmem:[%s6 + $0x8] sm:$0xff]
  %v3347 = vld [vmem:[%s6 + $0x10] sm:$0xff]
  %v3348 = vld [vmem:[%s6 + $0x18] sm:$0xff]
  %v3349 = vld [vmem:[%s7] sm:$0xff]
  %v3350 = vld [vmem:[%s7 + $0x8] sm:$0xff]
  %v3351 = vld [vmem:[%s7 + $0x10] sm:$0xff]
  %v3352 = vld [vmem:[%s7 + $0x18] sm:$0xff]
  %v3353 = vld [vmem:[%s8] sm:$0x1]
  %v3354 = vld [vmem:[%s9] sm:$0x1]
  %v3355 = vld [vmem:[%s10] sm:$0x1]
  %v3356 = vld [vmem:[%s11] sm:$0x1]
  %3357 = vmatprep.subr.mxu0 0.0
  %3358 = vmatpush1.msra.mxu0 0.0
  %3359 = vmatprep.subr.mxu0 0.0
  %3360 = vmatpush1.msra.mxu0 0.0
  %3361 = vmatprep.subr.mxu0 0.0
  %3362 = vmatpush1.msra.mxu0 0.0
  %3363 = vmatprep.subr.mxu0 0.0
  %3364 = vmatpush1.msra.mxu0 0.0
  %3365 = vmatprep.subr.mxu0 0.0
  %3366 = vmatpush1.msra.mxu0 0.0
  %3367 = vmatprep.subr.mxu0 0.0
  %3368 = vmatpush1.msra.mxu0 0.0
  %3369 = vmatprep.subr.mxu0 0.0
  %3370 = vmatpush1.msra.mxu0 0.0
  %3371 = vmatprep.subr.mxu0 0.0
  %3372 = vmatpush1.msra.mxu0 0.0
  %3373 = vmatprep.subr.mxu0 0.0
  %3374 = vmatpush1.msra.mxu0 0.0
  %3375 = vmatprep.subr.mxu0 0.0
  %3376 = vmatpush1.msra.mxu0 0.0
  %3377 = vmatprep.subr.mxu0 0.0
  %3378 = vmatpush1.msra.mxu0 0.0
  %3379 = vmatprep.subr.mxu0 0.0
  %3380 = vmatpush1.msra.mxu0 0.0
  %3381 = vmatprep.subr.mxu0 0.0
  %3382 = vmatpush1.msra.mxu0 %v3344
  %3383 = vmatprep.subr.mxu0 0.0
  %3384 = vmatpush1.msra.mxu0 %v3343
  %3385 = vmatprep.subr.mxu0 0.0
  %3386 = vmatpush1.msra.mxu0 %v3342
  %3387 = vmatprep.subr.mxu0 0.0
  %3388 = vmatpush1.msra.mxu0 %v3341
  %3389 = vmatprep.subr.mxu0 0.0
  %3390 = vmatpush2.msra.mxu0 0.0
  %3391 = vmatprep.subr.mxu0 0.0
  %3392 = vmatpush2.msra.mxu0 0.0
  %3393 = vmatprep.subr.mxu0 0.0
  %3394 = vmatpush2.msra.mxu0 0.0
  %3395 = vmatprep.subr.mxu0 0.0
  %3396 = vmatpush2.msra.mxu0 0.0
  %3397 = vmatprep.subr.mxu0 0.0
  %3398 = vmatpush2.msra.mxu0 0.0
  %3399 = vmatprep.subr.mxu0 0.0
  %3400 = vmatpush2.msra.mxu0 0.0
  %3401 = vmatprep.subr.mxu0 0.0
  %3402 = vmatpush2.msra.mxu0 0.0
  %3403 = vmatprep.subr.mxu0 0.0
  %3404 = vmatpush2.msra.mxu0 0.0
  %3405 = vmatprep.subr.mxu0 0.0
  %3406 = vmatpush2.msra.mxu0 0.0
  %3407 = vmatprep.subr.mxu0 0.0
  %3408 = vmatpush2.msra.mxu0 0.0
  %3409 = vmatprep.subr.mxu0 0.0
  %3410 = vmatpush2.msra.mxu0 0.0
  %3411 = vmatprep.subr.mxu0 0.0
  %3412 = vmatpush2.msra.mxu0 0.0
  %3413 = vmatprep.subr.mxu0 0.0
  %3414 = vmatpush2.msra.mxu0 0.0
  %3415 = vmatprep.subr.mxu0 0.0
  %3416 = vmatpush2.msra.mxu0 0.0
  %3417 = vmatprep.subr.mxu0 0.0
  %3418 = vmatpush2.msra.mxu0 0.0
  %3419 = vmatprep.subr.mxu0 0.0
  %3420 = vmatpush2.msra.mxu0 0.0
  %3421 = vmatprep.mubr.f32.mxu0 0.0
  %3422 = vmatmul.mubr.f32.gmra.mxu0 %v2844
  %v3423 = vpop.f32.mrf.mxu0
  %v3424 = vadd.f32 0.0, %v3423
  %v3425 = vpop.f32.mrf.mxu0
  %3426 = vdwg.mxu0
  %v3428 = vsel %vm111, %v3328, 0
  %3430 = vmatprep.subr.mxu0 0.0
  %3431 = vmatpush1.msra.mxu0 0.0
  %3432 = vmatprep.subr.mxu0 0.0
  %3433 = vmatpush1.msra.mxu0 0.0
  %3434 = vmatprep.subr.mxu0 0.0
  %3435 = vmatpush1.msra.mxu0 0.0
  %3436 = vmatprep.subr.mxu0 0.0
  %3437 = vmatpush1.msra.mxu0 0.0
  %3438 = vmatprep.subr.mxu0 0.0
  %3439 = vmatpush1.msra.mxu0 0.0
  %3440 = vmatprep.subr.mxu0 0.0
  %3441 = vmatpush1.msra.mxu0 0.0
  %3442 = vmatprep.subr.mxu0 0.0
  %3443 = vmatpush1.msra.mxu0 0.0
  %3444 = vmatprep.subr.mxu0 0.0
  %3445 = vmatpush1.msra.mxu0 0.0
  %3446 = vmatprep.subr.mxu0 0.0
  %3447 = vmatpush1.msra.mxu0 0.0
  %3448 = vmatprep.subr.mxu0 0.0
  %3449 = vmatpush1.msra.mxu0 0.0
  %3450 = vmatprep.subr.mxu0 0.0
  %3451 = vmatpush1.msra.mxu0 0.0
  %3452 = vmatprep.subr.mxu0 0.0
  %3453 = vmatpush1.msra.mxu0 0.0
  %3454 = vmatprep.subr.mxu0 0.0
  %3455 = vmatpush1.msra.mxu0 %v3332
  %3456 = vmatprep.subr.mxu0 0.0
  %3457 = vmatpush1.msra.mxu0 %v3331
  %3458 = vmatprep.subr.mxu0 0.0
  %3459 = vmatpush1.msra.mxu0 %v3330
  %3460 = vmatprep.subr.mxu0 0.0
  %3461 = vmatpush1.msra.mxu0 %v3329
  %3462 = vmatprep.subr.mxu0 0.0
  %3463 = vmatpush2.msra.mxu0 0.0
  %3464 = vmatprep.subr.mxu0 0.0
  %3465 = vmatpush2.msra.mxu0 0.0
  %3466 = vmatprep.subr.mxu0 0.0
  %3467 = vmatpush2.msra.mxu0 0.0
  %3468 = vmatprep.subr.mxu0 0.0
  %3469 = vmatpush2.msra.mxu0 0.0
  %3470 = vmatprep.subr.mxu0 0.0
  %3471 = vmatpush2.msra.mxu0 0.0
  %3472 = vmatprep.subr.mxu0 0.0
  %3473 = vmatpush2.msra.mxu0 0.0
  %3474 = vmatprep.subr.mxu0 0.0
  %3475 = vmatpush2.msra.mxu0 0.0
  %3476 = vmatprep.subr.mxu0 0.0
  %3477 = vmatpush2.msra.mxu0 0.0
  %3478 = vmatprep.subr.mxu0 0.0
  %3479 = vmatpush2.msra.mxu0 0.0
  %3480 = vmatprep.subr.mxu0 0.0
  %3481 = vmatpush2.msra.mxu0 0.0
  %3482 = vmatprep.subr.mxu0 0.0
  %3483 = vmatpush2.msra.mxu0 0.0
  %3484 = vmatprep.subr.mxu0 0.0
  %3485 = vmatpush2.msra.mxu0 0.0
  %3486 = vmatprep.subr.mxu0 0.0
  %3487 = vmatpush2.msra.mxu0 0.0
  %3488 = vmatprep.subr.mxu0 0.0
  %3489 = vmatpush2.msra.mxu0 0.0
  %3490 = vmatprep.subr.mxu0 0.0
  %3491 = vmatpush2.msra.mxu0 0.0
  %3492 = vmatprep.subr.mxu0 0.0
  %3493 = vmatpush2.msra.mxu0 0.0
  %3494 = vmatprep.mubr.f32.mxu0 0.0
  %3495 = vmatmul.mubr.f32.gmra.mxu0 %v3428
  %v3496 = vpop.f32.mrf.mxu0
  %v3497 = vadd.f32 %v3424, %v3496
  %v3498 = vpop.f32.mrf.mxu0
  %3499 = vdwg.mxu0
  %v3501 = vlaneseq
  %v3502 = vshrl.u32 %v3501, 7
  %v3503 = vsub.s32 0, %v3502
  %v3504 = vrot.slane %v3353, %v3503
  %v3506 = vadd.f32 %v3497, %v3504
  %3507 = vmatprep.subr.mxu0 0.0
  %3508 = vmatpush1.msra.mxu0 0.0
  %3509 = vmatprep.subr.mxu0 0.0
  %3510 = vmatpush1.msra.mxu0 0.0
  %3511 = vmatprep.subr.mxu0 0.0
  %3512 = vmatpush1.msra.mxu0 0.0
  %3513 = vmatprep.subr.mxu0 0.0
  %3514 = vmatpush1.msra.mxu0 0.0
  %3515 = vmatprep.subr.mxu0 0.0
  %3516 = vmatpush1.msra.mxu0 0.0
  %3517 = vmatprep.subr.mxu0 0.0
  %3518 = vmatpush1.msra.mxu0 0.0
  %3519 = vmatprep.subr.mxu0 0.0
  %3520 = vmatpush1.msra.mxu0 0.0
  %3521 = vmatprep.subr.mxu0 0.0
  %3522 = vmatpush1.msra.mxu0 0.0
  %3523 = vmatprep.subr.mxu0 0.0
  %3524 = vmatpush1.msra.mxu0 0.0
  %3525 = vmatprep.subr.mxu0 0.0
  %3526 = vmatpush1.msra.mxu0 0.0
  %3527 = vmatprep.subr.mxu0 0.0
  %3528 = vmatpush1.msra.mxu0 0.0
  %3529 = vmatprep.subr.mxu0 0.0
  %3530 = vmatpush1.msra.mxu0 0.0
  %3531 = vmatprep.subr.mxu0 0.0
  %3532 = vmatpush1.msra.mxu0 %v3348
  %3533 = vmatprep.subr.mxu0 0.0
  %3534 = vmatpush1.msra.mxu0 %v3347
  %3535 = vmatprep.subr.mxu0 0.0
  %3536 = vmatpush1.msra.mxu0 %v3346
  %3537 = vmatprep.subr.mxu0 0.0
  %3538 = vmatpush1.msra.mxu0 %v3345
  %3539 = vmatprep.subr.mxu0 0.0
  %3540 = vmatpush2.msra.mxu0 0.0
  %3541 = vmatprep.subr.mxu0 0.0
  %3542 = vmatpush2.msra.mxu0 0.0
  %3543 = vmatprep.subr.mxu0 0.0
  %3544 = vmatpush2.msra.mxu0 0.0
  %3545 = vmatprep.subr.mxu0 0.0
  %3546 = vmatpush2.msra.mxu0 0.0
  %3547 = vmatprep.subr.mxu0 0.0
  %3548 = vmatpush2.msra.mxu0 0.0
  %3549 = vmatprep.subr.mxu0 0.0
  %3550 = vmatpush2.msra.mxu0 0.0
  %3551 = vmatprep.subr.mxu0 0.0
  %3552 = vmatpush2.msra.mxu0 0.0
  %3553 = vmatprep.subr.mxu0 0.0
  %3554 = vmatpush2.msra.mxu0 0.0
  %3555 = vmatprep.subr.mxu0 0.0
  %3556 = vmatpush2.msra.mxu0 0.0
  %3557 = vmatprep.subr.mxu0 0.0
  %3558 = vmatpush2.msra.mxu0 0.0
  %3559 = vmatprep.subr.mxu0 0.0
  %3560 = vmatpush2.msra.mxu0 0.0
  %3561 = vmatprep.subr.mxu0 0.0
  %3562 = vmatpush2.msra.mxu0 0.0
  %3563 = vmatprep.subr.mxu0 0.0
  %3564 = vmatpush2.msra.mxu0 0.0
  %3565 = vmatprep.subr.mxu0 0.0
  %3566 = vmatpush2.msra.mxu0 0.0
  %3567 = vmatprep.subr.mxu0 0.0
  %3568 = vmatpush2.msra.mxu0 0.0
  %3569 = vmatprep.subr.mxu0 0.0
  %3570 = vmatpush2.msra.mxu0 0.0
  %3571 = vmatprep.mubr.f32.mxu0 0.0
  %3572 = vmatmul.mubr.f32.gmra.mxu0 %v2844
  %v3573 = vpop.f32.mrf.mxu0
  %v3574 = vadd.f32 0.0, %v3573
  %v3575 = vpop.f32.mrf.mxu0
  %3576 = vdwg.mxu0
  %3577 = vmatprep.subr.mxu0 0.0
  %3578 = vmatpush1.msra.mxu0 0.0
  %3579 = vmatprep.subr.mxu0 0.0
  %3580 = vmatpush1.msra.mxu0 0.0
  %3581 = vmatprep.subr.mxu0 0.0
  %3582 = vmatpush1.msra.mxu0 0.0
  %3583 = vmatprep.subr.mxu0 0.0
  %3584 = vmatpush1.msra.mxu0 0.0
  %3585 = vmatprep.subr.mxu0 0.0
  %3586 = vmatpush1.msra.mxu0 0.0
  %3587 = vmatprep.subr.mxu0 0.0
  %3588 = vmatpush1.msra.mxu0 0.0
  %3589 = vmatprep.subr.mxu0 0.0
  %3590 = vmatpush1.msra.mxu0 0.0
  %3591 = vmatprep.subr.mxu0 0.0
  %3592 = vmatpush1.msra.mxu0 0.0
  %3593 = vmatprep.subr.mxu0 0.0
  %3594 = vmatpush1.msra.mxu0 0.0
  %3595 = vmatprep.subr.mxu0 0.0
  %3596 = vmatpush1.msra.mxu0 0.0
  %3597 = vmatprep.subr.mxu0 0.0
  %3598 = vmatpush1.msra.mxu0 0.0
  %3599 = vmatprep.subr.mxu0 0.0
  %3600 = vmatpush1.msra.mxu0 0.0
  %3601 = vmatprep.subr.mxu0 0.0
  %3602 = vmatpush1.msra.mxu0 %v3336
  %3603 = vmatprep.subr.mxu0 0.0
  %3604 = vmatpush1.msra.mxu0 %v3335
  %3605 = vmatprep.subr.mxu0 0.0
  %3606 = vmatpush1.msra.mxu0 %v3334
  %3607 = vmatprep.subr.mxu0 0.0
  %3608 = vmatpush1.msra.mxu0 %v3333
  %3609 = vmatprep.subr.mxu0 0.0
  %3610 = vmatpush2.msra.mxu0 0.0
  %3611 = vmatprep.subr.mxu0 0.0
  %3612 = vmatpush2.msra.mxu0 0.0
  %3613 = vmatprep.subr.mxu0 0.0
  %3614 = vmatpush2.msra.mxu0 0.0
  %3615 = vmatprep.subr.mxu0 0.0
  %3616 = vmatpush2.msra.mxu0 0.0
  %3617 = vmatprep.subr.mxu0 0.0
  %3618 = vmatpush2.msra.mxu0 0.0
  %3619 = vmatprep.subr.mxu0 0.0
  %3620 = vmatpush2.msra.mxu0 0.0
  %3621 = vmatprep.subr.mxu0 0.0
  %3622 = vmatpush2.msra.mxu0 0.0
  %3623 = vmatprep.subr.mxu0 0.0
  %3624 = vmatpush2.msra.mxu0 0.0
  %3625 = vmatprep.subr.mxu0 0.0
  %3626 = vmatpush2.msra.mxu0 0.0
  %3627 = vmatprep.subr.mxu0 0.0
  %3628 = vmatpush2.msra.mxu0 0.0
  %3629 = vmatprep.subr.mxu0 0.0
  %3630 = vmatpush2.msra.mxu0 0.0
  %3631 = vmatprep.subr.mxu0 0.0
  %3632 = vmatpush2.msra.mxu0 0.0
  %3633 = vmatprep.subr.mxu0 0.0
  %3634 = vmatpush2.msra.mxu0 0.0
  %3635 = vmatprep.subr.mxu0 0.0
  %3636 = vmatpush2.msra.mxu0 0.0
  %3637 = vmatprep.subr.mxu0 0.0
  %3638 = vmatpush2.msra.mxu0 0.0
  %3639 = vmatprep.subr.mxu0 0.0
  %3640 = vmatpush2.msra.mxu0 0.0
  %3641 = vmatprep.mubr.f32.mxu0 0.0
  %3642 = vmatmul.mubr.f32.gmra.mxu0 %v3428
  %v3643 = vpop.f32.mrf.mxu0
  %v3644 = vadd.f32 %v3574, %v3643
  %v3645 = vpop.f32.mrf.mxu0
  %3646 = vdwg.mxu0
  %v3648 = vlaneseq
  %v3649 = vshrl.u32 %v3648, 7
  %v3650 = vsub.s32 0, %v3649
  %v3651 = vrot.slane %v3354, %v3650
  %v3653 = vadd.f32 %v3644, %v3651
  %v3655 = vlaneseq
  %v3656 = vshrl.u32 %v3655, 7
  %v3657 = vsub.s32 0, %v3656
  %v3658 = vrot.slane %v3355, %v3657
  %3660 = vmatprep.subr.mxu0 0.0
  %3661 = vmatpush1.msra.mxu0 0.0
  %3662 = vmatprep.subr.mxu0 0.0
  %3663 = vmatpush1.msra.mxu0 0.0
  %3664 = vmatprep.subr.mxu0 0.0
  %3665 = vmatpush1.msra.mxu0 0.0
  %3666 = vmatprep.subr.mxu0 0.0
  %3667 = vmatpush1.msra.mxu0 0.0
  %3668 = vmatprep.subr.mxu0 0.0
  %3669 = vmatpush1.msra.mxu0 0.0
  %3670 = vmatprep.subr.mxu0 0.0
  %3671 = vmatpush1.msra.mxu0 0.0
  %3672 = vmatprep.subr.mxu0 0.0
  %3673 = vmatpush1.msra.mxu0 0.0
  %3674 = vmatprep.subr.mxu0 0.0
  %3675 = vmatpush1.msra.mxu0 0.0
  %3676 = vmatprep.subr.mxu0 0.0
  %3677 = vmatpush1.msra.mxu0 0.0
  %3678 = vmatprep.subr.mxu0 0.0
  %3679 = vmatpush1.msra.mxu0 0.0
  %3680 = vmatprep.subr.mxu0 0.0
  %3681 = vmatpush1.msra.mxu0 0.0
  %3682 = vmatprep.subr.mxu0 0.0
  %3683 = vmatpush1.msra.mxu0 0.0
  %3684 = vmatprep.subr.mxu0 0.0
  %3685 = vmatpush1.msra.mxu0 %v3340
  %3686 = vmatprep.subr.mxu0 0.0
  %3687 = vmatpush1.msra.mxu0 %v3339
  %3688 = vmatprep.subr.mxu0 0.0
  %3689 = vmatpush1.msra.mxu0 %v3338
  %3690 = vmatprep.subr.mxu0 0.0
  %3691 = vmatpush1.msra.mxu0 %v3337
  %3692 = vmatprep.subr.mxu0 0.0
  %3693 = vmatpush2.msra.mxu0 0.0
  %3694 = vmatprep.subr.mxu0 0.0
  %3695 = vmatpush2.msra.mxu0 0.0
  %3696 = vmatprep.subr.mxu0 0.0
  %3697 = vmatpush2.msra.mxu0 0.0
  %3698 = vmatprep.subr.mxu0 0.0
  %3699 = vmatpush2.msra.mxu0 0.0
  %3700 = vmatprep.subr.mxu0 0.0
  %3701 = vmatpush2.msra.mxu0 0.0
  %3702 = vmatprep.subr.mxu0 0.0
  %3703 = vmatpush2.msra.mxu0 0.0
  %3704 = vmatprep.subr.mxu0 0.0
  %3705 = vmatpush2.msra.mxu0 0.0
  %3706 = vmatprep.subr.mxu0 0.0
  %3707 = vmatpush2.msra.mxu0 0.0
  %3708 = vmatprep.subr.mxu0 0.0
  %3709 = vmatpush2.msra.mxu0 0.0
  %3710 = vmatprep.subr.mxu0 0.0
  %3711 = vmatpush2.msra.mxu0 0.0
  %3712 = vmatprep.subr.mxu0 0.0
  %3713 = vmatpush2.msra.mxu0 0.0
  %3714 = vmatprep.subr.mxu0 0.0
  %3715 = vmatpush2.msra.mxu0 0.0
  %3716 = vmatprep.subr.mxu0 0.0
  %3717 = vmatpush2.msra.mxu0 0.0
  %3718 = vmatprep.subr.mxu0 0.0
  %3719 = vmatpush2.msra.mxu0 0.0
  %3720 = vmatprep.subr.mxu0 0.0
  %3721 = vmatpush2.msra.mxu0 0.0
  %3722 = vmatprep.subr.mxu0 0.0
  %3723 = vmatpush2.msra.mxu0 0.0
  %3724 = vmatprep.mubr.f32.mxu0 0.0
  %3725 = vmatmul.mubr.f32.gmra.mxu0 %v3428
  %v3726 = vpop.f32.mrf.mxu0
  %v3727 = vadd.f32 %v3658, %v3726
  %v3728 = vpop.f32.mrf.mxu0
  %3729 = vdwg.mxu0
  %v3731 = vlaneseq
  %v3732 = vshrl.u32 %v3731, 7
  %v3733 = vsub.s32 0, %v3732
  %v3734 = vrot.slane %v3356, %v3733
  %3736 = vmatprep.subr.mxu0 0.0
  %3737 = vmatpush1.msra.mxu0 0.0
  %3738 = vmatprep.subr.mxu0 0.0
  %3739 = vmatpush1.msra.mxu0 0.0
  %3740 = vmatprep.subr.mxu0 0.0
  %3741 = vmatpush1.msra.mxu0 0.0
  %3742 = vmatprep.subr.mxu0 0.0
  %3743 = vmatpush1.msra.mxu0 0.0
  %3744 = vmatprep.subr.mxu0 0.0
  %3745 = vmatpush1.msra.mxu0 0.0
  %3746 = vmatprep.subr.mxu0 0.0
  %3747 = vmatpush1.msra.mxu0 0.0
  %3748 = vmatprep.subr.mxu0 0.0
  %3749 = vmatpush1.msra.mxu0 0.0
  %3750 = vmatprep.subr.mxu0 0.0
  %3751 = vmatpush1.msra.mxu0 0.0
  %3752 = vmatprep.subr.mxu0 0.0
  %3753 = vmatpush1.msra.mxu0 0.0
  %3754 = vmatprep.subr.mxu0 0.0
  %3755 = vmatpush1.msra.mxu0 0.0
  %3756 = vmatprep.subr.mxu0 0.0
  %3757 = vmatpush1.msra.mxu0 0.0
  %3758 = vmatprep.subr.mxu0 0.0
  %3759 = vmatpush1.msra.mxu0 0.0
  %3760 = vmatprep.subr.mxu0 0.0
  %3761 = vmatpush1.msra.mxu0 %v3352
  %3762 = vmatprep.subr.mxu0 0.0
  %3763 = vmatpush1.msra.mxu0 %v3351
  %3764 = vmatprep.subr.mxu0 0.0
  %3765 = vmatpush1.msra.mxu0 %v3350
  %3766 = vmatprep.subr.mxu0 0.0
  %3767 = vmatpush1.msra.mxu0 %v3349
  %3768 = vmatprep.subr.mxu0 0.0
  %3769 = vmatpush2.msra.mxu0 0.0
  %3770 = vmatprep.subr.mxu0 0.0
  %3771 = vmatpush2.msra.mxu0 0.0
  %3772 = vmatprep.subr.mxu0 0.0
  %3773 = vmatpush2.msra.mxu0 0.0
  %3774 = vmatprep.subr.mxu0 0.0
  %3775 = vmatpush2.msra.mxu0 0.0
  %3776 = vmatprep.subr.mxu0 0.0
  %3777 = vmatpush2.msra.mxu0 0.0
  %3778 = vmatprep.subr.mxu0 0.0
  %3779 = vmatpush2.msra.mxu0 0.0
  %3780 = vmatprep.subr.mxu0 0.0
  %3781 = vmatpush2.msra.mxu0 0.0
  %3782 = vmatprep.subr.mxu0 0.0
  %3783 = vmatpush2.msra.mxu0 0.0
  %3784 = vmatprep.subr.mxu0 0.0
  %3785 = vmatpush2.msra.mxu0 0.0
  %3786 = vmatprep.subr.mxu0 0.0
  %3787 = vmatpush2.msra.mxu0 0.0
  %3788 = vmatprep.subr.mxu0 0.0
  %3789 = vmatpush2.msra.mxu0 0.0
  %3790 = vmatprep.subr.mxu0 0.0
  %3791 = vmatpush2.msra.mxu0 0.0
  %3792 = vmatprep.subr.mxu0 0.0
  %3793 = vmatpush2.msra.mxu0 0.0
  %3794 = vmatprep.subr.mxu0 0.0
  %3795 = vmatpush2.msra.mxu0 0.0
  %3796 = vmatprep.subr.mxu0 0.0
  %3797 = vmatpush2.msra.mxu0 0.0
  %3798 = vmatprep.subr.mxu0 0.0
  %3799 = vmatpush2.msra.mxu0 0.0
  %3800 = vmatprep.mubr.f32.mxu0 0.0
  %3801 = vmatmul.mubr.f32.gmra.mxu0 %v2844
  %v3802 = vpop.f32.mrf.mxu0
  %v3803 = vadd.f32 %v3734, %v3802
  %v3804 = vpop.f32.mrf.mxu0
  %3805 = vdwg.mxu0
  %v3806 = vxor.u32 %v3506, 2147483648
  %v3807 = vmul.f32 %v3806, 1.442695
  %v3808 = vpow.pop %v3807
  %v3809 = vadd.f32 %v3808, 1.0
  %v3810 = vrcp.pop %v3809
  %v3811 = vmul.f32 1.0, %v3810
  %v3812 = vxor.u32 %v3653, 2147483648
  %v3813 = vmul.f32 %v3812, 1.442695
  %v3814 = vpow.pop %v3813
  %v3815 = vadd.f32 %v3814, 1.0
  %v3816 = vrcp.pop %v3815
  %v3817 = vmul.f32 1.0, %v3816
  %v3818 = vmul.f32 %v3811, %v3803
  %v3819 = vadd.f32 %v3727, %v3818
  %v3820 = vtanh.pop %v3819
  %v3821 = vsub.f32 1.0, %v3817
  %v3822 = vmul.f32 %v3821, %v3820
  %v3823 = vmul.f32 %v3817, %v2744
  %v3824 = vadd.f32 %v3822, %v3823
  %v3825 = vld [vmem:[%s12] sm:$0xff]
  %v3826 = vld [vmem:[%s12 + $0x8] sm:$0xff]
  %v3827 = vld [vmem:[%s12 + $0x10] sm:$0xff]
  %v3828 = vld [vmem:[%s12 + $0x18] sm:$0xff]
  %v3829 = vld [vmem:[%s13] sm:$0xff]
  %v3830 = vld [vmem:[%s13 + $0x8] sm:$0xff]
  %v3831 = vld [vmem:[%s13 + $0x10] sm:$0xff]
  %v3832 = vld [vmem:[%s13 + $0x18] sm:$0xff]
  %v3833 = vld [vmem:[%s14] sm:$0xff]
  %v3834 = vld [vmem:[%s14 + $0x8] sm:$0xff]
  %v3835 = vld [vmem:[%s14 + $0x10] sm:$0xff]
  %v3836 = vld [vmem:[%s14 + $0x18] sm:$0xff]
  %v3837 = vld [vmem:[%s15] sm:$0xff]
  %v3838 = vld [vmem:[%s15 + $0x8] sm:$0xff]
  %v3839 = vld [vmem:[%s15 + $0x10] sm:$0xff]
  %v3840 = vld [vmem:[%s15 + $0x18] sm:$0xff]
  %v3841 = vld [vmem:[%s16] sm:$0xff]
  %v3842 = vld [vmem:[%s16 + $0x8] sm:$0xff]
  %v3843 = vld [vmem:[%s16 + $0x10] sm:$0xff]
  %v3844 = vld [vmem:[%s16 + $0x18] sm:$0xff]
  %v3845 = vld [vmem:[%s17] sm:$0xff]
  %v3846 = vld [vmem:[%s17 + $0x8] sm:$0xff]
  %v3847 = vld [vmem:[%s17 + $0x10] sm:$0xff]
  %v3848 = vld [vmem:[%s17 + $0x18] sm:$0xff]
  %v3849 = vld [vmem:[%s18] sm:$0x1]
  %v3850 = vld [vmem:[%s19] sm:$0x1]
  %v3851 = vld [vmem:[%s20] sm:$0x1]
  %v3852 = vld [vmem:[%s21] sm:$0x1]
  %3853 = vmatprep.subr.mxu0 0.0
  %3854 = vmatpush1.msra.mxu0 0.0
  %3855 = vmatprep.subr.mxu0 0.0
  %3856 = vmatpush1.msra.mxu0 0.0
  %3857 = vmatprep.subr.mxu0 0.0
  %3858 = vmatpush1.msra.mxu0 0.0
  %3859 = vmatprep.subr.mxu0 0.0
  %3860 = vmatpush1.msra.mxu0 0.0
  %3861 = vmatprep.subr.mxu0 0.0
  %3862 = vmatpush1.msra.mxu0 0.0
  %3863 = vmatprep.subr.mxu0 0.0
  %3864 = vmatpush1.msra.mxu0 0.0
  %3865 = vmatprep.subr.mxu0 0.0
  %3866 = vmatpush1.msra.mxu0 0.0
  %3867 = vmatprep.subr.mxu0 0.0
  %3868 = vmatpush1.msra.mxu0 0.0
  %3869 = vmatprep.subr.mxu0 0.0
  %3870 = vmatpush1.msra.mxu0 0.0
  %3871 = vmatprep.subr.mxu0 0.0
  %3872 = vmatpush1.msra.mxu0 0.0
  %3873 = vmatprep.subr.mxu0 0.0
  %3874 = vmatpush1.msra.mxu0 0.0
  %3875 = vmatprep.subr.mxu0 0.0
  %3876 = vmatpush1.msra.mxu0 0.0
  %3877 = vmatprep.subr.mxu0 0.0
  %3878 = vmatpush1.msra.mxu0 %v3840
  %3879 = vmatprep.subr.mxu0 0.0
  %3880 = vmatpush1.msra.mxu0 %v3839
  %3881 = vmatprep.subr.mxu0 0.0
  %3882 = vmatpush1.msra.mxu0 %v3838
  %3883 = vmatprep.subr.mxu0 0.0
  %3884 = vmatpush1.msra.mxu0 %v3837
  %3885 = vmatprep.subr.mxu0 0.0
  %3886 = vmatpush2.msra.mxu0 0.0
  %3887 = vmatprep.subr.mxu0 0.0
  %3888 = vmatpush2.msra.mxu0 0.0
  %3889 = vmatprep.subr.mxu0 0.0
  %3890 = vmatpush2.msra.mxu0 0.0
  %3891 = vmatprep.subr.mxu0 0.0
  %3892 = vmatpush2.msra.mxu0 0.0
  %3893 = vmatprep.subr.mxu0 0.0
  %3894 = vmatpush2.msra.mxu0 0.0
  %3895 = vmatprep.subr.mxu0 0.0
  %3896 = vmatpush2.msra.mxu0 0.0
  %3897 = vmatprep.subr.mxu0 0.0
  %3898 = vmatpush2.msra.mxu0 0.0
  %3899 = vmatprep.subr.mxu0 0.0
  %3900 = vmatpush2.msra.mxu0 0.0
  %3901 = vmatprep.subr.mxu0 0.0
  %3902 = vmatpush2.msra.mxu0 0.0
  %3903 = vmatprep.subr.mxu0 0.0
  %3904 = vmatpush2.msra.mxu0 0.0
  %3905 = vmatprep.subr.mxu0 0.0
  %3906 = vmatpush2.msra.mxu0 0.0
  %3907 = vmatprep.subr.mxu0 0.0
  %3908 = vmatpush2.msra.mxu0 0.0
  %3909 = vmatprep.subr.mxu0 0.0
  %3910 = vmatpush2.msra.mxu0 0.0
  %3911 = vmatprep.subr.mxu0 0.0
  %3912 = vmatpush2.msra.mxu0 0.0
  %3913 = vmatprep.subr.mxu0 0.0
  %3914 = vmatpush2.msra.mxu0 0.0
  %3915 = vmatprep.subr.mxu0 0.0
  %3916 = vmatpush2.msra.mxu0 0.0
  %3917 = vmatprep.mubr.f32.mxu0 0.0
  %3918 = vmatmul.mubr.f32.gmra.mxu0 %v3253
  %v3919 = vpop.f32.mrf.mxu0
  %v3920 = vadd.f32 0.0, %v3919
  %v3921 = vpop.f32.mrf.mxu0
  %3922 = vdwg.mxu0
  %v3924 = vsel %vm111, %v3824, 0
  %3926 = vmatprep.subr.mxu0 0.0
  %3927 = vmatpush1.msra.mxu0 0.0
  %3928 = vmatprep.subr.mxu0 0.0
  %3929 = vmatpush1.msra.mxu0 0.0
  %3930 = vmatprep.subr.mxu0 0.0
  %3931 = vmatpush1.msra.mxu0 0.0
  %3932 = vmatprep.subr.mxu0 0.0
  %3933 = vmatpush1.msra.mxu0 0.0
  %3934 = vmatprep.subr.mxu0 0.0
  %3935 = vmatpush1.msra.mxu0 0.0
  %3936 = vmatprep.subr.mxu0 0.0
  %3937 = vmatpush1.msra.mxu0 0.0
  %3938 = vmatprep.subr.mxu0 0.0
  %3939 = vmatpush1.msra.mxu0 0.0
  %3940 = vmatprep.subr.mxu0 0.0
  %3941 = vmatpush1.msra.mxu0 0.0
  %3942 = vmatprep.subr.mxu0 0.0
  %3943 = vmatpush1.msra.mxu0 0.0
  %3944 = vmatprep.subr.mxu0 0.0
  %3945 = vmatpush1.msra.mxu0 0.0
  %3946 = vmatprep.subr.mxu0 0.0
  %3947 = vmatpush1.msra.mxu0 0.0
  %3948 = vmatprep.subr.mxu0 0.0
  %3949 = vmatpush1.msra.mxu0 0.0
  %3950 = vmatprep.subr.mxu0 0.0
  %3951 = vmatpush1.msra.mxu0 %v3828
  %3952 = vmatprep.subr.mxu0 0.0
  %3953 = vmatpush1.msra.mxu0 %v3827
  %3954 = vmatprep.subr.mxu0 0.0
  %3955 = vmatpush1.msra.mxu0 %v3826
  %3956 = vmatprep.subr.mxu0 0.0
  %3957 = vmatpush1.msra.mxu0 %v3825
  %3958 = vmatprep.subr.mxu0 0.0
  %3959 = vmatpush2.msra.mxu0 0.0
  %3960 = vmatprep.subr.mxu0 0.0
  %3961 = vmatpush2.msra.mxu0 0.0
  %3962 = vmatprep.subr.mxu0 0.0
  %3963 = vmatpush2.msra.mxu0 0.0
  %3964 = vmatprep.subr.mxu0 0.0
  %3965 = vmatpush2.msra.mxu0 0.0
  %3966 = vmatprep.subr.mxu0 0.0
  %3967 = vmatpush2.msra.mxu0 0.0
  %3968 = vmatprep.subr.mxu0 0.0
  %3969 = vmatpush2.msra.mxu0 0.0
  %3970 = vmatprep.subr.mxu0 0.0
  %3971 = vmatpush2.msra.mxu0 0.0
  %3972 = vmatprep.subr.mxu0 0.0
  %3973 = vmatpush2.msra.mxu0 0.0
  %3974 = vmatprep.subr.mxu0 0.0
  %3975 = vmatpush2.msra.mxu0 0.0
  %3976 = vmatprep.subr.mxu0 0.0
  %3977 = vmatpush2.msra.mxu0 0.0
  %3978 = vmatprep.subr.mxu0 0.0
  %3979 = vmatpush2.msra.mxu0 0.0
  %3980 = vmatprep.subr.mxu0 0.0
  %3981 = vmatpush2.msra.mxu0 0.0
  %3982 = vmatprep.subr.mxu0 0.0
  %3983 = vmatpush2.msra.mxu0 0.0
  %3984 = vmatprep.subr.mxu0 0.0
  %3985 = vmatpush2.msra.mxu0 0.0
  %3986 = vmatprep.subr.mxu0 0.0
  %3987 = vmatpush2.msra.mxu0 0.0
  %3988 = vmatprep.subr.mxu0 0.0
  %3989 = vmatpush2.msra.mxu0 0.0
  %3990 = vmatprep.mubr.f32.mxu0 0.0
  %3991 = vmatmul.mubr.f32.gmra.mxu0 %v3924
  %v3992 = vpop.f32.mrf.mxu0
  %v3993 = vadd.f32 %v3920, %v3992
  %v3994 = vpop.f32.mrf.mxu0
  %3995 = vdwg.mxu0
  %v3997 = vlaneseq
  %v3998 = vshrl.u32 %v3997, 7
  %v3999 = vsub.s32 0, %v3998
  %v4000 = vrot.slane %v3849, %v3999
  %v4002 = vadd.f32 %v3993, %v4000
  %4003 = vmatprep.subr.mxu0 0.0
  %4004 = vmatpush1.msra.mxu0 0.0
  %4005 = vmatprep.subr.mxu0 0.0
  %4006 = vmatpush1.msra.mxu0 0.0
  %4007 = vmatprep.subr.mxu0 0.0
  %4008 = vmatpush1.msra.mxu0 0.0
  %4009 = vmatprep.subr.mxu0 0.0
  %4010 = vmatpush1.msra.mxu0 0.0
  %4011 = vmatprep.subr.mxu0 0.0
  %4012 = vmatpush1.msra.mxu0 0.0
  %4013 = vmatprep.subr.mxu0 0.0
  %4014 = vmatpush1.msra.mxu0 0.0
  %4015 = vmatprep.subr.mxu0 0.0
  %4016 = vmatpush1.msra.mxu0 0.0
  %4017 = vmatprep.subr.mxu0 0.0
  %4018 = vmatpush1.msra.mxu0 0.0
  %4019 = vmatprep.subr.mxu0 0.0
  %4020 = vmatpush1.msra.mxu0 0.0
  %4021 = vmatprep.subr.mxu0 0.0
  %4022 = vmatpush1.msra.mxu0 0.0
  %4023 = vmatprep.subr.mxu0 0.0
  %4024 = vmatpush1.msra.mxu0 0.0
  %4025 = vmatprep.subr.mxu0 0.0
  %4026 = vmatpush1.msra.mxu0 0.0
  %4027 = vmatprep.subr.mxu0 0.0
  %4028 = vmatpush1.msra.mxu0 %v3844
  %4029 = vmatprep.subr.mxu0 0.0
  %4030 = vmatpush1.msra.mxu0 %v3843
  %4031 = vmatprep.subr.mxu0 0.0
  %4032 = vmatpush1.msra.mxu0 %v3842
  %4033 = vmatprep.subr.mxu0 0.0
  %4034 = vmatpush1.msra.mxu0 %v3841
  %4035 = vmatprep.subr.mxu0 0.0
  %4036 = vmatpush2.msra.mxu0 0.0
  %4037 = vmatprep.subr.mxu0 0.0
  %4038 = vmatpush2.msra.mxu0 0.0
  %4039 = vmatprep.subr.mxu0 0.0
  %4040 = vmatpush2.msra.mxu0 0.0
  %4041 = vmatprep.subr.mxu0 0.0
  %4042 = vmatpush2.msra.mxu0 0.0
  %4043 = vmatprep.subr.mxu0 0.0
  %4044 = vmatpush2.msra.mxu0 0.0
  %4045 = vmatprep.subr.mxu0 0.0
  %4046 = vmatpush2.msra.mxu0 0.0
  %4047 = vmatprep.subr.mxu0 0.0
  %4048 = vmatpush2.msra.mxu0 0.0
  %4049 = vmatprep.subr.mxu0 0.0
  %4050 = vmatpush2.msra.mxu0 0.0
  %4051 = vmatprep.subr.mxu0 0.0
  %4052 = vmatpush2.msra.mxu0 0.0
  %4053 = vmatprep.subr.mxu0 0.0
  %4054 = vmatpush2.msra.mxu0 0.0
  %4055 = vmatprep.subr.mxu0 0.0
  %4056 = vmatpush2.msra.mxu0 0.0
  %4057 = vmatprep.subr.mxu0 0.0
  %4058 = vmatpush2.msra.mxu0 0.0
  %4059 = vmatprep.subr.mxu0 0.0
  %4060 = vmatpush2.msra.mxu0 0.0
  %4061 = vmatprep.subr.mxu0 0.0
  %4062 = vmatpush2.msra.mxu0 0.0
  %4063 = vmatprep.subr.mxu0 0.0
  %4064 = vmatpush2.msra.mxu0 0.0
  %4065 = vmatprep.subr.mxu0 0.0
  %4066 = vmatpush2.msra.mxu0 0.0
  %4067 = vmatprep.mubr.f32.mxu0 0.0
  %4068 = vmatmul.mubr.f32.gmra.mxu0 %v3253
  %v4069 = vpop.f32.mrf.mxu0
  %v4070 = vadd.f32 0.0, %v4069
  %v4071 = vpop.f32.mrf.mxu0
  %4072 = vdwg.mxu0
  %4073 = vmatprep.subr.mxu0 0.0
  %4074 = vmatpush1.msra.mxu0 0.0
  %4075 = vmatprep.subr.mxu0 0.0
  %4076 = vmatpush1.msra.mxu0 0.0
  %4077 = vmatprep.subr.mxu0 0.0
  %4078 = vmatpush1.msra.mxu0 0.0
  %4079 = vmatprep.subr.mxu0 0.0
  %4080 = vmatpush1.msra.mxu0 0.0
  %4081 = vmatprep.subr.mxu0 0.0
  %4082 = vmatpush1.msra.mxu0 0.0
  %4083 = vmatprep.subr.mxu0 0.0
  %4084 = vmatpush1.msra.mxu0 0.0
  %4085 = vmatprep.subr.mxu0 0.0
  %4086 = vmatpush1.msra.mxu0 0.0
  %4087 = vmatprep.subr.mxu0 0.0
  %4088 = vmatpush1.msra.mxu0 0.0
  %4089 = vmatprep.subr.mxu0 0.0
  %4090 = vmatpush1.msra.mxu0 0.0
  %4091 = vmatprep.subr.mxu0 0.0
  %4092 = vmatpush1.msra.mxu0 0.0
  %4093 = vmatprep.subr.mxu0 0.0
  %4094 = vmatpush1.msra.mxu0 0.0
  %4095 = vmatprep.subr.mxu0 0.0
  %4096 = vmatpush1.msra.mxu0 0.0
  %4097 = vmatprep.subr.mxu0 0.0
  %4098 = vmatpush1.msra.mxu0 %v3832
  %4099 = vmatprep.subr.mxu0 0.0
  %4100 = vmatpush1.msra.mxu0 %v3831
  %4101 = vmatprep.subr.mxu0 0.0
  %4102 = vmatpush1.msra.mxu0 %v3830
  %4103 = vmatprep.subr.mxu0 0.0
  %4104 = vmatpush1.msra.mxu0 %v3829
  %4105 = vmatprep.subr.mxu0 0.0
  %4106 = vmatpush2.msra.mxu0 0.0
  %4107 = vmatprep.subr.mxu0 0.0
  %4108 = vmatpush2.msra.mxu0 0.0
  %4109 = vmatprep.subr.mxu0 0.0
  %4110 = vmatpush2.msra.mxu0 0.0
  %4111 = vmatprep.subr.mxu0 0.0
  %4112 = vmatpush2.msra.mxu0 0.0
  %4113 = vmatprep.subr.mxu0 0.0
  %4114 = vmatpush2.msra.mxu0 0.0
  %4115 = vmatprep.subr.mxu0 0.0
  %4116 = vmatpush2.msra.mxu0 0.0
  %4117 = vmatprep.subr.mxu0 0.0
  %4118 = vmatpush2.msra.mxu0 0.0
  %4119 = vmatprep.subr.mxu0 0.0
  %4120 = vmatpush2.msra.mxu0 0.0
  %4121 = vmatprep.subr.mxu0 0.0
  %4122 = vmatpush2.msra.mxu0 0.0
  %4123 = vmatprep.subr.mxu0 0.0
  %4124 = vmatpush2.msra.mxu0 0.0
  %4125 = vmatprep.subr.mxu0 0.0
  %4126 = vmatpush2.msra.mxu0 0.0
  %4127 = vmatprep.subr.mxu0 0.0
  %4128 = vmatpush2.msra.mxu0 0.0
  %4129 = vmatprep.subr.mxu0 0.0
  %4130 = vmatpush2.msra.mxu0 0.0
  %4131 = vmatprep.subr.mxu0 0.0
  %4132 = vmatpush2.msra.mxu0 0.0
  %4133 = vmatprep.subr.mxu0 0.0
  %4134 = vmatpush2.msra.mxu0 0.0
  %4135 = vmatprep.subr.mxu0 0.0
  %4136 = vmatpush2.msra.mxu0 0.0
  %4137 = vmatprep.mubr.f32.mxu0 0.0
  %4138 = vmatmul.mubr.f32.gmra.mxu0 %v3924
  %v4139 = vpop.f32.mrf.mxu0
  %v4140 = vadd.f32 %v4070, %v4139
  %v4141 = vpop.f32.mrf.mxu0
  %4142 = vdwg.mxu0
  %v4144 = vlaneseq
  %v4145 = vshrl.u32 %v4144, 7
  %v4146 = vsub.s32 0, %v4145
  %v4147 = vrot.slane %v3850, %v4146
  %v4149 = vadd.f32 %v4140, %v4147
  %v4151 = vlaneseq
  %v4152 = vshrl.u32 %v4151, 7
  %v4153 = vsub.s32 0, %v4152
  %v4154 = vrot.slane %v3851, %v4153
  %4156 = vmatprep.subr.mxu0 0.0
  %4157 = vmatpush1.msra.mxu0 0.0
  %4158 = vmatprep.subr.mxu0 0.0
  %4159 = vmatpush1.msra.mxu0 0.0
  %4160 = vmatprep.subr.mxu0 0.0
  %4161 = vmatpush1.msra.mxu0 0.0
  %4162 = vmatprep.subr.mxu0 0.0
  %4163 = vmatpush1.msra.mxu0 0.0
  %4164 = vmatprep.subr.mxu0 0.0
  %4165 = vmatpush1.msra.mxu0 0.0
  %4166 = vmatprep.subr.mxu0 0.0
  %4167 = vmatpush1.msra.mxu0 0.0
  %4168 = vmatprep.subr.mxu0 0.0
  %4169 = vmatpush1.msra.mxu0 0.0
  %4170 = vmatprep.subr.mxu0 0.0
  %4171 = vmatpush1.msra.mxu0 0.0
  %4172 = vmatprep.subr.mxu0 0.0
  %4173 = vmatpush1.msra.mxu0 0.0
  %4174 = vmatprep.subr.mxu0 0.0
  %4175 = vmatpush1.msra.mxu0 0.0
  %4176 = vmatprep.subr.mxu0 0.0
  %4177 = vmatpush1.msra.mxu0 0.0
  %4178 = vmatprep.subr.mxu0 0.0
  %4179 = vmatpush1.msra.mxu0 0.0
  %4180 = vmatprep.subr.mxu0 0.0
  %4181 = vmatpush1.msra.mxu0 %v3836
  %4182 = vmatprep.subr.mxu0 0.0
  %4183 = vmatpush1.msra.mxu0 %v3835
  %4184 = vmatprep.subr.mxu0 0.0
  %4185 = vmatpush1.msra.mxu0 %v3834
  %4186 = vmatprep.subr.mxu0 0.0
  %4187 = vmatpush1.msra.mxu0 %v3833
  %4188 = vmatprep.subr.mxu0 0.0
  %4189 = vmatpush2.msra.mxu0 0.0
  %4190 = vmatprep.subr.mxu0 0.0
  %4191 = vmatpush2.msra.mxu0 0.0
  %4192 = vmatprep.subr.mxu0 0.0
  %4193 = vmatpush2.msra.mxu0 0.0
  %4194 = vmatprep.subr.mxu0 0.0
  %4195 = vmatpush2.msra.mxu0 0.0
  %4196 = vmatprep.subr.mxu0 0.0
  %4197 = vmatpush2.msra.mxu0 0.0
  %4198 = vmatprep.subr.mxu0 0.0
  %4199 = vmatpush2.msra.mxu0 0.0
  %4200 = vmatprep.subr.mxu0 0.0
  %4201 = vmatpush2.msra.mxu0 0.0
  %4202 = vmatprep.subr.mxu0 0.0
  %4203 = vmatpush2.msra.mxu0 0.0
  %4204 = vmatprep.subr.mxu0 0.0
  %4205 = vmatpush2.msra.mxu0 0.0
  %4206 = vmatprep.subr.mxu0 0.0
  %4207 = vmatpush2.msra.mxu0 0.0
  %4208 = vmatprep.subr.mxu0 0.0
  %4209 = vmatpush2.msra.mxu0 0.0
  %4210 = vmatprep.subr.mxu0 0.0
  %4211 = vmatpush2.msra.mxu0 0.0
  %4212 = vmatprep.subr.mxu0 0.0
  %4213 = vmatpush2.msra.mxu0 0.0
  %4214 = vmatprep.subr.mxu0 0.0
  %4215 = vmatpush2.msra.mxu0 0.0
  %4216 = vmatprep.subr.mxu0 0.0
  %4217 = vmatpush2.msra.mxu0 0.0
  %4218 = vmatprep.subr.mxu0 0.0
  %4219 = vmatpush2.msra.mxu0 0.0
  %4220 = vmatprep.mubr.f32.mxu0 0.0
  %4221 = vmatmul.mubr.f32.gmra.mxu0 %v3924
  %v4222 = vpop.f32.mrf.mxu0
  %v4223 = vadd.f32 %v4154, %v4222
  %v4224 = vpop.f32.mrf.mxu0
  %4225 = vdwg.mxu0
  %v4227 = vlaneseq
  %v4228 = vshrl.u32 %v4227, 7
  %v4229 = vsub.s32 0, %v4228
  %v4230 = vrot.slane %v3852, %v4229
  %4232 = vmatprep.subr.mxu0 0.0
  %4233 = vmatpush1.msra.mxu0 0.0
  %4234 = vmatprep.subr.mxu0 0.0
  %4235 = vmatpush1.msra.mxu0 0.0
  %4236 = vmatprep.subr.mxu0 0.0
  %4237 = vmatpush1.msra.mxu0 0.0
  %4238 = vmatprep.subr.mxu0 0.0
  %4239 = vmatpush1.msra.mxu0 0.0
  %4240 = vmatprep.subr.mxu0 0.0
  %4241 = vmatpush1.msra.mxu0 0.0
  %4242 = vmatprep.subr.mxu0 0.0
  %4243 = vmatpush1.msra.mxu0 0.0
  %4244 = vmatprep.subr.mxu0 0.0
  %4245 = vmatpush1.msra.mxu0 0.0
  %4246 = vmatprep.subr.mxu0 0.0
  %4247 = vmatpush1.msra.mxu0 0.0
  %4248 = vmatprep.subr.mxu0 0.0
  %4249 = vmatpush1.msra.mxu0 0.0
  %4250 = vmatprep.subr.mxu0 0.0
  %4251 = vmatpush1.msra.mxu0 0.0
  %4252 = vmatprep.subr.mxu0 0.0
  %4253 = vmatpush1.msra.mxu0 0.0
  %4254 = vmatprep.subr.mxu0 0.0
  %4255 = vmatpush1.msra.mxu0 0.0
  %4256 = vmatprep.subr.mxu0 0.0
  %4257 = vmatpush1.msra.mxu0 %v3848
  %4258 = vmatprep.subr.mxu0 0.0
  %4259 = vmatpush1.msra.mxu0 %v3847
  %4260 = vmatprep.subr.mxu0 0.0
  %4261 = vmatpush1.msra.mxu0 %v3846
  %4262 = vmatprep.subr.mxu0 0.0
  %4263 = vmatpush1.msra.mxu0 %v3845
  %4264 = vmatprep.subr.mxu0 0.0
  %4265 = vmatpush2.msra.mxu0 0.0
  %4266 = vmatprep.subr.mxu0 0.0
  %4267 = vmatpush2.msra.mxu0 0.0
  %4268 = vmatprep.subr.mxu0 0.0
  %4269 = vmatpush2.msra.mxu0 0.0
  %4270 = vmatprep.subr.mxu0 0.0
  %4271 = vmatpush2.msra.mxu0 0.0
  %4272 = vmatprep.subr.mxu0 0.0
  %4273 = vmatpush2.msra.mxu0 0.0
  %4274 = vmatprep.subr.mxu0 0.0
  %4275 = vmatpush2.msra.mxu0 0.0
  %4276 = vmatprep.subr.mxu0 0.0
  %4277 = vmatpush2.msra.mxu0 0.0
  %4278 = vmatprep.subr.mxu0 0.0
  %4279 = vmatpush2.msra.mxu0 0.0
  %4280 = vmatprep.subr.mxu0 0.0
  %4281 = vmatpush2.msra.mxu0 0.0
  %4282 = vmatprep.subr.mxu0 0.0
  %4283 = vmatpush2.msra.mxu0 0.0
  %4284 = vmatprep.subr.mxu0 0.0
  %4285 = vmatpush2.msra.mxu0 0.0
  %4286 = vmatprep.subr.mxu0 0.0
  %4287 = vmatpush2.msra.mxu0 0.0
  %4288 = vmatprep.subr.mxu0 0.0
  %4289 = vmatpush2.msra.mxu0 0.0
  %4290 = vmatprep.subr.mxu0 0.0
  %4291 = vmatpush2.msra.mxu0 0.0
  %4292 = vmatprep.subr.mxu0 0.0
  %4293 = vmatpush2.msra.mxu0 0.0
  %4294 = vmatprep.subr.mxu0 0.0
  %4295 = vmatpush2.msra.mxu0 0.0
  %4296 = vmatprep.mubr.f32.mxu0 0.0
  %4297 = vmatmul.mubr.f32.gmra.mxu0 %v3253
  %v4298 = vpop.f32.mrf.mxu0
  %v4299 = vadd.f32 %v4230, %v4298
  %v4300 = vpop.f32.mrf.mxu0
  %4301 = vdwg.mxu0
  %v4302 = vxor.u32 %v4002, 2147483648
  %v4303 = vmul.f32 %v4302, 1.442695
  %v4304 = vpow.pop %v4303
  %v4305 = vadd.f32 %v4304, 1.0
  %v4306 = vrcp.pop %v4305
  %v4307 = vmul.f32 1.0, %v4306
  %v4308 = vxor.u32 %v4149, 2147483648
  %v4309 = vmul.f32 %v4308, 1.442695
  %v4310 = vpow.pop %v4309
  %v4311 = vadd.f32 %v4310, 1.0
  %v4312 = vrcp.pop %v4311
  %v4313 = vmul.f32 1.0, %v4312
  %v4314 = vmul.f32 %v4307, %v4299
  %v4315 = vadd.f32 %v4223, %v4314
  %v4316 = vtanh.pop %v4315
  %v4317 = vsub.f32 1.0, %v4313
  %v4318 = vmul.f32 %v4317, %v4316
  %v4319 = vmul.f32 %v4313, %v3240
  %v4320 = vadd.f32 %v4318, %v4319
  %v4321 = vld [vmem:[%s22] sm:$0xff]
  %v4322 = vld [vmem:[%s22 + $0x8] sm:$0xff]
  %v4323 = vld [vmem:[%s22 + $0x10] sm:$0xff]
  %v4324 = vld [vmem:[%s22 + $0x18] sm:$0xff]
  %v4325 = vld [vmem:[%s23] sm:$0x1]
  %v4327 = vlaneseq
  %v4328 = vshrl.u32 %v4327, 7
  %v4329 = vsub.s32 0, %v4328
  %v4330 = vrot.slane %v4325, %v4329
  %v4333 = vsel %vm111, %v4320, 0
  %4335 = vmatprep.subr.mxu0 0.0
  %4336 = vmatpush1.msra.mxu0 0.0
  %4337 = vmatprep.subr.mxu0 0.0
  %4338 = vmatpush1.msra.mxu0 0.0
  %4339 = vmatprep.subr.mxu0 0.0
  %4340 = vmatpush1.msra.mxu0 0.0
  %4341 = vmatprep.subr.mxu0 0.0
  %4342 = vmatpush1.msra.mxu0 0.0
  %4343 = vmatprep.subr.mxu0 0.0
  %4344 = vmatpush1.msra.mxu0 0.0
  %4345 = vmatprep.subr.mxu0 0.0
  %4346 = vmatpush1.msra.mxu0 0.0
  %4347 = vmatprep.subr.mxu0 0.0
  %4348 = vmatpush1.msra.mxu0 0.0
  %4349 = vmatprep.subr.mxu0 0.0
  %4350 = vmatpush1.msra.mxu0 0.0
  %4351 = vmatprep.subr.mxu0 0.0
  %4352 = vmatpush1.msra.mxu0 0.0
  %4353 = vmatprep.subr.mxu0 0.0
  %4354 = vmatpush1.msra.mxu0 0.0
  %4355 = vmatprep.subr.mxu0 0.0
  %4356 = vmatpush1.msra.mxu0 0.0
  %4357 = vmatprep.subr.mxu0 0.0
  %4358 = vmatpush1.msra.mxu0 0.0
  %4359 = vmatprep.subr.mxu0 0.0
  %4360 = vmatpush1.msra.mxu0 %v4324
  %4361 = vmatprep.subr.mxu0 0.0
  %4362 = vmatpush1.msra.mxu0 %v4323
  %4363 = vmatprep.subr.mxu0 0.0
  %4364 = vmatpush1.msra.mxu0 %v4322
  %4365 = vmatprep.subr.mxu0 0.0
  %4366 = vmatpush1.msra.mxu0 %v4321
  %4367 = vmatprep.subr.mxu0 0.0
  %4368 = vmatpush2.msra.mxu0 0.0
  %4369 = vmatprep.subr.mxu0 0.0
  %4370 = vmatpush2.msra.mxu0 0.0
  %4371 = vmatprep.subr.mxu0 0.0
  %4372 = vmatpush2.msra.mxu0 0.0
  %4373 = vmatprep.subr.mxu0 0.0
  %4374 = vmatpush2.msra.mxu0 0.0
  %4375 = vmatprep.subr.mxu0 0.0
  %4376 = vmatpush2.msra.mxu0 0.0
  %4377 = vmatprep.subr.mxu0 0.0
  %4378 = vmatpush2.msra.mxu0 0.0
  %4379 = vmatprep.subr.mxu0 0.0
  %4380 = vmatpush2.msra.mxu0 0.0
  %4381 = vmatprep.subr.mxu0 0.0
  %4382 = vmatpush2.msra.mxu0 0.0
  %4383 = vmatprep.subr.mxu0 0.0
  %4384 = vmatpush2.msra.mxu0 0.0
  %4385 = vmatprep.subr.mxu0 0.0
  %4386 = vmatpush2.msra.mxu0 0.0
  %4387 = vmatprep.subr.mxu0 0.0
  %4388 = vmatpush2.msra.mxu0 0.0
  %4389 = vmatprep.subr.mxu0 0.0
  %4390 = vmatpush2.msra.mxu0 0.0
  %4391 = vmatprep.subr.mxu0 0.0
  %4392 = vmatpush2.msra.mxu0 0.0
  %4393 = vmatprep.subr.mxu0 0.0
  %4394 = vmatpush2.msra.mxu0 0.0
  %4395 = vmatprep.subr.mxu0 0.0
  %4396 = vmatpush2.msra.mxu0 0.0
  %4397 = vmatprep.subr.mxu0 0.0
  %4398 = vmatpush2.msra.mxu0 0.0
  %4399 = vmatprep.mubr.f32.mxu0 0.0
  %4400 = vmatmul.mubr.f32.gmra.mxu0 %v4333
  %v4401 = vpop.f32.mrf.mxu0
  %v4402 = vadd.f32 %v4330, %v4401
  %v4403 = vpop.f32.mrf.mxu0
  %4404 = vdwg.mxu0
  %s4405 = scalar_lea.vmem %s24, 24
  %4406 = vst [vmem:[%s4405] sm:$0xff] %v4402
  %s4407 = scalar_lea.vmem %s0, 32
  %v4408 = vld [vmem:[%s4407] sm:$0xff]
  %v4409 = vld [vmem:[%s2] sm:$0xff]
  %v4410 = vld [vmem:[%s2 + $0x8] sm:$0xff]
  %v4411 = vld [vmem:[%s2 + $0x10] sm:$0xff]
  %v4412 = vld [vmem:[%s2 + $0x18] sm:$0xff]
  %v4413 = vld [vmem:[%s3] sm:$0xff]
  %v4414 = vld [vmem:[%s3 + $0x8] sm:$0xff]
  %v4415 = vld [vmem:[%s3 + $0x10] sm:$0xff]
  %v4416 = vld [vmem:[%s3 + $0x18] sm:$0xff]
  %v4417 = vld [vmem:[%s4] sm:$0xff]
  %v4418 = vld [vmem:[%s4 + $0x8] sm:$0xff]
  %v4419 = vld [vmem:[%s4 + $0x10] sm:$0xff]
  %v4420 = vld [vmem:[%s4 + $0x18] sm:$0xff]
  %v4421 = vld [vmem:[%s5] sm:$0xff]
  %v4422 = vld [vmem:[%s5 + $0x8] sm:$0xff]
  %v4423 = vld [vmem:[%s5 + $0x10] sm:$0xff]
  %v4424 = vld [vmem:[%s5 + $0x18] sm:$0xff]
  %v4425 = vld [vmem:[%s6] sm:$0xff]
  %v4426 = vld [vmem:[%s6 + $0x8] sm:$0xff]
  %v4427 = vld [vmem:[%s6 + $0x10] sm:$0xff]
  %v4428 = vld [vmem:[%s6 + $0x18] sm:$0xff]
  %v4429 = vld [vmem:[%s7] sm:$0xff]
  %v4430 = vld [vmem:[%s7 + $0x8] sm:$0xff]
  %v4431 = vld [vmem:[%s7 + $0x10] sm:$0xff]
  %v4432 = vld [vmem:[%s7 + $0x18] sm:$0xff]
  %v4433 = vld [vmem:[%s8] sm:$0x1]
  %v4434 = vld [vmem:[%s9] sm:$0x1]
  %v4435 = vld [vmem:[%s10] sm:$0x1]
  %v4436 = vld [vmem:[%s11] sm:$0x1]
  %4437 = vmatprep.subr.mxu0 0.0
  %4438 = vmatpush1.msra.mxu0 0.0
  %4439 = vmatprep.subr.mxu0 0.0
  %4440 = vmatpush1.msra.mxu0 0.0
  %4441 = vmatprep.subr.mxu0 0.0
  %4442 = vmatpush1.msra.mxu0 0.0
  %4443 = vmatprep.subr.mxu0 0.0
  %4444 = vmatpush1.msra.mxu0 0.0
  %4445 = vmatprep.subr.mxu0 0.0
  %4446 = vmatpush1.msra.mxu0 0.0
  %4447 = vmatprep.subr.mxu0 0.0
  %4448 = vmatpush1.msra.mxu0 0.0
  %4449 = vmatprep.subr.mxu0 0.0
  %4450 = vmatpush1.msra.mxu0 0.0
  %4451 = vmatprep.subr.mxu0 0.0
  %4452 = vmatpush1.msra.mxu0 0.0
  %4453 = vmatprep.subr.mxu0 0.0
  %4454 = vmatpush1.msra.mxu0 0.0
  %4455 = vmatprep.subr.mxu0 0.0
  %4456 = vmatpush1.msra.mxu0 0.0
  %4457 = vmatprep.subr.mxu0 0.0
  %4458 = vmatpush1.msra.mxu0 0.0
  %4459 = vmatprep.subr.mxu0 0.0
  %4460 = vmatpush1.msra.mxu0 0.0
  %4461 = vmatprep.subr.mxu0 0.0
  %4462 = vmatpush1.msra.mxu0 %v4424
  %4463 = vmatprep.subr.mxu0 0.0
  %4464 = vmatpush1.msra.mxu0 %v4423
  %4465 = vmatprep.subr.mxu0 0.0
  %4466 = vmatpush1.msra.mxu0 %v4422
  %4467 = vmatprep.subr.mxu0 0.0
  %4468 = vmatpush1.msra.mxu0 %v4421
  %4469 = vmatprep.subr.mxu0 0.0
  %4470 = vmatpush2.msra.mxu0 0.0
  %4471 = vmatprep.subr.mxu0 0.0
  %4472 = vmatpush2.msra.mxu0 0.0
  %4473 = vmatprep.subr.mxu0 0.0
  %4474 = vmatpush2.msra.mxu0 0.0
  %4475 = vmatprep.subr.mxu0 0.0
  %4476 = vmatpush2.msra.mxu0 0.0
  %4477 = vmatprep.subr.mxu0 0.0
  %4478 = vmatpush2.msra.mxu0 0.0
  %4479 = vmatprep.subr.mxu0 0.0
  %4480 = vmatpush2.msra.mxu0 0.0
  %4481 = vmatprep.subr.mxu0 0.0
  %4482 = vmatpush2.msra.mxu0 0.0
  %4483 = vmatprep.subr.mxu0 0.0
  %4484 = vmatpush2.msra.mxu0 0.0
  %4485 = vmatprep.subr.mxu0 0.0
  %4486 = vmatpush2.msra.mxu0 0.0
  %4487 = vmatprep.subr.mxu0 0.0
  %4488 = vmatpush2.msra.mxu0 0.0
  %4489 = vmatprep.subr.mxu0 0.0
  %4490 = vmatpush2.msra.mxu0 0.0
  %4491 = vmatprep.subr.mxu0 0.0
  %4492 = vmatpush2.msra.mxu0 0.0
  %4493 = vmatprep.subr.mxu0 0.0
  %4494 = vmatpush2.msra.mxu0 0.0
  %4495 = vmatprep.subr.mxu0 0.0
  %4496 = vmatpush2.msra.mxu0 0.0
  %4497 = vmatprep.subr.mxu0 0.0
  %4498 = vmatpush2.msra.mxu0 0.0
  %4499 = vmatprep.subr.mxu0 0.0
  %4500 = vmatpush2.msra.mxu0 0.0
  %4501 = vmatprep.mubr.f32.mxu0 0.0
  %4502 = vmatmul.mubr.f32.gmra.mxu0 %v3924
  %v4503 = vpop.f32.mrf.mxu0
  %v4504 = vadd.f32 0.0, %v4503
  %v4505 = vpop.f32.mrf.mxu0
  %4506 = vdwg.mxu0
  %v4508 = vsel %vm111, %v4408, 0
  %4510 = vmatprep.subr.mxu0 0.0
  %4511 = vmatpush1.msra.mxu0 0.0
  %4512 = vmatprep.subr.mxu0 0.0
  %4513 = vmatpush1.msra.mxu0 0.0
  %4514 = vmatprep.subr.mxu0 0.0
  %4515 = vmatpush1.msra.mxu0 0.0
  %4516 = vmatprep.subr.mxu0 0.0
  %4517 = vmatpush1.msra.mxu0 0.0
  %4518 = vmatprep.subr.mxu0 0.0
  %4519 = vmatpush1.msra.mxu0 0.0
  %4520 = vmatprep.subr.mxu0 0.0
  %4521 = vmatpush1.msra.mxu0 0.0
  %4522 = vmatprep.subr.mxu0 0.0
  %4523 = vmatpush1.msra.mxu0 0.0
  %4524 = vmatprep.subr.mxu0 0.0
  %4525 = vmatpush1.msra.mxu0 0.0
  %4526 = vmatprep.subr.mxu0 0.0
  %4527 = vmatpush1.msra.mxu0 0.0
  %4528 = vmatprep.subr.mxu0 0.0
  %4529 = vmatpush1.msra.mxu0 0.0
  %4530 = vmatprep.subr.mxu0 0.0
  %4531 = vmatpush1.msra.mxu0 0.0
  %4532 = vmatprep.subr.mxu0 0.0
  %4533 = vmatpush1.msra.mxu0 0.0
  %4534 = vmatprep.subr.mxu0 0.0
  %4535 = vmatpush1.msra.mxu0 %v4412
  %4536 = vmatprep.subr.mxu0 0.0
  %4537 = vmatpush1.msra.mxu0 %v4411
  %4538 = vmatprep.subr.mxu0 0.0
  %4539 = vmatpush1.msra.mxu0 %v4410
  %4540 = vmatprep.subr.mxu0 0.0
  %4541 = vmatpush1.msra.mxu0 %v4409
  %4542 = vmatprep.subr.mxu0 0.0
  %4543 = vmatpush2.msra.mxu0 0.0
  %4544 = vmatprep.subr.mxu0 0.0
  %4545 = vmatpush2.msra.mxu0 0.0
  %4546 = vmatprep.subr.mxu0 0.0
  %4547 = vmatpush2.msra.mxu0 0.0
  %4548 = vmatprep.subr.mxu0 0.0
  %4549 = vmatpush2.msra.mxu0 0.0
  %4550 = vmatprep.subr.mxu0 0.0
  %4551 = vmatpush2.msra.mxu0 0.0
  %4552 = vmatprep.subr.mxu0 0.0
  %4553 = vmatpush2.msra.mxu0 0.0
  %4554 = vmatprep.subr.mxu0 0.0
  %4555 = vmatpush2.msra.mxu0 0.0
  %4556 = vmatprep.subr.mxu0 0.0
  %4557 = vmatpush2.msra.mxu0 0.0
  %4558 = vmatprep.subr.mxu0 0.0
  %4559 = vmatpush2.msra.mxu0 0.0
  %4560 = vmatprep.subr.mxu0 0.0
  %4561 = vmatpush2.msra.mxu0 0.0
  %4562 = vmatprep.subr.mxu0 0.0
  %4563 = vmatpush2.msra.mxu0 0.0
  %4564 = vmatprep.subr.mxu0 0.0
  %4565 = vmatpush2.msra.mxu0 0.0
  %4566 = vmatprep.subr.mxu0 0.0
  %4567 = vmatpush2.msra.mxu0 0.0
  %4568 = vmatprep.subr.mxu0 0.0
  %4569 = vmatpush2.msra.mxu0 0.0
  %4570 = vmatprep.subr.mxu0 0.0
  %4571 = vmatpush2.msra.mxu0 0.0
  %4572 = vmatprep.subr.mxu0 0.0
  %4573 = vmatpush2.msra.mxu0 0.0
  %4574 = vmatprep.mubr.f32.mxu0 0.0
  %4575 = vmatmul.mubr.f32.gmra.mxu0 %v4508
  %v4576 = vpop.f32.mrf.mxu0
  %v4577 = vadd.f32 %v4504, %v4576
  %v4578 = vpop.f32.mrf.mxu0
  %4579 = vdwg.mxu0
  %v4581 = vlaneseq
  %v4582 = vshrl.u32 %v4581, 7
  %v4583 = vsub.s32 0, %v4582
  %v4584 = vrot.slane %v4433, %v4583
  %v4586 = vadd.f32 %v4577, %v4584
  %4587 = vmatprep.subr.mxu0 0.0
  %4588 = vmatpush1.msra.mxu0 0.0
  %4589 = vmatprep.subr.mxu0 0.0
  %4590 = vmatpush1.msra.mxu0 0.0
  %4591 = vmatprep.subr.mxu0 0.0
  %4592 = vmatpush1.msra.mxu0 0.0
  %4593 = vmatprep.subr.mxu0 0.0
  %4594 = vmatpush1.msra.mxu0 0.0
  %4595 = vmatprep.subr.mxu0 0.0
  %4596 = vmatpush1.msra.mxu0 0.0
  %4597 = vmatprep.subr.mxu0 0.0
  %4598 = vmatpush1.msra.mxu0 0.0
  %4599 = vmatprep.subr.mxu0 0.0
  %4600 = vmatpush1.msra.mxu0 0.0
  %4601 = vmatprep.subr.mxu0 0.0
  %4602 = vmatpush1.msra.mxu0 0.0
  %4603 = vmatprep.subr.mxu0 0.0
  %4604 = vmatpush1.msra.mxu0 0.0
  %4605 = vmatprep.subr.mxu0 0.0
  %4606 = vmatpush1.msra.mxu0 0.0
  %4607 = vmatprep.subr.mxu0 0.0
  %4608 = vmatpush1.msra.mxu0 0.0
  %4609 = vmatprep.subr.mxu0 0.0
  %4610 = vmatpush1.msra.mxu0 0.0
  %4611 = vmatprep.subr.mxu0 0.0
  %4612 = vmatpush1.msra.mxu0 %v4428
  %4613 = vmatprep.subr.mxu0 0.0
  %4614 = vmatpush1.msra.mxu0 %v4427
  %4615 = vmatprep.subr.mxu0 0.0
  %4616 = vmatpush1.msra.mxu0 %v4426
  %4617 = vmatprep.subr.mxu0 0.0
  %4618 = vmatpush1.msra.mxu0 %v4425
  %4619 = vmatprep.subr.mxu0 0.0
  %4620 = vmatpush2.msra.mxu0 0.0
  %4621 = vmatprep.subr.mxu0 0.0
  %4622 = vmatpush2.msra.mxu0 0.0
  %4623 = vmatprep.subr.mxu0 0.0
  %4624 = vmatpush2.msra.mxu0 0.0
  %4625 = vmatprep.subr.mxu0 0.0
  %4626 = vmatpush2.msra.mxu0 0.0
  %4627 = vmatprep.subr.mxu0 0.0
  %4628 = vmatpush2.msra.mxu0 0.0
  %4629 = vmatprep.subr.mxu0 0.0
  %4630 = vmatpush2.msra.mxu0 0.0
  %4631 = vmatprep.subr.mxu0 0.0
  %4632 = vmatpush2.msra.mxu0 0.0
  %4633 = vmatprep.subr.mxu0 0.0
  %4634 = vmatpush2.msra.mxu0 0.0
  %4635 = vmatprep.subr.mxu0 0.0
  %4636 = vmatpush2.msra.mxu0 0.0
  %4637 = vmatprep.subr.mxu0 0.0
  %4638 = vmatpush2.msra.mxu0 0.0
  %4639 = vmatprep.subr.mxu0 0.0
  %4640 = vmatpush2.msra.mxu0 0.0
  %4641 = vmatprep.subr.mxu0 0.0
  %4642 = vmatpush2.msra.mxu0 0.0
  %4643 = vmatprep.subr.mxu0 0.0
  %4644 = vmatpush2.msra.mxu0 0.0
  %4645 = vmatprep.subr.mxu0 0.0
  %4646 = vmatpush2.msra.mxu0 0.0
  %4647 = vmatprep.subr.mxu0 0.0
  %4648 = vmatpush2.msra.mxu0 0.0
  %4649 = vmatprep.subr.mxu0 0.0
  %4650 = vmatpush2.msra.mxu0 0.0
  %4651 = vmatprep.mubr.f32.mxu0 0.0
  %4652 = vmatmul.mubr.f32.gmra.mxu0 %v3924
  %v4653 = vpop.f32.mrf.mxu0
  %v4654 = vadd.f32 0.0, %v4653
  %v4655 = vpop.f32.mrf.mxu0
  %4656 = vdwg.mxu0
  %4657 = vmatprep.subr.mxu0 0.0
  %4658 = vmatpush1.msra.mxu0 0.0
  %4659 = vmatprep.subr.mxu0 0.0
  %4660 = vmatpush1.msra.mxu0 0.0
  %4661 = vmatprep.subr.mxu0 0.0
  %4662 = vmatpush1.msra.mxu0 0.0
  %4663 = vmatprep.subr.mxu0 0.0
  %4664 = vmatpush1.msra.mxu0 0.0
  %4665 = vmatprep.subr.mxu0 0.0
  %4666 = vmatpush1.msra.mxu0 0.0
  %4667 = vmatprep.subr.mxu0 0.0
  %4668 = vmatpush1.msra.mxu0 0.0
  %4669 = vmatprep.subr.mxu0 0.0
  %4670 = vmatpush1.msra.mxu0 0.0
  %4671 = vmatprep.subr.mxu0 0.0
  %4672 = vmatpush1.msra.mxu0 0.0
  %4673 = vmatprep.subr.mxu0 0.0
  %4674 = vmatpush1.msra.mxu0 0.0
  %4675 = vmatprep.subr.mxu0 0.0
  %4676 = vmatpush1.msra.mxu0 0.0
  %4677 = vmatprep.subr.mxu0 0.0
  %4678 = vmatpush1.msra.mxu0 0.0
  %4679 = vmatprep.subr.mxu0 0.0
  %4680 = vmatpush1.msra.mxu0 0.0
  %4681 = vmatprep.subr.mxu0 0.0
  %4682 = vmatpush1.msra.mxu0 %v4416
  %4683 = vmatprep.subr.mxu0 0.0
  %4684 = vmatpush1.msra.mxu0 %v4415
  %4685 = vmatprep.subr.mxu0 0.0
  %4686 = vmatpush1.msra.mxu0 %v4414
  %4687 = vmatprep.subr.mxu0 0.0
  %4688 = vmatpush1.msra.mxu0 %v4413
  %4689 = vmatprep.subr.mxu0 0.0
  %4690 = vmatpush2.msra.mxu0 0.0
  %4691 = vmatprep.subr.mxu0 0.0
  %4692 = vmatpush2.msra.mxu0 0.0
  %4693 = vmatprep.subr.mxu0 0.0
  %4694 = vmatpush2.msra.mxu0 0.0
  %4695 = vmatprep.subr.mxu0 0.0
  %4696 = vmatpush2.msra.mxu0 0.0
  %4697 = vmatprep.subr.mxu0 0.0
  %4698 = vmatpush2.msra.mxu0 0.0
  %4699 = vmatprep.subr.mxu0 0.0
  %4700 = vmatpush2.msra.mxu0 0.0
  %4701 = vmatprep.subr.mxu0 0.0
  %4702 = vmatpush2.msra.mxu0 0.0
  %4703 = vmatprep.subr.mxu0 0.0
  %4704 = vmatpush2.msra.mxu0 0.0
  %4705 = vmatprep.subr.mxu0 0.0
  %4706 = vmatpush2.msra.mxu0 0.0
  %4707 = vmatprep.subr.mxu0 0.0
  %4708 = vmatpush2.msra.mxu0 0.0
  %4709 = vmatprep.subr.mxu0 0.0
  %4710 = vmatpush2.msra.mxu0 0.0
  %4711 = vmatprep.subr.mxu0 0.0
  %4712 = vmatpush2.msra.mxu0 0.0
  %4713 = vmatprep.subr.mxu0 0.0
  %4714 = vmatpush2.msra.mxu0 0.0
  %4715 = vmatprep.subr.mxu0 0.0
  %4716 = vmatpush2.msra.mxu0 0.0
  %4717 = vmatprep.subr.mxu0 0.0
  %4718 = vmatpush2.msra.mxu0 0.0
  %4719 = vmatprep.subr.mxu0 0.0
  %4720 = vmatpush2.msra.mxu0 0.0
  %4721 = vmatprep.mubr.f32.mxu0 0.0
  %4722 = vmatmul.mubr.f32.gmra.mxu0 %v4508
  %v4723 = vpop.f32.mrf.mxu0
  %v4724 = vadd.f32 %v4654, %v4723
  %v4725 = vpop.f32.mrf.mxu0
  %4726 = vdwg.mxu0
  %v4728 = vlaneseq
  %v4729 = vshrl.u32 %v4728, 7
  %v4730 = vsub.s32 0, %v4729
  %v4731 = vrot.slane %v4434, %v4730
  %v4733 = vadd.f32 %v4724, %v4731
  %v4735 = vlaneseq
  %v4736 = vshrl.u32 %v4735, 7
  %v4737 = vsub.s32 0, %v4736
  %v4738 = vrot.slane %v4435, %v4737
  %4740 = vmatprep.subr.mxu0 0.0
  %4741 = vmatpush1.msra.mxu0 0.0
  %4742 = vmatprep.subr.mxu0 0.0
  %4743 = vmatpush1.msra.mxu0 0.0
  %4744 = vmatprep.subr.mxu0 0.0
  %4745 = vmatpush1.msra.mxu0 0.0
  %4746 = vmatprep.subr.mxu0 0.0
  %4747 = vmatpush1.msra.mxu0 0.0
  %4748 = vmatprep.subr.mxu0 0.0
  %4749 = vmatpush1.msra.mxu0 0.0
  %4750 = vmatprep.subr.mxu0 0.0
  %4751 = vmatpush1.msra.mxu0 0.0
  %4752 = vmatprep.subr.mxu0 0.0
  %4753 = vmatpush1.msra.mxu0 0.0
  %4754 = vmatprep.subr.mxu0 0.0
  %4755 = vmatpush1.msra.mxu0 0.0
  %4756 = vmatprep.subr.mxu0 0.0
  %4757 = vmatpush1.msra.mxu0 0.0
  %4758 = vmatprep.subr.mxu0 0.0
  %4759 = vmatpush1.msra.mxu0 0.0
  %4760 = vmatprep.subr.mxu0 0.0
  %4761 = vmatpush1.msra.mxu0 0.0
  %4762 = vmatprep.subr.mxu0 0.0
  %4763 = vmatpush1.msra.mxu0 0.0
  %4764 = vmatprep.subr.mxu0 0.0
  %4765 = vmatpush1.msra.mxu0 %v4420
  %4766 = vmatprep.subr.mxu0 0.0
  %4767 = vmatpush1.msra.mxu0 %v4419
  %4768 = vmatprep.subr.mxu0 0.0
  %4769 = vmatpush1.msra.mxu0 %v4418
  %4770 = vmatprep.subr.mxu0 0.0
  %4771 = vmatpush1.msra.mxu0 %v4417
  %4772 = vmatprep.subr.mxu0 0.0
  %4773 = vmatpush2.msra.mxu0 0.0
  %4774 = vmatprep.subr.mxu0 0.0
  %4775 = vmatpush2.msra.mxu0 0.0
  %4776 = vmatprep.subr.mxu0 0.0
  %4777 = vmatpush2.msra.mxu0 0.0
  %4778 = vmatprep.subr.mxu0 0.0
  %4779 = vmatpush2.msra.mxu0 0.0
  %4780 = vmatprep.subr.mxu0 0.0
  %4781 = vmatpush2.msra.mxu0 0.0
  %4782 = vmatprep.subr.mxu0 0.0
  %4783 = vmatpush2.msra.mxu0 0.0
  %4784 = vmatprep.subr.mxu0 0.0
  %4785 = vmatpush2.msra.mxu0 0.0
  %4786 = vmatprep.subr.mxu0 0.0
  %4787 = vmatpush2.msra.mxu0 0.0
  %4788 = vmatprep.subr.mxu0 0.0
  %4789 = vmatpush2.msra.mxu0 0.0
  %4790 = vmatprep.subr.mxu0 0.0
  %4791 = vmatpush2.msra.mxu0 0.0
  %4792 = vmatprep.subr.mxu0 0.0
  %4793 = vmatpush2.msra.mxu0 0.0
  %4794 = vmatprep.subr.mxu0 0.0
  %4795 = vmatpush2.msra.mxu0 0.0
  %4796 = vmatprep.subr.mxu0 0.0
  %4797 = vmatpush2.msra.mxu0 0.0
  %4798 = vmatprep.subr.mxu0 0.0
  %4799 = vmatpush2.msra.mxu0 0.0
  %4800 = vmatprep.subr.mxu0 0.0
  %4801 = vmatpush2.msra.mxu0 0.0
  %4802 = vmatprep.subr.mxu0 0.0
  %4803 = vmatpush2.msra.mxu0 0.0
  %4804 = vmatprep.mubr.f32.mxu0 0.0
  %4805 = vmatmul.mubr.f32.gmra.mxu0 %v4508
  %v4806 = vpop.f32.mrf.mxu0
  %v4807 = vadd.f32 %v4738, %v4806
  %v4808 = vpop.f32.mrf.mxu0
  %4809 = vdwg.mxu0
  %v4811 = vlaneseq
  %v4812 = vshrl.u32 %v4811, 7
  %v4813 = vsub.s32 0, %v4812
  %v4814 = vrot.slane %v4436, %v4813
  %4816 = vmatprep.subr.mxu0 0.0
  %4817 = vmatpush1.msra.mxu0 0.0
  %4818 = vmatprep.subr.mxu0 0.0
  %4819 = vmatpush1.msra.mxu0 0.0
  %4820 = vmatprep.subr.mxu0 0.0
  %4821 = vmatpush1.msra.mxu0 0.0
  %4822 = vmatprep.subr.mxu0 0.0
  %4823 = vmatpush1.msra.mxu0 0.0
  %4824 = vmatprep.subr.mxu0 0.0
  %4825 = vmatpush1.msra.mxu0 0.0
  %4826 = vmatprep.subr.mxu0 0.0
  %4827 = vmatpush1.msra.mxu0 0.0
  %4828 = vmatprep.subr.mxu0 0.0
  %4829 = vmatpush1.msra.mxu0 0.0
  %4830 = vmatprep.subr.mxu0 0.0
  %4831 = vmatpush1.msra.mxu0 0.0
  %4832 = vmatprep.subr.mxu0 0.0
  %4833 = vmatpush1.msra.mxu0 0.0
  %4834 = vmatprep.subr.mxu0 0.0
  %4835 = vmatpush1.msra.mxu0 0.0
  %4836 = vmatprep.subr.mxu0 0.0
  %4837 = vmatpush1.msra.mxu0 0.0
  %4838 = vmatprep.subr.mxu0 0.0
  %4839 = vmatpush1.msra.mxu0 0.0
  %4840 = vmatprep.subr.mxu0 0.0
  %4841 = vmatpush1.msra.mxu0 %v4432
  %4842 = vmatprep.subr.mxu0 0.0
  %4843 = vmatpush1.msra.mxu0 %v4431
  %4844 = vmatprep.subr.mxu0 0.0
  %4845 = vmatpush1.msra.mxu0 %v4430
  %4846 = vmatprep.subr.mxu0 0.0
  %4847 = vmatpush1.msra.mxu0 %v4429
  %4848 = vmatprep.subr.mxu0 0.0
  %4849 = vmatpush2.msra.mxu0 0.0
  %4850 = vmatprep.subr.mxu0 0.0
  %4851 = vmatpush2.msra.mxu0 0.0
  %4852 = vmatprep.subr.mxu0 0.0
  %4853 = vmatpush2.msra.mxu0 0.0
  %4854 = vmatprep.subr.mxu0 0.0
  %4855 = vmatpush2.msra.mxu0 0.0
  %4856 = vmatprep.subr.mxu0 0.0
  %4857 = vmatpush2.msra.mxu0 0.0
  %4858 = vmatprep.subr.mxu0 0.0
  %4859 = vmatpush2.msra.mxu0 0.0
  %4860 = vmatprep.subr.mxu0 0.0
  %4861 = vmatpush2.msra.mxu0 0.0
  %4862 = vmatprep.subr.mxu0 0.0
  %4863 = vmatpush2.msra.mxu0 0.0
  %4864 = vmatprep.subr.mxu0 0.0
  %4865 = vmatpush2.msra.mxu0 0.0
  %4866 = vmatprep.subr.mxu0 0.0
  %4867 = vmatpush2.msra.mxu0 0.0
  %4868 = vmatprep.subr.mxu0 0.0
  %4869 = vmatpush2.msra.mxu0 0.0
  %4870 = vmatprep.subr.mxu0 0.0
  %4871 = vmatpush2.msra.mxu0 0.0
  %4872 = vmatprep.subr.mxu0 0.0
  %4873 = vmatpush2.msra.mxu0 0.0
  %4874 = vmatprep.subr.mxu0 0.0
  %4875 = vmatpush2.msra.mxu0 0.0
  %4876 = vmatprep.subr.mxu0 0.0
  %4877 = vmatpush2.msra.mxu0 0.0
  %4878 = vmatprep.subr.mxu0 0.0
  %4879 = vmatpush2.msra.mxu0 0.0
  %4880 = vmatprep.mubr.f32.mxu0 0.0
  %4881 = vmatmul.mubr.f32.gmra.mxu0 %v3924
  %v4882 = vpop.f32.mrf.mxu0
  %v4883 = vadd.f32 %v4814, %v4882
  %v4884 = vpop.f32.mrf.mxu0
  %4885 = vdwg.mxu0
  %v4886 = vxor.u32 %v4586, 2147483648
  %v4887 = vmul.f32 %v4886, 1.442695
  %v4888 = vpow.pop %v4887
  %v4889 = vadd.f32 %v4888, 1.0
  %v4890 = vrcp.pop %v4889
  %v4891 = vmul.f32 1.0, %v4890
  %v4892 = vxor.u32 %v4733, 2147483648
  %v4893 = vmul.f32 %v4892, 1.442695
  %v4894 = vpow.pop %v4893
  %v4895 = vadd.f32 %v4894, 1.0
  %v4896 = vrcp.pop %v4895
  %v4897 = vmul.f32 1.0, %v4896
  %v4898 = vmul.f32 %v4891, %v4883
  %v4899 = vadd.f32 %v4807, %v4898
  %v4900 = vtanh.pop %v4899
  %v4901 = vsub.f32 1.0, %v4897
  %v4902 = vmul.f32 %v4901, %v4900
  %v4903 = vmul.f32 %v4897, %v3824
  %v4904 = vadd.f32 %v4902, %v4903
  %v4905 = vld [vmem:[%s12] sm:$0xff]
  %v4906 = vld [vmem:[%s12 + $0x8] sm:$0xff]
  %v4907 = vld [vmem:[%s12 + $0x10] sm:$0xff]
  %v4908 = vld [vmem:[%s12 + $0x18] sm:$0xff]
  %v4909 = vld [vmem:[%s13] sm:$0xff]
  %v4910 = vld [vmem:[%s13 + $0x8] sm:$0xff]
  %v4911 = vld [vmem:[%s13 + $0x10] sm:$0xff]
  %v4912 = vld [vmem:[%s13 + $0x18] sm:$0xff]
  %v4913 = vld [vmem:[%s14] sm:$0xff]
  %v4914 = vld [vmem:[%s14 + $0x8] sm:$0xff]
  %v4915 = vld [vmem:[%s14 + $0x10] sm:$0xff]
  %v4916 = vld [vmem:[%s14 + $0x18] sm:$0xff]
  %v4917 = vld [vmem:[%s15] sm:$0xff]
  %v4918 = vld [vmem:[%s15 + $0x8] sm:$0xff]
  %v4919 = vld [vmem:[%s15 + $0x10] sm:$0xff]
  %v4920 = vld [vmem:[%s15 + $0x18] sm:$0xff]
  %v4921 = vld [vmem:[%s16] sm:$0xff]
  %v4922 = vld [vmem:[%s16 + $0x8] sm:$0xff]
  %v4923 = vld [vmem:[%s16 + $0x10] sm:$0xff]
  %v4924 = vld [vmem:[%s16 + $0x18] sm:$0xff]
  %v4925 = vld [vmem:[%s17] sm:$0xff]
  %v4926 = vld [vmem:[%s17 + $0x8] sm:$0xff]
  %v4927 = vld [vmem:[%s17 + $0x10] sm:$0xff]
  %v4928 = vld [vmem:[%s17 + $0x18] sm:$0xff]
  %v4929 = vld [vmem:[%s18] sm:$0x1]
  %v4930 = vld [vmem:[%s19] sm:$0x1]
  %v4931 = vld [vmem:[%s20] sm:$0x1]
  %v4932 = vld [vmem:[%s21] sm:$0x1]
  %4933 = vmatprep.subr.mxu0 0.0
  %4934 = vmatpush1.msra.mxu0 0.0
  %4935 = vmatprep.subr.mxu0 0.0
  %4936 = vmatpush1.msra.mxu0 0.0
  %4937 = vmatprep.subr.mxu0 0.0
  %4938 = vmatpush1.msra.mxu0 0.0
  %4939 = vmatprep.subr.mxu0 0.0
  %4940 = vmatpush1.msra.mxu0 0.0
  %4941 = vmatprep.subr.mxu0 0.0
  %4942 = vmatpush1.msra.mxu0 0.0
  %4943 = vmatprep.subr.mxu0 0.0
  %4944 = vmatpush1.msra.mxu0 0.0
  %4945 = vmatprep.subr.mxu0 0.0
  %4946 = vmatpush1.msra.mxu0 0.0
  %4947 = vmatprep.subr.mxu0 0.0
  %4948 = vmatpush1.msra.mxu0 0.0
  %4949 = vmatprep.subr.mxu0 0.0
  %4950 = vmatpush1.msra.mxu0 0.0
  %4951 = vmatprep.subr.mxu0 0.0
  %4952 = vmatpush1.msra.mxu0 0.0
  %4953 = vmatprep.subr.mxu0 0.0
  %4954 = vmatpush1.msra.mxu0 0.0
  %4955 = vmatprep.subr.mxu0 0.0
  %4956 = vmatpush1.msra.mxu0 0.0
  %4957 = vmatprep.subr.mxu0 0.0
  %4958 = vmatpush1.msra.mxu0 %v4920
  %4959 = vmatprep.subr.mxu0 0.0
  %4960 = vmatpush1.msra.mxu0 %v4919
  %4961 = vmatprep.subr.mxu0 0.0
  %4962 = vmatpush1.msra.mxu0 %v4918
  %4963 = vmatprep.subr.mxu0 0.0
  %4964 = vmatpush1.msra.mxu0 %v4917
  %4965 = vmatprep.subr.mxu0 0.0
  %4966 = vmatpush2.msra.mxu0 0.0
  %4967 = vmatprep.subr.mxu0 0.0
  %4968 = vmatpush2.msra.mxu0 0.0
  %4969 = vmatprep.subr.mxu0 0.0
  %4970 = vmatpush2.msra.mxu0 0.0
  %4971 = vmatprep.subr.mxu0 0.0
  %4972 = vmatpush2.msra.mxu0 0.0
  %4973 = vmatprep.subr.mxu0 0.0
  %4974 = vmatpush2.msra.mxu0 0.0
  %4975 = vmatprep.subr.mxu0 0.0
  %4976 = vmatpush2.msra.mxu0 0.0
  %4977 = vmatprep.subr.mxu0 0.0
  %4978 = vmatpush2.msra.mxu0 0.0
  %4979 = vmatprep.subr.mxu0 0.0
  %4980 = vmatpush2.msra.mxu0 0.0
  %4981 = vmatprep.subr.mxu0 0.0
  %4982 = vmatpush2.msra.mxu0 0.0
  %4983 = vmatprep.subr.mxu0 0.0
  %4984 = vmatpush2.msra.mxu0 0.0
  %4985 = vmatprep.subr.mxu0 0.0
  %4986 = vmatpush2.msra.mxu0 0.0
  %4987 = vmatprep.subr.mxu0 0.0
  %4988 = vmatpush2.msra.mxu0 0.0
  %4989 = vmatprep.subr.mxu0 0.0
  %4990 = vmatpush2.msra.mxu0 0.0
  %4991 = vmatprep.subr.mxu0 0.0
  %4992 = vmatpush2.msra.mxu0 0.0
  %4993 = vmatprep.subr.mxu0 0.0
  %4994 = vmatpush2.msra.mxu0 0.0
  %4995 = vmatprep.subr.mxu0 0.0
  %4996 = vmatpush2.msra.mxu0 0.0
  %4997 = vmatprep.mubr.f32.mxu0 0.0
  %4998 = vmatmul.mubr.f32.gmra.mxu0 %v4333
  %v4999 = vpop.f32.mrf.mxu0
  %v5000 = vadd.f32 0.0, %v4999
  %v5001 = vpop.f32.mrf.mxu0
  %5002 = vdwg.mxu0
  %v5004 = vsel %vm111, %v4904, 0
  %5006 = vmatprep.subr.mxu0 0.0
  %5007 = vmatpush1.msra.mxu0 0.0
  %5008 = vmatprep.subr.mxu0 0.0
  %5009 = vmatpush1.msra.mxu0 0.0
  %5010 = vmatprep.subr.mxu0 0.0
  %5011 = vmatpush1.msra.mxu0 0.0
  %5012 = vmatprep.subr.mxu0 0.0
  %5013 = vmatpush1.msra.mxu0 0.0
  %5014 = vmatprep.subr.mxu0 0.0
  %5015 = vmatpush1.msra.mxu0 0.0
  %5016 = vmatprep.subr.mxu0 0.0
  %5017 = vmatpush1.msra.mxu0 0.0
  %5018 = vmatprep.subr.mxu0 0.0
  %5019 = vmatpush1.msra.mxu0 0.0
  %5020 = vmatprep.subr.mxu0 0.0
  %5021 = vmatpush1.msra.mxu0 0.0
  %5022 = vmatprep.subr.mxu0 0.0
  %5023 = vmatpush1.msra.mxu0 0.0
  %5024 = vmatprep.subr.mxu0 0.0
  %5025 = vmatpush1.msra.mxu0 0.0
  %5026 = vmatprep.subr.mxu0 0.0
  %5027 = vmatpush1.msra.mxu0 0.0
  %5028 = vmatprep.subr.mxu0 0.0
  %5029 = vmatpush1.msra.mxu0 0.0
  %5030 = vmatprep.subr.mxu0 0.0
  %5031 = vmatpush1.msra.mxu0 %v4908
  %5032 = vmatprep.subr.mxu0 0.0
  %5033 = vmatpush1.msra.mxu0 %v4907
  %5034 = vmatprep.subr.mxu0 0.0
  %5035 = vmatpush1.msra.mxu0 %v4906
  %5036 = vmatprep.subr.mxu0 0.0
  %5037 = vmatpush1.msra.mxu0 %v4905
  %5038 = vmatprep.subr.mxu0 0.0
  %5039 = vmatpush2.msra.mxu0 0.0
  %5040 = vmatprep.subr.mxu0 0.0
  %5041 = vmatpush2.msra.mxu0 0.0
  %5042 = vmatprep.subr.mxu0 0.0
  %5043 = vmatpush2.msra.mxu0 0.0
  %5044 = vmatprep.subr.mxu0 0.0
  %5045 = vmatpush2.msra.mxu0 0.0
  %5046 = vmatprep.subr.mxu0 0.0
  %5047 = vmatpush2.msra.mxu0 0.0
  %5048 = vmatprep.subr.mxu0 0.0
  %5049 = vmatpush2.msra.mxu0 0.0
  %5050 = vmatprep.subr.mxu0 0.0
  %5051 = vmatpush2.msra.mxu0 0.0
  %5052 = vmatprep.subr.mxu0 0.0
  %5053 = vmatpush2.msra.mxu0 0.0
  %5054 = vmatprep.subr.mxu0 0.0
  %5055 = vmatpush2.msra.mxu0 0.0
  %5056 = vmatprep.subr.mxu0 0.0
  %5057 = vmatpush2.msra.mxu0 0.0
  %5058 = vmatprep.subr.mxu0 0.0
  %5059 = vmatpush2.msra.mxu0 0.0
  %5060 = vmatprep.subr.mxu0 0.0
  %5061 = vmatpush2.msra.mxu0 0.0
  %5062 = vmatprep.subr.mxu0 0.0
  %5063 = vmatpush2.msra.mxu0 0.0
  %5064 = vmatprep.subr.mxu0 0.0
  %5065 = vmatpush2.msra.mxu0 0.0
  %5066 = vmatprep.subr.mxu0 0.0
  %5067 = vmatpush2.msra.mxu0 0.0
  %5068 = vmatprep.subr.mxu0 0.0
  %5069 = vmatpush2.msra.mxu0 0.0
  %5070 = vmatprep.mubr.f32.mxu0 0.0
  %5071 = vmatmul.mubr.f32.gmra.mxu0 %v5004
  %v5072 = vpop.f32.mrf.mxu0
  %v5073 = vadd.f32 %v5000, %v5072
  %v5074 = vpop.f32.mrf.mxu0
  %5075 = vdwg.mxu0
  %v5077 = vlaneseq
  %v5078 = vshrl.u32 %v5077, 7
  %v5079 = vsub.s32 0, %v5078
  %v5080 = vrot.slane %v4929, %v5079
  %v5082 = vadd.f32 %v5073, %v5080
  %5083 = vmatprep.subr.mxu0 0.0
  %5084 = vmatpush1.msra.mxu0 0.0
  %5085 = vmatprep.subr.mxu0 0.0
  %5086 = vmatpush1.msra.mxu0 0.0
  %5087 = vmatprep.subr.mxu0 0.0
  %5088 = vmatpush1.msra.mxu0 0.0
  %5089 = vmatprep.subr.mxu0 0.0
  %5090 = vmatpush1.msra.mxu0 0.0
  %5091 = vmatprep.subr.mxu0 0.0
  %5092 = vmatpush1.msra.mxu0 0.0
  %5093 = vmatprep.subr.mxu0 0.0
  %5094 = vmatpush1.msra.mxu0 0.0
  %5095 = vmatprep.subr.mxu0 0.0
  %5096 = vmatpush1.msra.mxu0 0.0
  %5097 = vmatprep.subr.mxu0 0.0
  %5098 = vmatpush1.msra.mxu0 0.0
  %5099 = vmatprep.subr.mxu0 0.0
  %5100 = vmatpush1.msra.mxu0 0.0
  %5101 = vmatprep.subr.mxu0 0.0
  %5102 = vmatpush1.msra.mxu0 0.0
  %5103 = vmatprep.subr.mxu0 0.0
  %5104 = vmatpush1.msra.mxu0 0.0
  %5105 = vmatprep.subr.mxu0 0.0
  %5106 = vmatpush1.msra.mxu0 0.0
  %5107 = vmatprep.subr.mxu0 0.0
  %5108 = vmatpush1.msra.mxu0 %v4924
  %5109 = vmatprep.subr.mxu0 0.0
  %5110 = vmatpush1.msra.mxu0 %v4923
  %5111 = vmatprep.subr.mxu0 0.0
  %5112 = vmatpush1.msra.mxu0 %v4922
  %5113 = vmatprep.subr.mxu0 0.0
  %5114 = vmatpush1.msra.mxu0 %v4921
  %5115 = vmatprep.subr.mxu0 0.0
  %5116 = vmatpush2.msra.mxu0 0.0
  %5117 = vmatprep.subr.mxu0 0.0
  %5118 = vmatpush2.msra.mxu0 0.0
  %5119 = vmatprep.subr.mxu0 0.0
  %5120 = vmatpush2.msra.mxu0 0.0
  %5121 = vmatprep.subr.mxu0 0.0
  %5122 = vmatpush2.msra.mxu0 0.0
  %5123 = vmatprep.subr.mxu0 0.0
  %5124 = vmatpush2.msra.mxu0 0.0
  %5125 = vmatprep.subr.mxu0 0.0
  %5126 = vmatpush2.msra.mxu0 0.0
  %5127 = vmatprep.subr.mxu0 0.0
  %5128 = vmatpush2.msra.mxu0 0.0
  %5129 = vmatprep.subr.mxu0 0.0
  %5130 = vmatpush2.msra.mxu0 0.0
  %5131 = vmatprep.subr.mxu0 0.0
  %5132 = vmatpush2.msra.mxu0 0.0
  %5133 = vmatprep.subr.mxu0 0.0
  %5134 = vmatpush2.msra.mxu0 0.0
  %5135 = vmatprep.subr.mxu0 0.0
  %5136 = vmatpush2.msra.mxu0 0.0
  %5137 = vmatprep.subr.mxu0 0.0
  %5138 = vmatpush2.msra.mxu0 0.0
  %5139 = vmatprep.subr.mxu0 0.0
  %5140 = vmatpush2.msra.mxu0 0.0
  %5141 = vmatprep.subr.mxu0 0.0
  %5142 = vmatpush2.msra.mxu0 0.0
  %5143 = vmatprep.subr.mxu0 0.0
  %5144 = vmatpush2.msra.mxu0 0.0
  %5145 = vmatprep.subr.mxu0 0.0
  %5146 = vmatpush2.msra.mxu0 0.0
  %5147 = vmatprep.mubr.f32.mxu0 0.0
  %5148 = vmatmul.mubr.f32.gmra.mxu0 %v4333
  %v5149 = vpop.f32.mrf.mxu0
  %v5150 = vadd.f32 0.0, %v5149
  %v5151 = vpop.f32.mrf.mxu0
  %5152 = vdwg.mxu0
  %5153 = vmatprep.subr.mxu0 0.0
  %5154 = vmatpush1.msra.mxu0 0.0
  %5155 = vmatprep.subr.mxu0 0.0
  %5156 = vmatpush1.msra.mxu0 0.0
  %5157 = vmatprep.subr.mxu0 0.0
  %5158 = vmatpush1.msra.mxu0 0.0
  %5159 = vmatprep.subr.mxu0 0.0
  %5160 = vmatpush1.msra.mxu0 0.0
  %5161 = vmatprep.subr.mxu0 0.0
  %5162 = vmatpush1.msra.mxu0 0.0
  %5163 = vmatprep.subr.mxu0 0.0
  %5164 = vmatpush1.msra.mxu0 0.0
  %5165 = vmatprep.subr.mxu0 0.0
  %5166 = vmatpush1.msra.mxu0 0.0
  %5167 = vmatprep.subr.mxu0 0.0
  %5168 = vmatpush1.msra.mxu0 0.0
  %5169 = vmatprep.subr.mxu0 0.0
  %5170 = vmatpush1.msra.mxu0 0.0
  %5171 = vmatprep.subr.mxu0 0.0
  %5172 = vmatpush1.msra.mxu0 0.0
  %5173 = vmatprep.subr.mxu0 0.0
  %5174 = vmatpush1.msra.mxu0 0.0
  %5175 = vmatprep.subr.mxu0 0.0
  %5176 = vmatpush1.msra.mxu0 0.0
  %5177 = vmatprep.subr.mxu0 0.0
  %5178 = vmatpush1.msra.mxu0 %v4912
  %5179 = vmatprep.subr.mxu0 0.0
  %5180 = vmatpush1.msra.mxu0 %v4911
  %5181 = vmatprep.subr.mxu0 0.0
  %5182 = vmatpush1.msra.mxu0 %v4910
  %5183 = vmatprep.subr.mxu0 0.0
  %5184 = vmatpush1.msra.mxu0 %v4909
  %5185 = vmatprep.subr.mxu0 0.0
  %5186 = vmatpush2.msra.mxu0 0.0
  %5187 = vmatprep.subr.mxu0 0.0
  %5188 = vmatpush2.msra.mxu0 0.0
  %5189 = vmatprep.subr.mxu0 0.0
  %5190 = vmatpush2.msra.mxu0 0.0
  %5191 = vmatprep.subr.mxu0 0.0
  %5192 = vmatpush2.msra.mxu0 0.0
  %5193 = vmatprep.subr.mxu0 0.0
  %5194 = vmatpush2.msra.mxu0 0.0
  %5195 = vmatprep.subr.mxu0 0.0
  %5196 = vmatpush2.msra.mxu0 0.0
  %5197 = vmatprep.subr.mxu0 0.0
  %5198 = vmatpush2.msra.mxu0 0.0
  %5199 = vmatprep.subr.mxu0 0.0
  %5200 = vmatpush2.msra.mxu0 0.0
  %5201 = vmatprep.subr.mxu0 0.0
  %5202 = vmatpush2.msra.mxu0 0.0
  %5203 = vmatprep.subr.mxu0 0.0
  %5204 = vmatpush2.msra.mxu0 0.0
  %5205 = vmatprep.subr.mxu0 0.0
  %5206 = vmatpush2.msra.mxu0 0.0
  %5207 = vmatprep.subr.mxu0 0.0
  %5208 = vmatpush2.msra.mxu0 0.0
  %5209 = vmatprep.subr.mxu0 0.0
  %5210 = vmatpush2.msra.mxu0 0.0
  %5211 = vmatprep.subr.mxu0 0.0
  %5212 = vmatpush2.msra.mxu0 0.0
  %5213 = vmatprep.subr.mxu0 0.0
  %5214 = vmatpush2.msra.mxu0 0.0
  %5215 = vmatprep.subr.mxu0 0.0
  %5216 = vmatpush2.msra.mxu0 0.0
  %5217 = vmatprep.mubr.f32.mxu0 0.0
  %5218 = vmatmul.mubr.f32.gmra.mxu0 %v5004
  %v5219 = vpop.f32.mrf.mxu0
  %v5220 = vadd.f32 %v5150, %v5219
  %v5221 = vpop.f32.mrf.mxu0
  %5222 = vdwg.mxu0
  %v5224 = vlaneseq
  %v5225 = vshrl.u32 %v5224, 7
  %v5226 = vsub.s32 0, %v5225
  %v5227 = vrot.slane %v4930, %v5226
  %v5229 = vadd.f32 %v5220, %v5227
  %v5231 = vlaneseq
  %v5232 = vshrl.u32 %v5231, 7
  %v5233 = vsub.s32 0, %v5232
  %v5234 = vrot.slane %v4931, %v5233
  %5236 = vmatprep.subr.mxu0 0.0
  %5237 = vmatpush1.msra.mxu0 0.0
  %5238 = vmatprep.subr.mxu0 0.0
  %5239 = vmatpush1.msra.mxu0 0.0
  %5240 = vmatprep.subr.mxu0 0.0
  %5241 = vmatpush1.msra.mxu0 0.0
  %5242 = vmatprep.subr.mxu0 0.0
  %5243 = vmatpush1.msra.mxu0 0.0
  %5244 = vmatprep.subr.mxu0 0.0
  %5245 = vmatpush1.msra.mxu0 0.0
  %5246 = vmatprep.subr.mxu0 0.0
  %5247 = vmatpush1.msra.mxu0 0.0
  %5248 = vmatprep.subr.mxu0 0.0
  %5249 = vmatpush1.msra.mxu0 0.0
  %5250 = vmatprep.subr.mxu0 0.0
  %5251 = vmatpush1.msra.mxu0 0.0
  %5252 = vmatprep.subr.mxu0 0.0
  %5253 = vmatpush1.msra.mxu0 0.0
  %5254 = vmatprep.subr.mxu0 0.0
  %5255 = vmatpush1.msra.mxu0 0.0
  %5256 = vmatprep.subr.mxu0 0.0
  %5257 = vmatpush1.msra.mxu0 0.0
  %5258 = vmatprep.subr.mxu0 0.0
  %5259 = vmatpush1.msra.mxu0 0.0
  %5260 = vmatprep.subr.mxu0 0.0
  %5261 = vmatpush1.msra.mxu0 %v4916
  %5262 = vmatprep.subr.mxu0 0.0
  %5263 = vmatpush1.msra.mxu0 %v4915
  %5264 = vmatprep.subr.mxu0 0.0
  %5265 = vmatpush1.msra.mxu0 %v4914
  %5266 = vmatprep.subr.mxu0 0.0
  %5267 = vmatpush1.msra.mxu0 %v4913
  %5268 = vmatprep.subr.mxu0 0.0
  %5269 = vmatpush2.msra.mxu0 0.0
  %5270 = vmatprep.subr.mxu0 0.0
  %5271 = vmatpush2.msra.mxu0 0.0
  %5272 = vmatprep.subr.mxu0 0.0
  %5273 = vmatpush2.msra.mxu0 0.0
  %5274 = vmatprep.subr.mxu0 0.0
  %5275 = vmatpush2.msra.mxu0 0.0
  %5276 = vmatprep.subr.mxu0 0.0
  %5277 = vmatpush2.msra.mxu0 0.0
  %5278 = vmatprep.subr.mxu0 0.0
  %5279 = vmatpush2.msra.mxu0 0.0
  %5280 = vmatprep.subr.mxu0 0.0
  %5281 = vmatpush2.msra.mxu0 0.0
  %5282 = vmatprep.subr.mxu0 0.0
  %5283 = vmatpush2.msra.mxu0 0.0
  %5284 = vmatprep.subr.mxu0 0.0
  %5285 = vmatpush2.msra.mxu0 0.0
  %5286 = vmatprep.subr.mxu0 0.0
  %5287 = vmatpush2.msra.mxu0 0.0
  %5288 = vmatprep.subr.mxu0 0.0
  %5289 = vmatpush2.msra.mxu0 0.0
  %5290 = vmatprep.subr.mxu0 0.0
  %5291 = vmatpush2.msra.mxu0 0.0
  %5292 = vmatprep.subr.mxu0 0.0
  %5293 = vmatpush2.msra.mxu0 0.0
  %5294 = vmatprep.subr.mxu0 0.0
  %5295 = vmatpush2.msra.mxu0 0.0
  %5296 = vmatprep.subr.mxu0 0.0
  %5297 = vmatpush2.msra.mxu0 0.0
  %5298 = vmatprep.subr.mxu0 0.0
  %5299 = vmatpush2.msra.mxu0 0.0
  %5300 = vmatprep.mubr.f32.mxu0 0.0
  %5301 = vmatmul.mubr.f32.gmra.mxu0 %v5004
  %v5302 = vpop.f32.mrf.mxu0
  %v5303 = vadd.f32 %v5234, %v5302
  %v5304 = vpop.f32.mrf.mxu0
  %5305 = vdwg.mxu0
  %v5307 = vlaneseq
  %v5308 = vshrl.u32 %v5307, 7
  %v5309 = vsub.s32 0, %v5308
  %v5310 = vrot.slane %v4932, %v5309
  %5312 = vmatprep.subr.mxu0 0.0
  %5313 = vmatpush1.msra.mxu0 0.0
  %5314 = vmatprep.subr.mxu0 0.0
  %5315 = vmatpush1.msra.mxu0 0.0
  %5316 = vmatprep.subr.mxu0 0.0
  %5317 = vmatpush1.msra.mxu0 0.0
  %5318 = vmatprep.subr.mxu0 0.0
  %5319 = vmatpush1.msra.mxu0 0.0
  %5320 = vmatprep.subr.mxu0 0.0
  %5321 = vmatpush1.msra.mxu0 0.0
  %5322 = vmatprep.subr.mxu0 0.0
  %5323 = vmatpush1.msra.mxu0 0.0
  %5324 = vmatprep.subr.mxu0 0.0
  %5325 = vmatpush1.msra.mxu0 0.0
  %5326 = vmatprep.subr.mxu0 0.0
  %5327 = vmatpush1.msra.mxu0 0.0
  %5328 = vmatprep.subr.mxu0 0.0
  %5329 = vmatpush1.msra.mxu0 0.0
  %5330 = vmatprep.subr.mxu0 0.0
  %5331 = vmatpush1.msra.mxu0 0.0
  %5332 = vmatprep.subr.mxu0 0.0
  %5333 = vmatpush1.msra.mxu0 0.0
  %5334 = vmatprep.subr.mxu0 0.0
  %5335 = vmatpush1.msra.mxu0 0.0
  %5336 = vmatprep.subr.mxu0 0.0
  %5337 = vmatpush1.msra.mxu0 %v4928
  %5338 = vmatprep.subr.mxu0 0.0
  %5339 = vmatpush1.msra.mxu0 %v4927
  %5340 = vmatprep.subr.mxu0 0.0
  %5341 = vmatpush1.msra.mxu0 %v4926
  %5342 = vmatprep.subr.mxu0 0.0
  %5343 = vmatpush1.msra.mxu0 %v4925
  %5344 = vmatprep.subr.mxu0 0.0
  %5345 = vmatpush2.msra.mxu0 0.0
  %5346 = vmatprep.subr.mxu0 0.0
  %5347 = vmatpush2.msra.mxu0 0.0
  %5348 = vmatprep.subr.mxu0 0.0
  %5349 = vmatpush2.msra.mxu0 0.0
  %5350 = vmatprep.subr.mxu0 0.0
  %5351 = vmatpush2.msra.mxu0 0.0
  %5352 = vmatprep.subr.mxu0 0.0
  %5353 = vmatpush2.msra.mxu0 0.0
  %5354 = vmatprep.subr.mxu0 0.0
  %5355 = vmatpush2.msra.mxu0 0.0
  %5356 = vmatprep.subr.mxu0 0.0
  %5357 = vmatpush2.msra.mxu0 0.0
  %5358 = vmatprep.subr.mxu0 0.0
  %5359 = vmatpush2.msra.mxu0 0.0
  %5360 = vmatprep.subr.mxu0 0.0
  %5361 = vmatpush2.msra.mxu0 0.0
  %5362 = vmatprep.subr.mxu0 0.0
  %5363 = vmatpush2.msra.mxu0 0.0
  %5364 = vmatprep.subr.mxu0 0.0
  %5365 = vmatpush2.msra.mxu0 0.0
  %5366 = vmatprep.subr.mxu0 0.0
  %5367 = vmatpush2.msra.mxu0 0.0
  %5368 = vmatprep.subr.mxu0 0.0
  %5369 = vmatpush2.msra.mxu0 0.0
  %5370 = vmatprep.subr.mxu0 0.0
  %5371 = vmatpush2.msra.mxu0 0.0
  %5372 = vmatprep.subr.mxu0 0.0
  %5373 = vmatpush2.msra.mxu0 0.0
  %5374 = vmatprep.subr.mxu0 0.0
  %5375 = vmatpush2.msra.mxu0 0.0
  %5376 = vmatprep.mubr.f32.mxu0 0.0
  %5377 = vmatmul.mubr.f32.gmra.mxu0 %v4333
  %v5378 = vpop.f32.mrf.mxu0
  %v5379 = vadd.f32 %v5310, %v5378
  %v5380 = vpop.f32.mrf.mxu0
  %5381 = vdwg.mxu0
  %v5382 = vxor.u32 %v5082, 2147483648
  %v5383 = vmul.f32 %v5382, 1.442695
  %v5384 = vpow.pop %v5383
  %v5385 = vadd.f32 %v5384, 1.0
  %v5386 = vrcp.pop %v5385
  %v5387 = vmul.f32 1.0, %v5386
  %v5388 = vxor.u32 %v5229, 2147483648
  %v5389 = vmul.f32 %v5388, 1.442695
  %v5390 = vpow.pop %v5389
  %v5391 = vadd.f32 %v5390, 1.0
  %v5392 = vrcp.pop %v5391
  %v5393 = vmul.f32 1.0, %v5392
  %v5394 = vmul.f32 %v5387, %v5379
  %v5395 = vadd.f32 %v5303, %v5394
  %v5396 = vtanh.pop %v5395
  %v5397 = vsub.f32 1.0, %v5393
  %v5398 = vmul.f32 %v5397, %v5396
  %v5399 = vmul.f32 %v5393, %v4320
  %v5400 = vadd.f32 %v5398, %v5399
  %v5401 = vld [vmem:[%s22] sm:$0xff]
  %v5402 = vld [vmem:[%s22 + $0x8] sm:$0xff]
  %v5403 = vld [vmem:[%s22 + $0x10] sm:$0xff]
  %v5404 = vld [vmem:[%s22 + $0x18] sm:$0xff]
  %v5405 = vld [vmem:[%s23] sm:$0x1]
  %v5407 = vlaneseq
  %v5408 = vshrl.u32 %v5407, 7
  %v5409 = vsub.s32 0, %v5408
  %v5410 = vrot.slane %v5405, %v5409
  %v5413 = vsel %vm111, %v5400, 0
  %5415 = vmatprep.subr.mxu0 0.0
  %5416 = vmatpush1.msra.mxu0 0.0
  %5417 = vmatprep.subr.mxu0 0.0
  %5418 = vmatpush1.msra.mxu0 0.0
  %5419 = vmatprep.subr.mxu0 0.0
  %5420 = vmatpush1.msra.mxu0 0.0
  %5421 = vmatprep.subr.mxu0 0.0
  %5422 = vmatpush1.msra.mxu0 0.0
  %5423 = vmatprep.subr.mxu0 0.0
  %5424 = vmatpush1.msra.mxu0 0.0
  %5425 = vmatprep.subr.mxu0 0.0
  %5426 = vmatpush1.msra.mxu0 0.0
  %5427 = vmatprep.subr.mxu0 0.0
  %5428 = vmatpush1.msra.mxu0 0.0
  %5429 = vmatprep.subr.mxu0 0.0
  %5430 = vmatpush1.msra.mxu0 0.0
  %5431 = vmatprep.subr.mxu0 0.0
  %5432 = vmatpush1.msra.mxu0 0.0
  %5433 = vmatprep.subr.mxu0 0.0
  %5434 = vmatpush1.msra.mxu0 0.0
  %5435 = vmatprep.subr.mxu0 0.0
  %5436 = vmatpush1.msra.mxu0 0.0
  %5437 = vmatprep.subr.mxu0 0.0
  %5438 = vmatpush1.msra.mxu0 0.0
  %5439 = vmatprep.subr.mxu0 0.0
  %5440 = vmatpush1.msra.mxu0 %v5404
  %5441 = vmatprep.subr.mxu0 0.0
  %5442 = vmatpush1.msra.mxu0 %v5403
  %5443 = vmatprep.subr.mxu0 0.0
  %5444 = vmatpush1.msra.mxu0 %v5402
  %5445 = vmatprep.subr.mxu0 0.0
  %5446 = vmatpush1.msra.mxu0 %v5401
  %5447 = vmatprep.subr.mxu0 0.0
  %5448 = vmatpush2.msra.mxu0 0.0
  %5449 = vmatprep.subr.mxu0 0.0
  %5450 = vmatpush2.msra.mxu0 0.0
  %5451 = vmatprep.subr.mxu0 0.0
  %5452 = vmatpush2.msra.mxu0 0.0
  %5453 = vmatprep.subr.mxu0 0.0
  %5454 = vmatpush2.msra.mxu0 0.0
  %5455 = vmatprep.subr.mxu0 0.0
  %5456 = vmatpush2.msra.mxu0 0.0
  %5457 = vmatprep.subr.mxu0 0.0
  %5458 = vmatpush2.msra.mxu0 0.0
  %5459 = vmatprep.subr.mxu0 0.0
  %5460 = vmatpush2.msra.mxu0 0.0
  %5461 = vmatprep.subr.mxu0 0.0
  %5462 = vmatpush2.msra.mxu0 0.0
  %5463 = vmatprep.subr.mxu0 0.0
  %5464 = vmatpush2.msra.mxu0 0.0
  %5465 = vmatprep.subr.mxu0 0.0
  %5466 = vmatpush2.msra.mxu0 0.0
  %5467 = vmatprep.subr.mxu0 0.0
  %5468 = vmatpush2.msra.mxu0 0.0
  %5469 = vmatprep.subr.mxu0 0.0
  %5470 = vmatpush2.msra.mxu0 0.0
  %5471 = vmatprep.subr.mxu0 0.0
  %5472 = vmatpush2.msra.mxu0 0.0
  %5473 = vmatprep.subr.mxu0 0.0
  %5474 = vmatpush2.msra.mxu0 0.0
  %5475 = vmatprep.subr.mxu0 0.0
  %5476 = vmatpush2.msra.mxu0 0.0
  %5477 = vmatprep.subr.mxu0 0.0
  %5478 = vmatpush2.msra.mxu0 0.0
  %5479 = vmatprep.mubr.f32.mxu0 0.0
  %5480 = vmatmul.mubr.f32.gmra.mxu0 %v5413
  %v5481 = vpop.f32.mrf.mxu0
  %v5482 = vadd.f32 %v5410, %v5481
  %v5483 = vpop.f32.mrf.mxu0
  %5484 = vdwg.mxu0
  %s5485 = scalar_lea.vmem %s24, 32
  %5486 = vst [vmem:[%s5485] sm:$0xff] %v5482
  %s5487 = scalar_lea.vmem %s0, 40
  %v5488 = vld [vmem:[%s5487] sm:$0xff]
  %v5489 = vld [vmem:[%s2] sm:$0xff]
  %v5490 = vld [vmem:[%s2 + $0x8] sm:$0xff]
  %v5491 = vld [vmem:[%s2 + $0x10] sm:$0xff]
  %v5492 = vld [vmem:[%s2 + $0x18] sm:$0xff]
  %v5493 = vld [vmem:[%s3] sm:$0xff]
  %v5494 = vld [vmem:[%s3 + $0x8] sm:$0xff]
  %v5495 = vld [vmem:[%s3 + $0x10] sm:$0xff]
  %v5496 = vld [vmem:[%s3 + $0x18] sm:$0xff]
  %v5497 = vld [vmem:[%s4] sm:$0xff]
  %v5498 = vld [vmem:[%s4 + $0x8] sm:$0xff]
  %v5499 = vld [vmem:[%s4 + $0x10] sm:$0xff]
  %v5500 = vld [vmem:[%s4 + $0x18] sm:$0xff]
  %v5501 = vld [vmem:[%s5] sm:$0xff]
  %v5502 = vld [vmem:[%s5 + $0x8] sm:$0xff]
  %v5503 = vld [vmem:[%s5 + $0x10] sm:$0xff]
  %v5504 = vld [vmem:[%s5 + $0x18] sm:$0xff]
  %v5505 = vld [vmem:[%s6] sm:$0xff]
  %v5506 = vld [vmem:[%s6 + $0x8] sm:$0xff]
  %v5507 = vld [vmem:[%s6 + $0x10] sm:$0xff]
  %v5508 = vld [vmem:[%s6 + $0x18] sm:$0xff]
  %v5509 = vld [vmem:[%s7] sm:$0xff]
  %v5510 = vld [vmem:[%s7 + $0x8] sm:$0xff]
  %v5511 = vld [vmem:[%s7 + $0x10] sm:$0xff]
  %v5512 = vld [vmem:[%s7 + $0x18] sm:$0xff]
  %v5513 = vld [vmem:[%s8] sm:$0x1]
  %v5514 = vld [vmem:[%s9] sm:$0x1]
  %v5515 = vld [vmem:[%s10] sm:$0x1]
  %v5516 = vld [vmem:[%s11] sm:$0x1]
  %5517 = vmatprep.subr.mxu0 0.0
  %5518 = vmatpush1.msra.mxu0 0.0
  %5519 = vmatprep.subr.mxu0 0.0
  %5520 = vmatpush1.msra.mxu0 0.0
  %5521 = vmatprep.subr.mxu0 0.0
  %5522 = vmatpush1.msra.mxu0 0.0
  %5523 = vmatprep.subr.mxu0 0.0
  %5524 = vmatpush1.msra.mxu0 0.0
  %5525 = vmatprep.subr.mxu0 0.0
  %5526 = vmatpush1.msra.mxu0 0.0
  %5527 = vmatprep.subr.mxu0 0.0
  %5528 = vmatpush1.msra.mxu0 0.0
  %5529 = vmatprep.subr.mxu0 0.0
  %5530 = vmatpush1.msra.mxu0 0.0
  %5531 = vmatprep.subr.mxu0 0.0
  %5532 = vmatpush1.msra.mxu0 0.0
  %5533 = vmatprep.subr.mxu0 0.0
  %5534 = vmatpush1.msra.mxu0 0.0
  %5535 = vmatprep.subr.mxu0 0.0
  %5536 = vmatpush1.msra.mxu0 0.0
  %5537 = vmatprep.subr.mxu0 0.0
  %5538 = vmatpush1.msra.mxu0 0.0
  %5539 = vmatprep.subr.mxu0 0.0
  %5540 = vmatpush1.msra.mxu0 0.0
  %5541 = vmatprep.subr.mxu0 0.0
  %5542 = vmatpush1.msra.mxu0 %v5504
  %5543 = vmatprep.subr.mxu0 0.0
  %5544 = vmatpush1.msra.mxu0 %v5503
  %5545 = vmatprep.subr.mxu0 0.0
  %5546 = vmatpush1.msra.mxu0 %v5502
  %5547 = vmatprep.subr.mxu0 0.0
  %5548 = vmatpush1.msra.mxu0 %v5501
  %5549 = vmatprep.subr.mxu0 0.0
  %5550 = vmatpush2.msra.mxu0 0.0
  %5551 = vmatprep.subr.mxu0 0.0
  %5552 = vmatpush2.msra.mxu0 0.0
  %5553 = vmatprep.subr.mxu0 0.0
  %5554 = vmatpush2.msra.mxu0 0.0
  %5555 = vmatprep.subr.mxu0 0.0
  %5556 = vmatpush2.msra.mxu0 0.0
  %5557 = vmatprep.subr.mxu0 0.0
  %5558 = vmatpush2.msra.mxu0 0.0
  %5559 = vmatprep.subr.mxu0 0.0
  %5560 = vmatpush2.msra.mxu0 0.0
  %5561 = vmatprep.subr.mxu0 0.0
  %5562 = vmatpush2.msra.mxu0 0.0
  %5563 = vmatprep.subr.mxu0 0.0
  %5564 = vmatpush2.msra.mxu0 0.0
  %5565 = vmatprep.subr.mxu0 0.0
  %5566 = vmatpush2.msra.mxu0 0.0
  %5567 = vmatprep.subr.mxu0 0.0
  %5568 = vmatpush2.msra.mxu0 0.0
  %5569 = vmatprep.subr.mxu0 0.0
  %5570 = vmatpush2.msra.mxu0 0.0
  %5571 = vmatprep.subr.mxu0 0.0
  %5572 = vmatpush2.msra.mxu0 0.0
  %5573 = vmatprep.subr.mxu0 0.0
  %5574 = vmatpush2.msra.mxu0 0.0
  %5575 = vmatprep.subr.mxu0 0.0
  %5576 = vmatpush2.msra.mxu0 0.0
  %5577 = vmatprep.subr.mxu0 0.0
  %5578 = vmatpush2.msra.mxu0 0.0
  %5579 = vmatprep.subr.mxu0 0.0
  %5580 = vmatpush2.msra.mxu0 0.0
  %5581 = vmatprep.mubr.f32.mxu0 0.0
  %5582 = vmatmul.mubr.f32.gmra.mxu0 %v5004
  %v5583 = vpop.f32.mrf.mxu0
  %v5584 = vadd.f32 0.0, %v5583
  %v5585 = vpop.f32.mrf.mxu0
  %5586 = vdwg.mxu0
  %v5588 = vsel %vm111, %v5488, 0
  %5590 = vmatprep.subr.mxu0 0.0
  %5591 = vmatpush1.msra.mxu0 0.0
  %5592 = vmatprep.subr.mxu0 0.0
  %5593 = vmatpush1.msra.mxu0 0.0
  %5594 = vmatprep.subr.mxu0 0.0
  %5595 = vmatpush1.msra.mxu0 0.0
  %5596 = vmatprep.subr.mxu0 0.0
  %5597 = vmatpush1.msra.mxu0 0.0
  %5598 = vmatprep.subr.mxu0 0.0
  %5599 = vmatpush1.msra.mxu0 0.0
  %5600 = vmatprep.subr.mxu0 0.0
  %5601 = vmatpush1.msra.mxu0 0.0
  %5602 = vmatprep.subr.mxu0 0.0
  %5603 = vmatpush1.msra.mxu0 0.0
  %5604 = vmatprep.subr.mxu0 0.0
  %5605 = vmatpush1.msra.mxu0 0.0
  %5606 = vmatprep.subr.mxu0 0.0
  %5607 = vmatpush1.msra.mxu0 0.0
  %5608 = vmatprep.subr.mxu0 0.0
  %5609 = vmatpush1.msra.mxu0 0.0
  %5610 = vmatprep.subr.mxu0 0.0
  %5611 = vmatpush1.msra.mxu0 0.0
  %5612 = vmatprep.subr.mxu0 0.0
  %5613 = vmatpush1.msra.mxu0 0.0
  %5614 = vmatprep.subr.mxu0 0.0
  %5615 = vmatpush1.msra.mxu0 %v5492
  %5616 = vmatprep.subr.mxu0 0.0
  %5617 = vmatpush1.msra.mxu0 %v5491
  %5618 = vmatprep.subr.mxu0 0.0
  %5619 = vmatpush1.msra.mxu0 %v5490
  %5620 = vmatprep.subr.mxu0 0.0
  %5621 = vmatpush1.msra.mxu0 %v5489
  %5622 = vmatprep.subr.mxu0 0.0
  %5623 = vmatpush2.msra.mxu0 0.0
  %5624 = vmatprep.subr.mxu0 0.0
  %5625 = vmatpush2.msra.mxu0 0.0
  %5626 = vmatprep.subr.mxu0 0.0
  %5627 = vmatpush2.msra.mxu0 0.0
  %5628 = vmatprep.subr.mxu0 0.0
  %5629 = vmatpush2.msra.mxu0 0.0
  %5630 = vmatprep.subr.mxu0 0.0
  %5631 = vmatpush2.msra.mxu0 0.0
  %5632 = vmatprep.subr.mxu0 0.0
  %5633 = vmatpush2.msra.mxu0 0.0
  %5634 = vmatprep.subr.mxu0 0.0
  %5635 = vmatpush2.msra.mxu0 0.0
  %5636 = vmatprep.subr.mxu0 0.0
  %5637 = vmatpush2.msra.mxu0 0.0
  %5638 = vmatprep.subr.mxu0 0.0
  %5639 = vmatpush2.msra.mxu0 0.0
  %5640 = vmatprep.subr.mxu0 0.0
  %5641 = vmatpush2.msra.mxu0 0.0
  %5642 = vmatprep.subr.mxu0 0.0
  %5643 = vmatpush2.msra.mxu0 0.0
  %5644 = vmatprep.subr.mxu0 0.0
  %5645 = vmatpush2.msra.mxu0 0.0
  %5646 = vmatprep.subr.mxu0 0.0
  %5647 = vmatpush2.msra.mxu0 0.0
  %5648 = vmatprep.subr.mxu0 0.0
  %5649 = vmatpush2.msra.mxu0 0.0
  %5650 = vmatprep.subr.mxu0 0.0
  %5651 = vmatpush2.msra.mxu0 0.0
  %5652 = vmatprep.subr.mxu0 0.0
  %5653 = vmatpush2.msra.mxu0 0.0
  %5654 = vmatprep.mubr.f32.mxu0 0.0
  %5655 = vmatmul.mubr.f32.gmra.mxu0 %v5588
  %v5656 = vpop.f32.mrf.mxu0
  %v5657 = vadd.f32 %v5584, %v5656
  %v5658 = vpop.f32.mrf.mxu0
  %5659 = vdwg.mxu0
  %v5661 = vlaneseq
  %v5662 = vshrl.u32 %v5661, 7
  %v5663 = vsub.s32 0, %v5662
  %v5664 = vrot.slane %v5513, %v5663
  %v5666 = vadd.f32 %v5657, %v5664
  %5667 = vmatprep.subr.mxu0 0.0
  %5668 = vmatpush1.msra.mxu0 0.0
  %5669 = vmatprep.subr.mxu0 0.0
  %5670 = vmatpush1.msra.mxu0 0.0
  %5671 = vmatprep.subr.mxu0 0.0
  %5672 = vmatpush1.msra.mxu0 0.0
  %5673 = vmatprep.subr.mxu0 0.0
  %5674 = vmatpush1.msra.mxu0 0.0
  %5675 = vmatprep.subr.mxu0 0.0
  %5676 = vmatpush1.msra.mxu0 0.0
  %5677 = vmatprep.subr.mxu0 0.0
  %5678 = vmatpush1.msra.mxu0 0.0
  %5679 = vmatprep.subr.mxu0 0.0
  %5680 = vmatpush1.msra.mxu0 0.0
  %5681 = vmatprep.subr.mxu0 0.0
  %5682 = vmatpush1.msra.mxu0 0.0
  %5683 = vmatprep.subr.mxu0 0.0
  %5684 = vmatpush1.msra.mxu0 0.0
  %5685 = vmatprep.subr.mxu0 0.0
  %5686 = vmatpush1.msra.mxu0 0.0
  %5687 = vmatprep.subr.mxu0 0.0
  %5688 = vmatpush1.msra.mxu0 0.0
  %5689 = vmatprep.subr.mxu0 0.0
  %5690 = vmatpush1.msra.mxu0 0.0
  %5691 = vmatprep.subr.mxu0 0.0
  %5692 = vmatpush1.msra.mxu0 %v5508
  %5693 = vmatprep.subr.mxu0 0.0
  %5694 = vmatpush1.msra.mxu0 %v5507
  %5695 = vmatprep.subr.mxu0 0.0
  %5696 = vmatpush1.msra.mxu0 %v5506
  %5697 = vmatprep.subr.mxu0 0.0
  %5698 = vmatpush1.msra.mxu0 %v5505
  %5699 = vmatprep.subr.mxu0 0.0
  %5700 = vmatpush2.msra.mxu0 0.0
  %5701 = vmatprep.subr.mxu0 0.0
  %5702 = vmatpush2.msra.mxu0 0.0
  %5703 = vmatprep.subr.mxu0 0.0
  %5704 = vmatpush2.msra.mxu0 0.0
  %5705 = vmatprep.subr.mxu0 0.0
  %5706 = vmatpush2.msra.mxu0 0.0
  %5707 = vmatprep.subr.mxu0 0.0
  %5708 = vmatpush2.msra.mxu0 0.0
  %5709 = vmatprep.subr.mxu0 0.0
  %5710 = vmatpush2.msra.mxu0 0.0
  %5711 = vmatprep.subr.mxu0 0.0
  %5712 = vmatpush2.msra.mxu0 0.0
  %5713 = vmatprep.subr.mxu0 0.0
  %5714 = vmatpush2.msra.mxu0 0.0
  %5715 = vmatprep.subr.mxu0 0.0
  %5716 = vmatpush2.msra.mxu0 0.0
  %5717 = vmatprep.subr.mxu0 0.0
  %5718 = vmatpush2.msra.mxu0 0.0
  %5719 = vmatprep.subr.mxu0 0.0
  %5720 = vmatpush2.msra.mxu0 0.0
  %5721 = vmatprep.subr.mxu0 0.0
  %5722 = vmatpush2.msra.mxu0 0.0
  %5723 = vmatprep.subr.mxu0 0.0
  %5724 = vmatpush2.msra.mxu0 0.0
  %5725 = vmatprep.subr.mxu0 0.0
  %5726 = vmatpush2.msra.mxu0 0.0
  %5727 = vmatprep.subr.mxu0 0.0
  %5728 = vmatpush2.msra.mxu0 0.0
  %5729 = vmatprep.subr.mxu0 0.0
  %5730 = vmatpush2.msra.mxu0 0.0
  %5731 = vmatprep.mubr.f32.mxu0 0.0
  %5732 = vmatmul.mubr.f32.gmra.mxu0 %v5004
  %v5733 = vpop.f32.mrf.mxu0
  %v5734 = vadd.f32 0.0, %v5733
  %v5735 = vpop.f32.mrf.mxu0
  %5736 = vdwg.mxu0
  %5737 = vmatprep.subr.mxu0 0.0
  %5738 = vmatpush1.msra.mxu0 0.0
  %5739 = vmatprep.subr.mxu0 0.0
  %5740 = vmatpush1.msra.mxu0 0.0
  %5741 = vmatprep.subr.mxu0 0.0
  %5742 = vmatpush1.msra.mxu0 0.0
  %5743 = vmatprep.subr.mxu0 0.0
  %5744 = vmatpush1.msra.mxu0 0.0
  %5745 = vmatprep.subr.mxu0 0.0
  %5746 = vmatpush1.msra.mxu0 0.0
  %5747 = vmatprep.subr.mxu0 0.0
  %5748 = vmatpush1.msra.mxu0 0.0
  %5749 = vmatprep.subr.mxu0 0.0
  %5750 = vmatpush1.msra.mxu0 0.0
  %5751 = vmatprep.subr.mxu0 0.0
  %5752 = vmatpush1.msra.mxu0 0.0
  %5753 = vmatprep.subr.mxu0 0.0
  %5754 = vmatpush1.msra.mxu0 0.0
  %5755 = vmatprep.subr.mxu0 0.0
  %5756 = vmatpush1.msra.mxu0 0.0
  %5757 = vmatprep.subr.mxu0 0.0
  %5758 = vmatpush1.msra.mxu0 0.0
  %5759 = vmatprep.subr.mxu0 0.0
  %5760 = vmatpush1.msra.mxu0 0.0
  %5761 = vmatprep.subr.mxu0 0.0
  %5762 = vmatpush1.msra.mxu0 %v5496
  %5763 = vmatprep.subr.mxu0 0.0
  %5764 = vmatpush1.msra.mxu0 %v5495
  %5765 = vmatprep.subr.mxu0 0.0
  %5766 = vmatpush1.msra.mxu0 %v5494
  %5767 = vmatprep.subr.mxu0 0.0
  %5768 = vmatpush1.msra.mxu0 %v5493
  %5769 = vmatprep.subr.mxu0 0.0
  %5770 = vmatpush2.msra.mxu0 0.0
  %5771 = vmatprep.subr.mxu0 0.0
  %5772 = vmatpush2.msra.mxu0 0.0
  %5773 = vmatprep.subr.mxu0 0.0
  %5774 = vmatpush2.msra.mxu0 0.0
  %5775 = vmatprep.subr.mxu0 0.0
  %5776 = vmatpush2.msra.mxu0 0.0
  %5777 = vmatprep.subr.mxu0 0.0
  %5778 = vmatpush2.msra.mxu0 0.0
  %5779 = vmatprep.subr.mxu0 0.0
  %5780 = vmatpush2.msra.mxu0 0.0
  %5781 = vmatprep.subr.mxu0 0.0
  %5782 = vmatpush2.msra.mxu0 0.0
  %5783 = vmatprep.subr.mxu0 0.0
  %5784 = vmatpush2.msra.mxu0 0.0
  %5785 = vmatprep.subr.mxu0 0.0
  %5786 = vmatpush2.msra.mxu0 0.0
  %5787 = vmatprep.subr.mxu0 0.0
  %5788 = vmatpush2.msra.mxu0 0.0
  %5789 = vmatprep.subr.mxu0 0.0
  %5790 = vmatpush2.msra.mxu0 0.0
  %5791 = vmatprep.subr.mxu0 0.0
  %5792 = vmatpush2.msra.mxu0 0.0
  %5793 = vmatprep.subr.mxu0 0.0
  %5794 = vmatpush2.msra.mxu0 0.0
  %5795 = vmatprep.subr.mxu0 0.0
  %5796 = vmatpush2.msra.mxu0 0.0
  %5797 = vmatprep.subr.mxu0 0.0
  %5798 = vmatpush2.msra.mxu0 0.0
  %5799 = vmatprep.subr.mxu0 0.0
  %5800 = vmatpush2.msra.mxu0 0.0
  %5801 = vmatprep.mubr.f32.mxu0 0.0
  %5802 = vmatmul.mubr.f32.gmra.mxu0 %v5588
  %v5803 = vpop.f32.mrf.mxu0
  %v5804 = vadd.f32 %v5734, %v5803
  %v5805 = vpop.f32.mrf.mxu0
  %5806 = vdwg.mxu0
  %v5808 = vlaneseq
  %v5809 = vshrl.u32 %v5808, 7
  %v5810 = vsub.s32 0, %v5809
  %v5811 = vrot.slane %v5514, %v5810
  %v5813 = vadd.f32 %v5804, %v5811
  %v5815 = vlaneseq
  %v5816 = vshrl.u32 %v5815, 7
  %v5817 = vsub.s32 0, %v5816
  %v5818 = vrot.slane %v5515, %v5817
  %5820 = vmatprep.subr.mxu0 0.0
  %5821 = vmatpush1.msra.mxu0 0.0
  %5822 = vmatprep.subr.mxu0 0.0
  %5823 = vmatpush1.msra.mxu0 0.0
  %5824 = vmatprep.subr.mxu0 0.0
  %5825 = vmatpush1.msra.mxu0 0.0
  %5826 = vmatprep.subr.mxu0 0.0
  %5827 = vmatpush1.msra.mxu0 0.0
  %5828 = vmatprep.subr.mxu0 0.0
  %5829 = vmatpush1.msra.mxu0 0.0
  %5830 = vmatprep.subr.mxu0 0.0
  %5831 = vmatpush1.msra.mxu0 0.0
  %5832 = vmatprep.subr.mxu0 0.0
  %5833 = vmatpush1.msra.mxu0 0.0
  %5834 = vmatprep.subr.mxu0 0.0
  %5835 = vmatpush1.msra.mxu0 0.0
  %5836 = vmatprep.subr.mxu0 0.0
  %5837 = vmatpush1.msra.mxu0 0.0
  %5838 = vmatprep.subr.mxu0 0.0
  %5839 = vmatpush1.msra.mxu0 0.0
  %5840 = vmatprep.subr.mxu0 0.0
  %5841 = vmatpush1.msra.mxu0 0.0
  %5842 = vmatprep.subr.mxu0 0.0
  %5843 = vmatpush1.msra.mxu0 0.0
  %5844 = vmatprep.subr.mxu0 0.0
  %5845 = vmatpush1.msra.mxu0 %v5500
  %5846 = vmatprep.subr.mxu0 0.0
  %5847 = vmatpush1.msra.mxu0 %v5499
  %5848 = vmatprep.subr.mxu0 0.0
  %5849 = vmatpush1.msra.mxu0 %v5498
  %5850 = vmatprep.subr.mxu0 0.0
  %5851 = vmatpush1.msra.mxu0 %v5497
  %5852 = vmatprep.subr.mxu0 0.0
  %5853 = vmatpush2.msra.mxu0 0.0
  %5854 = vmatprep.subr.mxu0 0.0
  %5855 = vmatpush2.msra.mxu0 0.0
  %5856 = vmatprep.subr.mxu0 0.0
  %5857 = vmatpush2.msra.mxu0 0.0
  %5858 = vmatprep.subr.mxu0 0.0
  %5859 = vmatpush2.msra.mxu0 0.0
  %5860 = vmatprep.subr.mxu0 0.0
  %5861 = vmatpush2.msra.mxu0 0.0
  %5862 = vmatprep.subr.mxu0 0.0
  %5863 = vmatpush2.msra.mxu0 0.0
  %5864 = vmatprep.subr.mxu0 0.0
  %5865 = vmatpush2.msra.mxu0 0.0
  %5866 = vmatprep.subr.mxu0 0.0
  %5867 = vmatpush2.msra.mxu0 0.0
  %5868 = vmatprep.subr.mxu0 0.0
  %5869 = vmatpush2.msra.mxu0 0.0
  %5870 = vmatprep.subr.mxu0 0.0
  %5871 = vmatpush2.msra.mxu0 0.0
  %5872 = vmatprep.subr.mxu0 0.0
  %5873 = vmatpush2.msra.mxu0 0.0
  %5874 = vmatprep.subr.mxu0 0.0
  %5875 = vmatpush2.msra.mxu0 0.0
  %5876 = vmatprep.subr.mxu0 0.0
  %5877 = vmatpush2.msra.mxu0 0.0
  %5878 = vmatprep.subr.mxu0 0.0
  %5879 = vmatpush2.msra.mxu0 0.0
  %5880 = vmatprep.subr.mxu0 0.0
  %5881 = vmatpush2.msra.mxu0 0.0
  %5882 = vmatprep.subr.mxu0 0.0
  %5883 = vmatpush2.msra.mxu0 0.0
  %5884 = vmatprep.mubr.f32.mxu0 0.0
  %5885 = vmatmul.mubr.f32.gmra.mxu0 %v5588
  %v5886 = vpop.f32.mrf.mxu0
  %v5887 = vadd.f32 %v5818, %v5886
  %v5888 = vpop.f32.mrf.mxu0
  %5889 = vdwg.mxu0
  %v5891 = vlaneseq
  %v5892 = vshrl.u32 %v5891, 7
  %v5893 = vsub.s32 0, %v5892
  %v5894 = vrot.slane %v5516, %v5893
  %5896 = vmatprep.subr.mxu0 0.0
  %5897 = vmatpush1.msra.mxu0 0.0
  %5898 = vmatprep.subr.mxu0 0.0
  %5899 = vmatpush1.msra.mxu0 0.0
  %5900 = vmatprep.subr.mxu0 0.0
  %5901 = vmatpush1.msra.mxu0 0.0
  %5902 = vmatprep.subr.mxu0 0.0
  %5903 = vmatpush1.msra.mxu0 0.0
  %5904 = vmatprep.subr.mxu0 0.0
  %5905 = vmatpush1.msra.mxu0 0.0
  %5906 = vmatprep.subr.mxu0 0.0
  %5907 = vmatpush1.msra.mxu0 0.0
  %5908 = vmatprep.subr.mxu0 0.0
  %5909 = vmatpush1.msra.mxu0 0.0
  %5910 = vmatprep.subr.mxu0 0.0
  %5911 = vmatpush1.msra.mxu0 0.0
  %5912 = vmatprep.subr.mxu0 0.0
  %5913 = vmatpush1.msra.mxu0 0.0
  %5914 = vmatprep.subr.mxu0 0.0
  %5915 = vmatpush1.msra.mxu0 0.0
  %5916 = vmatprep.subr.mxu0 0.0
  %5917 = vmatpush1.msra.mxu0 0.0
  %5918 = vmatprep.subr.mxu0 0.0
  %5919 = vmatpush1.msra.mxu0 0.0
  %5920 = vmatprep.subr.mxu0 0.0
  %5921 = vmatpush1.msra.mxu0 %v5512
  %5922 = vmatprep.subr.mxu0 0.0
  %5923 = vmatpush1.msra.mxu0 %v5511
  %5924 = vmatprep.subr.mxu0 0.0
  %5925 = vmatpush1.msra.mxu0 %v5510
  %5926 = vmatprep.subr.mxu0 0.0
  %5927 = vmatpush1.msra.mxu0 %v5509
  %5928 = vmatprep.subr.mxu0 0.0
  %5929 = vmatpush2.msra.mxu0 0.0
  %5930 = vmatprep.subr.mxu0 0.0
  %5931 = vmatpush2.msra.mxu0 0.0
  %5932 = vmatprep.subr.mxu0 0.0
  %5933 = vmatpush2.msra.mxu0 0.0
  %5934 = vmatprep.subr.mxu0 0.0
  %5935 = vmatpush2.msra.mxu0 0.0
  %5936 = vmatprep.subr.mxu0 0.0
  %5937 = vmatpush2.msra.mxu0 0.0
  %5938 = vmatprep.subr.mxu0 0.0
  %5939 = vmatpush2.msra.mxu0 0.0
  %5940 = vmatprep.subr.mxu0 0.0
  %5941 = vmatpush2.msra.mxu0 0.0
  %5942 = vmatprep.subr.mxu0 0.0
  %5943 = vmatpush2.msra.mxu0 0.0
  %5944 = vmatprep.subr.mxu0 0.0
  %5945 = vmatpush2.msra.mxu0 0.0
  %5946 = vmatprep.subr.mxu0 0.0
  %5947 = vmatpush2.msra.mxu0 0.0
  %5948 = vmatprep.subr.mxu0 0.0
  %5949 = vmatpush2.msra.mxu0 0.0
  %5950 = vmatprep.subr.mxu0 0.0
  %5951 = vmatpush2.msra.mxu0 0.0
  %5952 = vmatprep.subr.mxu0 0.0
  %5953 = vmatpush2.msra.mxu0 0.0
  %5954 = vmatprep.subr.mxu0 0.0
  %5955 = vmatpush2.msra.mxu0 0.0
  %5956 = vmatprep.subr.mxu0 0.0
  %5957 = vmatpush2.msra.mxu0 0.0
  %5958 = vmatprep.subr.mxu0 0.0
  %5959 = vmatpush2.msra.mxu0 0.0
  %5960 = vmatprep.mubr.f32.mxu0 0.0
  %5961 = vmatmul.mubr.f32.gmra.mxu0 %v5004
  %v5962 = vpop.f32.mrf.mxu0
  %v5963 = vadd.f32 %v5894, %v5962
  %v5964 = vpop.f32.mrf.mxu0
  %5965 = vdwg.mxu0
  %v5966 = vxor.u32 %v5666, 2147483648
  %v5967 = vmul.f32 %v5966, 1.442695
  %v5968 = vpow.pop %v5967
  %v5969 = vadd.f32 %v5968, 1.0
  %v5970 = vrcp.pop %v5969
  %v5971 = vmul.f32 1.0, %v5970
  %v5972 = vxor.u32 %v5813, 2147483648
  %v5973 = vmul.f32 %v5972, 1.442695
  %v5974 = vpow.pop %v5973
  %v5975 = vadd.f32 %v5974, 1.0
  %v5976 = vrcp.pop %v5975
  %v5977 = vmul.f32 1.0, %v5976
  %v5978 = vmul.f32 %v5971, %v5963
  %v5979 = vadd.f32 %v5887, %v5978
  %v5980 = vtanh.pop %v5979
  %v5981 = vsub.f32 1.0, %v5977
  %v5982 = vmul.f32 %v5981, %v5980
  %v5983 = vmul.f32 %v5977, %v4904
  %v5984 = vadd.f32 %v5982, %v5983
  %v5985 = vld [vmem:[%s12] sm:$0xff]
  %v5986 = vld [vmem:[%s12 + $0x8] sm:$0xff]
  %v5987 = vld [vmem:[%s12 + $0x10] sm:$0xff]
  %v5988 = vld [vmem:[%s12 + $0x18] sm:$0xff]
  %v5989 = vld [vmem:[%s13] sm:$0xff]
  %v5990 = vld [vmem:[%s13 + $0x8] sm:$0xff]
  %v5991 = vld [vmem:[%s13 + $0x10] sm:$0xff]
  %v5992 = vld [vmem:[%s13 + $0x18] sm:$0xff]
  %v5993 = vld [vmem:[%s14] sm:$0xff]
  %v5994 = vld [vmem:[%s14 + $0x8] sm:$0xff]
  %v5995 = vld [vmem:[%s14 + $0x10] sm:$0xff]
  %v5996 = vld [vmem:[%s14 + $0x18] sm:$0xff]
  %v5997 = vld [vmem:[%s15] sm:$0xff]
  %v5998 = vld [vmem:[%s15 + $0x8] sm:$0xff]
  %v5999 = vld [vmem:[%s15 + $0x10] sm:$0xff]
  %v6000 = vld [vmem:[%s15 + $0x18] sm:$0xff]
  %v6001 = vld [vmem:[%s16] sm:$0xff]
  %v6002 = vld [vmem:[%s16 + $0x8] sm:$0xff]
  %v6003 = vld [vmem:[%s16 + $0x10] sm:$0xff]
  %v6004 = vld [vmem:[%s16 + $0x18] sm:$0xff]
  %v6005 = vld [vmem:[%s17] sm:$0xff]
  %v6006 = vld [vmem:[%s17 + $0x8] sm:$0xff]
  %v6007 = vld [vmem:[%s17 + $0x10] sm:$0xff]
  %v6008 = vld [vmem:[%s17 + $0x18] sm:$0xff]
  %v6009 = vld [vmem:[%s18] sm:$0x1]
  %v6010 = vld [vmem:[%s19] sm:$0x1]
  %v6011 = vld [vmem:[%s20] sm:$0x1]
  %v6012 = vld [vmem:[%s21] sm:$0x1]
  %6013 = vmatprep.subr.mxu0 0.0
  %6014 = vmatpush1.msra.mxu0 0.0
  %6015 = vmatprep.subr.mxu0 0.0
  %6016 = vmatpush1.msra.mxu0 0.0
  %6017 = vmatprep.subr.mxu0 0.0
  %6018 = vmatpush1.msra.mxu0 0.0
  %6019 = vmatprep.subr.mxu0 0.0
  %6020 = vmatpush1.msra.mxu0 0.0
  %6021 = vmatprep.subr.mxu0 0.0
  %6022 = vmatpush1.msra.mxu0 0.0
  %6023 = vmatprep.subr.mxu0 0.0
  %6024 = vmatpush1.msra.mxu0 0.0
  %6025 = vmatprep.subr.mxu0 0.0
  %6026 = vmatpush1.msra.mxu0 0.0
  %6027 = vmatprep.subr.mxu0 0.0
  %6028 = vmatpush1.msra.mxu0 0.0
  %6029 = vmatprep.subr.mxu0 0.0
  %6030 = vmatpush1.msra.mxu0 0.0
  %6031 = vmatprep.subr.mxu0 0.0
  %6032 = vmatpush1.msra.mxu0 0.0
  %6033 = vmatprep.subr.mxu0 0.0
  %6034 = vmatpush1.msra.mxu0 0.0
  %6035 = vmatprep.subr.mxu0 0.0
  %6036 = vmatpush1.msra.mxu0 0.0
  %6037 = vmatprep.subr.mxu0 0.0
  %6038 = vmatpush1.msra.mxu0 %v6000
  %6039 = vmatprep.subr.mxu0 0.0
  %6040 = vmatpush1.msra.mxu0 %v5999
  %6041 = vmatprep.subr.mxu0 0.0
  %6042 = vmatpush1.msra.mxu0 %v5998
  %6043 = vmatprep.subr.mxu0 0.0
  %6044 = vmatpush1.msra.mxu0 %v5997
  %6045 = vmatprep.subr.mxu0 0.0
  %6046 = vmatpush2.msra.mxu0 0.0
  %6047 = vmatprep.subr.mxu0 0.0
  %6048 = vmatpush2.msra.mxu0 0.0
  %6049 = vmatprep.subr.mxu0 0.0
  %6050 = vmatpush2.msra.mxu0 0.0
  %6051 = vmatprep.subr.mxu0 0.0
  %6052 = vmatpush2.msra.mxu0 0.0
  %6053 = vmatprep.subr.mxu0 0.0
  %6054 = vmatpush2.msra.mxu0 0.0
  %6055 = vmatprep.subr.mxu0 0.0
  %6056 = vmatpush2.msra.mxu0 0.0
  %6057 = vmatprep.subr.mxu0 0.0
  %6058 = vmatpush2.msra.mxu0 0.0
  %6059 = vmatprep.subr.mxu0 0.0
  %6060 = vmatpush2.msra.mxu0 0.0
  %6061 = vmatprep.subr.mxu0 0.0
  %6062 = vmatpush2.msra.mxu0 0.0
  %6063 = vmatprep.subr.mxu0 0.0
  %6064 = vmatpush2.msra.mxu0 0.0
  %6065 = vmatprep.subr.mxu0 0.0
  %6066 = vmatpush2.msra.mxu0 0.0
  %6067 = vmatprep.subr.mxu0 0.0
  %6068 = vmatpush2.msra.mxu0 0.0
  %6069 = vmatprep.subr.mxu0 0.0
  %6070 = vmatpush2.msra.mxu0 0.0
  %6071 = vmatprep.subr.mxu0 0.0
  %6072 = vmatpush2.msra.mxu0 0.0
  %6073 = vmatprep.subr.mxu0 0.0
  %6074 = vmatpush2.msra.mxu0 0.0
  %6075 = vmatprep.subr.mxu0 0.0
  %6076 = vmatpush2.msra.mxu0 0.0
  %6077 = vmatprep.mubr.f32.mxu0 0.0
  %6078 = vmatmul.mubr.f32.gmra.mxu0 %v5413
  %v6079 = vpop.f32.mrf.mxu0
  %v6080 = vadd.f32 0.0, %v6079
  %v6081 = vpop.f32.mrf.mxu0
  %6082 = vdwg.mxu0
  %v6084 = vsel %vm111, %v5984, 0
  %6086 = vmatprep.subr.mxu0 0.0
  %6087 = vmatpush1.msra.mxu0 0.0
  %6088 = vmatprep.subr.mxu0 0.0
  %6089 = vmatpush1.msra.mxu0 0.0
  %6090 = vmatprep.subr.mxu0 0.0
  %6091 = vmatpush1.msra.mxu0 0.0
  %6092 = vmatprep.subr.mxu0 0.0
  %6093 = vmatpush1.msra.mxu0 0.0
  %6094 = vmatprep.subr.mxu0 0.0
  %6095 = vmatpush1.msra.mxu0 0.0
  %6096 = vmatprep.subr.mxu0 0.0
  %6097 = vmatpush1.msra.mxu0 0.0
  %6098 = vmatprep.subr.mxu0 0.0
  %6099 = vmatpush1.msra.mxu0 0.0
  %6100 = vmatprep.subr.mxu0 0.0
  %6101 = vmatpush1.msra.mxu0 0.0
  %6102 = vmatprep.subr.mxu0 0.0
  %6103 = vmatpush1.msra.mxu0 0.0
  %6104 = vmatprep.subr.mxu0 0.0
  %6105 = vmatpush1.msra.mxu0 0.0
  %6106 = vmatprep.subr.mxu0 0.0
  %6107 = vmatpush1.msra.mxu0 0.0
  %6108 = vmatprep.subr.mxu0 0.0
  %6109 = vmatpush1.msra.mxu0 0.0
  %6110 = vmatprep.subr.mxu0 0.0
  %6111 = vmatpush1.msra.mxu0 %v5988
  %6112 = vmatprep.subr.mxu0 0.0
  %6113 = vmatpush1.msra.mxu0 %v5987
  %6114 = vmatprep.subr.mxu0 0.0
  %6115 = vmatpush1.msra.mxu0 %v5986
  %6116 = vmatprep.subr.mxu0 0.0
  %6117 = vmatpush1.msra.mxu0 %v5985
  %6118 = vmatprep.subr.mxu0 0.0
  %6119 = vmatpush2.msra.mxu0 0.0
  %6120 = vmatprep.subr.mxu0 0.0
  %6121 = vmatpush2.msra.mxu0 0.0
  %6122 = vmatprep.subr.mxu0 0.0
  %6123 = vmatpush2.msra.mxu0 0.0
  %6124 = vmatprep.subr.mxu0 0.0
  %6125 = vmatpush2.msra.mxu0 0.0
  %6126 = vmatprep.subr.mxu0 0.0
  %6127 = vmatpush2.msra.mxu0 0.0
  %6128 = vmatprep.subr.mxu0 0.0
  %6129 = vmatpush2.msra.mxu0 0.0
  %6130 = vmatprep.subr.mxu0 0.0
  %6131 = vmatpush2.msra.mxu0 0.0
  %6132 = vmatprep.subr.mxu0 0.0
  %6133 = vmatpush2.msra.mxu0 0.0
  %6134 = vmatprep.subr.mxu0 0.0
  %6135 = vmatpush2.msra.mxu0 0.0
  %6136 = vmatprep.subr.mxu0 0.0
  %6137 = vmatpush2.msra.mxu0 0.0
  %6138 = vmatprep.subr.mxu0 0.0
  %6139 = vmatpush2.msra.mxu0 0.0
  %6140 = vmatprep.subr.mxu0 0.0
  %6141 = vmatpush2.msra.mxu0 0.0
  %6142 = vmatprep.subr.mxu0 0.0
  %6143 = vmatpush2.msra.mxu0 0.0
  %6144 = vmatprep.subr.mxu0 0.0
  %6145 = vmatpush2.msra.mxu0 0.0
  %6146 = vmatprep.subr.mxu0 0.0
  %6147 = vmatpush2.msra.mxu0 0.0
  %6148 = vmatprep.subr.mxu0 0.0
  %6149 = vmatpush2.msra.mxu0 0.0
  %6150 = vmatprep.mubr.f32.mxu0 0.0
  %6151 = vmatmul.mubr.f32.gmra.mxu0 %v6084
  %v6152 = vpop.f32.mrf.mxu0
  %v6153 = vadd.f32 %v6080, %v6152
  %v6154 = vpop.f32.mrf.mxu0
  %6155 = vdwg.mxu0
  %v6157 = vlaneseq
  %v6158 = vshrl.u32 %v6157, 7
  %v6159 = vsub.s32 0, %v6158
  %v6160 = vrot.slane %v6009, %v6159
  %v6162 = vadd.f32 %v6153, %v6160
  %6163 = vmatprep.subr.mxu0 0.0
  %6164 = vmatpush1.msra.mxu0 0.0
  %6165 = vmatprep.subr.mxu0 0.0
  %6166 = vmatpush1.msra.mxu0 0.0
  %6167 = vmatprep.subr.mxu0 0.0
  %6168 = vmatpush1.msra.mxu0 0.0
  %6169 = vmatprep.subr.mxu0 0.0
  %6170 = vmatpush1.msra.mxu0 0.0
  %6171 = vmatprep.subr.mxu0 0.0
  %6172 = vmatpush1.msra.mxu0 0.0
  %6173 = vmatprep.subr.mxu0 0.0
  %6174 = vmatpush1.msra.mxu0 0.0
  %6175 = vmatprep.subr.mxu0 0.0
  %6176 = vmatpush1.msra.mxu0 0.0
  %6177 = vmatprep.subr.mxu0 0.0
  %6178 = vmatpush1.msra.mxu0 0.0
  %6179 = vmatprep.subr.mxu0 0.0
  %6180 = vmatpush1.msra.mxu0 0.0
  %6181 = vmatprep.subr.mxu0 0.0
  %6182 = vmatpush1.msra.mxu0 0.0
  %6183 = vmatprep.subr.mxu0 0.0
  %6184 = vmatpush1.msra.mxu0 0.0
  %6185 = vmatprep.subr.mxu0 0.0
  %6186 = vmatpush1.msra.mxu0 0.0
  %6187 = vmatprep.subr.mxu0 0.0
  %6188 = vmatpush1.msra.mxu0 %v6004
  %6189 = vmatprep.subr.mxu0 0.0
  %6190 = vmatpush1.msra.mxu0 %v6003
  %6191 = vmatprep.subr.mxu0 0.0
  %6192 = vmatpush1.msra.mxu0 %v6002
  %6193 = vmatprep.subr.mxu0 0.0
  %6194 = vmatpush1.msra.mxu0 %v6001
  %6195 = vmatprep.subr.mxu0 0.0
  %6196 = vmatpush2.msra.mxu0 0.0
  %6197 = vmatprep.subr.mxu0 0.0
  %6198 = vmatpush2.msra.mxu0 0.0
  %6199 = vmatprep.subr.mxu0 0.0
  %6200 = vmatpush2.msra.mxu0 0.0
  %6201 = vmatprep.subr.mxu0 0.0
  %6202 = vmatpush2.msra.mxu0 0.0
  %6203 = vmatprep.subr.mxu0 0.0
  %6204 = vmatpush2.msra.mxu0 0.0
  %6205 = vmatprep.subr.mxu0 0.0
  %6206 = vmatpush2.msra.mxu0 0.0
  %6207 = vmatprep.subr.mxu0 0.0
  %6208 = vmatpush2.msra.mxu0 0.0
  %6209 = vmatprep.subr.mxu0 0.0
  %6210 = vmatpush2.msra.mxu0 0.0
  %6211 = vmatprep.subr.mxu0 0.0
  %6212 = vmatpush2.msra.mxu0 0.0
  %6213 = vmatprep.subr.mxu0 0.0
  %6214 = vmatpush2.msra.mxu0 0.0
  %6215 = vmatprep.subr.mxu0 0.0
  %6216 = vmatpush2.msra.mxu0 0.0
  %6217 = vmatprep.subr.mxu0 0.0
  %6218 = vmatpush2.msra.mxu0 0.0
  %6219 = vmatprep.subr.mxu0 0.0
  %6220 = vmatpush2.msra.mxu0 0.0
  %6221 = vmatprep.subr.mxu0 0.0
  %6222 = vmatpush2.msra.mxu0 0.0
  %6223 = vmatprep.subr.mxu0 0.0
  %6224 = vmatpush2.msra.mxu0 0.0
  %6225 = vmatprep.subr.mxu0 0.0
  %6226 = vmatpush2.msra.mxu0 0.0
  %6227 = vmatprep.mubr.f32.mxu0 0.0
  %6228 = vmatmul.mubr.f32.gmra.mxu0 %v5413
  %v6229 = vpop.f32.mrf.mxu0
  %v6230 = vadd.f32 0.0, %v6229
  %v6231 = vpop.f32.mrf.mxu0
  %6232 = vdwg.mxu0
  %6233 = vmatprep.subr.mxu0 0.0
  %6234 = vmatpush1.msra.mxu0 0.0
  %6235 = vmatprep.subr.mxu0 0.0
  %6236 = vmatpush1.msra.mxu0 0.0
  %6237 = vmatprep.subr.mxu0 0.0
  %6238 = vmatpush1.msra.mxu0 0.0
  %6239 = vmatprep.subr.mxu0 0.0
  %6240 = vmatpush1.msra.mxu0 0.0
  %6241 = vmatprep.subr.mxu0 0.0
  %6242 = vmatpush1.msra.mxu0 0.0
  %6243 = vmatprep.subr.mxu0 0.0
  %6244 = vmatpush1.msra.mxu0 0.0
  %6245 = vmatprep.subr.mxu0 0.0
  %6246 = vmatpush1.msra.mxu0 0.0
  %6247 = vmatprep.subr.mxu0 0.0
  %6248 = vmatpush1.msra.mxu0 0.0
  %6249 = vmatprep.subr.mxu0 0.0
  %6250 = vmatpush1.msra.mxu0 0.0
  %6251 = vmatprep.subr.mxu0 0.0
  %6252 = vmatpush1.msra.mxu0 0.0
  %6253 = vmatprep.subr.mxu0 0.0
  %6254 = vmatpush1.msra.mxu0 0.0
  %6255 = vmatprep.subr.mxu0 0.0
  %6256 = vmatpush1.msra.mxu0 0.0
  %6257 = vmatprep.subr.mxu0 0.0
  %6258 = vmatpush1.msra.mxu0 %v5992
  %6259 = vmatprep.subr.mxu0 0.0
  %6260 = vmatpush1.msra.mxu0 %v5991
  %6261 = vmatprep.subr.mxu0 0.0
  %6262 = vmatpush1.msra.mxu0 %v5990
  %6263 = vmatprep.subr.mxu0 0.0
  %6264 = vmatpush1.msra.mxu0 %v5989
  %6265 = vmatprep.subr.mxu0 0.0
  %6266 = vmatpush2.msra.mxu0 0.0
  %6267 = vmatprep.subr.mxu0 0.0
  %6268 = vmatpush2.msra.mxu0 0.0
  %6269 = vmatprep.subr.mxu0 0.0
  %6270 = vmatpush2.msra.mxu0 0.0
  %6271 = vmatprep.subr.mxu0 0.0
  %6272 = vmatpush2.msra.mxu0 0.0
  %6273 = vmatprep.subr.mxu0 0.0
  %6274 = vmatpush2.msra.mxu0 0.0
  %6275 = vmatprep.subr.mxu0 0.0
  %6276 = vmatpush2.msra.mxu0 0.0
  %6277 = vmatprep.subr.mxu0 0.0
  %6278 = vmatpush2.msra.mxu0 0.0
  %6279 = vmatprep.subr.mxu0 0.0
  %6280 = vmatpush2.msra.mxu0 0.0
  %6281 = vmatprep.subr.mxu0 0.0
  %6282 = vmatpush2.msra.mxu0 0.0
  %6283 = vmatprep.subr.mxu0 0.0
  %6284 = vmatpush2.msra.mxu0 0.0
  %6285 = vmatprep.subr.mxu0 0.0
  %6286 = vmatpush2.msra.mxu0 0.0
  %6287 = vmatprep.subr.mxu0 0.0
  %6288 = vmatpush2.msra.mxu0 0.0
  %6289 = vmatprep.subr.mxu0 0.0
  %6290 = vmatpush2.msra.mxu0 0.0
  %6291 = vmatprep.subr.mxu0 0.0
  %6292 = vmatpush2.msra.mxu0 0.0
  %6293 = vmatprep.subr.mxu0 0.0
  %6294 = vmatpush2.msra.mxu0 0.0
  %6295 = vmatprep.subr.mxu0 0.0
  %6296 = vmatpush2.msra.mxu0 0.0
  %6297 = vmatprep.mubr.f32.mxu0 0.0
  %6298 = vmatmul.mubr.f32.gmra.mxu0 %v6084
  %v6299 = vpop.f32.mrf.mxu0
  %v6300 = vadd.f32 %v6230, %v6299
  %v6301 = vpop.f32.mrf.mxu0
  %6302 = vdwg.mxu0
  %v6304 = vlaneseq
  %v6305 = vshrl.u32 %v6304, 7
  %v6306 = vsub.s32 0, %v6305
  %v6307 = vrot.slane %v6010, %v6306
  %v6309 = vadd.f32 %v6300, %v6307
  %v6311 = vlaneseq
  %v6312 = vshrl.u32 %v6311, 7
  %v6313 = vsub.s32 0, %v6312
  %v6314 = vrot.slane %v6011, %v6313
  %6316 = vmatprep.subr.mxu0 0.0
  %6317 = vmatpush1.msra.mxu0 0.0
  %6318 = vmatprep.subr.mxu0 0.0
  %6319 = vmatpush1.msra.mxu0 0.0
  %6320 = vmatprep.subr.mxu0 0.0
  %6321 = vmatpush1.msra.mxu0 0.0
  %6322 = vmatprep.subr.mxu0 0.0
  %6323 = vmatpush1.msra.mxu0 0.0
  %6324 = vmatprep.subr.mxu0 0.0
  %6325 = vmatpush1.msra.mxu0 0.0
  %6326 = vmatprep.subr.mxu0 0.0
  %6327 = vmatpush1.msra.mxu0 0.0
  %6328 = vmatprep.subr.mxu0 0.0
  %6329 = vmatpush1.msra.mxu0 0.0
  %6330 = vmatprep.subr.mxu0 0.0
  %6331 = vmatpush1.msra.mxu0 0.0
  %6332 = vmatprep.subr.mxu0 0.0
  %6333 = vmatpush1.msra.mxu0 0.0
  %6334 = vmatprep.subr.mxu0 0.0
  %6335 = vmatpush1.msra.mxu0 0.0
  %6336 = vmatprep.subr.mxu0 0.0
  %6337 = vmatpush1.msra.mxu0 0.0
  %6338 = vmatprep.subr.mxu0 0.0
  %6339 = vmatpush1.msra.mxu0 0.0
  %6340 = vmatprep.subr.mxu0 0.0
  %6341 = vmatpush1.msra.mxu0 %v5996
  %6342 = vmatprep.subr.mxu0 0.0
  %6343 = vmatpush1.msra.mxu0 %v5995
  %6344 = vmatprep.subr.mxu0 0.0
  %6345 = vmatpush1.msra.mxu0 %v5994
  %6346 = vmatprep.subr.mxu0 0.0
  %6347 = vmatpush1.msra.mxu0 %v5993
  %6348 = vmatprep.subr.mxu0 0.0
  %6349 = vmatpush2.msra.mxu0 0.0
  %6350 = vmatprep.subr.mxu0 0.0
  %6351 = vmatpush2.msra.mxu0 0.0
  %6352 = vmatprep.subr.mxu0 0.0
  %6353 = vmatpush2.msra.mxu0 0.0
  %6354 = vmatprep.subr.mxu0 0.0
  %6355 = vmatpush2.msra.mxu0 0.0
  %6356 = vmatprep.subr.mxu0 0.0
  %6357 = vmatpush2.msra.mxu0 0.0
  %6358 = vmatprep.subr.mxu0 0.0
  %6359 = vmatpush2.msra.mxu0 0.0
  %6360 = vmatprep.subr.mxu0 0.0
  %6361 = vmatpush2.msra.mxu0 0.0
  %6362 = vmatprep.subr.mxu0 0.0
  %6363 = vmatpush2.msra.mxu0 0.0
  %6364 = vmatprep.subr.mxu0 0.0
  %6365 = vmatpush2.msra.mxu0 0.0
  %6366 = vmatprep.subr.mxu0 0.0
  %6367 = vmatpush2.msra.mxu0 0.0
  %6368 = vmatprep.subr.mxu0 0.0
  %6369 = vmatpush2.msra.mxu0 0.0
  %6370 = vmatprep.subr.mxu0 0.0
  %6371 = vmatpush2.msra.mxu0 0.0
  %6372 = vmatprep.subr.mxu0 0.0
  %6373 = vmatpush2.msra.mxu0 0.0
  %6374 = vmatprep.subr.mxu0 0.0
  %6375 = vmatpush2.msra.mxu0 0.0
  %6376 = vmatprep.subr.mxu0 0.0
  %6377 = vmatpush2.msra.mxu0 0.0
  %6378 = vmatprep.subr.mxu0 0.0
  %6379 = vmatpush2.msra.mxu0 0.0
  %6380 = vmatprep.mubr.f32.mxu0 0.0
  %6381 = vmatmul.mubr.f32.gmra.mxu0 %v6084
  %v6382 = vpop.f32.mrf.mxu0
  %v6383 = vadd.f32 %v6314, %v6382
  %v6384 = vpop.f32.mrf.mxu0
  %6385 = vdwg.mxu0
  %v6387 = vlaneseq
  %v6388 = vshrl.u32 %v6387, 7
  %v6389 = vsub.s32 0, %v6388
  %v6390 = vrot.slane %v6012, %v6389
  %6392 = vmatprep.subr.mxu0 0.0
  %6393 = vmatpush1.msra.mxu0 0.0
  %6394 = vmatprep.subr.mxu0 0.0
  %6395 = vmatpush1.msra.mxu0 0.0
  %6396 = vmatprep.subr.mxu0 0.0
  %6397 = vmatpush1.msra.mxu0 0.0
  %6398 = vmatprep.subr.mxu0 0.0
  %6399 = vmatpush1.msra.mxu0 0.0
  %6400 = vmatprep.subr.mxu0 0.0
  %6401 = vmatpush1.msra.mxu0 0.0
  %6402 = vmatprep.subr.mxu0 0.0
  %6403 = vmatpush1.msra.mxu0 0.0
  %6404 = vmatprep.subr.mxu0 0.0
  %6405 = vmatpush1.msra.mxu0 0.0
  %6406 = vmatprep.subr.mxu0 0.0
  %6407 = vmatpush1.msra.mxu0 0.0
  %6408 = vmatprep.subr.mxu0 0.0
  %6409 = vmatpush1.msra.mxu0 0.0
  %6410 = vmatprep.subr.mxu0 0.0
  %6411 = vmatpush1.msra.mxu0 0.0
  %6412 = vmatprep.subr.mxu0 0.0
  %6413 = vmatpush1.msra.mxu0 0.0
  %6414 = vmatprep.subr.mxu0 0.0
  %6415 = vmatpush1.msra.mxu0 0.0
  %6416 = vmatprep.subr.mxu0 0.0
  %6417 = vmatpush1.msra.mxu0 %v6008
  %6418 = vmatprep.subr.mxu0 0.0
  %6419 = vmatpush1.msra.mxu0 %v6007
  %6420 = vmatprep.subr.mxu0 0.0
  %6421 = vmatpush1.msra.mxu0 %v6006
  %6422 = vmatprep.subr.mxu0 0.0
  %6423 = vmatpush1.msra.mxu0 %v6005
  %6424 = vmatprep.subr.mxu0 0.0
  %6425 = vmatpush2.msra.mxu0 0.0
  %6426 = vmatprep.subr.mxu0 0.0
  %6427 = vmatpush2.msra.mxu0 0.0
  %6428 = vmatprep.subr.mxu0 0.0
  %6429 = vmatpush2.msra.mxu0 0.0
  %6430 = vmatprep.subr.mxu0 0.0
  %6431 = vmatpush2.msra.mxu0 0.0
  %6432 = vmatprep.subr.mxu0 0.0
  %6433 = vmatpush2.msra.mxu0 0.0
  %6434 = vmatprep.subr.mxu0 0.0
  %6435 = vmatpush2.msra.mxu0 0.0
  %6436 = vmatprep.subr.mxu0 0.0
  %6437 = vmatpush2.msra.mxu0 0.0
  %6438 = vmatprep.subr.mxu0 0.0
  %6439 = vmatpush2.msra.mxu0 0.0
  %6440 = vmatprep.subr.mxu0 0.0
  %6441 = vmatpush2.msra.mxu0 0.0
  %6442 = vmatprep.subr.mxu0 0.0
  %6443 = vmatpush2.msra.mxu0 0.0
  %6444 = vmatprep.subr.mxu0 0.0
  %6445 = vmatpush2.msra.mxu0 0.0
  %6446 = vmatprep.subr.mxu0 0.0
  %6447 = vmatpush2.msra.mxu0 0.0
  %6448 = vmatprep.subr.mxu0 0.0
  %6449 = vmatpush2.msra.mxu0 0.0
  %6450 = vmatprep.subr.mxu0 0.0
  %6451 = vmatpush2.msra.mxu0 0.0
  %6452 = vmatprep.subr.mxu0 0.0
  %6453 = vmatpush2.msra.mxu0 0.0
  %6454 = vmatprep.subr.mxu0 0.0
  %6455 = vmatpush2.msra.mxu0 0.0
  %6456 = vmatprep.mubr.f32.mxu0 0.0
  %6457 = vmatmul.mubr.f32.gmra.mxu0 %v5413
  %v6458 = vpop.f32.mrf.mxu0
  %v6459 = vadd.f32 %v6390, %v6458
  %v6460 = vpop.f32.mrf.mxu0
  %6461 = vdwg.mxu0
  %v6462 = vxor.u32 %v6162, 2147483648
  %v6463 = vmul.f32 %v6462, 1.442695
  %v6464 = vpow.pop %v6463
  %v6465 = vadd.f32 %v6464, 1.0
  %v6466 = vrcp.pop %v6465
  %v6467 = vmul.f32 1.0, %v6466
  %v6468 = vxor.u32 %v6309, 2147483648
  %v6469 = vmul.f32 %v6468, 1.442695
  %v6470 = vpow.pop %v6469
  %v6471 = vadd.f32 %v6470, 1.0
  %v6472 = vrcp.pop %v6471
  %v6473 = vmul.f32 1.0, %v6472
  %v6474 = vmul.f32 %v6467, %v6459
  %v6475 = vadd.f32 %v6383, %v6474
  %v6476 = vtanh.pop %v6475
  %v6477 = vsub.f32 1.0, %v6473
  %v6478 = vmul.f32 %v6477, %v6476
  %v6479 = vmul.f32 %v6473, %v5400
  %v6480 = vadd.f32 %v6478, %v6479
  %v6481 = vld [vmem:[%s22] sm:$0xff]
  %v6482 = vld [vmem:[%s22 + $0x8] sm:$0xff]
  %v6483 = vld [vmem:[%s22 + $0x10] sm:$0xff]
  %v6484 = vld [vmem:[%s22 + $0x18] sm:$0xff]
  %v6485 = vld [vmem:[%s23] sm:$0x1]
  %v6487 = vlaneseq
  %v6488 = vshrl.u32 %v6487, 7
  %v6489 = vsub.s32 0, %v6488
  %v6490 = vrot.slane %v6485, %v6489
  %v6493 = vsel %vm111, %v6480, 0
  %6495 = vmatprep.subr.mxu0 0.0
  %6496 = vmatpush1.msra.mxu0 0.0
  %6497 = vmatprep.subr.mxu0 0.0
  %6498 = vmatpush1.msra.mxu0 0.0
  %6499 = vmatprep.subr.mxu0 0.0
  %6500 = vmatpush1.msra.mxu0 0.0
  %6501 = vmatprep.subr.mxu0 0.0
  %6502 = vmatpush1.msra.mxu0 0.0
  %6503 = vmatprep.subr.mxu0 0.0
  %6504 = vmatpush1.msra.mxu0 0.0
  %6505 = vmatprep.subr.mxu0 0.0
  %6506 = vmatpush1.msra.mxu0 0.0
  %6507 = vmatprep.subr.mxu0 0.0
  %6508 = vmatpush1.msra.mxu0 0.0
  %6509 = vmatprep.subr.mxu0 0.0
  %6510 = vmatpush1.msra.mxu0 0.0
  %6511 = vmatprep.subr.mxu0 0.0
  %6512 = vmatpush1.msra.mxu0 0.0
  %6513 = vmatprep.subr.mxu0 0.0
  %6514 = vmatpush1.msra.mxu0 0.0
  %6515 = vmatprep.subr.mxu0 0.0
  %6516 = vmatpush1.msra.mxu0 0.0
  %6517 = vmatprep.subr.mxu0 0.0
  %6518 = vmatpush1.msra.mxu0 0.0
  %6519 = vmatprep.subr.mxu0 0.0
  %6520 = vmatpush1.msra.mxu0 %v6484
  %6521 = vmatprep.subr.mxu0 0.0
  %6522 = vmatpush1.msra.mxu0 %v6483
  %6523 = vmatprep.subr.mxu0 0.0
  %6524 = vmatpush1.msra.mxu0 %v6482
  %6525 = vmatprep.subr.mxu0 0.0
  %6526 = vmatpush1.msra.mxu0 %v6481
  %6527 = vmatprep.subr.mxu0 0.0
  %6528 = vmatpush2.msra.mxu0 0.0
  %6529 = vmatprep.subr.mxu0 0.0
  %6530 = vmatpush2.msra.mxu0 0.0
  %6531 = vmatprep.subr.mxu0 0.0
  %6532 = vmatpush2.msra.mxu0 0.0
  %6533 = vmatprep.subr.mxu0 0.0
  %6534 = vmatpush2.msra.mxu0 0.0
  %6535 = vmatprep.subr.mxu0 0.0
  %6536 = vmatpush2.msra.mxu0 0.0
  %6537 = vmatprep.subr.mxu0 0.0
  %6538 = vmatpush2.msra.mxu0 0.0
  %6539 = vmatprep.subr.mxu0 0.0
  %6540 = vmatpush2.msra.mxu0 0.0
  %6541 = vmatprep.subr.mxu0 0.0
  %6542 = vmatpush2.msra.mxu0 0.0
  %6543 = vmatprep.subr.mxu0 0.0
  %6544 = vmatpush2.msra.mxu0 0.0
  %6545 = vmatprep.subr.mxu0 0.0
  %6546 = vmatpush2.msra.mxu0 0.0
  %6547 = vmatprep.subr.mxu0 0.0
  %6548 = vmatpush2.msra.mxu0 0.0
  %6549 = vmatprep.subr.mxu0 0.0
  %6550 = vmatpush2.msra.mxu0 0.0
  %6551 = vmatprep.subr.mxu0 0.0
  %6552 = vmatpush2.msra.mxu0 0.0
  %6553 = vmatprep.subr.mxu0 0.0
  %6554 = vmatpush2.msra.mxu0 0.0
  %6555 = vmatprep.subr.mxu0 0.0
  %6556 = vmatpush2.msra.mxu0 0.0
  %6557 = vmatprep.subr.mxu0 0.0
  %6558 = vmatpush2.msra.mxu0 0.0
  %6559 = vmatprep.mubr.f32.mxu0 0.0
  %6560 = vmatmul.mubr.f32.gmra.mxu0 %v6493
  %v6561 = vpop.f32.mrf.mxu0
  %v6562 = vadd.f32 %v6490, %v6561
  %v6563 = vpop.f32.mrf.mxu0
  %6564 = vdwg.mxu0
  %s6565 = scalar_lea.vmem %s24, 40
  %6566 = vst [vmem:[%s6565] sm:$0xff] %v6562
  %s6567 = scalar_lea.vmem %s0, 48
  %v6568 = vld [vmem:[%s6567] sm:$0xff]
  %v6569 = vld [vmem:[%s2] sm:$0xff]
  %v6570 = vld [vmem:[%s2 + $0x8] sm:$0xff]
  %v6571 = vld [vmem:[%s2 + $0x10] sm:$0xff]
  %v6572 = vld [vmem:[%s2 + $0x18] sm:$0xff]
  %v6573 = vld [vmem:[%s3] sm:$0xff]
  %v6574 = vld [vmem:[%s3 + $0x8] sm:$0xff]
  %v6575 = vld [vmem:[%s3 + $0x10] sm:$0xff]
  %v6576 = vld [vmem:[%s3 + $0x18] sm:$0xff]
  %v6577 = vld [vmem:[%s4] sm:$0xff]
  %v6578 = vld [vmem:[%s4 + $0x8] sm:$0xff]
  %v6579 = vld [vmem:[%s4 + $0x10] sm:$0xff]
  %v6580 = vld [vmem:[%s4 + $0x18] sm:$0xff]
  %v6581 = vld [vmem:[%s5] sm:$0xff]
  %v6582 = vld [vmem:[%s5 + $0x8] sm:$0xff]
  %v6583 = vld [vmem:[%s5 + $0x10] sm:$0xff]
  %v6584 = vld [vmem:[%s5 + $0x18] sm:$0xff]
  %v6585 = vld [vmem:[%s6] sm:$0xff]
  %v6586 = vld [vmem:[%s6 + $0x8] sm:$0xff]
  %v6587 = vld [vmem:[%s6 + $0x10] sm:$0xff]
  %v6588 = vld [vmem:[%s6 + $0x18] sm:$0xff]
  %v6589 = vld [vmem:[%s7] sm:$0xff]
  %v6590 = vld [vmem:[%s7 + $0x8] sm:$0xff]
  %v6591 = vld [vmem:[%s7 + $0x10] sm:$0xff]
  %v6592 = vld [vmem:[%s7 + $0x18] sm:$0xff]
  %v6593 = vld [vmem:[%s8] sm:$0x1]
  %v6594 = vld [vmem:[%s9] sm:$0x1]
  %v6595 = vld [vmem:[%s10] sm:$0x1]
  %v6596 = vld [vmem:[%s11] sm:$0x1]
  %6597 = vmatprep.subr.mxu0 0.0
  %6598 = vmatpush1.msra.mxu0 0.0
  %6599 = vmatprep.subr.mxu0 0.0
  %6600 = vmatpush1.msra.mxu0 0.0
  %6601 = vmatprep.subr.mxu0 0.0
  %6602 = vmatpush1.msra.mxu0 0.0
  %6603 = vmatprep.subr.mxu0 0.0
  %6604 = vmatpush1.msra.mxu0 0.0
  %6605 = vmatprep.subr.mxu0 0.0
  %6606 = vmatpush1.msra.mxu0 0.0
  %6607 = vmatprep.subr.mxu0 0.0
  %6608 = vmatpush1.msra.mxu0 0.0
  %6609 = vmatprep.subr.mxu0 0.0
  %6610 = vmatpush1.msra.mxu0 0.0
  %6611 = vmatprep.subr.mxu0 0.0
  %6612 = vmatpush1.msra.mxu0 0.0
  %6613 = vmatprep.subr.mxu0 0.0
  %6614 = vmatpush1.msra.mxu0 0.0
  %6615 = vmatprep.subr.mxu0 0.0
  %6616 = vmatpush1.msra.mxu0 0.0
  %6617 = vmatprep.subr.mxu0 0.0
  %6618 = vmatpush1.msra.mxu0 0.0
  %6619 = vmatprep.subr.mxu0 0.0
  %6620 = vmatpush1.msra.mxu0 0.0
  %6621 = vmatprep.subr.mxu0 0.0
  %6622 = vmatpush1.msra.mxu0 %v6584
  %6623 = vmatprep.subr.mxu0 0.0
  %6624 = vmatpush1.msra.mxu0 %v6583
  %6625 = vmatprep.subr.mxu0 0.0
  %6626 = vmatpush1.msra.mxu0 %v6582
  %6627 = vmatprep.subr.mxu0 0.0
  %6628 = vmatpush1.msra.mxu0 %v6581
  %6629 = vmatprep.subr.mxu0 0.0
  %6630 = vmatpush2.msra.mxu0 0.0
  %6631 = vmatprep.subr.mxu0 0.0
  %6632 = vmatpush2.msra.mxu0 0.0
  %6633 = vmatprep.subr.mxu0 0.0
  %6634 = vmatpush2.msra.mxu0 0.0
  %6635 = vmatprep.subr.mxu0 0.0
  %6636 = vmatpush2.msra.mxu0 0.0
  %6637 = vmatprep.subr.mxu0 0.0
  %6638 = vmatpush2.msra.mxu0 0.0
  %6639 = vmatprep.subr.mxu0 0.0
  %6640 = vmatpush2.msra.mxu0 0.0
  %6641 = vmatprep.subr.mxu0 0.0
  %6642 = vmatpush2.msra.mxu0 0.0
  %6643 = vmatprep.subr.mxu0 0.0
  %6644 = vmatpush2.msra.mxu0 0.0
  %6645 = vmatprep.subr.mxu0 0.0
  %6646 = vmatpush2.msra.mxu0 0.0
  %6647 = vmatprep.subr.mxu0 0.0
  %6648 = vmatpush2.msra.mxu0 0.0
  %6649 = vmatprep.subr.mxu0 0.0
  %6650 = vmatpush2.msra.mxu0 0.0
  %6651 = vmatprep.subr.mxu0 0.0
  %6652 = vmatpush2.msra.mxu0 0.0
  %6653 = vmatprep.subr.mxu0 0.0
  %6654 = vmatpush2.msra.mxu0 0.0
  %6655 = vmatprep.subr.mxu0 0.0
  %6656 = vmatpush2.msra.mxu0 0.0
  %6657 = vmatprep.subr.mxu0 0.0
  %6658 = vmatpush2.msra.mxu0 0.0
  %6659 = vmatprep.subr.mxu0 0.0
  %6660 = vmatpush2.msra.mxu0 0.0
  %6661 = vmatprep.mubr.f32.mxu0 0.0
  %6662 = vmatmul.mubr.f32.gmra.mxu0 %v6084
  %v6663 = vpop.f32.mrf.mxu0
  %v6664 = vadd.f32 0.0, %v6663
  %v6665 = vpop.f32.mrf.mxu0
  %6666 = vdwg.mxu0
  %v6668 = vsel %vm111, %v6568, 0
  %6670 = vmatprep.subr.mxu0 0.0
  %6671 = vmatpush1.msra.mxu0 0.0
  %6672 = vmatprep.subr.mxu0 0.0
  %6673 = vmatpush1.msra.mxu0 0.0
  %6674 = vmatprep.subr.mxu0 0.0
  %6675 = vmatpush1.msra.mxu0 0.0
  %6676 = vmatprep.subr.mxu0 0.0
  %6677 = vmatpush1.msra.mxu0 0.0
  %6678 = vmatprep.subr.mxu0 0.0
  %6679 = vmatpush1.msra.mxu0 0.0
  %6680 = vmatprep.subr.mxu0 0.0
  %6681 = vmatpush1.msra.mxu0 0.0
  %6682 = vmatprep.subr.mxu0 0.0
  %6683 = vmatpush1.msra.mxu0 0.0
  %6684 = vmatprep.subr.mxu0 0.0
  %6685 = vmatpush1.msra.mxu0 0.0
  %6686 = vmatprep.subr.mxu0 0.0
  %6687 = vmatpush1.msra.mxu0 0.0
  %6688 = vmatprep.subr.mxu0 0.0
  %6689 = vmatpush1.msra.mxu0 0.0
  %6690 = vmatprep.subr.mxu0 0.0
  %6691 = vmatpush1.msra.mxu0 0.0
  %6692 = vmatprep.subr.mxu0 0.0
  %6693 = vmatpush1.msra.mxu0 0.0
  %6694 = vmatprep.subr.mxu0 0.0
  %6695 = vmatpush1.msra.mxu0 %v6572
  %6696 = vmatprep.subr.mxu0 0.0
  %6697 = vmatpush1.msra.mxu0 %v6571
  %6698 = vmatprep.subr.mxu0 0.0
  %6699 = vmatpush1.msra.mxu0 %v6570
  %6700 = vmatprep.subr.mxu0 0.0
  %6701 = vmatpush1.msra.mxu0 %v6569
  %6702 = vmatprep.subr.mxu0 0.0
  %6703 = vmatpush2.msra.mxu0 0.0
  %6704 = vmatprep.subr.mxu0 0.0
  %6705 = vmatpush2.msra.mxu0 0.0
  %6706 = vmatprep.subr.mxu0 0.0
  %6707 = vmatpush2.msra.mxu0 0.0
  %6708 = vmatprep.subr.mxu0 0.0
  %6709 = vmatpush2.msra.mxu0 0.0
  %6710 = vmatprep.subr.mxu0 0.0
  %6711 = vmatpush2.msra.mxu0 0.0
  %6712 = vmatprep.subr.mxu0 0.0
  %6713 = vmatpush2.msra.mxu0 0.0
  %6714 = vmatprep.subr.mxu0 0.0
  %6715 = vmatpush2.msra.mxu0 0.0
  %6716 = vmatprep.subr.mxu0 0.0
  %6717 = vmatpush2.msra.mxu0 0.0
  %6718 = vmatprep.subr.mxu0 0.0
  %6719 = vmatpush2.msra.mxu0 0.0
  %6720 = vmatprep.subr.mxu0 0.0
  %6721 = vmatpush2.msra.mxu0 0.0
  %6722 = vmatprep.subr.mxu0 0.0
  %6723 = vmatpush2.msra.mxu0 0.0
  %6724 = vmatprep.subr.mxu0 0.0
  %6725 = vmatpush2.msra.mxu0 0.0
  %6726 = vmatprep.subr.mxu0 0.0
  %6727 = vmatpush2.msra.mxu0 0.0
  %6728 = vmatprep.subr.mxu0 0.0
  %6729 = vmatpush2.msra.mxu0 0.0
  %6730 = vmatprep.subr.mxu0 0.0
  %6731 = vmatpush2.msra.mxu0 0.0
  %6732 = vmatprep.subr.mxu0 0.0
  %6733 = vmatpush2.msra.mxu0 0.0
  %6734 = vmatprep.mubr.f32.mxu0 0.0
  %6735 = vmatmul.mubr.f32.gmra.mxu0 %v6668
  %v6736 = vpop.f32.mrf.mxu0
  %v6737 = vadd.f32 %v6664, %v6736
  %v6738 = vpop.f32.mrf.mxu0
  %6739 = vdwg.mxu0
  %v6741 = vlaneseq
  %v6742 = vshrl.u32 %v6741, 7
  %v6743 = vsub.s32 0, %v6742
  %v6744 = vrot.slane %v6593, %v6743
  %v6746 = vadd.f32 %v6737, %v6744
  %6747 = vmatprep.subr.mxu0 0.0
  %6748 = vmatpush1.msra.mxu0 0.0
  %6749 = vmatprep.subr.mxu0 0.0
  %6750 = vmatpush1.msra.mxu0 0.0
  %6751 = vmatprep.subr.mxu0 0.0
  %6752 = vmatpush1.msra.mxu0 0.0
  %6753 = vmatprep.subr.mxu0 0.0
  %6754 = vmatpush1.msra.mxu0 0.0
  %6755 = vmatprep.subr.mxu0 0.0
  %6756 = vmatpush1.msra.mxu0 0.0
  %6757 = vmatprep.subr.mxu0 0.0
  %6758 = vmatpush1.msra.mxu0 0.0
  %6759 = vmatprep.subr.mxu0 0.0
  %6760 = vmatpush1.msra.mxu0 0.0
  %6761 = vmatprep.subr.mxu0 0.0
  %6762 = vmatpush1.msra.mxu0 0.0
  %6763 = vmatprep.subr.mxu0 0.0
  %6764 = vmatpush1.msra.mxu0 0.0
  %6765 = vmatprep.subr.mxu0 0.0
  %6766 = vmatpush1.msra.mxu0 0.0
  %6767 = vmatprep.subr.mxu0 0.0
  %6768 = vmatpush1.msra.mxu0 0.0
  %6769 = vmatprep.subr.mxu0 0.0
  %6770 = vmatpush1.msra.mxu0 0.0
  %6771 = vmatprep.subr.mxu0 0.0
  %6772 = vmatpush1.msra.mxu0 %v6588
  %6773 = vmatprep.subr.mxu0 0.0
  %6774 = vmatpush1.msra.mxu0 %v6587
  %6775 = vmatprep.subr.mxu0 0.0
  %6776 = vmatpush1.msra.mxu0 %v6586
  %6777 = vmatprep.subr.mxu0 0.0
  %6778 = vmatpush1.msra.mxu0 %v6585
  %6779 = vmatprep.subr.mxu0 0.0
  %6780 = vmatpush2.msra.mxu0 0.0
  %6781 = vmatprep.subr.mxu0 0.0
  %6782 = vmatpush2.msra.mxu0 0.0
  %6783 = vmatprep.subr.mxu0 0.0
  %6784 = vmatpush2.msra.mxu0 0.0
  %6785 = vmatprep.subr.mxu0 0.0
  %6786 = vmatpush2.msra.mxu0 0.0
  %6787 = vmatprep.subr.mxu0 0.0
  %6788 = vmatpush2.msra.mxu0 0.0
  %6789 = vmatprep.subr.mxu0 0.0
  %6790 = vmatpush2.msra.mxu0 0.0
  %6791 = vmatprep.subr.mxu0 0.0
  %6792 = vmatpush2.msra.mxu0 0.0
  %6793 = vmatprep.subr.mxu0 0.0
  %6794 = vmatpush2.msra.mxu0 0.0
  %6795 = vmatprep.subr.mxu0 0.0
  %6796 = vmatpush2.msra.mxu0 0.0
  %6797 = vmatprep.subr.mxu0 0.0
  %6798 = vmatpush2.msra.mxu0 0.0
  %6799 = vmatprep.subr.mxu0 0.0
  %6800 = vmatpush2.msra.mxu0 0.0
  %6801 = vmatprep.subr.mxu0 0.0
  %6802 = vmatpush2.msra.mxu0 0.0
  %6803 = vmatprep.subr.mxu0 0.0
  %6804 = vmatpush2.msra.mxu0 0.0
  %6805 = vmatprep.subr.mxu0 0.0
  %6806 = vmatpush2.msra.mxu0 0.0
  %6807 = vmatprep.subr.mxu0 0.0
  %6808 = vmatpush2.msra.mxu0 0.0
  %6809 = vmatprep.subr.mxu0 0.0
  %6810 = vmatpush2.msra.mxu0 0.0
  %6811 = vmatprep.mubr.f32.mxu0 0.0
  %6812 = vmatmul.mubr.f32.gmra.mxu0 %v6084
  %v6813 = vpop.f32.mrf.mxu0
  %v6814 = vadd.f32 0.0, %v6813
  %v6815 = vpop.f32.mrf.mxu0
  %6816 = vdwg.mxu0
  %6817 = vmatprep.subr.mxu0 0.0
  %6818 = vmatpush1.msra.mxu0 0.0
  %6819 = vmatprep.subr.mxu0 0.0
  %6820 = vmatpush1.msra.mxu0 0.0
  %6821 = vmatprep.subr.mxu0 0.0
  %6822 = vmatpush1.msra.mxu0 0.0
  %6823 = vmatprep.subr.mxu0 0.0
  %6824 = vmatpush1.msra.mxu0 0.0
  %6825 = vmatprep.subr.mxu0 0.0
  %6826 = vmatpush1.msra.mxu0 0.0
  %6827 = vmatprep.subr.mxu0 0.0
  %6828 = vmatpush1.msra.mxu0 0.0
  %6829 = vmatprep.subr.mxu0 0.0
  %6830 = vmatpush1.msra.mxu0 0.0
  %6831 = vmatprep.subr.mxu0 0.0
  %6832 = vmatpush1.msra.mxu0 0.0
  %6833 = vmatprep.subr.mxu0 0.0
  %6834 = vmatpush1.msra.mxu0 0.0
  %6835 = vmatprep.subr.mxu0 0.0
  %6836 = vmatpush1.msra.mxu0 0.0
  %6837 = vmatprep.subr.mxu0 0.0
  %6838 = vmatpush1.msra.mxu0 0.0
  %6839 = vmatprep.subr.mxu0 0.0
  %6840 = vmatpush1.msra.mxu0 0.0
  %6841 = vmatprep.subr.mxu0 0.0
  %6842 = vmatpush1.msra.mxu0 %v6576
  %6843 = vmatprep.subr.mxu0 0.0
  %6844 = vmatpush1.msra.mxu0 %v6575
  %6845 = vmatprep.subr.mxu0 0.0
  %6846 = vmatpush1.msra.mxu0 %v6574
  %6847 = vmatprep.subr.mxu0 0.0
  %6848 = vmatpush1.msra.mxu0 %v6573
  %6849 = vmatprep.subr.mxu0 0.0
  %6850 = vmatpush2.msra.mxu0 0.0
  %6851 = vmatprep.subr.mxu0 0.0
  %6852 = vmatpush2.msra.mxu0 0.0
  %6853 = vmatprep.subr.mxu0 0.0
  %6854 = vmatpush2.msra.mxu0 0.0
  %6855 = vmatprep.subr.mxu0 0.0
  %6856 = vmatpush2.msra.mxu0 0.0
  %6857 = vmatprep.subr.mxu0 0.0
  %6858 = vmatpush2.msra.mxu0 0.0
  %6859 = vmatprep.subr.mxu0 0.0
  %6860 = vmatpush2.msra.mxu0 0.0
  %6861 = vmatprep.subr.mxu0 0.0
  %6862 = vmatpush2.msra.mxu0 0.0
  %6863 = vmatprep.subr.mxu0 0.0
  %6864 = vmatpush2.msra.mxu0 0.0
  %6865 = vmatprep.subr.mxu0 0.0
  %6866 = vmatpush2.msra.mxu0 0.0
  %6867 = vmatprep.subr.mxu0 0.0
  %6868 = vmatpush2.msra.mxu0 0.0
  %6869 = vmatprep.subr.mxu0 0.0
  %6870 = vmatpush2.msra.mxu0 0.0
  %6871 = vmatprep.subr.mxu0 0.0
  %6872 = vmatpush2.msra.mxu0 0.0
  %6873 = vmatprep.subr.mxu0 0.0
  %6874 = vmatpush2.msra.mxu0 0.0
  %6875 = vmatprep.subr.mxu0 0.0
  %6876 = vmatpush2.msra.mxu0 0.0
  %6877 = vmatprep.subr.mxu0 0.0
  %6878 = vmatpush2.msra.mxu0 0.0
  %6879 = vmatprep.subr.mxu0 0.0
  %6880 = vmatpush2.msra.mxu0 0.0
  %6881 = vmatprep.mubr.f32.mxu0 0.0
  %6882 = vmatmul.mubr.f32.gmra.mxu0 %v6668
  %v6883 = vpop.f32.mrf.mxu0
  %v6884 = vadd.f32 %v6814, %v6883
  %v6885 = vpop.f32.mrf.mxu0
  %6886 = vdwg.mxu0
  %v6888 = vlaneseq
  %v6889 = vshrl.u32 %v6888, 7
  %v6890 = vsub.s32 0, %v6889
  %v6891 = vrot.slane %v6594, %v6890
  %v6893 = vadd.f32 %v6884, %v6891
  %v6895 = vlaneseq
  %v6896 = vshrl.u32 %v6895, 7
  %v6897 = vsub.s32 0, %v6896
  %v6898 = vrot.slane %v6595, %v6897
  %6900 = vmatprep.subr.mxu0 0.0
  %6901 = vmatpush1.msra.mxu0 0.0
  %6902 = vmatprep.subr.mxu0 0.0
  %6903 = vmatpush1.msra.mxu0 0.0
  %6904 = vmatprep.subr.mxu0 0.0
  %6905 = vmatpush1.msra.mxu0 0.0
  %6906 = vmatprep.subr.mxu0 0.0
  %6907 = vmatpush1.msra.mxu0 0.0
  %6908 = vmatprep.subr.mxu0 0.0
  %6909 = vmatpush1.msra.mxu0 0.0
  %6910 = vmatprep.subr.mxu0 0.0
  %6911 = vmatpush1.msra.mxu0 0.0
  %6912 = vmatprep.subr.mxu0 0.0
  %6913 = vmatpush1.msra.mxu0 0.0
  %6914 = vmatprep.subr.mxu0 0.0
  %6915 = vmatpush1.msra.mxu0 0.0
  %6916 = vmatprep.subr.mxu0 0.0
  %6917 = vmatpush1.msra.mxu0 0.0
  %6918 = vmatprep.subr.mxu0 0.0
  %6919 = vmatpush1.msra.mxu0 0.0
  %6920 = vmatprep.subr.mxu0 0.0
  %6921 = vmatpush1.msra.mxu0 0.0
  %6922 = vmatprep.subr.mxu0 0.0
  %6923 = vmatpush1.msra.mxu0 0.0
  %6924 = vmatprep.subr.mxu0 0.0
  %6925 = vmatpush1.msra.mxu0 %v6580
  %6926 = vmatprep.subr.mxu0 0.0
  %6927 = vmatpush1.msra.mxu0 %v6579
  %6928 = vmatprep.subr.mxu0 0.0
  %6929 = vmatpush1.msra.mxu0 %v6578
  %6930 = vmatprep.subr.mxu0 0.0
  %6931 = vmatpush1.msra.mxu0 %v6577
  %6932 = vmatprep.subr.mxu0 0.0
  %6933 = vmatpush2.msra.mxu0 0.0
  %6934 = vmatprep.subr.mxu0 0.0
  %6935 = vmatpush2.msra.mxu0 0.0
  %6936 = vmatprep.subr.mxu0 0.0
  %6937 = vmatpush2.msra.mxu0 0.0
  %6938 = vmatprep.subr.mxu0 0.0
  %6939 = vmatpush2.msra.mxu0 0.0
  %6940 = vmatprep.subr.mxu0 0.0
  %6941 = vmatpush2.msra.mxu0 0.0
  %6942 = vmatprep.subr.mxu0 0.0
  %6943 = vmatpush2.msra.mxu0 0.0
  %6944 = vmatprep.subr.mxu0 0.0
  %6945 = vmatpush2.msra.mxu0 0.0
  %6946 = vmatprep.subr.mxu0 0.0
  %6947 = vmatpush2.msra.mxu0 0.0
  %6948 = vmatprep.subr.mxu0 0.0
  %6949 = vmatpush2.msra.mxu0 0.0
  %6950 = vmatprep.subr.mxu0 0.0
  %6951 = vmatpush2.msra.mxu0 0.0
  %6952 = vmatprep.subr.mxu0 0.0
  %6953 = vmatpush2.msra.mxu0 0.0
  %6954 = vmatprep.subr.mxu0 0.0
  %6955 = vmatpush2.msra.mxu0 0.0
  %6956 = vmatprep.subr.mxu0 0.0
  %6957 = vmatpush2.msra.mxu0 0.0
  %6958 = vmatprep.subr.mxu0 0.0
  %6959 = vmatpush2.msra.mxu0 0.0
  %6960 = vmatprep.subr.mxu0 0.0
  %6961 = vmatpush2.msra.mxu0 0.0
  %6962 = vmatprep.subr.mxu0 0.0
  %6963 = vmatpush2.msra.mxu0 0.0
  %6964 = vmatprep.mubr.f32.mxu0 0.0
  %6965 = vmatmul.mubr.f32.gmra.mxu0 %v6668
  %v6966 = vpop.f32.mrf.mxu0
  %v6967 = vadd.f32 %v6898, %v6966
  %v6968 = vpop.f32.mrf.mxu0
  %6969 = vdwg.mxu0
  %v6971 = vlaneseq
  %v6972 = vshrl.u32 %v6971, 7
  %v6973 = vsub.s32 0, %v6972
  %v6974 = vrot.slane %v6596, %v6973
  %6976 = vmatprep.subr.mxu0 0.0
  %6977 = vmatpush1.msra.mxu0 0.0
  %6978 = vmatprep.subr.mxu0 0.0
  %6979 = vmatpush1.msra.mxu0 0.0
  %6980 = vmatprep.subr.mxu0 0.0
  %6981 = vmatpush1.msra.mxu0 0.0
  %6982 = vmatprep.subr.mxu0 0.0
  %6983 = vmatpush1.msra.mxu0 0.0
  %6984 = vmatprep.subr.mxu0 0.0
  %6985 = vmatpush1.msra.mxu0 0.0
  %6986 = vmatprep.subr.mxu0 0.0
  %6987 = vmatpush1.msra.mxu0 0.0
  %6988 = vmatprep.subr.mxu0 0.0
  %6989 = vmatpush1.msra.mxu0 0.0
  %6990 = vmatprep.subr.mxu0 0.0
  %6991 = vmatpush1.msra.mxu0 0.0
  %6992 = vmatprep.subr.mxu0 0.0
  %6993 = vmatpush1.msra.mxu0 0.0
  %6994 = vmatprep.subr.mxu0 0.0
  %6995 = vmatpush1.msra.mxu0 0.0
  %6996 = vmatprep.subr.mxu0 0.0
  %6997 = vmatpush1.msra.mxu0 0.0
  %6998 = vmatprep.subr.mxu0 0.0
  %6999 = vmatpush1.msra.mxu0 0.0
  %7000 = vmatprep.subr.mxu0 0.0
  %7001 = vmatpush1.msra.mxu0 %v6592
  %7002 = vmatprep.subr.mxu0 0.0
  %7003 = vmatpush1.msra.mxu0 %v6591
  %7004 = vmatprep.subr.mxu0 0.0
  %7005 = vmatpush1.msra.mxu0 %v6590
  %7006 = vmatprep.subr.mxu0 0.0
  %7007 = vmatpush1.msra.mxu0 %v6589
  %7008 = vmatprep.subr.mxu0 0.0
  %7009 = vmatpush2.msra.mxu0 0.0
  %7010 = vmatprep.subr.mxu0 0.0
  %7011 = vmatpush2.msra.mxu0 0.0
  %7012 = vmatprep.subr.mxu0 0.0
  %7013 = vmatpush2.msra.mxu0 0.0
  %7014 = vmatprep.subr.mxu0 0.0
  %7015 = vmatpush2.msra.mxu0 0.0
  %7016 = vmatprep.subr.mxu0 0.0
  %7017 = vmatpush2.msra.mxu0 0.0
  %7018 = vmatprep.subr.mxu0 0.0
  %7019 = vmatpush2.msra.mxu0 0.0
  %7020 = vmatprep.subr.mxu0 0.0
  %7021 = vmatpush2.msra.mxu0 0.0
  %7022 = vmatprep.subr.mxu0 0.0
  %7023 = vmatpush2.msra.mxu0 0.0
  %7024 = vmatprep.subr.mxu0 0.0
  %7025 = vmatpush2.msra.mxu0 0.0
  %7026 = vmatprep.subr.mxu0 0.0
  %7027 = vmatpush2.msra.mxu0 0.0
  %7028 = vmatprep.subr.mxu0 0.0
  %7029 = vmatpush2.msra.mxu0 0.0
  %7030 = vmatprep.subr.mxu0 0.0
  %7031 = vmatpush2.msra.mxu0 0.0
  %7032 = vmatprep.subr.mxu0 0.0
  %7033 = vmatpush2.msra.mxu0 0.0
  %7034 = vmatprep.subr.mxu0 0.0
  %7035 = vmatpush2.msra.mxu0 0.0
  %7036 = vmatprep.subr.mxu0 0.0
  %7037 = vmatpush2.msra.mxu0 0.0
  %7038 = vmatprep.subr.mxu0 0.0
  %7039 = vmatpush2.msra.mxu0 0.0
  %7040 = vmatprep.mubr.f32.mxu0 0.0
  %7041 = vmatmul.mubr.f32.gmra.mxu0 %v6084
  %v7042 = vpop.f32.mrf.mxu0
  %v7043 = vadd.f32 %v6974, %v7042
  %v7044 = vpop.f32.mrf.mxu0
  %7045 = vdwg.mxu0
  %v7046 = vxor.u32 %v6746, 2147483648
  %v7047 = vmul.f32 %v7046, 1.442695
  %v7048 = vpow.pop %v7047
  %v7049 = vadd.f32 %v7048, 1.0
  %v7050 = vrcp.pop %v7049
  %v7051 = vmul.f32 1.0, %v7050
  %v7052 = vxor.u32 %v6893, 2147483648
  %v7053 = vmul.f32 %v7052, 1.442695
  %v7054 = vpow.pop %v7053
  %v7055 = vadd.f32 %v7054, 1.0
  %v7056 = vrcp.pop %v7055
  %v7057 = vmul.f32 1.0, %v7056
  %v7058 = vmul.f32 %v7051, %v7043
  %v7059 = vadd.f32 %v6967, %v7058
  %v7060 = vtanh.pop %v7059
  %v7061 = vsub.f32 1.0, %v7057
  %v7062 = vmul.f32 %v7061, %v7060
  %v7063 = vmul.f32 %v7057, %v5984
  %v7064 = vadd.f32 %v7062, %v7063
  %v7065 = vld [vmem:[%s12] sm:$0xff]
  %v7066 = vld [vmem:[%s12 + $0x8] sm:$0xff]
  %v7067 = vld [vmem:[%s12 + $0x10] sm:$0xff]
  %v7068 = vld [vmem:[%s12 + $0x18] sm:$0xff]
  %v7069 = vld [vmem:[%s13] sm:$0xff]
  %v7070 = vld [vmem:[%s13 + $0x8] sm:$0xff]
  %v7071 = vld [vmem:[%s13 + $0x10] sm:$0xff]
  %v7072 = vld [vmem:[%s13 + $0x18] sm:$0xff]
  %v7073 = vld [vmem:[%s14] sm:$0xff]
  %v7074 = vld [vmem:[%s14 + $0x8] sm:$0xff]
  %v7075 = vld [vmem:[%s14 + $0x10] sm:$0xff]
  %v7076 = vld [vmem:[%s14 + $0x18] sm:$0xff]
  %v7077 = vld [vmem:[%s15] sm:$0xff]
  %v7078 = vld [vmem:[%s15 + $0x8] sm:$0xff]
  %v7079 = vld [vmem:[%s15 + $0x10] sm:$0xff]
  %v7080 = vld [vmem:[%s15 + $0x18] sm:$0xff]
  %v7081 = vld [vmem:[%s16] sm:$0xff]
  %v7082 = vld [vmem:[%s16 + $0x8] sm:$0xff]
  %v7083 = vld [vmem:[%s16 + $0x10] sm:$0xff]
  %v7084 = vld [vmem:[%s16 + $0x18] sm:$0xff]
  %v7085 = vld [vmem:[%s17] sm:$0xff]
  %v7086 = vld [vmem:[%s17 + $0x8] sm:$0xff]
  %v7087 = vld [vmem:[%s17 + $0x10] sm:$0xff]
  %v7088 = vld [vmem:[%s17 + $0x18] sm:$0xff]
  %v7089 = vld [vmem:[%s18] sm:$0x1]
  %v7090 = vld [vmem:[%s19] sm:$0x1]
  %v7091 = vld [vmem:[%s20] sm:$0x1]
  %v7092 = vld [vmem:[%s21] sm:$0x1]
  %7093 = vmatprep.subr.mxu0 0.0
  %7094 = vmatpush1.msra.mxu0 0.0
  %7095 = vmatprep.subr.mxu0 0.0
  %7096 = vmatpush1.msra.mxu0 0.0
  %7097 = vmatprep.subr.mxu0 0.0
  %7098 = vmatpush1.msra.mxu0 0.0
  %7099 = vmatprep.subr.mxu0 0.0
  %7100 = vmatpush1.msra.mxu0 0.0
  %7101 = vmatprep.subr.mxu0 0.0
  %7102 = vmatpush1.msra.mxu0 0.0
  %7103 = vmatprep.subr.mxu0 0.0
  %7104 = vmatpush1.msra.mxu0 0.0
  %7105 = vmatprep.subr.mxu0 0.0
  %7106 = vmatpush1.msra.mxu0 0.0
  %7107 = vmatprep.subr.mxu0 0.0
  %7108 = vmatpush1.msra.mxu0 0.0
  %7109 = vmatprep.subr.mxu0 0.0
  %7110 = vmatpush1.msra.mxu0 0.0
  %7111 = vmatprep.subr.mxu0 0.0
  %7112 = vmatpush1.msra.mxu0 0.0
  %7113 = vmatprep.subr.mxu0 0.0
  %7114 = vmatpush1.msra.mxu0 0.0
  %7115 = vmatprep.subr.mxu0 0.0
  %7116 = vmatpush1.msra.mxu0 0.0
  %7117 = vmatprep.subr.mxu0 0.0
  %7118 = vmatpush1.msra.mxu0 %v7080
  %7119 = vmatprep.subr.mxu0 0.0
  %7120 = vmatpush1.msra.mxu0 %v7079
  %7121 = vmatprep.subr.mxu0 0.0
  %7122 = vmatpush1.msra.mxu0 %v7078
  %7123 = vmatprep.subr.mxu0 0.0
  %7124 = vmatpush1.msra.mxu0 %v7077
  %7125 = vmatprep.subr.mxu0 0.0
  %7126 = vmatpush2.msra.mxu0 0.0
  %7127 = vmatprep.subr.mxu0 0.0
  %7128 = vmatpush2.msra.mxu0 0.0
  %7129 = vmatprep.subr.mxu0 0.0
  %7130 = vmatpush2.msra.mxu0 0.0
  %7131 = vmatprep.subr.mxu0 0.0
  %7132 = vmatpush2.msra.mxu0 0.0
  %7133 = vmatprep.subr.mxu0 0.0
  %7134 = vmatpush2.msra.mxu0 0.0
  %7135 = vmatprep.subr.mxu0 0.0
  %7136 = vmatpush2.msra.mxu0 0.0
  %7137 = vmatprep.subr.mxu0 0.0
  %7138 = vmatpush2.msra.mxu0 0.0
  %7139 = vmatprep.subr.mxu0 0.0
  %7140 = vmatpush2.msra.mxu0 0.0
  %7141 = vmatprep.subr.mxu0 0.0
  %7142 = vmatpush2.msra.mxu0 0.0
  %7143 = vmatprep.subr.mxu0 0.0
  %7144 = vmatpush2.msra.mxu0 0.0
  %7145 = vmatprep.subr.mxu0 0.0
  %7146 = vmatpush2.msra.mxu0 0.0
  %7147 = vmatprep.subr.mxu0 0.0
  %7148 = vmatpush2.msra.mxu0 0.0
  %7149 = vmatprep.subr.mxu0 0.0
  %7150 = vmatpush2.msra.mxu0 0.0
  %7151 = vmatprep.subr.mxu0 0.0
  %7152 = vmatpush2.msra.mxu0 0.0
  %7153 = vmatprep.subr.mxu0 0.0
  %7154 = vmatpush2.msra.mxu0 0.0
  %7155 = vmatprep.subr.mxu0 0.0
  %7156 = vmatpush2.msra.mxu0 0.0
  %7157 = vmatprep.mubr.f32.mxu0 0.0
  %7158 = vmatmul.mubr.f32.gmra.mxu0 %v6493
  %v7159 = vpop.f32.mrf.mxu0
  %v7160 = vadd.f32 0.0, %v7159
  %v7161 = vpop.f32.mrf.mxu0
  %7162 = vdwg.mxu0
  %v7164 = vsel %vm111, %v7064, 0
  %7166 = vmatprep.subr.mxu0 0.0
  %7167 = vmatpush1.msra.mxu0 0.0
  %7168 = vmatprep.subr.mxu0 0.0
  %7169 = vmatpush1.msra.mxu0 0.0
  %7170 = vmatprep.subr.mxu0 0.0
  %7171 = vmatpush1.msra.mxu0 0.0
  %7172 = vmatprep.subr.mxu0 0.0
  %7173 = vmatpush1.msra.mxu0 0.0
  %7174 = vmatprep.subr.mxu0 0.0
  %7175 = vmatpush1.msra.mxu0 0.0
  %7176 = vmatprep.subr.mxu0 0.0
  %7177 = vmatpush1.msra.mxu0 0.0
  %7178 = vmatprep.subr.mxu0 0.0
  %7179 = vmatpush1.msra.mxu0 0.0
  %7180 = vmatprep.subr.mxu0 0.0
  %7181 = vmatpush1.msra.mxu0 0.0
  %7182 = vmatprep.subr.mxu0 0.0
  %7183 = vmatpush1.msra.mxu0 0.0
  %7184 = vmatprep.subr.mxu0 0.0
  %7185 = vmatpush1.msra.mxu0 0.0
  %7186 = vmatprep.subr.mxu0 0.0
  %7187 = vmatpush1.msra.mxu0 0.0
  %7188 = vmatprep.subr.mxu0 0.0
  %7189 = vmatpush1.msra.mxu0 0.0
  %7190 = vmatprep.subr.mxu0 0.0
  %7191 = vmatpush1.msra.mxu0 %v7068
  %7192 = vmatprep.subr.mxu0 0.0
  %7193 = vmatpush1.msra.mxu0 %v7067
  %7194 = vmatprep.subr.mxu0 0.0
  %7195 = vmatpush1.msra.mxu0 %v7066
  %7196 = vmatprep.subr.mxu0 0.0
  %7197 = vmatpush1.msra.mxu0 %v7065
  %7198 = vmatprep.subr.mxu0 0.0
  %7199 = vmatpush2.msra.mxu0 0.0
  %7200 = vmatprep.subr.mxu0 0.0
  %7201 = vmatpush2.msra.mxu0 0.0
  %7202 = vmatprep.subr.mxu0 0.0
  %7203 = vmatpush2.msra.mxu0 0.0
  %7204 = vmatprep.subr.mxu0 0.0
  %7205 = vmatpush2.msra.mxu0 0.0
  %7206 = vmatprep.subr.mxu0 0.0
  %7207 = vmatpush2.msra.mxu0 0.0
  %7208 = vmatprep.subr.mxu0 0.0
  %7209 = vmatpush2.msra.mxu0 0.0
  %7210 = vmatprep.subr.mxu0 0.0
  %7211 = vmatpush2.msra.mxu0 0.0
  %7212 = vmatprep.subr.mxu0 0.0
  %7213 = vmatpush2.msra.mxu0 0.0
  %7214 = vmatprep.subr.mxu0 0.0
  %7215 = vmatpush2.msra.mxu0 0.0
  %7216 = vmatprep.subr.mxu0 0.0
  %7217 = vmatpush2.msra.mxu0 0.0
  %7218 = vmatprep.subr.mxu0 0.0
  %7219 = vmatpush2.msra.mxu0 0.0
  %7220 = vmatprep.subr.mxu0 0.0
  %7221 = vmatpush2.msra.mxu0 0.0
  %7222 = vmatprep.subr.mxu0 0.0
  %7223 = vmatpush2.msra.mxu0 0.0
  %7224 = vmatprep.subr.mxu0 0.0
  %7225 = vmatpush2.msra.mxu0 0.0
  %7226 = vmatprep.subr.mxu0 0.0
  %7227 = vmatpush2.msra.mxu0 0.0
  %7228 = vmatprep.subr.mxu0 0.0
  %7229 = vmatpush2.msra.mxu0 0.0
  %7230 = vmatprep.mubr.f32.mxu0 0.0
  %7231 = vmatmul.mubr.f32.gmra.mxu0 %v7164
  %v7232 = vpop.f32.mrf.mxu0
  %v7233 = vadd.f32 %v7160, %v7232
  %v7234 = vpop.f32.mrf.mxu0
  %7235 = vdwg.mxu0
  %v7237 = vlaneseq
  %v7238 = vshrl.u32 %v7237, 7
  %v7239 = vsub.s32 0, %v7238
  %v7240 = vrot.slane %v7089, %v7239
  %v7242 = vadd.f32 %v7233, %v7240
  %7243 = vmatprep.subr.mxu0 0.0
  %7244 = vmatpush1.msra.mxu0 0.0
  %7245 = vmatprep.subr.mxu0 0.0
  %7246 = vmatpush1.msra.mxu0 0.0
  %7247 = vmatprep.subr.mxu0 0.0
  %7248 = vmatpush1.msra.mxu0 0.0
  %7249 = vmatprep.subr.mxu0 0.0
  %7250 = vmatpush1.msra.mxu0 0.0
  %7251 = vmatprep.subr.mxu0 0.0
  %7252 = vmatpush1.msra.mxu0 0.0
  %7253 = vmatprep.subr.mxu0 0.0
  %7254 = vmatpush1.msra.mxu0 0.0
  %7255 = vmatprep.subr.mxu0 0.0
  %7256 = vmatpush1.msra.mxu0 0.0
  %7257 = vmatprep.subr.mxu0 0.0
  %7258 = vmatpush1.msra.mxu0 0.0
  %7259 = vmatprep.subr.mxu0 0.0
  %7260 = vmatpush1.msra.mxu0 0.0
  %7261 = vmatprep.subr.mxu0 0.0
  %7262 = vmatpush1.msra.mxu0 0.0
  %7263 = vmatprep.subr.mxu0 0.0
  %7264 = vmatpush1.msra.mxu0 0.0
  %7265 = vmatprep.subr.mxu0 0.0
  %7266 = vmatpush1.msra.mxu0 0.0
  %7267 = vmatprep.subr.mxu0 0.0
  %7268 = vmatpush1.msra.mxu0 %v7084
  %7269 = vmatprep.subr.mxu0 0.0
  %7270 = vmatpush1.msra.mxu0 %v7083
  %7271 = vmatprep.subr.mxu0 0.0
  %7272 = vmatpush1.msra.mxu0 %v7082
  %7273 = vmatprep.subr.mxu0 0.0
  %7274 = vmatpush1.msra.mxu0 %v7081
  %7275 = vmatprep.subr.mxu0 0.0
  %7276 = vmatpush2.msra.mxu0 0.0
  %7277 = vmatprep.subr.mxu0 0.0
  %7278 = vmatpush2.msra.mxu0 0.0
  %7279 = vmatprep.subr.mxu0 0.0
  %7280 = vmatpush2.msra.mxu0 0.0
  %7281 = vmatprep.subr.mxu0 0.0
  %7282 = vmatpush2.msra.mxu0 0.0
  %7283 = vmatprep.subr.mxu0 0.0
  %7284 = vmatpush2.msra.mxu0 0.0
  %7285 = vmatprep.subr.mxu0 0.0
  %7286 = vmatpush2.msra.mxu0 0.0
  %7287 = vmatprep.subr.mxu0 0.0
  %7288 = vmatpush2.msra.mxu0 0.0
  %7289 = vmatprep.subr.mxu0 0.0
  %7290 = vmatpush2.msra.mxu0 0.0
  %7291 = vmatprep.subr.mxu0 0.0
  %7292 = vmatpush2.msra.mxu0 0.0
  %7293 = vmatprep.subr.mxu0 0.0
  %7294 = vmatpush2.msra.mxu0 0.0
  %7295 = vmatprep.subr.mxu0 0.0
  %7296 = vmatpush2.msra.mxu0 0.0
  %7297 = vmatprep.subr.mxu0 0.0
  %7298 = vmatpush2.msra.mxu0 0.0
  %7299 = vmatprep.subr.mxu0 0.0
  %7300 = vmatpush2.msra.mxu0 0.0
  %7301 = vmatprep.subr.mxu0 0.0
  %7302 = vmatpush2.msra.mxu0 0.0
  %7303 = vmatprep.subr.mxu0 0.0
  %7304 = vmatpush2.msra.mxu0 0.0
  %7305 = vmatprep.subr.mxu0 0.0
  %7306 = vmatpush2.msra.mxu0 0.0
  %7307 = vmatprep.mubr.f32.mxu0 0.0
  %7308 = vmatmul.mubr.f32.gmra.mxu0 %v6493
  %v7309 = vpop.f32.mrf.mxu0
  %v7310 = vadd.f32 0.0, %v7309
  %v7311 = vpop.f32.mrf.mxu0
  %7312 = vdwg.mxu0
  %7313 = vmatprep.subr.mxu0 0.0
  %7314 = vmatpush1.msra.mxu0 0.0
  %7315 = vmatprep.subr.mxu0 0.0
  %7316 = vmatpush1.msra.mxu0 0.0
  %7317 = vmatprep.subr.mxu0 0.0
  %7318 = vmatpush1.msra.mxu0 0.0
  %7319 = vmatprep.subr.mxu0 0.0
  %7320 = vmatpush1.msra.mxu0 0.0
  %7321 = vmatprep.subr.mxu0 0.0
  %7322 = vmatpush1.msra.mxu0 0.0
  %7323 = vmatprep.subr.mxu0 0.0
  %7324 = vmatpush1.msra.mxu0 0.0
  %7325 = vmatprep.subr.mxu0 0.0
  %7326 = vmatpush1.msra.mxu0 0.0
  %7327 = vmatprep.subr.mxu0 0.0
  %7328 = vmatpush1.msra.mxu0 0.0
  %7329 = vmatprep.subr.mxu0 0.0
  %7330 = vmatpush1.msra.mxu0 0.0
  %7331 = vmatprep.subr.mxu0 0.0
  %7332 = vmatpush1.msra.mxu0 0.0
  %7333 = vmatprep.subr.mxu0 0.0
  %7334 = vmatpush1.msra.mxu0 0.0
  %7335 = vmatprep.subr.mxu0 0.0
  %7336 = vmatpush1.msra.mxu0 0.0
  %7337 = vmatprep.subr.mxu0 0.0
  %7338 = vmatpush1.msra.mxu0 %v7072
  %7339 = vmatprep.subr.mxu0 0.0
  %7340 = vmatpush1.msra.mxu0 %v7071
  %7341 = vmatprep.subr.mxu0 0.0
  %7342 = vmatpush1.msra.mxu0 %v7070
  %7343 = vmatprep.subr.mxu0 0.0
  %7344 = vmatpush1.msra.mxu0 %v7069
  %7345 = vmatprep.subr.mxu0 0.0
  %7346 = vmatpush2.msra.mxu0 0.0
  %7347 = vmatprep.subr.mxu0 0.0
  %7348 = vmatpush2.msra.mxu0 0.0
  %7349 = vmatprep.subr.mxu0 0.0
  %7350 = vmatpush2.msra.mxu0 0.0
  %7351 = vmatprep.subr.mxu0 0.0
  %7352 = vmatpush2.msra.mxu0 0.0
  %7353 = vmatprep.subr.mxu0 0.0
  %7354 = vmatpush2.msra.mxu0 0.0
  %7355 = vmatprep.subr.mxu0 0.0
  %7356 = vmatpush2.msra.mxu0 0.0
  %7357 = vmatprep.subr.mxu0 0.0
  %7358 = vmatpush2.msra.mxu0 0.0
  %7359 = vmatprep.subr.mxu0 0.0
  %7360 = vmatpush2.msra.mxu0 0.0
  %7361 = vmatprep.subr.mxu0 0.0
  %7362 = vmatpush2.msra.mxu0 0.0
  %7363 = vmatprep.subr.mxu0 0.0
  %7364 = vmatpush2.msra.mxu0 0.0
  %7365 = vmatprep.subr.mxu0 0.0
  %7366 = vmatpush2.msra.mxu0 0.0
  %7367 = vmatprep.subr.mxu0 0.0
  %7368 = vmatpush2.msra.mxu0 0.0
  %7369 = vmatprep.subr.mxu0 0.0
  %7370 = vmatpush2.msra.mxu0 0.0
  %7371 = vmatprep.subr.mxu0 0.0
  %7372 = vmatpush2.msra.mxu0 0.0
  %7373 = vmatprep.subr.mxu0 0.0
  %7374 = vmatpush2.msra.mxu0 0.0
  %7375 = vmatprep.subr.mxu0 0.0
  %7376 = vmatpush2.msra.mxu0 0.0
  %7377 = vmatprep.mubr.f32.mxu0 0.0
  %7378 = vmatmul.mubr.f32.gmra.mxu0 %v7164
  %v7379 = vpop.f32.mrf.mxu0
  %v7380 = vadd.f32 %v7310, %v7379
  %v7381 = vpop.f32.mrf.mxu0
  %7382 = vdwg.mxu0
  %v7384 = vlaneseq
  %v7385 = vshrl.u32 %v7384, 7
  %v7386 = vsub.s32 0, %v7385
  %v7387 = vrot.slane %v7090, %v7386
  %v7389 = vadd.f32 %v7380, %v7387
  %v7391 = vlaneseq
  %v7392 = vshrl.u32 %v7391, 7
  %v7393 = vsub.s32 0, %v7392
  %v7394 = vrot.slane %v7091, %v7393
  %7396 = vmatprep.subr.mxu0 0.0
  %7397 = vmatpush1.msra.mxu0 0.0
  %7398 = vmatprep.subr.mxu0 0.0
  %7399 = vmatpush1.msra.mxu0 0.0
  %7400 = vmatprep.subr.mxu0 0.0
  %7401 = vmatpush1.msra.mxu0 0.0
  %7402 = vmatprep.subr.mxu0 0.0
  %7403 = vmatpush1.msra.mxu0 0.0
  %7404 = vmatprep.subr.mxu0 0.0
  %7405 = vmatpush1.msra.mxu0 0.0
  %7406 = vmatprep.subr.mxu0 0.0
  %7407 = vmatpush1.msra.mxu0 0.0
  %7408 = vmatprep.subr.mxu0 0.0
  %7409 = vmatpush1.msra.mxu0 0.0
  %7410 = vmatprep.subr.mxu0 0.0
  %7411 = vmatpush1.msra.mxu0 0.0
  %7412 = vmatprep.subr.mxu0 0.0
  %7413 = vmatpush1.msra.mxu0 0.0
  %7414 = vmatprep.subr.mxu0 0.0
  %7415 = vmatpush1.msra.mxu0 0.0
  %7416 = vmatprep.subr.mxu0 0.0
  %7417 = vmatpush1.msra.mxu0 0.0
  %7418 = vmatprep.subr.mxu0 0.0
  %7419 = vmatpush1.msra.mxu0 0.0
  %7420 = vmatprep.subr.mxu0 0.0
  %7421 = vmatpush1.msra.mxu0 %v7076
  %7422 = vmatprep.subr.mxu0 0.0
  %7423 = vmatpush1.msra.mxu0 %v7075
  %7424 = vmatprep.subr.mxu0 0.0
  %7425 = vmatpush1.msra.mxu0 %v7074
  %7426 = vmatprep.subr.mxu0 0.0
  %7427 = vmatpush1.msra.mxu0 %v7073
  %7428 = vmatprep.subr.mxu0 0.0
  %7429 = vmatpush2.msra.mxu0 0.0
  %7430 = vmatprep.subr.mxu0 0.0
  %7431 = vmatpush2.msra.mxu0 0.0
  %7432 = vmatprep.subr.mxu0 0.0
  %7433 = vmatpush2.msra.mxu0 0.0
  %7434 = vmatprep.subr.mxu0 0.0
  %7435 = vmatpush2.msra.mxu0 0.0
  %7436 = vmatprep.subr.mxu0 0.0
  %7437 = vmatpush2.msra.mxu0 0.0
  %7438 = vmatprep.subr.mxu0 0.0
  %7439 = vmatpush2.msra.mxu0 0.0
  %7440 = vmatprep.subr.mxu0 0.0
  %7441 = vmatpush2.msra.mxu0 0.0
  %7442 = vmatprep.subr.mxu0 0.0
  %7443 = vmatpush2.msra.mxu0 0.0
  %7444 = vmatprep.subr.mxu0 0.0
  %7445 = vmatpush2.msra.mxu0 0.0
  %7446 = vmatprep.subr.mxu0 0.0
  %7447 = vmatpush2.msra.mxu0 0.0
  %7448 = vmatprep.subr.mxu0 0.0
  %7449 = vmatpush2.msra.mxu0 0.0
  %7450 = vmatprep.subr.mxu0 0.0
  %7451 = vmatpush2.msra.mxu0 0.0
  %7452 = vmatprep.subr.mxu0 0.0
  %7453 = vmatpush2.msra.mxu0 0.0
  %7454 = vmatprep.subr.mxu0 0.0
  %7455 = vmatpush2.msra.mxu0 0.0
  %7456 = vmatprep.subr.mxu0 0.0
  %7457 = vmatpush2.msra.mxu0 0.0
  %7458 = vmatprep.subr.mxu0 0.0
  %7459 = vmatpush2.msra.mxu0 0.0
  %7460 = vmatprep.mubr.f32.mxu0 0.0
  %7461 = vmatmul.mubr.f32.gmra.mxu0 %v7164
  %v7462 = vpop.f32.mrf.mxu0
  %v7463 = vadd.f32 %v7394, %v7462
  %v7464 = vpop.f32.mrf.mxu0
  %7465 = vdwg.mxu0
  %v7467 = vlaneseq
  %v7468 = vshrl.u32 %v7467, 7
  %v7469 = vsub.s32 0, %v7468
  %v7470 = vrot.slane %v7092, %v7469
  %7472 = vmatprep.subr.mxu0 0.0
  %7473 = vmatpush1.msra.mxu0 0.0
  %7474 = vmatprep.subr.mxu0 0.0
  %7475 = vmatpush1.msra.mxu0 0.0
  %7476 = vmatprep.subr.mxu0 0.0
  %7477 = vmatpush1.msra.mxu0 0.0
  %7478 = vmatprep.subr.mxu0 0.0
  %7479 = vmatpush1.msra.mxu0 0.0
  %7480 = vmatprep.subr.mxu0 0.0
  %7481 = vmatpush1.msra.mxu0 0.0
  %7482 = vmatprep.subr.mxu0 0.0
  %7483 = vmatpush1.msra.mxu0 0.0
  %7484 = vmatprep.subr.mxu0 0.0
  %7485 = vmatpush1.msra.mxu0 0.0
  %7486 = vmatprep.subr.mxu0 0.0
  %7487 = vmatpush1.msra.mxu0 0.0
  %7488 = vmatprep.subr.mxu0 0.0
  %7489 = vmatpush1.msra.mxu0 0.0
  %7490 = vmatprep.subr.mxu0 0.0
  %7491 = vmatpush1.msra.mxu0 0.0
  %7492 = vmatprep.subr.mxu0 0.0
  %7493 = vmatpush1.msra.mxu0 0.0
  %7494 = vmatprep.subr.mxu0 0.0
  %7495 = vmatpush1.msra.mxu0 0.0
  %7496 = vmatprep.subr.mxu0 0.0
  %7497 = vmatpush1.msra.mxu0 %v7088
  %7498 = vmatprep.subr.mxu0 0.0
  %7499 = vmatpush1.msra.mxu0 %v7087
  %7500 = vmatprep.subr.mxu0 0.0
  %7501 = vmatpush1.msra.mxu0 %v7086
  %7502 = vmatprep.subr.mxu0 0.0
  %7503 = vmatpush1.msra.mxu0 %v7085
  %7504 = vmatprep.subr.mxu0 0.0
  %7505 = vmatpush2.msra.mxu0 0.0
  %7506 = vmatprep.subr.mxu0 0.0
  %7507 = vmatpush2.msra.mxu0 0.0
  %7508 = vmatprep.subr.mxu0 0.0
  %7509 = vmatpush2.msra.mxu0 0.0
  %7510 = vmatprep.subr.mxu0 0.0
  %7511 = vmatpush2.msra.mxu0 0.0
  %7512 = vmatprep.subr.mxu0 0.0
  %7513 = vmatpush2.msra.mxu0 0.0
  %7514 = vmatprep.subr.mxu0 0.0
  %7515 = vmatpush2.msra.mxu0 0.0
  %7516 = vmatprep.subr.mxu0 0.0
  %7517 = vmatpush2.msra.mxu0 0.0
  %7518 = vmatprep.subr.mxu0 0.0
  %7519 = vmatpush2.msra.mxu0 0.0
  %7520 = vmatprep.subr.mxu0 0.0
  %7521 = vmatpush2.msra.mxu0 0.0
  %7522 = vmatprep.subr.mxu0 0.0
  %7523 = vmatpush2.msra.mxu0 0.0
  %7524 = vmatprep.subr.mxu0 0.0
  %7525 = vmatpush2.msra.mxu0 0.0
  %7526 = vmatprep.subr.mxu0 0.0
  %7527 = vmatpush2.msra.mxu0 0.0
  %7528 = vmatprep.subr.mxu0 0.0
  %7529 = vmatpush2.msra.mxu0 0.0
  %7530 = vmatprep.subr.mxu0 0.0
  %7531 = vmatpush2.msra.mxu0 0.0
  %7532 = vmatprep.subr.mxu0 0.0
  %7533 = vmatpush2.msra.mxu0 0.0
  %7534 = vmatprep.subr.mxu0 0.0
  %7535 = vmatpush2.msra.mxu0 0.0
  %7536 = vmatprep.mubr.f32.mxu0 0.0
  %7537 = vmatmul.mubr.f32.gmra.mxu0 %v6493
  %v7538 = vpop.f32.mrf.mxu0
  %v7539 = vadd.f32 %v7470, %v7538
  %v7540 = vpop.f32.mrf.mxu0
  %7541 = vdwg.mxu0
  %v7542 = vxor.u32 %v7242, 2147483648
  %v7543 = vmul.f32 %v7542, 1.442695
  %v7544 = vpow.pop %v7543
  %v7545 = vadd.f32 %v7544, 1.0
  %v7546 = vrcp.pop %v7545
  %v7547 = vmul.f32 1.0, %v7546
  %v7548 = vxor.u32 %v7389, 2147483648
  %v7549 = vmul.f32 %v7548, 1.442695
  %v7550 = vpow.pop %v7549
  %v7551 = vadd.f32 %v7550, 1.0
  %v7552 = vrcp.pop %v7551
  %v7553 = vmul.f32 1.0, %v7552
  %v7554 = vmul.f32 %v7547, %v7539
  %v7555 = vadd.f32 %v7463, %v7554
  %v7556 = vtanh.pop %v7555
  %v7557 = vsub.f32 1.0, %v7553
  %v7558 = vmul.f32 %v7557, %v7556
  %v7559 = vmul.f32 %v7553, %v6480
  %v7560 = vadd.f32 %v7558, %v7559
  %v7561 = vld [vmem:[%s22] sm:$0xff]
  %v7562 = vld [vmem:[%s22 + $0x8] sm:$0xff]
  %v7563 = vld [vmem:[%s22 + $0x10] sm:$0xff]
  %v7564 = vld [vmem:[%s22 + $0x18] sm:$0xff]
  %v7565 = vld [vmem:[%s23] sm:$0x1]
  %v7567 = vlaneseq
  %v7568 = vshrl.u32 %v7567, 7
  %v7569 = vsub.s32 0, %v7568
  %v7570 = vrot.slane %v7565, %v7569
  %v7573 = vsel %vm111, %v7560, 0
  %7575 = vmatprep.subr.mxu0 0.0
  %7576 = vmatpush1.msra.mxu0 0.0
  %7577 = vmatprep.subr.mxu0 0.0
  %7578 = vmatpush1.msra.mxu0 0.0
  %7579 = vmatprep.subr.mxu0 0.0
  %7580 = vmatpush1.msra.mxu0 0.0
  %7581 = vmatprep.subr.mxu0 0.0
  %7582 = vmatpush1.msra.mxu0 0.0
  %7583 = vmatprep.subr.mxu0 0.0
  %7584 = vmatpush1.msra.mxu0 0.0
  %7585 = vmatprep.subr.mxu0 0.0
  %7586 = vmatpush1.msra.mxu0 0.0
  %7587 = vmatprep.subr.mxu0 0.0
  %7588 = vmatpush1.msra.mxu0 0.0
  %7589 = vmatprep.subr.mxu0 0.0
  %7590 = vmatpush1.msra.mxu0 0.0
  %7591 = vmatprep.subr.mxu0 0.0
  %7592 = vmatpush1.msra.mxu0 0.0
  %7593 = vmatprep.subr.mxu0 0.0
  %7594 = vmatpush1.msra.mxu0 0.0
  %7595 = vmatprep.subr.mxu0 0.0
  %7596 = vmatpush1.msra.mxu0 0.0
  %7597 = vmatprep.subr.mxu0 0.0
  %7598 = vmatpush1.msra.mxu0 0.0
  %7599 = vmatprep.subr.mxu0 0.0
  %7600 = vmatpush1.msra.mxu0 %v7564
  %7601 = vmatprep.subr.mxu0 0.0
  %7602 = vmatpush1.msra.mxu0 %v7563
  %7603 = vmatprep.subr.mxu0 0.0
  %7604 = vmatpush1.msra.mxu0 %v7562
  %7605 = vmatprep.subr.mxu0 0.0
  %7606 = vmatpush1.msra.mxu0 %v7561
  %7607 = vmatprep.subr.mxu0 0.0
  %7608 = vmatpush2.msra.mxu0 0.0
  %7609 = vmatprep.subr.mxu0 0.0
  %7610 = vmatpush2.msra.mxu0 0.0
  %7611 = vmatprep.subr.mxu0 0.0
  %7612 = vmatpush2.msra.mxu0 0.0
  %7613 = vmatprep.subr.mxu0 0.0
  %7614 = vmatpush2.msra.mxu0 0.0
  %7615 = vmatprep.subr.mxu0 0.0
  %7616 = vmatpush2.msra.mxu0 0.0
  %7617 = vmatprep.subr.mxu0 0.0
  %7618 = vmatpush2.msra.mxu0 0.0
  %7619 = vmatprep.subr.mxu0 0.0
  %7620 = vmatpush2.msra.mxu0 0.0
  %7621 = vmatprep.subr.mxu0 0.0
  %7622 = vmatpush2.msra.mxu0 0.0
  %7623 = vmatprep.subr.mxu0 0.0
  %7624 = vmatpush2.msra.mxu0 0.0
  %7625 = vmatprep.subr.mxu0 0.0
  %7626 = vmatpush2.msra.mxu0 0.0
  %7627 = vmatprep.subr.mxu0 0.0
  %7628 = vmatpush2.msra.mxu0 0.0
  %7629 = vmatprep.subr.mxu0 0.0
  %7630 = vmatpush2.msra.mxu0 0.0
  %7631 = vmatprep.subr.mxu0 0.0
  %7632 = vmatpush2.msra.mxu0 0.0
  %7633 = vmatprep.subr.mxu0 0.0
  %7634 = vmatpush2.msra.mxu0 0.0
  %7635 = vmatprep.subr.mxu0 0.0
  %7636 = vmatpush2.msra.mxu0 0.0
  %7637 = vmatprep.subr.mxu0 0.0
  %7638 = vmatpush2.msra.mxu0 0.0
  %7639 = vmatprep.mubr.f32.mxu0 0.0
  %7640 = vmatmul.mubr.f32.gmra.mxu0 %v7573
  %v7641 = vpop.f32.mrf.mxu0
  %v7642 = vadd.f32 %v7570, %v7641
  %v7643 = vpop.f32.mrf.mxu0
  %7644 = vdwg.mxu0
  %s7645 = scalar_lea.vmem %s24, 48
  %7646 = vst [vmem:[%s7645] sm:$0xff] %v7642
  %s7647 = scalar_lea.vmem %s0, 56
  %v7648 = vld [vmem:[%s7647] sm:$0xff]
  %v7649 = vld [vmem:[%s2] sm:$0xff]
  %v7650 = vld [vmem:[%s2 + $0x8] sm:$0xff]
  %v7651 = vld [vmem:[%s2 + $0x10] sm:$0xff]
  %v7652 = vld [vmem:[%s2 + $0x18] sm:$0xff]
  %v7653 = vld [vmem:[%s3] sm:$0xff]
  %v7654 = vld [vmem:[%s3 + $0x8] sm:$0xff]
  %v7655 = vld [vmem:[%s3 + $0x10] sm:$0xff]
  %v7656 = vld [vmem:[%s3 + $0x18] sm:$0xff]
  %v7657 = vld [vmem:[%s4] sm:$0xff]
  %v7658 = vld [vmem:[%s4 + $0x8] sm:$0xff]
  %v7659 = vld [vmem:[%s4 + $0x10] sm:$0xff]
  %v7660 = vld [vmem:[%s4 + $0x18] sm:$0xff]
  %v7661 = vld [vmem:[%s5] sm:$0xff]
  %v7662 = vld [vmem:[%s5 + $0x8] sm:$0xff]
  %v7663 = vld [vmem:[%s5 + $0x10] sm:$0xff]
  %v7664 = vld [vmem:[%s5 + $0x18] sm:$0xff]
  %v7665 = vld [vmem:[%s6] sm:$0xff]
  %v7666 = vld [vmem:[%s6 + $0x8] sm:$0xff]
  %v7667 = vld [vmem:[%s6 + $0x10] sm:$0xff]
  %v7668 = vld [vmem:[%s6 + $0x18] sm:$0xff]
  %v7669 = vld [vmem:[%s7] sm:$0xff]
  %v7670 = vld [vmem:[%s7 + $0x8] sm:$0xff]
  %v7671 = vld [vmem:[%s7 + $0x10] sm:$0xff]
  %v7672 = vld [vmem:[%s7 + $0x18] sm:$0xff]
  %v7673 = vld [vmem:[%s8] sm:$0x1]
  %v7674 = vld [vmem:[%s9] sm:$0x1]
  %v7675 = vld [vmem:[%s10] sm:$0x1]
  %v7676 = vld [vmem:[%s11] sm:$0x1]
  %7677 = vmatprep.subr.mxu0 0.0
  %7678 = vmatpush1.msra.mxu0 0.0
  %7679 = vmatprep.subr.mxu0 0.0
  %7680 = vmatpush1.msra.mxu0 0.0
  %7681 = vmatprep.subr.mxu0 0.0
  %7682 = vmatpush1.msra.mxu0 0.0
  %7683 = vmatprep.subr.mxu0 0.0
  %7684 = vmatpush1.msra.mxu0 0.0
  %7685 = vmatprep.subr.mxu0 0.0
  %7686 = vmatpush1.msra.mxu0 0.0
  %7687 = vmatprep.subr.mxu0 0.0
  %7688 = vmatpush1.msra.mxu0 0.0
  %7689 = vmatprep.subr.mxu0 0.0
  %7690 = vmatpush1.msra.mxu0 0.0
  %7691 = vmatprep.subr.mxu0 0.0
  %7692 = vmatpush1.msra.mxu0 0.0
  %7693 = vmatprep.subr.mxu0 0.0
  %7694 = vmatpush1.msra.mxu0 0.0
  %7695 = vmatprep.subr.mxu0 0.0
  %7696 = vmatpush1.msra.mxu0 0.0
  %7697 = vmatprep.subr.mxu0 0.0
  %7698 = vmatpush1.msra.mxu0 0.0
  %7699 = vmatprep.subr.mxu0 0.0
  %7700 = vmatpush1.msra.mxu0 0.0
  %7701 = vmatprep.subr.mxu0 0.0
  %7702 = vmatpush1.msra.mxu0 %v7664
  %7703 = vmatprep.subr.mxu0 0.0
  %7704 = vmatpush1.msra.mxu0 %v7663
  %7705 = vmatprep.subr.mxu0 0.0
  %7706 = vmatpush1.msra.mxu0 %v7662
  %7707 = vmatprep.subr.mxu0 0.0
  %7708 = vmatpush1.msra.mxu0 %v7661
  %7709 = vmatprep.subr.mxu0 0.0
  %7710 = vmatpush2.msra.mxu0 0.0
  %7711 = vmatprep.subr.mxu0 0.0
  %7712 = vmatpush2.msra.mxu0 0.0
  %7713 = vmatprep.subr.mxu0 0.0
  %7714 = vmatpush2.msra.mxu0 0.0
  %7715 = vmatprep.subr.mxu0 0.0
  %7716 = vmatpush2.msra.mxu0 0.0
  %7717 = vmatprep.subr.mxu0 0.0
  %7718 = vmatpush2.msra.mxu0 0.0
  %7719 = vmatprep.subr.mxu0 0.0
  %7720 = vmatpush2.msra.mxu0 0.0
  %7721 = vmatprep.subr.mxu0 0.0
  %7722 = vmatpush2.msra.mxu0 0.0
  %7723 = vmatprep.subr.mxu0 0.0
  %7724 = vmatpush2.msra.mxu0 0.0
  %7725 = vmatprep.subr.mxu0 0.0
  %7726 = vmatpush2.msra.mxu0 0.0
  %7727 = vmatprep.subr.mxu0 0.0
  %7728 = vmatpush2.msra.mxu0 0.0
  %7729 = vmatprep.subr.mxu0 0.0
  %7730 = vmatpush2.msra.mxu0 0.0
  %7731 = vmatprep.subr.mxu0 0.0
  %7732 = vmatpush2.msra.mxu0 0.0
  %7733 = vmatprep.subr.mxu0 0.0
  %7734 = vmatpush2.msra.mxu0 0.0
  %7735 = vmatprep.subr.mxu0 0.0
  %7736 = vmatpush2.msra.mxu0 0.0
  %7737 = vmatprep.subr.mxu0 0.0
  %7738 = vmatpush2.msra.mxu0 0.0
  %7739 = vmatprep.subr.mxu0 0.0
  %7740 = vmatpush2.msra.mxu0 0.0
  %7741 = vmatprep.mubr.f32.mxu0 0.0
  %7742 = vmatmul.mubr.f32.gmra.mxu0 %v7164
  %v7743 = vpop.f32.mrf.mxu0
  %v7744 = vadd.f32 0.0, %v7743
  %v7745 = vpop.f32.mrf.mxu0
  %7746 = vdwg.mxu0
  %v7748 = vsel %vm111, %v7648, 0
  %7750 = vmatprep.subr.mxu0 0.0
  %7751 = vmatpush1.msra.mxu0 0.0
  %7752 = vmatprep.subr.mxu0 0.0
  %7753 = vmatpush1.msra.mxu0 0.0
  %7754 = vmatprep.subr.mxu0 0.0
  %7755 = vmatpush1.msra.mxu0 0.0
  %7756 = vmatprep.subr.mxu0 0.0
  %7757 = vmatpush1.msra.mxu0 0.0
  %7758 = vmatprep.subr.mxu0 0.0
  %7759 = vmatpush1.msra.mxu0 0.0
  %7760 = vmatprep.subr.mxu0 0.0
  %7761 = vmatpush1.msra.mxu0 0.0
  %7762 = vmatprep.subr.mxu0 0.0
  %7763 = vmatpush1.msra.mxu0 0.0
  %7764 = vmatprep.subr.mxu0 0.0
  %7765 = vmatpush1.msra.mxu0 0.0
  %7766 = vmatprep.subr.mxu0 0.0
  %7767 = vmatpush1.msra.mxu0 0.0
  %7768 = vmatprep.subr.mxu0 0.0
  %7769 = vmatpush1.msra.mxu0 0.0
  %7770 = vmatprep.subr.mxu0 0.0
  %7771 = vmatpush1.msra.mxu0 0.0
  %7772 = vmatprep.subr.mxu0 0.0
  %7773 = vmatpush1.msra.mxu0 0.0
  %7774 = vmatprep.subr.mxu0 0.0
  %7775 = vmatpush1.msra.mxu0 %v7652
  %7776 = vmatprep.subr.mxu0 0.0
  %7777 = vmatpush1.msra.mxu0 %v7651
  %7778 = vmatprep.subr.mxu0 0.0
  %7779 = vmatpush1.msra.mxu0 %v7650
  %7780 = vmatprep.subr.mxu0 0.0
  %7781 = vmatpush1.msra.mxu0 %v7649
  %7782 = vmatprep.subr.mxu0 0.0
  %7783 = vmatpush2.msra.mxu0 0.0
  %7784 = vmatprep.subr.mxu0 0.0
  %7785 = vmatpush2.msra.mxu0 0.0
  %7786 = vmatprep.subr.mxu0 0.0
  %7787 = vmatpush2.msra.mxu0 0.0
  %7788 = vmatprep.subr.mxu0 0.0
  %7789 = vmatpush2.msra.mxu0 0.0
  %7790 = vmatprep.subr.mxu0 0.0
  %7791 = vmatpush2.msra.mxu0 0.0
  %7792 = vmatprep.subr.mxu0 0.0
  %7793 = vmatpush2.msra.mxu0 0.0
  %7794 = vmatprep.subr.mxu0 0.0
  %7795 = vmatpush2.msra.mxu0 0.0
  %7796 = vmatprep.subr.mxu0 0.0
  %7797 = vmatpush2.msra.mxu0 0.0
  %7798 = vmatprep.subr.mxu0 0.0
  %7799 = vmatpush2.msra.mxu0 0.0
  %7800 = vmatprep.subr.mxu0 0.0
  %7801 = vmatpush2.msra.mxu0 0.0
  %7802 = vmatprep.subr.mxu0 0.0
  %7803 = vmatpush2.msra.mxu0 0.0
  %7804 = vmatprep.subr.mxu0 0.0
  %7805 = vmatpush2.msra.mxu0 0.0
  %7806 = vmatprep.subr.mxu0 0.0
  %7807 = vmatpush2.msra.mxu0 0.0
  %7808 = vmatprep.subr.mxu0 0.0
  %7809 = vmatpush2.msra.mxu0 0.0
  %7810 = vmatprep.subr.mxu0 0.0
  %7811 = vmatpush2.msra.mxu0 0.0
  %7812 = vmatprep.subr.mxu0 0.0
  %7813 = vmatpush2.msra.mxu0 0.0
  %7814 = vmatprep.mubr.f32.mxu0 0.0
  %7815 = vmatmul.mubr.f32.gmra.mxu0 %v7748
  %v7816 = vpop.f32.mrf.mxu0
  %v7817 = vadd.f32 %v7744, %v7816
  %v7818 = vpop.f32.mrf.mxu0
  %7819 = vdwg.mxu0
  %v7821 = vlaneseq
  %v7822 = vshrl.u32 %v7821, 7
  %v7823 = vsub.s32 0, %v7822
  %v7824 = vrot.slane %v7673, %v7823
  %v7826 = vadd.f32 %v7817, %v7824
  %7827 = vmatprep.subr.mxu0 0.0
  %7828 = vmatpush1.msra.mxu0 0.0
  %7829 = vmatprep.subr.mxu0 0.0
  %7830 = vmatpush1.msra.mxu0 0.0
  %7831 = vmatprep.subr.mxu0 0.0
  %7832 = vmatpush1.msra.mxu0 0.0
  %7833 = vmatprep.subr.mxu0 0.0
  %7834 = vmatpush1.msra.mxu0 0.0
  %7835 = vmatprep.subr.mxu0 0.0
  %7836 = vmatpush1.msra.mxu0 0.0
  %7837 = vmatprep.subr.mxu0 0.0
  %7838 = vmatpush1.msra.mxu0 0.0
  %7839 = vmatprep.subr.mxu0 0.0
  %7840 = vmatpush1.msra.mxu0 0.0
  %7841 = vmatprep.subr.mxu0 0.0
  %7842 = vmatpush1.msra.mxu0 0.0
  %7843 = vmatprep.subr.mxu0 0.0
  %7844 = vmatpush1.msra.mxu0 0.0
  %7845 = vmatprep.subr.mxu0 0.0
  %7846 = vmatpush1.msra.mxu0 0.0
  %7847 = vmatprep.subr.mxu0 0.0
  %7848 = vmatpush1.msra.mxu0 0.0
  %7849 = vmatprep.subr.mxu0 0.0
  %7850 = vmatpush1.msra.mxu0 0.0
  %7851 = vmatprep.subr.mxu0 0.0
  %7852 = vmatpush1.msra.mxu0 %v7668
  %7853 = vmatprep.subr.mxu0 0.0
  %7854 = vmatpush1.msra.mxu0 %v7667
  %7855 = vmatprep.subr.mxu0 0.0
  %7856 = vmatpush1.msra.mxu0 %v7666
  %7857 = vmatprep.subr.mxu0 0.0
  %7858 = vmatpush1.msra.mxu0 %v7665
  %7859 = vmatprep.subr.mxu0 0.0
  %7860 = vmatpush2.msra.mxu0 0.0
  %7861 = vmatprep.subr.mxu0 0.0
  %7862 = vmatpush2.msra.mxu0 0.0
  %7863 = vmatprep.subr.mxu0 0.0
  %7864 = vmatpush2.msra.mxu0 0.0
  %7865 = vmatprep.subr.mxu0 0.0
  %7866 = vmatpush2.msra.mxu0 0.0
  %7867 = vmatprep.subr.mxu0 0.0
  %7868 = vmatpush2.msra.mxu0 0.0
  %7869 = vmatprep.subr.mxu0 0.0
  %7870 = vmatpush2.msra.mxu0 0.0
  %7871 = vmatprep.subr.mxu0 0.0
  %7872 = vmatpush2.msra.mxu0 0.0
  %7873 = vmatprep.subr.mxu0 0.0
  %7874 = vmatpush2.msra.mxu0 0.0
  %7875 = vmatprep.subr.mxu0 0.0
  %7876 = vmatpush2.msra.mxu0 0.0
  %7877 = vmatprep.subr.mxu0 0.0
  %7878 = vmatpush2.msra.mxu0 0.0
  %7879 = vmatprep.subr.mxu0 0.0
  %7880 = vmatpush2.msra.mxu0 0.0
  %7881 = vmatprep.subr.mxu0 0.0
  %7882 = vmatpush2.msra.mxu0 0.0
  %7883 = vmatprep.subr.mxu0 0.0
  %7884 = vmatpush2.msra.mxu0 0.0
  %7885 = vmatprep.subr.mxu0 0.0
  %7886 = vmatpush2.msra.mxu0 0.0
  %7887 = vmatprep.subr.mxu0 0.0
  %7888 = vmatpush2.msra.mxu0 0.0
  %7889 = vmatprep.subr.mxu0 0.0
  %7890 = vmatpush2.msra.mxu0 0.0
  %7891 = vmatprep.mubr.f32.mxu0 0.0
  %7892 = vmatmul.mubr.f32.gmra.mxu0 %v7164
  %v7893 = vpop.f32.mrf.mxu0
  %v7894 = vadd.f32 0.0, %v7893
  %v7895 = vpop.f32.mrf.mxu0
  %7896 = vdwg.mxu0
  %7897 = vmatprep.subr.mxu0 0.0
  %7898 = vmatpush1.msra.mxu0 0.0
  %7899 = vmatprep.subr.mxu0 0.0
  %7900 = vmatpush1.msra.mxu0 0.0
  %7901 = vmatprep.subr.mxu0 0.0
  %7902 = vmatpush1.msra.mxu0 0.0
  %7903 = vmatprep.subr.mxu0 0.0
  %7904 = vmatpush1.msra.mxu0 0.0
  %7905 = vmatprep.subr.mxu0 0.0
  %7906 = vmatpush1.msra.mxu0 0.0
  %7907 = vmatprep.subr.mxu0 0.0
  %7908 = vmatpush1.msra.mxu0 0.0
  %7909 = vmatprep.subr.mxu0 0.0
  %7910 = vmatpush1.msra.mxu0 0.0
  %7911 = vmatprep.subr.mxu0 0.0
  %7912 = vmatpush1.msra.mxu0 0.0
  %7913 = vmatprep.subr.mxu0 0.0
  %7914 = vmatpush1.msra.mxu0 0.0
  %7915 = vmatprep.subr.mxu0 0.0
  %7916 = vmatpush1.msra.mxu0 0.0
  %7917 = vmatprep.subr.mxu0 0.0
  %7918 = vmatpush1.msra.mxu0 0.0
  %7919 = vmatprep.subr.mxu0 0.0
  %7920 = vmatpush1.msra.mxu0 0.0
  %7921 = vmatprep.subr.mxu0 0.0
  %7922 = vmatpush1.msra.mxu0 %v7656
  %7923 = vmatprep.subr.mxu0 0.0
  %7924 = vmatpush1.msra.mxu0 %v7655
  %7925 = vmatprep.subr.mxu0 0.0
  %7926 = vmatpush1.msra.mxu0 %v7654
  %7927 = vmatprep.subr.mxu0 0.0
  %7928 = vmatpush1.msra.mxu0 %v7653
  %7929 = vmatprep.subr.mxu0 0.0
  %7930 = vmatpush2.msra.mxu0 0.0
  %7931 = vmatprep.subr.mxu0 0.0
  %7932 = vmatpush2.msra.mxu0 0.0
  %7933 = vmatprep.subr.mxu0 0.0
  %7934 = vmatpush2.msra.mxu0 0.0
  %7935 = vmatprep.subr.mxu0 0.0
  %7936 = vmatpush2.msra.mxu0 0.0
  %7937 = vmatprep.subr.mxu0 0.0
  %7938 = vmatpush2.msra.mxu0 0.0
  %7939 = vmatprep.subr.mxu0 0.0
  %7940 = vmatpush2.msra.mxu0 0.0
  %7941 = vmatprep.subr.mxu0 0.0
  %7942 = vmatpush2.msra.mxu0 0.0
  %7943 = vmatprep.subr.mxu0 0.0
  %7944 = vmatpush2.msra.mxu0 0.0
  %7945 = vmatprep.subr.mxu0 0.0
  %7946 = vmatpush2.msra.mxu0 0.0
  %7947 = vmatprep.subr.mxu0 0.0
  %7948 = vmatpush2.msra.mxu0 0.0
  %7949 = vmatprep.subr.mxu0 0.0
  %7950 = vmatpush2.msra.mxu0 0.0
  %7951 = vmatprep.subr.mxu0 0.0
  %7952 = vmatpush2.msra.mxu0 0.0
  %7953 = vmatprep.subr.mxu0 0.0
  %7954 = vmatpush2.msra.mxu0 0.0
  %7955 = vmatprep.subr.mxu0 0.0
  %7956 = vmatpush2.msra.mxu0 0.0
  %7957 = vmatprep.subr.mxu0 0.0
  %7958 = vmatpush2.msra.mxu0 0.0
  %7959 = vmatprep.subr.mxu0 0.0
  %7960 = vmatpush2.msra.mxu0 0.0
  %7961 = vmatprep.mubr.f32.mxu0 0.0
  %7962 = vmatmul.mubr.f32.gmra.mxu0 %v7748
  %v7963 = vpop.f32.mrf.mxu0
  %v7964 = vadd.f32 %v7894, %v7963
  %v7965 = vpop.f32.mrf.mxu0
  %7966 = vdwg.mxu0
  %v7968 = vlaneseq
  %v7969 = vshrl.u32 %v7968, 7
  %v7970 = vsub.s32 0, %v7969
  %v7971 = vrot.slane %v7674, %v7970
  %v7973 = vadd.f32 %v7964, %v7971
  %v7975 = vlaneseq
  %v7976 = vshrl.u32 %v7975, 7
  %v7977 = vsub.s32 0, %v7976
  %v7978 = vrot.slane %v7675, %v7977
  %7980 = vmatprep.subr.mxu0 0.0
  %7981 = vmatpush1.msra.mxu0 0.0
  %7982 = vmatprep.subr.mxu0 0.0
  %7983 = vmatpush1.msra.mxu0 0.0
  %7984 = vmatprep.subr.mxu0 0.0
  %7985 = vmatpush1.msra.mxu0 0.0
  %7986 = vmatprep.subr.mxu0 0.0
  %7987 = vmatpush1.msra.mxu0 0.0
  %7988 = vmatprep.subr.mxu0 0.0
  %7989 = vmatpush1.msra.mxu0 0.0
  %7990 = vmatprep.subr.mxu0 0.0
  %7991 = vmatpush1.msra.mxu0 0.0
  %7992 = vmatprep.subr.mxu0 0.0
  %7993 = vmatpush1.msra.mxu0 0.0
  %7994 = vmatprep.subr.mxu0 0.0
  %7995 = vmatpush1.msra.mxu0 0.0
  %7996 = vmatprep.subr.mxu0 0.0
  %7997 = vmatpush1.msra.mxu0 0.0
  %7998 = vmatprep.subr.mxu0 0.0
  %7999 = vmatpush1.msra.mxu0 0.0
  %8000 = vmatprep.subr.mxu0 0.0
  %8001 = vmatpush1.msra.mxu0 0.0
  %8002 = vmatprep.subr.mxu0 0.0
  %8003 = vmatpush1.msra.mxu0 0.0
  %8004 = vmatprep.subr.mxu0 0.0
  %8005 = vmatpush1.msra.mxu0 %v7660
  %8006 = vmatprep.subr.mxu0 0.0
  %8007 = vmatpush1.msra.mxu0 %v7659
  %8008 = vmatprep.subr.mxu0 0.0
  %8009 = vmatpush1.msra.mxu0 %v7658
  %8010 = vmatprep.subr.mxu0 0.0
  %8011 = vmatpush1.msra.mxu0 %v7657
  %8012 = vmatprep.subr.mxu0 0.0
  %8013 = vmatpush2.msra.mxu0 0.0
  %8014 = vmatprep.subr.mxu0 0.0
  %8015 = vmatpush2.msra.mxu0 0.0
  %8016 = vmatprep.subr.mxu0 0.0
  %8017 = vmatpush2.msra.mxu0 0.0
  %8018 = vmatprep.subr.mxu0 0.0
  %8019 = vmatpush2.msra.mxu0 0.0
  %8020 = vmatprep.subr.mxu0 0.0
  %8021 = vmatpush2.msra.mxu0 0.0
  %8022 = vmatprep.subr.mxu0 0.0
  %8023 = vmatpush2.msra.mxu0 0.0
  %8024 = vmatprep.subr.mxu0 0.0
  %8025 = vmatpush2.msra.mxu0 0.0
  %8026 = vmatprep.subr.mxu0 0.0
  %8027 = vmatpush2.msra.mxu0 0.0
  %8028 = vmatprep.subr.mxu0 0.0
  %8029 = vmatpush2.msra.mxu0 0.0
  %8030 = vmatprep.subr.mxu0 0.0
  %8031 = vmatpush2.msra.mxu0 0.0
  %8032 = vmatprep.subr.mxu0 0.0
  %8033 = vmatpush2.msra.mxu0 0.0
  %8034 = vmatprep.subr.mxu0 0.0
  %8035 = vmatpush2.msra.mxu0 0.0
  %8036 = vmatprep.subr.mxu0 0.0
  %8037 = vmatpush2.msra.mxu0 0.0
  %8038 = vmatprep.subr.mxu0 0.0
  %8039 = vmatpush2.msra.mxu0 0.0
  %8040 = vmatprep.subr.mxu0 0.0
  %8041 = vmatpush2.msra.mxu0 0.0
  %8042 = vmatprep.subr.mxu0 0.0
  %8043 = vmatpush2.msra.mxu0 0.0
  %8044 = vmatprep.mubr.f32.mxu0 0.0
  %8045 = vmatmul.mubr.f32.gmra.mxu0 %v7748
  %v8046 = vpop.f32.mrf.mxu0
  %v8047 = vadd.f32 %v7978, %v8046
  %v8048 = vpop.f32.mrf.mxu0
  %8049 = vdwg.mxu0
  %v8051 = vlaneseq
  %v8052 = vshrl.u32 %v8051, 7
  %v8053 = vsub.s32 0, %v8052
  %v8054 = vrot.slane %v7676, %v8053
  %8056 = vmatprep.subr.mxu0 0.0
  %8057 = vmatpush1.msra.mxu0 0.0
  %8058 = vmatprep.subr.mxu0 0.0
  %8059 = vmatpush1.msra.mxu0 0.0
  %8060 = vmatprep.subr.mxu0 0.0
  %8061 = vmatpush1.msra.mxu0 0.0
  %8062 = vmatprep.subr.mxu0 0.0
  %8063 = vmatpush1.msra.mxu0 0.0
  %8064 = vmatprep.subr.mxu0 0.0
  %8065 = vmatpush1.msra.mxu0 0.0
  %8066 = vmatprep.subr.mxu0 0.0
  %8067 = vmatpush1.msra.mxu0 0.0
  %8068 = vmatprep.subr.mxu0 0.0
  %8069 = vmatpush1.msra.mxu0 0.0
  %8070 = vmatprep.subr.mxu0 0.0
  %8071 = vmatpush1.msra.mxu0 0.0
  %8072 = vmatprep.subr.mxu0 0.0
  %8073 = vmatpush1.msra.mxu0 0.0
  %8074 = vmatprep.subr.mxu0 0.0
  %8075 = vmatpush1.msra.mxu0 0.0
  %8076 = vmatprep.subr.mxu0 0.0
  %8077 = vmatpush1.msra.mxu0 0.0
  %8078 = vmatprep.subr.mxu0 0.0
  %8079 = vmatpush1.msra.mxu0 0.0
  %8080 = vmatprep.subr.mxu0 0.0
  %8081 = vmatpush1.msra.mxu0 %v7672
  %8082 = vmatprep.subr.mxu0 0.0
  %8083 = vmatpush1.msra.mxu0 %v7671
  %8084 = vmatprep.subr.mxu0 0.0
  %8085 = vmatpush1.msra.mxu0 %v7670
  %8086 = vmatprep.subr.mxu0 0.0
  %8087 = vmatpush1.msra.mxu0 %v7669
  %8088 = vmatprep.subr.mxu0 0.0
  %8089 = vmatpush2.msra.mxu0 0.0
  %8090 = vmatprep.subr.mxu0 0.0
  %8091 = vmatpush2.msra.mxu0 0.0
  %8092 = vmatprep.subr.mxu0 0.0
  %8093 = vmatpush2.msra.mxu0 0.0
  %8094 = vmatprep.subr.mxu0 0.0
  %8095 = vmatpush2.msra.mxu0 0.0
  %8096 = vmatprep.subr.mxu0 0.0
  %8097 = vmatpush2.msra.mxu0 0.0
  %8098 = vmatprep.subr.mxu0 0.0
  %8099 = vmatpush2.msra.mxu0 0.0
  %8100 = vmatprep.subr.mxu0 0.0
  %8101 = vmatpush2.msra.mxu0 0.0
  %8102 = vmatprep.subr.mxu0 0.0
  %8103 = vmatpush2.msra.mxu0 0.0
  %8104 = vmatprep.subr.mxu0 0.0
  %8105 = vmatpush2.msra.mxu0 0.0
  %8106 = vmatprep.subr.mxu0 0.0
  %8107 = vmatpush2.msra.mxu0 0.0
  %8108 = vmatprep.subr.mxu0 0.0
  %8109 = vmatpush2.msra.mxu0 0.0
  %8110 = vmatprep.subr.mxu0 0.0
  %8111 = vmatpush2.msra.mxu0 0.0
  %8112 = vmatprep.subr.mxu0 0.0
  %8113 = vmatpush2.msra.mxu0 0.0
  %8114 = vmatprep.subr.mxu0 0.0
  %8115 = vmatpush2.msra.mxu0 0.0
  %8116 = vmatprep.subr.mxu0 0.0
  %8117 = vmatpush2.msra.mxu0 0.0
  %8118 = vmatprep.subr.mxu0 0.0
  %8119 = vmatpush2.msra.mxu0 0.0
  %8120 = vmatprep.mubr.f32.mxu0 0.0
  %8121 = vmatmul.mubr.f32.gmra.mxu0 %v7164
  %v8122 = vpop.f32.mrf.mxu0
  %v8123 = vadd.f32 %v8054, %v8122
  %v8124 = vpop.f32.mrf.mxu0
  %8125 = vdwg.mxu0
  %v8126 = vxor.u32 %v7826, 2147483648
  %v8127 = vmul.f32 %v8126, 1.442695
  %v8128 = vpow.pop %v8127
  %v8129 = vadd.f32 %v8128, 1.0
  %v8130 = vrcp.pop %v8129
  %v8131 = vmul.f32 1.0, %v8130
  %v8132 = vxor.u32 %v7973, 2147483648
  %v8133 = vmul.f32 %v8132, 1.442695
  %v8134 = vpow.pop %v8133
  %v8135 = vadd.f32 %v8134, 1.0
  %v8136 = vrcp.pop %v8135
  %v8137 = vmul.f32 1.0, %v8136
  %v8138 = vmul.f32 %v8131, %v8123
  %v8139 = vadd.f32 %v8047, %v8138
  %v8140 = vtanh.pop %v8139
  %v8141 = vsub.f32 1.0, %v8137
  %v8142 = vmul.f32 %v8141, %v8140
  %v8143 = vmul.f32 %v8137, %v7064
  %v8144 = vadd.f32 %v8142, %v8143
  %v8145 = vld [vmem:[%s12] sm:$0xff]
  %v8146 = vld [vmem:[%s12 + $0x8] sm:$0xff]
  %v8147 = vld [vmem:[%s12 + $0x10] sm:$0xff]
  %v8148 = vld [vmem:[%s12 + $0x18] sm:$0xff]
  %v8149 = vld [vmem:[%s13] sm:$0xff]
  %v8150 = vld [vmem:[%s13 + $0x8] sm:$0xff]
  %v8151 = vld [vmem:[%s13 + $0x10] sm:$0xff]
  %v8152 = vld [vmem:[%s13 + $0x18] sm:$0xff]
  %v8153 = vld [vmem:[%s14] sm:$0xff]
  %v8154 = vld [vmem:[%s14 + $0x8] sm:$0xff]
  %v8155 = vld [vmem:[%s14 + $0x10] sm:$0xff]
  %v8156 = vld [vmem:[%s14 + $0x18] sm:$0xff]
  %v8157 = vld [vmem:[%s15] sm:$0xff]
  %v8158 = vld [vmem:[%s15 + $0x8] sm:$0xff]
  %v8159 = vld [vmem:[%s15 + $0x10] sm:$0xff]
  %v8160 = vld [vmem:[%s15 + $0x18] sm:$0xff]
  %v8161 = vld [vmem:[%s16] sm:$0xff]
  %v8162 = vld [vmem:[%s16 + $0x8] sm:$0xff]
  %v8163 = vld [vmem:[%s16 + $0x10] sm:$0xff]
  %v8164 = vld [vmem:[%s16 + $0x18] sm:$0xff]
  %v8165 = vld [vmem:[%s17] sm:$0xff]
  %v8166 = vld [vmem:[%s17 + $0x8] sm:$0xff]
  %v8167 = vld [vmem:[%s17 + $0x10] sm:$0xff]
  %v8168 = vld [vmem:[%s17 + $0x18] sm:$0xff]
  %v8169 = vld [vmem:[%s18] sm:$0x1]
  %v8170 = vld [vmem:[%s19] sm:$0x1]
  %v8171 = vld [vmem:[%s20] sm:$0x1]
  %v8172 = vld [vmem:[%s21] sm:$0x1]
  %8173 = vmatprep.subr.mxu0 0.0
  %8174 = vmatpush1.msra.mxu0 0.0
  %8175 = vmatprep.subr.mxu0 0.0
  %8176 = vmatpush1.msra.mxu0 0.0
  %8177 = vmatprep.subr.mxu0 0.0
  %8178 = vmatpush1.msra.mxu0 0.0
  %8179 = vmatprep.subr.mxu0 0.0
  %8180 = vmatpush1.msra.mxu0 0.0
  %8181 = vmatprep.subr.mxu0 0.0
  %8182 = vmatpush1.msra.mxu0 0.0
  %8183 = vmatprep.subr.mxu0 0.0
  %8184 = vmatpush1.msra.mxu0 0.0
  %8185 = vmatprep.subr.mxu0 0.0
  %8186 = vmatpush1.msra.mxu0 0.0
  %8187 = vmatprep.subr.mxu0 0.0
  %8188 = vmatpush1.msra.mxu0 0.0
  %8189 = vmatprep.subr.mxu0 0.0
  %8190 = vmatpush1.msra.mxu0 0.0
  %8191 = vmatprep.subr.mxu0 0.0
  %8192 = vmatpush1.msra.mxu0 0.0
  %8193 = vmatprep.subr.mxu0 0.0
  %8194 = vmatpush1.msra.mxu0 0.0
  %8195 = vmatprep.subr.mxu0 0.0
  %8196 = vmatpush1.msra.mxu0 0.0
  %8197 = vmatprep.subr.mxu0 0.0
  %8198 = vmatpush1.msra.mxu0 %v8160
  %8199 = vmatprep.subr.mxu0 0.0
  %8200 = vmatpush1.msra.mxu0 %v8159
  %8201 = vmatprep.subr.mxu0 0.0
  %8202 = vmatpush1.msra.mxu0 %v8158
  %8203 = vmatprep.subr.mxu0 0.0
  %8204 = vmatpush1.msra.mxu0 %v8157
  %8205 = vmatprep.subr.mxu0 0.0
  %8206 = vmatpush2.msra.mxu0 0.0
  %8207 = vmatprep.subr.mxu0 0.0
  %8208 = vmatpush2.msra.mxu0 0.0
  %8209 = vmatprep.subr.mxu0 0.0
  %8210 = vmatpush2.msra.mxu0 0.0
  %8211 = vmatprep.subr.mxu0 0.0
  %8212 = vmatpush2.msra.mxu0 0.0
  %8213 = vmatprep.subr.mxu0 0.0
  %8214 = vmatpush2.msra.mxu0 0.0
  %8215 = vmatprep.subr.mxu0 0.0
  %8216 = vmatpush2.msra.mxu0 0.0
  %8217 = vmatprep.subr.mxu0 0.0
  %8218 = vmatpush2.msra.mxu0 0.0
  %8219 = vmatprep.subr.mxu0 0.0
  %8220 = vmatpush2.msra.mxu0 0.0
  %8221 = vmatprep.subr.mxu0 0.0
  %8222 = vmatpush2.msra.mxu0 0.0
  %8223 = vmatprep.subr.mxu0 0.0
  %8224 = vmatpush2.msra.mxu0 0.0
  %8225 = vmatprep.subr.mxu0 0.0
  %8226 = vmatpush2.msra.mxu0 0.0
  %8227 = vmatprep.subr.mxu0 0.0
  %8228 = vmatpush2.msra.mxu0 0.0
  %8229 = vmatprep.subr.mxu0 0.0
  %8230 = vmatpush2.msra.mxu0 0.0
  %8231 = vmatprep.subr.mxu0 0.0
  %8232 = vmatpush2.msra.mxu0 0.0
  %8233 = vmatprep.subr.mxu0 0.0
  %8234 = vmatpush2.msra.mxu0 0.0
  %8235 = vmatprep.subr.mxu0 0.0
  %8236 = vmatpush2.msra.mxu0 0.0
  %8237 = vmatprep.mubr.f32.mxu0 0.0
  %8238 = vmatmul.mubr.f32.gmra.mxu0 %v7573
  %v8239 = vpop.f32.mrf.mxu0
  %v8240 = vadd.f32 0.0, %v8239
  %v8241 = vpop.f32.mrf.mxu0
  %8242 = vdwg.mxu0
  %v8244 = vsel %vm111, %v8144, 0
  %8246 = vmatprep.subr.mxu0 0.0
  %8247 = vmatpush1.msra.mxu0 0.0
  %8248 = vmatprep.subr.mxu0 0.0
  %8249 = vmatpush1.msra.mxu0 0.0
  %8250 = vmatprep.subr.mxu0 0.0
  %8251 = vmatpush1.msra.mxu0 0.0
  %8252 = vmatprep.subr.mxu0 0.0
  %8253 = vmatpush1.msra.mxu0 0.0
  %8254 = vmatprep.subr.mxu0 0.0
  %8255 = vmatpush1.msra.mxu0 0.0
  %8256 = vmatprep.subr.mxu0 0.0
  %8257 = vmatpush1.msra.mxu0 0.0
  %8258 = vmatprep.subr.mxu0 0.0
  %8259 = vmatpush1.msra.mxu0 0.0
  %8260 = vmatprep.subr.mxu0 0.0
  %8261 = vmatpush1.msra.mxu0 0.0
  %8262 = vmatprep.subr.mxu0 0.0
  %8263 = vmatpush1.msra.mxu0 0.0
  %8264 = vmatprep.subr.mxu0 0.0
  %8265 = vmatpush1.msra.mxu0 0.0
  %8266 = vmatprep.subr.mxu0 0.0
  %8267 = vmatpush1.msra.mxu0 0.0
  %8268 = vmatprep.subr.mxu0 0.0
  %8269 = vmatpush1.msra.mxu0 0.0
  %8270 = vmatprep.subr.mxu0 0.0
  %8271 = vmatpush1.msra.mxu0 %v8148
  %8272 = vmatprep.subr.mxu0 0.0
  %8273 = vmatpush1.msra.mxu0 %v8147
  %8274 = vmatprep.subr.mxu0 0.0
  %8275 = vmatpush1.msra.mxu0 %v8146
  %8276 = vmatprep.subr.mxu0 0.0
  %8277 = vmatpush1.msra.mxu0 %v8145
  %8278 = vmatprep.subr.mxu0 0.0
  %8279 = vmatpush2.msra.mxu0 0.0
  %8280 = vmatprep.subr.mxu0 0.0
  %8281 = vmatpush2.msra.mxu0 0.0
  %8282 = vmatprep.subr.mxu0 0.0
  %8283 = vmatpush2.msra.mxu0 0.0
  %8284 = vmatprep.subr.mxu0 0.0
  %8285 = vmatpush2.msra.mxu0 0.0
  %8286 = vmatprep.subr.mxu0 0.0
  %8287 = vmatpush2.msra.mxu0 0.0
  %8288 = vmatprep.subr.mxu0 0.0
  %8289 = vmatpush2.msra.mxu0 0.0
  %8290 = vmatprep.subr.mxu0 0.0
  %8291 = vmatpush2.msra.mxu0 0.0
  %8292 = vmatprep.subr.mxu0 0.0
  %8293 = vmatpush2.msra.mxu0 0.0
  %8294 = vmatprep.subr.mxu0 0.0
  %8295 = vmatpush2.msra.mxu0 0.0
  %8296 = vmatprep.subr.mxu0 0.0
  %8297 = vmatpush2.msra.mxu0 0.0
  %8298 = vmatprep.subr.mxu0 0.0
  %8299 = vmatpush2.msra.mxu0 0.0
  %8300 = vmatprep.subr.mxu0 0.0
  %8301 = vmatpush2.msra.mxu0 0.0
  %8302 = vmatprep.subr.mxu0 0.0
  %8303 = vmatpush2.msra.mxu0 0.0
  %8304 = vmatprep.subr.mxu0 0.0
  %8305 = vmatpush2.msra.mxu0 0.0
  %8306 = vmatprep.subr.mxu0 0.0
  %8307 = vmatpush2.msra.mxu0 0.0
  %8308 = vmatprep.subr.mxu0 0.0
  %8309 = vmatpush2.msra.mxu0 0.0
  %8310 = vmatprep.mubr.f32.mxu0 0.0
  %8311 = vmatmul.mubr.f32.gmra.mxu0 %v8244
  %v8312 = vpop.f32.mrf.mxu0
  %v8313 = vadd.f32 %v8240, %v8312
  %v8314 = vpop.f32.mrf.mxu0
  %8315 = vdwg.mxu0
  %v8317 = vlaneseq
  %v8318 = vshrl.u32 %v8317, 7
  %v8319 = vsub.s32 0, %v8318
  %v8320 = vrot.slane %v8169, %v8319
  %v8322 = vadd.f32 %v8313, %v8320
  %8323 = vmatprep.subr.mxu0 0.0
  %8324 = vmatpush1.msra.mxu0 0.0
  %8325 = vmatprep.subr.mxu0 0.0
  %8326 = vmatpush1.msra.mxu0 0.0
  %8327 = vmatprep.subr.mxu0 0.0
  %8328 = vmatpush1.msra.mxu0 0.0
  %8329 = vmatprep.subr.mxu0 0.0
  %8330 = vmatpush1.msra.mxu0 0.0
  %8331 = vmatprep.subr.mxu0 0.0
  %8332 = vmatpush1.msra.mxu0 0.0
  %8333 = vmatprep.subr.mxu0 0.0
  %8334 = vmatpush1.msra.mxu0 0.0
  %8335 = vmatprep.subr.mxu0 0.0
  %8336 = vmatpush1.msra.mxu0 0.0
  %8337 = vmatprep.subr.mxu0 0.0
  %8338 = vmatpush1.msra.mxu0 0.0
  %8339 = vmatprep.subr.mxu0 0.0
  %8340 = vmatpush1.msra.mxu0 0.0
  %8341 = vmatprep.subr.mxu0 0.0
  %8342 = vmatpush1.msra.mxu0 0.0
  %8343 = vmatprep.subr.mxu0 0.0
  %8344 = vmatpush1.msra.mxu0 0.0
  %8345 = vmatprep.subr.mxu0 0.0
  %8346 = vmatpush1.msra.mxu0 0.0
  %8347 = vmatprep.subr.mxu0 0.0
  %8348 = vmatpush1.msra.mxu0 %v8164
  %8349 = vmatprep.subr.mxu0 0.0
  %8350 = vmatpush1.msra.mxu0 %v8163
  %8351 = vmatprep.subr.mxu0 0.0
  %8352 = vmatpush1.msra.mxu0 %v8162
  %8353 = vmatprep.subr.mxu0 0.0
  %8354 = vmatpush1.msra.mxu0 %v8161
  %8355 = vmatprep.subr.mxu0 0.0
  %8356 = vmatpush2.msra.mxu0 0.0
  %8357 = vmatprep.subr.mxu0 0.0
  %8358 = vmatpush2.msra.mxu0 0.0
  %8359 = vmatprep.subr.mxu0 0.0
  %8360 = vmatpush2.msra.mxu0 0.0
  %8361 = vmatprep.subr.mxu0 0.0
  %8362 = vmatpush2.msra.mxu0 0.0
  %8363 = vmatprep.subr.mxu0 0.0
  %8364 = vmatpush2.msra.mxu0 0.0
  %8365 = vmatprep.subr.mxu0 0.0
  %8366 = vmatpush2.msra.mxu0 0.0
  %8367 = vmatprep.subr.mxu0 0.0
  %8368 = vmatpush2.msra.mxu0 0.0
  %8369 = vmatprep.subr.mxu0 0.0
  %8370 = vmatpush2.msra.mxu0 0.0
  %8371 = vmatprep.subr.mxu0 0.0
  %8372 = vmatpush2.msra.mxu0 0.0
  %8373 = vmatprep.subr.mxu0 0.0
  %8374 = vmatpush2.msra.mxu0 0.0
  %8375 = vmatprep.subr.mxu0 0.0
  %8376 = vmatpush2.msra.mxu0 0.0
  %8377 = vmatprep.subr.mxu0 0.0
  %8378 = vmatpush2.msra.mxu0 0.0
  %8379 = vmatprep.subr.mxu0 0.0
  %8380 = vmatpush2.msra.mxu0 0.0
  %8381 = vmatprep.subr.mxu0 0.0
  %8382 = vmatpush2.msra.mxu0 0.0
  %8383 = vmatprep.subr.mxu0 0.0
  %8384 = vmatpush2.msra.mxu0 0.0
  %8385 = vmatprep.subr.mxu0 0.0
  %8386 = vmatpush2.msra.mxu0 0.0
  %8387 = vmatprep.mubr.f32.mxu0 0.0
  %8388 = vmatmul.mubr.f32.gmra.mxu0 %v7573
  %v8389 = vpop.f32.mrf.mxu0
  %v8390 = vadd.f32 0.0, %v8389
  %v8391 = vpop.f32.mrf.mxu0
  %8392 = vdwg.mxu0
  %8393 = vmatprep.subr.mxu0 0.0
  %8394 = vmatpush1.msra.mxu0 0.0
  %8395 = vmatprep.subr.mxu0 0.0
  %8396 = vmatpush1.msra.mxu0 0.0
  %8397 = vmatprep.subr.mxu0 0.0
  %8398 = vmatpush1.msra.mxu0 0.0
  %8399 = vmatprep.subr.mxu0 0.0
  %8400 = vmatpush1.msra.mxu0 0.0
  %8401 = vmatprep.subr.mxu0 0.0
  %8402 = vmatpush1.msra.mxu0 0.0
  %8403 = vmatprep.subr.mxu0 0.0
  %8404 = vmatpush1.msra.mxu0 0.0
  %8405 = vmatprep.subr.mxu0 0.0
  %8406 = vmatpush1.msra.mxu0 0.0
  %8407 = vmatprep.subr.mxu0 0.0
  %8408 = vmatpush1.msra.mxu0 0.0
  %8409 = vmatprep.subr.mxu0 0.0
  %8410 = vmatpush1.msra.mxu0 0.0
  %8411 = vmatprep.subr.mxu0 0.0
  %8412 = vmatpush1.msra.mxu0 0.0
  %8413 = vmatprep.subr.mxu0 0.0
  %8414 = vmatpush1.msra.mxu0 0.0
  %8415 = vmatprep.subr.mxu0 0.0
  %8416 = vmatpush1.msra.mxu0 0.0
  %8417 = vmatprep.subr.mxu0 0.0
  %8418 = vmatpush1.msra.mxu0 %v8152
  %8419 = vmatprep.subr.mxu0 0.0
  %8420 = vmatpush1.msra.mxu0 %v8151
  %8421 = vmatprep.subr.mxu0 0.0
  %8422 = vmatpush1.msra.mxu0 %v8150
  %8423 = vmatprep.subr.mxu0 0.0
  %8424 = vmatpush1.msra.mxu0 %v8149
  %8425 = vmatprep.subr.mxu0 0.0
  %8426 = vmatpush2.msra.mxu0 0.0
  %8427 = vmatprep.subr.mxu0 0.0
  %8428 = vmatpush2.msra.mxu0 0.0
  %8429 = vmatprep.subr.mxu0 0.0
  %8430 = vmatpush2.msra.mxu0 0.0
  %8431 = vmatprep.subr.mxu0 0.0
  %8432 = vmatpush2.msra.mxu0 0.0
  %8433 = vmatprep.subr.mxu0 0.0
  %8434 = vmatpush2.msra.mxu0 0.0
  %8435 = vmatprep.subr.mxu0 0.0
  %8436 = vmatpush2.msra.mxu0 0.0
  %8437 = vmatprep.subr.mxu0 0.0
  %8438 = vmatpush2.msra.mxu0 0.0
  %8439 = vmatprep.subr.mxu0 0.0
  %8440 = vmatpush2.msra.mxu0 0.0
  %8441 = vmatprep.subr.mxu0 0.0
  %8442 = vmatpush2.msra.mxu0 0.0
  %8443 = vmatprep.subr.mxu0 0.0
  %8444 = vmatpush2.msra.mxu0 0.0
  %8445 = vmatprep.subr.mxu0 0.0
  %8446 = vmatpush2.msra.mxu0 0.0
  %8447 = vmatprep.subr.mxu0 0.0
  %8448 = vmatpush2.msra.mxu0 0.0
  %8449 = vmatprep.subr.mxu0 0.0
  %8450 = vmatpush2.msra.mxu0 0.0
  %8451 = vmatprep.subr.mxu0 0.0
  %8452 = vmatpush2.msra.mxu0 0.0
  %8453 = vmatprep.subr.mxu0 0.0
  %8454 = vmatpush2.msra.mxu0 0.0
  %8455 = vmatprep.subr.mxu0 0.0
  %8456 = vmatpush2.msra.mxu0 0.0
  %8457 = vmatprep.mubr.f32.mxu0 0.0
  %8458 = vmatmul.mubr.f32.gmra.mxu0 %v8244
  %v8459 = vpop.f32.mrf.mxu0
  %v8460 = vadd.f32 %v8390, %v8459
  %v8461 = vpop.f32.mrf.mxu0
  %8462 = vdwg.mxu0
  %v8464 = vlaneseq
  %v8465 = vshrl.u32 %v8464, 7
  %v8466 = vsub.s32 0, %v8465
  %v8467 = vrot.slane %v8170, %v8466
  %v8469 = vadd.f32 %v8460, %v8467
  %v8471 = vlaneseq
  %v8472 = vshrl.u32 %v8471, 7
  %v8473 = vsub.s32 0, %v8472
  %v8474 = vrot.slane %v8171, %v8473
  %8476 = vmatprep.subr.mxu0 0.0
  %8477 = vmatpush1.msra.mxu0 0.0
  %8478 = vmatprep.subr.mxu0 0.0
  %8479 = vmatpush1.msra.mxu0 0.0
  %8480 = vmatprep.subr.mxu0 0.0
  %8481 = vmatpush1.msra.mxu0 0.0
  %8482 = vmatprep.subr.mxu0 0.0
  %8483 = vmatpush1.msra.mxu0 0.0
  %8484 = vmatprep.subr.mxu0 0.0
  %8485 = vmatpush1.msra.mxu0 0.0
  %8486 = vmatprep.subr.mxu0 0.0
  %8487 = vmatpush1.msra.mxu0 0.0
  %8488 = vmatprep.subr.mxu0 0.0
  %8489 = vmatpush1.msra.mxu0 0.0
  %8490 = vmatprep.subr.mxu0 0.0
  %8491 = vmatpush1.msra.mxu0 0.0
  %8492 = vmatprep.subr.mxu0 0.0
  %8493 = vmatpush1.msra.mxu0 0.0
  %8494 = vmatprep.subr.mxu0 0.0
  %8495 = vmatpush1.msra.mxu0 0.0
  %8496 = vmatprep.subr.mxu0 0.0
  %8497 = vmatpush1.msra.mxu0 0.0
  %8498 = vmatprep.subr.mxu0 0.0
  %8499 = vmatpush1.msra.mxu0 0.0
  %8500 = vmatprep.subr.mxu0 0.0
  %8501 = vmatpush1.msra.mxu0 %v8156
  %8502 = vmatprep.subr.mxu0 0.0
  %8503 = vmatpush1.msra.mxu0 %v8155
  %8504 = vmatprep.subr.mxu0 0.0
  %8505 = vmatpush1.msra.mxu0 %v8154
  %8506 = vmatprep.subr.mxu0 0.0
  %8507 = vmatpush1.msra.mxu0 %v8153
  %8508 = vmatprep.subr.mxu0 0.0
  %8509 = vmatpush2.msra.mxu0 0.0
  %8510 = vmatprep.subr.mxu0 0.0
  %8511 = vmatpush2.msra.mxu0 0.0
  %8512 = vmatprep.subr.mxu0 0.0
  %8513 = vmatpush2.msra.mxu0 0.0
  %8514 = vmatprep.subr.mxu0 0.0
  %8515 = vmatpush2.msra.mxu0 0.0
  %8516 = vmatprep.subr.mxu0 0.0
  %8517 = vmatpush2.msra.mxu0 0.0
  %8518 = vmatprep.subr.mxu0 0.0
  %8519 = vmatpush2.msra.mxu0 0.0
  %8520 = vmatprep.subr.mxu0 0.0
  %8521 = vmatpush2.msra.mxu0 0.0
  %8522 = vmatprep.subr.mxu0 0.0
  %8523 = vmatpush2.msra.mxu0 0.0
  %8524 = vmatprep.subr.mxu0 0.0
  %8525 = vmatpush2.msra.mxu0 0.0
  %8526 = vmatprep.subr.mxu0 0.0
  %8527 = vmatpush2.msra.mxu0 0.0
  %8528 = vmatprep.subr.mxu0 0.0
  %8529 = vmatpush2.msra.mxu0 0.0
  %8530 = vmatprep.subr.mxu0 0.0
  %8531 = vmatpush2.msra.mxu0 0.0
  %8532 = vmatprep.subr.mxu0 0.0
  %8533 = vmatpush2.msra.mxu0 0.0
  %8534 = vmatprep.subr.mxu0 0.0
  %8535 = vmatpush2.msra.mxu0 0.0
  %8536 = vmatprep.subr.mxu0 0.0
  %8537 = vmatpush2.msra.mxu0 0.0
  %8538 = vmatprep.subr.mxu0 0.0
  %8539 = vmatpush2.msra.mxu0 0.0
  %8540 = vmatprep.mubr.f32.mxu0 0.0
  %8541 = vmatmul.mubr.f32.gmra.mxu0 %v8244
  %v8542 = vpop.f32.mrf.mxu0
  %v8543 = vadd.f32 %v8474, %v8542
  %v8544 = vpop.f32.mrf.mxu0
  %8545 = vdwg.mxu0
  %v8547 = vlaneseq
  %v8548 = vshrl.u32 %v8547, 7
  %v8549 = vsub.s32 0, %v8548
  %v8550 = vrot.slane %v8172, %v8549
  %8552 = vmatprep.subr.mxu0 0.0
  %8553 = vmatpush1.msra.mxu0 0.0
  %8554 = vmatprep.subr.mxu0 0.0
  %8555 = vmatpush1.msra.mxu0 0.0
  %8556 = vmatprep.subr.mxu0 0.0
  %8557 = vmatpush1.msra.mxu0 0.0
  %8558 = vmatprep.subr.mxu0 0.0
  %8559 = vmatpush1.msra.mxu0 0.0
  %8560 = vmatprep.subr.mxu0 0.0
  %8561 = vmatpush1.msra.mxu0 0.0
  %8562 = vmatprep.subr.mxu0 0.0
  %8563 = vmatpush1.msra.mxu0 0.0
  %8564 = vmatprep.subr.mxu0 0.0
  %8565 = vmatpush1.msra.mxu0 0.0
  %8566 = vmatprep.subr.mxu0 0.0
  %8567 = vmatpush1.msra.mxu0 0.0
  %8568 = vmatprep.subr.mxu0 0.0
  %8569 = vmatpush1.msra.mxu0 0.0
  %8570 = vmatprep.subr.mxu0 0.0
  %8571 = vmatpush1.msra.mxu0 0.0
  %8572 = vmatprep.subr.mxu0 0.0
  %8573 = vmatpush1.msra.mxu0 0.0
  %8574 = vmatprep.subr.mxu0 0.0
  %8575 = vmatpush1.msra.mxu0 0.0
  %8576 = vmatprep.subr.mxu0 0.0
  %8577 = vmatpush1.msra.mxu0 %v8168
  %8578 = vmatprep.subr.mxu0 0.0
  %8579 = vmatpush1.msra.mxu0 %v8167
  %8580 = vmatprep.subr.mxu0 0.0
  %8581 = vmatpush1.msra.mxu0 %v8166
  %8582 = vmatprep.subr.mxu0 0.0
  %8583 = vmatpush1.msra.mxu0 %v8165
  %8584 = vmatprep.subr.mxu0 0.0
  %8585 = vmatpush2.msra.mxu0 0.0
  %8586 = vmatprep.subr.mxu0 0.0
  %8587 = vmatpush2.msra.mxu0 0.0
  %8588 = vmatprep.subr.mxu0 0.0
  %8589 = vmatpush2.msra.mxu0 0.0
  %8590 = vmatprep.subr.mxu0 0.0
  %8591 = vmatpush2.msra.mxu0 0.0
  %8592 = vmatprep.subr.mxu0 0.0
  %8593 = vmatpush2.msra.mxu0 0.0
  %8594 = vmatprep.subr.mxu0 0.0
  %8595 = vmatpush2.msra.mxu0 0.0
  %8596 = vmatprep.subr.mxu0 0.0
  %8597 = vmatpush2.msra.mxu0 0.0
  %8598 = vmatprep.subr.mxu0 0.0
  %8599 = vmatpush2.msra.mxu0 0.0
  %8600 = vmatprep.subr.mxu0 0.0
  %8601 = vmatpush2.msra.mxu0 0.0
  %8602 = vmatprep.subr.mxu0 0.0
  %8603 = vmatpush2.msra.mxu0 0.0
  %8604 = vmatprep.subr.mxu0 0.0
  %8605 = vmatpush2.msra.mxu0 0.0
  %8606 = vmatprep.subr.mxu0 0.0
  %8607 = vmatpush2.msra.mxu0 0.0
  %8608 = vmatprep.subr.mxu0 0.0
  %8609 = vmatpush2.msra.mxu0 0.0
  %8610 = vmatprep.subr.mxu0 0.0
  %8611 = vmatpush2.msra.mxu0 0.0
  %8612 = vmatprep.subr.mxu0 0.0
  %8613 = vmatpush2.msra.mxu0 0.0
  %8614 = vmatprep.subr.mxu0 0.0
  %8615 = vmatpush2.msra.mxu0 0.0
  %8616 = vmatprep.mubr.f32.mxu0 0.0
  %8617 = vmatmul.mubr.f32.gmra.mxu0 %v7573
  %v8618 = vpop.f32.mrf.mxu0
  %v8619 = vadd.f32 %v8550, %v8618
  %v8620 = vpop.f32.mrf.mxu0
  %8621 = vdwg.mxu0
  %v8622 = vxor.u32 %v8322, 2147483648
  %v8623 = vmul.f32 %v8622, 1.442695
  %v8624 = vpow.pop %v8623
  %v8625 = vadd.f32 %v8624, 1.0
  %v8626 = vrcp.pop %v8625
  %v8627 = vmul.f32 1.0, %v8626
  %v8628 = vxor.u32 %v8469, 2147483648
  %v8629 = vmul.f32 %v8628, 1.442695
  %v8630 = vpow.pop %v8629
  %v8631 = vadd.f32 %v8630, 1.0
  %v8632 = vrcp.pop %v8631
  %v8633 = vmul.f32 1.0, %v8632
  %v8634 = vmul.f32 %v8627, %v8619
  %v8635 = vadd.f32 %v8543, %v8634
  %v8636 = vtanh.pop %v8635
  %v8637 = vsub.f32 1.0, %v8633
  %v8638 = vmul.f32 %v8637, %v8636
  %v8639 = vmul.f32 %v8633, %v7560
  %v8640 = vadd.f32 %v8638, %v8639
  %v8641 = vld [vmem:[%s22] sm:$0xff]
  %v8642 = vld [vmem:[%s22 + $0x8] sm:$0xff]
  %v8643 = vld [vmem:[%s22 + $0x10] sm:$0xff]
  %v8644 = vld [vmem:[%s22 + $0x18] sm:$0xff]
  %v8645 = vld [vmem:[%s23] sm:$0x1]
  %v8647 = vlaneseq
  %v8648 = vshrl.u32 %v8647, 7
  %v8649 = vsub.s32 0, %v8648
  %v8650 = vrot.slane %v8645, %v8649
  %v8653 = vsel %vm111, %v8640, 0
  %8655 = vmatprep.subr.mxu0 0.0
  %8656 = vmatpush1.msra.mxu0 0.0
  %8657 = vmatprep.subr.mxu0 0.0
  %8658 = vmatpush1.msra.mxu0 0.0
  %8659 = vmatprep.subr.mxu0 0.0
  %8660 = vmatpush1.msra.mxu0 0.0
  %8661 = vmatprep.subr.mxu0 0.0
  %8662 = vmatpush1.msra.mxu0 0.0
  %8663 = vmatprep.subr.mxu0 0.0
  %8664 = vmatpush1.msra.mxu0 0.0
  %8665 = vmatprep.subr.mxu0 0.0
  %8666 = vmatpush1.msra.mxu0 0.0
  %8667 = vmatprep.subr.mxu0 0.0
  %8668 = vmatpush1.msra.mxu0 0.0
  %8669 = vmatprep.subr.mxu0 0.0
  %8670 = vmatpush1.msra.mxu0 0.0
  %8671 = vmatprep.subr.mxu0 0.0
  %8672 = vmatpush1.msra.mxu0 0.0
  %8673 = vmatprep.subr.mxu0 0.0
  %8674 = vmatpush1.msra.mxu0 0.0
  %8675 = vmatprep.subr.mxu0 0.0
  %8676 = vmatpush1.msra.mxu0 0.0
  %8677 = vmatprep.subr.mxu0 0.0
  %8678 = vmatpush1.msra.mxu0 0.0
  %8679 = vmatprep.subr.mxu0 0.0
  %8680 = vmatpush1.msra.mxu0 %v8644
  %8681 = vmatprep.subr.mxu0 0.0
  %8682 = vmatpush1.msra.mxu0 %v8643
  %8683 = vmatprep.subr.mxu0 0.0
  %8684 = vmatpush1.msra.mxu0 %v8642
  %8685 = vmatprep.subr.mxu0 0.0
  %8686 = vmatpush1.msra.mxu0 %v8641
  %8687 = vmatprep.subr.mxu0 0.0
  %8688 = vmatpush2.msra.mxu0 0.0
  %8689 = vmatprep.subr.mxu0 0.0
  %8690 = vmatpush2.msra.mxu0 0.0
  %8691 = vmatprep.subr.mxu0 0.0
  %8692 = vmatpush2.msra.mxu0 0.0
  %8693 = vmatprep.subr.mxu0 0.0
  %8694 = vmatpush2.msra.mxu0 0.0
  %8695 = vmatprep.subr.mxu0 0.0
  %8696 = vmatpush2.msra.mxu0 0.0
  %8697 = vmatprep.subr.mxu0 0.0
  %8698 = vmatpush2.msra.mxu0 0.0
  %8699 = vmatprep.subr.mxu0 0.0
  %8700 = vmatpush2.msra.mxu0 0.0
  %8701 = vmatprep.subr.mxu0 0.0
  %8702 = vmatpush2.msra.mxu0 0.0
  %8703 = vmatprep.subr.mxu0 0.0
  %8704 = vmatpush2.msra.mxu0 0.0
  %8705 = vmatprep.subr.mxu0 0.0
  %8706 = vmatpush2.msra.mxu0 0.0
  %8707 = vmatprep.subr.mxu0 0.0
  %8708 = vmatpush2.msra.mxu0 0.0
  %8709 = vmatprep.subr.mxu0 0.0
  %8710 = vmatpush2.msra.mxu0 0.0
  %8711 = vmatprep.subr.mxu0 0.0
  %8712 = vmatpush2.msra.mxu0 0.0
  %8713 = vmatprep.subr.mxu0 0.0
  %8714 = vmatpush2.msra.mxu0 0.0
  %8715 = vmatprep.subr.mxu0 0.0
  %8716 = vmatpush2.msra.mxu0 0.0
  %8717 = vmatprep.subr.mxu0 0.0
  %8718 = vmatpush2.msra.mxu0 0.0
  %8719 = vmatprep.mubr.f32.mxu0 0.0
  %8720 = vmatmul.mubr.f32.gmra.mxu0 %v8653
  %v8721 = vpop.f32.mrf.mxu0
  %v8722 = vadd.f32 %v8650, %v8721
  %v8723 = vpop.f32.mrf.mxu0
  %8724 = vdwg.mxu0
  %s8725 = scalar_lea.vmem %s24, 56
  %8726 = vst [vmem:[%s8725] sm:$0xff] %v8722
  %8727 = vst.msk [vmem:[%s25] sm:$0xff] %vm111, %v8144
  %s8728 = scalar_lea.vmem %s25, 8
  %8729 = vst.msk [vmem:[%s8728] sm:$0xff] %vm111, %v8640
  // Predicated region
  $region98: #{_lambda_.1} parent=0 // pred_check
    _
  $region99: #{_lambda_.1} parent=0 // pred_check_branch
    %8731 = sbr.rel (0) target = $region101
  $region100: #{_lambda_.1} parent=0 // pred_region
    _
  $region101: #{_lambda_.1} parent=0 // pred_fallthru
    _
  // Predicated region
  $region102: #{_lambda_.1} parent=0 // pred_check
    _
  $region103: #{_lambda_.1} parent=0 // pred_check_branch
    %8733 = sbr.rel (0) target = $region105
  $region104: #{_lambda_.1} parent=0 // pred_region
    _
  $region105: #{_lambda_.1} parent=0 // pred_fallthru
    _
  // Predicated region
  $region106: #{_lambda_.1} parent=0 // pred_check
    _
  $region107: #{_lambda_.1} parent=0 // pred_check_branch
    %8735 = sbr.rel (0) target = $region109
  $region108: #{_lambda_.1} parent=0 // pred_region
    _
  $region109: #{_lambda_.1} parent=0 // pred_fallthru
    _
  // Predicated region
  $region110: #{_lambda_.1} parent=0 // pred_check
    _
  $region111: #{_lambda_.1} parent=0 // pred_check_branch
    %8737 = sbr.rel (0) target = $region113
  $region112: #{_lambda_.1} parent=0 // pred_region
    _
  $region113: #{_lambda_.1} parent=0 // pred_fallthru
    _

</llo_original>
